<compile_context>
chip_gen: v6e
topology: v6e:2x2x1
jax: 0.10.0
libtpu: 0.0.40
codegen_flags: <defaults>
</compile_context>

<pallas_src>
import jax
import jax.numpy as jnp
from jax.experimental import pallas as pl
from jax.experimental.pallas import tpu as pltpu

# ----------------------------- activations ----------------------------------
ACT_NONE, ACT_RELU, ACT_HARDSWISH, ACT_HARDSIGMOID = 0, 1, 2, 3

_VMEM_LIMIT = 32 * 1024 * 1024     # fits scoped VMEM on v5e/v6e/v7x
_ROW_TILE_CAP = 512                # M-tile rows (multiple of 8)


def _apply_act(x, act):
    if act == ACT_RELU:
        return jnp.maximum(x, 0.0)
    if act == ACT_HARDSWISH:
        return x * jnp.clip(x + 3.0, 0.0, 6.0) * (1.0 / 6.0)
    if act == ACT_HARDSIGMOID:
        return jnp.clip(x + 3.0, 0.0, 6.0) * (1.0 / 6.0)
    return x


def _cparams(*sems):
    return pltpu.CompilerParams(dimension_semantics=sems,
                                vmem_limit_bytes=_VMEM_LIMIT)


def _row_tile(rows, cap=_ROW_TILE_CAP):
    return rows if rows <= cap else cap


# ------------------------------- kernels -------------------------------------
def _make_matmul_kernel(act, has_scale, has_res):
    """out = act(((x * scale?) @ w) + bias) (+ residual?)  -- bf16 operands, f32 acc."""
    def kernel(*refs):
        i = 0
        x_ref = refs[i]; i += 1
        w_ref = refs[i]; i += 1
        b_ref = refs[i]; i += 1
        s_ref = None
        r_ref = None
        if has_scale:
            s_ref = refs[i]; i += 1
        if has_res:
            r_ref = refs[i]; i += 1
        o_ref = refs[i]

        x = x_ref[0]                                           # (TM, Cin) bf16
        if has_scale:
            x = (x.astype(jnp.float32) * s_ref[0]).astype(jnp.bfloat16)
        y = jnp.dot(x, w_ref[...], preferred_element_type=jnp.float32)
        y = y + b_ref[...]                                     # folded BN bias (f32)
        y = _apply_act(y, act)
        if has_res:
            y = y + r_ref[0].astype(jnp.float32)
        o_ref[0] = y.astype(o_ref.dtype)
    return kernel


def _make_dw_s1_kernel(K, Ho, Wo, act):
    """Stride-1 depthwise KxK: shifted-window accumulation, no patch tensor in HBM."""
    def kernel(x_ref, w_ref, b_ref, o_ref):
        xf = x_ref[0].astype(jnp.float32)                      # (Hp, Wp, C)
        wf = w_ref[...].astype(jnp.float32)                    # (K*K, C)
        C = o_ref.shape[-1]
        acc = jnp.zeros((Ho, Wo, C), jnp.float32)
        for ky in range(K):
            for kx in range(K):
                win = xf[ky:ky + Ho, kx:kx + Wo, :]
                tap = ky * K + kx
                acc = acc + win * wf[tap:tap + 1]
        y = _apply_act(acc + b_ref[...], act)
        o_ref[0] = y.astype(o_ref.dtype)
    return kernel


def _make_dw_planes_kernel(KK, act):
    """Strided depthwise from (KK, TM, C) shifted planes: unrolled VPU FMA over taps."""
    def kernel(p_ref, w_ref, b_ref, o_ref):
        wf = w_ref[...].astype(jnp.float32)                    # (KK, C)
        acc = p_ref[0].astype(jnp.float32) * wf[0:1]
        for kk in range(1, KK):
            acc = acc + p_ref[kk].astype(jnp.float32) * wf[kk:kk + 1]
        y = _apply_act(acc + b_ref[...], act)
        o_ref[...] = y.astype(o_ref.dtype)
    return kernel


def _se_scale_kernel(x_ref, w1_ref, b1_ref, w2_ref, b2_ref, s_ref):
    """SE scale only: global mean -> fc1+ReLU -> fc2+Hardsigmoid (no full rescale)."""
    x = x_ref[0].astype(jnp.float32)                           # (HW, C)
    pooled = jnp.mean(x, axis=0, keepdims=True)                # (1, C)
    h = jnp.dot(pooled.astype(jnp.bfloat16), w1_ref[...],
                preferred_element_type=jnp.float32) + b1_ref[...]
    h = jnp.maximum(h, 0.0)
    s = jnp.dot(h.astype(jnp.bfloat16), w2_ref[...],
                preferred_element_type=jnp.float32) + b2_ref[...]
    s_ref[0] = jnp.clip(s + 3.0, 0.0, 6.0) * (1.0 / 6.0)       # Hardsigmoid


def _head_kernel(x_ref, w1_ref, b1_ref, w2_ref, b2_ref, o_ref):
    """Fused global avgpool + Linear+Hardswish + Linear (logits in f32)."""
    x = x_ref[...].astype(jnp.float32)                         # (N, HW, C)
    pooled = jnp.mean(x, axis=1)                               # (N, C)
    h = jnp.dot(pooled.astype(jnp.bfloat16), w1_ref[...],
                preferred_element_type=jnp.float32) + b1_ref[...]
    h = _apply_act(h, ACT_HARDSWISH)
    # TODO(synk): nn.Dropout(p=0.2) is identity at inference time (no masking).
    y = jnp.dot(h.astype(jnp.bfloat16), w2_ref[...],
                preferred_element_type=jnp.float32) + b2_ref[...]
    o_ref[...] = y


# --------------------------- kernel wrappers ---------------------------------
def pointwise_conv(x3d, w, bias, act, scale=None, residual=None):
    """Fused 1x1-conv/matmul + folded-BN bias + activation [+ SE scale, + residual].

    x3d: (N, HW, Cin) bf16; w: (Cin, Cout) bf16; bias: (Cout,) f32;
    scale: (N, 1, Cin) f32; residual: (N, HW, Cout) bf16.  Returns (N, HW, Cout) bf16.
    """
    N, HW, Cin = x3d.shape
    Cout = w.shape[1]
    thw = _row_tile(HW)
    grid = (N, pl.cdiv(HW, thw))

    in_specs = [
        pl.BlockSpec((1, thw, Cin), lambda n, t: (n, t, 0)),
        pl.BlockSpec((Cin, Cout), lambda n, t: (0, 0)),
        pl.BlockSpec((1, Cout), lambda n, t: (0, 0)),
    ]
    args = [x3d, w, bias.reshape(1, Cout)]
    if scale is not None:
        in_specs.append(pl.BlockSpec((1, 1, Cin), lambda n, t: (n, 0, 0)))
        args.append(scale)
    if residual is not None:
        in_specs.append(pl.BlockSpec((1, thw, Cout), lambda n, t: (n, t, 0)))
        args.append(residual)

    return pl.pallas_call(
        _make_matmul_kernel(act, scale is not None, residual is not None),
        out_shape=jax.ShapeDtypeStruct((N, HW, Cout), jnp.bfloat16),
        grid=grid,
        in_specs=in_specs,
        out_specs=pl.BlockSpec((1, thw, Cout), lambda n, t: (n, t, 0)),
        compiler_params=_cparams("parallel", "parallel"),
    )(*args)


def depthwise_conv(x, wm, bias, stride, K, act):
    """Depthwise KxK conv + folded-BN bias + activation.  x: (N,H,W,C) bf16."""
    N, H, W, C = x.shape
    pad = (K - 1) // 2
    if stride == 1:
        xp = jnp.pad(x, ((0, 0), (pad, pad), (pad, pad), (0, 0)))
        Hp, Wp = H + 2 * pad, W + 2 * pad
        return pl.pallas_call(
            _make_dw_s1_kernel(K, H, W, act),
            out_shape=jax.ShapeDtypeStruct((N, H, W, C), jnp.bfloat16),
            grid=(N,),
            in_specs=[pl.BlockSpec((1, Hp, Wp, C), lambda n: (n, 0, 0, 0)),
                      pl.BlockSpec((K * K, C), lambda n: (0, 0)),
                      pl.BlockSpec((1, C), lambda n: (0, 0))],
            out_specs=pl.BlockSpec((1, H, W, C), lambda n: (n, 0, 0, 0)),
            compiler_params=_cparams("parallel"),
        )(xp, wm, bias.reshape(1, C))

    # strided depthwise: (K*K, M, C) shifted/strided planes, grid over M tiles
    planes, Ho, Wo = _shifted_planes(x, K, stride, pad)
    M = N * Ho * Wo
    tm = _row_tile(M)
    out = pl.pallas_call(
        _make_dw_planes_kernel(K * K, act),
        out_shape=jax.ShapeDtypeStruct((M, C), jnp.bfloat16),
        grid=(pl.cdiv(M, tm),),
        in_specs=[pl.BlockSpec((K * K, tm, C), lambda t: (0, t, 0)),
                  pl.BlockSpec((K * K, C), lambda t: (0, 0)),
                  pl.BlockSpec((1, C), lambda t: (0, 0))],
        out_specs=pl.BlockSpec((tm, C), lambda t: (t, 0)),
        compiler_params=_cparams("parallel"),
    )(planes, wm, bias.reshape(1, C))
    return out.reshape(N, Ho, Wo, C)


def se_scale(x, w1, b1, w2, b2):
    """Returns the (N, 1, C) squeeze-excitation scale (rescale is fused downstream)."""
    N, H, W, C = x.shape
    Csq = w1.shape[1]
    xr = x.reshape(N, H * W, C)
    return pl.pallas_call(
        _se_scale_kernel,
        out_shape=jax.ShapeDtypeStruct((N, 1, C), jnp.float32),
        grid=(N,),
        in_specs=[pl.BlockSpec((1, H * W, C), lambda n: (n, 0, 0)),
                  pl.BlockSpec((C, Csq), lambda n: (0, 0)),
                  pl.BlockSpec((1, Csq), lambda n: (0, 0)),
                  pl.BlockSpec((Csq, C), lambda n: (0, 0)),
                  pl.BlockSpec((1, C), lambda n: (0, 0))],
        out_specs=pl.BlockSpec((1, 1, C), lambda n: (n, 0, 0)),
        compiler_params=_cparams("parallel"),
    )(xr, w1, b1.reshape(1, Csq), w2, b2.reshape(1, C))


def classifier_head(x, w1, b1, w2, b2):
    """Fused avgpool + fc1(Hardswish) + fc2.  x: (N,H,W,C) bf16 -> (N, classes) f32."""
    N, H, W, C = x.shape
    hidden = w1.shape[1]
    classes = w2.shape[1]
    xr = x.reshape(N, H * W, C)
    return pl.pallas_call(
        _head_kernel,
        out_shape=jax.ShapeDtypeStruct((N, classes), jnp.float32),
        grid=(1,),
        in_specs=[pl.BlockSpec((N, H * W, C), lambda i: (0, 0, 0)),
                  pl.BlockSpec((C, hidden), lambda i: (0, 0)),
                  pl.BlockSpec((1, hidden), lambda i: (0, 0)),
                  pl.BlockSpec((hidden, classes), lambda i: (0, 0)),
                  pl.BlockSpec((1, classes), lambda i: (0, 0))],
        out_specs=pl.BlockSpec((N, classes), lambda i: (0, 0)),
        compiler_params=_cparams("arbitrary"),
    )(xr, w1, b1.reshape(1, hidden), w2, b2.reshape(1, classes))


# ------------------------------ conv glue ------------------------------------
def _shifted_planes(x, k, stride, padding):
    """(K*K, N*Ho*Wo, C) shifted/strided planes, tap order (ky, kx)."""
    N, H, W, C = x.shape
    xp = jnp.pad(x, ((0, 0), (padding, padding), (padding, padding), (0, 0)))
    Ho = (H + 2 * padding - k) // stride + 1
    Wo = (W + 2 * padding - k) // stride + 1
    planes = []
    for ky in range(k):
        for kx in range(k):
            planes.append(
                xp[:, ky:ky + (Ho - 1) * stride + 1:stride,
                   kx:kx + (Wo - 1) * stride + 1:stride, :].reshape(N * Ho * Wo, C))
    return jnp.stack(planes, axis=0), Ho, Wo


def _im2col_last(x, k, stride, padding):
    """(N, Ho*Wo, K*K*C) im2col with (ky, kx, c) channel order — stem only (Cin=3)."""
    N, H, W, C = x.shape
    xp = jnp.pad(x, ((0, 0), (padding, padding), (padding, padding), (0, 0)))
    Ho = (H + 2 * padding - k) // stride + 1
    Wo = (W + 2 * padding - k) // stride + 1
    taps = []
    for ky in range(k):
        for kx in range(k):
            taps.append(xp[:, ky:ky + (Ho - 1) * stride + 1:stride,
                           kx:kx + (Wo - 1) * stride + 1:stride, :])
    p = jnp.stack(taps, axis=3)                                 # (N, Ho, Wo, K*K, C)
    return p.reshape(N, Ho * Wo, k * k * C), Ho, Wo


# --------------------------- model configuration -----------------------------
def _make_divisible(v, divisor=8, min_value=None):
    if min_value is None:
        min_value = divisor
    new_v = max(min_value, int(v + divisor / 2) // divisor * divisor)
    if new_v < 0.9 * v:
        new_v += divisor
    return new_v


def _bneck(inp, k, exp, out, use_se, activation, stride):
    return dict(
        input_channels=_make_divisible(inp * 1.0),
        kernel=k,
        expanded_channels=_make_divisible(exp * 1.0),
        out_channels=_make_divisible(out * 1.0),
        use_se=use_se,
        use_hs=(activation == "HS"),
        stride=stride,
        dilation=1,
    )


# Small (truncated) mobilenet_v3_small-style inverted residual setting.
SETTING = [
    _bneck(16, 3, 16, 16, True, "RE", 2),
    _bneck(16, 3, 72, 24, False, "RE", 2),
    _bneck(24, 5, 88, 24, True, "HS", 1),   # exercises SE + residual connection
]
LAST_CHANNEL = 128
NUM_CLASSES = 10


# ------------------------------- parameters ----------------------------------
def _init_conv(key, cout, cin_g, k):
    fan_out = cout * k * k                      # kaiming_normal_(mode="fan_out")
    return jax.random.normal(key, (cout, cin_g, k, k), jnp.float32) * (2.0 / fan_out) ** 0.5


def _bn_fold(c, eps=1e-3):
    gamma, beta = jnp.ones((c,), jnp.float32), jnp.zeros((c,), jnp.float32)
    mean, var = jnp.zeros((c,), jnp.float32), jnp.ones((c,), jnp.float32)
    scale = gamma / jnp.sqrt(var + eps)
    shift = beta - mean * scale
    return scale, shift


def make_params(setting, last_channel, num_classes, key):
    ks = iter(jax.random.split(key, 256))
    params = {}

    def conv_bn(cout, cin_g, k):
        w = _init_conv(next(ks), cout, cin_g, k)
        scale, shift = _bn_fold(cout)
        return w * scale.reshape(-1, 1, 1, 1), shift        # fold BN scale into weights

    # stem: 3x3 stride-2 conv
    c0 = setting[0]["input_channels"]
    wf, b = conv_bn(c0, 3, 3)
    params["stem"] = dict(
        w=jnp.transpose(wf, (2, 3, 1, 0)).reshape(3 * 3 * 3, c0).astype(jnp.bfloat16),
        b=b)

    blocks = []
    for cnf in setting:
        bp = {}
        if cnf["expanded_channels"] != cnf["input_channels"]:
            wf, b = conv_bn(cnf["expanded_channels"], cnf["input_channels"], 1)
            bp["expand"] = dict(w=wf[:, :, 0, 0].T.astype(jnp.bfloat16), b=b)
        wf, b = conv_bn(cnf["expanded_channels"], 1, cnf["kernel"])
        bp["dw"] = dict(
            w=jnp.transpose(wf, (2, 3, 0, 1)).reshape(
                cnf["kernel"] * cnf["kernel"], cnf["expanded_channels"]).astype(jnp.bfloat16),
            b=b)
        if cnf["use_se"]:
            csq = _make_divisible(cnf["expanded_channels"] // 4)
            w1 = _init_conv(next(ks), csq, cnf["expanded_channels"], 1)
            w2 = _init_conv(next(ks), cnf["expanded_channels"], csq, 1)
            bp["se"] = dict(
                w1=w1[:, :, 0, 0].T.astype(jnp.bfloat16),
                b1=jnp.zeros((csq,), jnp.float32),
                w2=w2[:, :, 0, 0].T.astype(jnp.bfloat16),
                b2=jnp.zeros((cnf["expanded_channels"],), jnp.float32))
        wf, b = conv_bn(cnf["out_channels"], cnf["expanded_channels"], 1)
        bp["project"] = dict(w=wf[:, :, 0, 0].T.astype(jnp.bfloat16), b=b)
        blocks.append(bp)
    params["blocks"] = blocks

    last_in = setting[-1]["out_channels"]
    last_out = 6 * last_in
    wf, b = conv_bn(last_out, last_in, 1)
    params["lastconv"] = dict(w=wf[:, :, 0, 0].T.astype(jnp.bfloat16), b=b)

    # classifier weights stored pre-transposed to (in_features, out_features)
    params["fc1"] = dict(
        w=(jax.random.normal(next(ks), (last_channel, last_out), jnp.float32) * 0.01)
        .T.astype(jnp.bfloat16),
        b=jnp.zeros((last_channel,), jnp.float32))
    params["fc2"] = dict(
        w=(jax.random.normal(next(ks), (num_classes, last_channel), jnp.float32) * 0.01)
        .T.astype(jnp.bfloat16),
        b=jnp.zeros((num_classes,), jnp.float32))
    return params


# -------------------------------- forward ------------------------------------
def _inverted_residual(bp, cnf, x):
    act = ACT_HARDSWISH if cnf["use_hs"] else ACT_RELU
    N, H, W, Cin = x.shape
    out = x
    if "expand" in bp:
        p = bp["expand"]
        out = pointwise_conv(out.reshape(N, H * W, Cin), p["w"], p["b"], act)
        out = out.reshape(N, H, W, -1)
    p = bp["dw"]
    out = depthwise_conv(out, p["w"], p["b"], cnf["stride"], cnf["kernel"], act)
    No, Ho, Wo, Ce = out.shape
    scale = None
    if "se" in bp:
        s = bp["se"]
        scale = se_scale(out, s["w1"], s["b1"], s["w2"], s["b2"])   # (N, 1, Ce) f32
    use_res = cnf["stride"] == 1 and cnf["input_channels"] == cnf["out_channels"]
    residual = x.reshape(N, H * W, Cin) if use_res else None
    p = bp["project"]
    out = pointwise_conv(out.reshape(No, Ho * Wo, Ce), p["w"], p["b"], ACT_NONE,
                         scale=scale, residual=residual)            # SE + res fused
    return out.reshape(No, Ho, Wo, cnf["out_channels"])


def mobilenet_v3_forward(params, setting, x_nchw):
    x = jnp.transpose(x_nchw, (0, 2, 3, 1)).astype(jnp.bfloat16)    # NCHW -> NHWC, bf16
    N = x.shape[0]

    p = params["stem"]
    patches, Ho, Wo = _im2col_last(x, 3, 2, 1)                      # Cin=3 only
    x = pointwise_conv(patches, p["w"], p["b"], ACT_HARDSWISH).reshape(N, Ho, Wo, -1)

    for cnf, bp in zip(setting, params["blocks"]):
        x = _inverted_residual(bp, cnf, x)

    p = params["lastconv"]
    Nn, H, W, C = x.shape
    x = pointwise_conv(x.reshape(Nn, H * W, C), p["w"], p["b"], ACT_HARDSWISH)
    x = x.reshape(Nn, H, W, -1)

    return classifier_head(x, params["fc1"]["w"], params["fc1"]["b"],
                           params["fc2"]["w"], params["fc2"]["b"])


# --------------------------------- main ---------------------------------------
if __name__ == "__main__":
    key = jax.random.PRNGKey(0)
    pkey, xkey = jax.random.split(key)
    params = make_params(SETTING, LAST_CHANNEL, NUM_CLASSES, pkey)
    x = jax.random.normal(xkey, (2, 3, 32, 32), jnp.float32)        # NCHW like PyTorch

    @jax.jit
    def fwd(params, x):
        return mobilenet_v3_forward(params, SETTING, x)

    out = fwd(params, x)
    jax.block_until_ready(out)
    assert out.shape == (2, NUM_CLASSES)
    assert bool(jnp.all(jnp.isfinite(out)))
    print("KERNEL_OK")
</pallas_src>

<mosaic_0001>
module attributes {stable_mosaic.version = 11 : i64} {
  func.func @kernel(%arg0: i32, %arg1: i32, %arg2: memref<1x256x27xbf16, #tpu.memory_space<vmem>>, %arg3: memref<27x16xbf16, #tpu.memory_space<vmem>>, %arg4: memref<1x16xf32, #tpu.memory_space<vmem>>, %arg5: memref<1x256x16xbf16, #tpu.memory_space<vmem>>) attributes {dimension_semantics = [#tpu.dimension_semantics<parallel>, #tpu.dimension_semantics<parallel>], iteration_bounds = array<i64: 2, 1>, scalar_prefetch = 0 : i64, scratch_operands = 0 : i64, tpu.core_type = #tpu.core_type<tc>, window_params = [{transform_indices = @transform_0, window_bounds = array<i64: 1, 256, 27>}, {pipeline_mode = #tpu.pipeline_mode<synchronous>, transform_indices = @transform_1, window_bounds = array<i64: 27, 16>}, {pipeline_mode = #tpu.pipeline_mode<synchronous>, transform_indices = @transform_2, window_bounds = array<i64: 1, 16>}, {transform_indices = @transform_3, window_bounds = array<i64: 1, 256, 16>}]} {
    %c0 = arith.constant 0 : index
    %c0_0 = arith.constant 0 : index
    %c0_1 = arith.constant 0 : index
    %0 = vector.load %arg2[%c0, %c0_0, %c0_1] : memref<1x256x27xbf16, #tpu.memory_space<vmem>>, vector<1x256x27xbf16>
    %1 = vector.shape_cast %0 : vector<1x256x27xbf16> to vector<256x27xbf16>
    %c0_2 = arith.constant 0 : index
    %c0_3 = arith.constant 0 : index
    %2 = vector.load %arg3[%c0_2, %c0_3] : memref<27x16xbf16, #tpu.memory_space<vmem>>, vector<27x16xbf16>
    %cst = arith.constant dense<0.000000e+00> : vector<256x16xf32>
    %3 = tpu.matmul %1, %2, %cst {dimension_numbers = #tpu.dot_dimension_numbers<[1], [0], [0], [1], [0, 0, 1, 1], [], []>} : vector<256x27xbf16>, vector<27x16xbf16>, vector<256x16xf32> -> vector<256x16xf32>
    %c0_4 = arith.constant 0 : index
    %c0_5 = arith.constant 0 : index
    %4 = vector.load %arg4[%c0_4, %c0_5] : memref<1x16xf32, #tpu.memory_space<vmem>>, vector<1x16xf32>
    %5 = vector.broadcast %4 : vector<1x16xf32> to vector<256x16xf32>
    %6 = arith.addf %3, %5 : vector<256x16xf32>
    %cst_6 = arith.constant 3.000000e+00 : f32
    %7 = vector.broadcast %cst_6 : f32 to vector<256x16xf32>
    %8 = arith.addf %6, %7 : vector<256x16xf32>
    %cst_7 = arith.constant 0.000000e+00 : f32
    %cst_8 = arith.constant 6.000000e+00 : f32
    %9 = vector.broadcast %cst_7 : f32 to vector<256x16xf32>
    %10 = arith.maximumf %9, %8 : vector<256x16xf32>
    %11 = vector.broadcast %cst_8 : f32 to vector<256x16xf32>
    %12 = arith.minimumf %11, %10 : vector<256x16xf32>
    %13 = arith.mulf %6, %12 : vector<256x16xf32>
    %cst_9 = arith.constant 0.166666672 : f32
    %14 = vector.broadcast %cst_9 : f32 to vector<256x16xf32>
    %15 = arith.mulf %13, %14 : vector<256x16xf32>
    %16 = arith.truncf %15 : vector<256x16xf32> to vector<256x16xbf16>
    %c0_10 = arith.constant 0 : index
    %c0_11 = arith.constant 0 : index
    %c0_12 = arith.constant 0 : index
    %17 = vector.load %arg5[%c0_10, %c0_11, %c0_12] : memref<1x256x16xbf16, #tpu.memory_space<vmem>>, vector<1x256x16xbf16>
    %18 = vector.shape_cast %17 : vector<1x256x16xbf16> to vector<256x16xbf16>
    %19 = vector.shape_cast %16 : vector<256x16xbf16> to vector<1x256x16xbf16>
    tpu.vector_store %arg5[%c0_10, %c0_11, %c0_12], %19 {strides = array<i32>} : memref<1x256x16xbf16, #tpu.memory_space<vmem>>, vector<1x256x16xbf16>,
    return
  }
  func.func @transform_0(%arg0: i32, %arg1: i32) -> (i32, i32, i32) {
    %c0_i32 = arith.constant 0 : i32
    %c0_i32_0 = arith.constant 0 : i32
    return %arg0, %arg1, %c0_i32 : i32, i32, i32
  }
  func.func @transform_1(%arg0: i32, %arg1: i32) -> (i32, i32) {
    %c0_i32 = arith.constant 0 : i32
    %c0_i32_0 = arith.constant 0 : i32
    %c0_i32_1 = arith.constant 0 : i32
    return %c0_i32, %c0_i32_0 : i32, i32
  }
  func.func @transform_2(%arg0: i32, %arg1: i32) -> (i32, i32) {
    %c0_i32 = arith.constant 0 : i32
    %c0_i32_0 = arith.constant 0 : i32
    %c0_i32_1 = arith.constant 0 : i32
    return %c0_i32, %c0_i32_0 : i32, i32
  }
  func.func @transform_3(%arg0: i32, %arg1: i32) -> (i32, i32, i32) {
    %c0_i32 = arith.constant 0 : i32
    %c0_i32_0 = arith.constant 0 : i32
    return %arg0, %arg1, %c0_i32 : i32, i32, i32
  }
}

module attributes {stable_mosaic.version = 11 : i64} {
  func.func @kernel(%arg0: i32, %arg1: i32, %arg2: memref<1x64x16xbf16, #tpu.memory_space<vmem>>, %arg3: memref<16x16xbf16, #tpu.memory_space<vmem>>, %arg4: memref<1x16xf32, #tpu.memory_space<vmem>>, %arg5: memref<1x1x16xf32, #tpu.memory_space<vmem>>, %arg6: memref<1x64x16xbf16, #tpu.memory_space<vmem>>) attributes {dimension_semantics = [#tpu.dimension_semantics<parallel>, #tpu.dimension_semantics<parallel>], iteration_bounds = array<i64: 2, 1>, scalar_prefetch = 0 : i64, scratch_operands = 0 : i64, tpu.core_type = #tpu.core_type<tc>, window_params = [{transform_indices = @transform_0, window_bounds = array<i64: 1, 64, 16>}, {pipeline_mode = #tpu.pipeline_mode<synchronous>, transform_indices = @transform_1, window_bounds = array<i64: 16, 16>}, {pipeline_mode = #tpu.pipeline_mode<synchronous>, transform_indices = @transform_2, window_bounds = array<i64: 1, 16>}, {transform_indices = @transform_3, window_bounds = array<i64: 1, 1, 16>}, {transform_indices = @transform_4, window_bounds = array<i64: 1, 64, 16>}]} {
    %c0 = arith.constant 0 : index
    %c0_0 = arith.constant 0 : index
    %c0_1 = arith.constant 0 : index
    %0 = vector.load %arg2[%c0, %c0_0, %c0_1] : memref<1x64x16xbf16, #tpu.memory_space<vmem>>, vector<1x64x16xbf16>
    %1 = vector.shape_cast %0 : vector<1x64x16xbf16> to vector<64x16xbf16>
    %2 = arith.extf %1 : vector<64x16xbf16> to vector<64x16xf32>
    %c0_2 = arith.constant 0 : index
    %c0_3 = arith.constant 0 : index
    %c0_4 = arith.constant 0 : index
    %3 = vector.load %arg5[%c0_2, %c0_3, %c0_4] : memref<1x1x16xf32, #tpu.memory_space<vmem>>, vector<1x1x16xf32>
    %4 = vector.shape_cast %3 : vector<1x1x16xf32> to vector<1x16xf32>
    %5 = vector.broadcast %4 : vector<1x16xf32> to vector<64x16xf32>
    %6 = arith.mulf %2, %5 : vector<64x16xf32>
    %7 = arith.truncf %6 : vector<64x16xf32> to vector<64x16xbf16>
    %c0_5 = arith.constant 0 : index
    %c0_6 = arith.constant 0 : index
    %8 = vector.load %arg3[%c0_5, %c0_6] : memref<16x16xbf16, #tpu.memory_space<vmem>>, vector<16x16xbf16>
    %cst = arith.constant dense<0.000000e+00> : vector<64x16xf32>
    %9 = tpu.matmul %7, %8, %cst {dimension_numbers = #tpu.dot_dimension_numbers<[1], [0], [0], [1], [0, 0, 1, 1], [], []>} : vector<64x16xbf16>, vector<16x16xbf16>, vector<64x16xf32> -> vector<64x16xf32>
    %c0_7 = arith.constant 0 : index
    %c0_8 = arith.constant 0 : index
    %10 = vector.load %arg4[%c0_7, %c0_8] : memref<1x16xf32, #tpu.memory_space<vmem>>, vector<1x16xf32>
    %11 = vector.broadcast %10 : vector<1x16xf32> to vector<64x16xf32>
    %12 = arith.addf %9, %11 : vector<64x16xf32>
    %13 = arith.truncf %12 : vector<64x16xf32> to vector<64x16xbf16>
    %c0_9 = arith.constant 0 : index
    %c0_10 = arith.constant 0 : index
    %c0_11 = arith.constant 0 : index
    %14 = vector.load %arg6[%c0_9, %c0_10, %c0_11] : memref<1x64x16xbf16, #tpu.memory_space<vmem>>, vector<1x64x16xbf16>
    %15 = vector.shape_cast %14 : vector<1x64x16xbf16> to vector<64x16xbf16>
    %16 = vector.shape_cast %13 : vector<64x16xbf16> to vector<1x64x16xbf16>
    tpu.vector_store %arg6[%c0_9, %c0_10, %c0_11], %16 {strides = array<i32>} : memref<1x64x16xbf16, #tpu.memory_space<vmem>>, vector<1x64x16xbf16>,
    return
  }
  func.func @transform_0(%arg0: i32, %arg1: i32) -> (i32, i32, i32) {
    %c0_i32 = arith.constant 0 : i32
    %c0_i32_0 = arith.constant 0 : i32
    return %arg0, %arg1, %c0_i32 : i32, i32, i32
  }
  func.func @transform_1(%arg0: i32, %arg1: i32) -> (i32, i32) {
    %c0_i32 = arith.constant 0 : i32
    %c0_i32_0 = arith.constant 0 : i32
    %c0_i32_1 = arith.constant 0 : i32
    return %c0_i32, %c0_i32_0 : i32, i32
  }
  func.func @transform_2(%arg0: i32, %arg1: i32) -> (i32, i32) {
    %c0_i32 = arith.constant 0 : i32
    %c0_i32_0 = arith.constant 0 : i32
    %c0_i32_1 = arith.constant 0 : i32
    return %c0_i32, %c0_i32_0 : i32, i32
  }
  func.func @transform_3(%arg0: i32, %arg1: i32) -> (i32, i32, i32) {
    %c0_i32 = arith.constant 0 : i32
    %c0_i32_0 = arith.constant 0 : i32
    %c0_i32_1 = arith.constant 0 : i32
    return %arg0, %c0_i32, %c0_i32_0 : i32, i32, i32
  }
  func.func @transform_4(%arg0: i32, %arg1: i32) -> (i32, i32, i32) {
    %c0_i32 = arith.constant 0 : i32
    %c0_i32_0 = arith.constant 0 : i32
    return %arg0, %arg1, %c0_i32 : i32, i32, i32
  }
}

module attributes {stable_mosaic.version = 11 : i64} {
  func.func @kernel(%arg0: i32, %arg1: memref<9x128x16xbf16, #tpu.memory_space<vmem>>, %arg2: memref<9x16xbf16, #tpu.memory_space<vmem>>, %arg3: memref<1x16xf32, #tpu.memory_space<vmem>>, %arg4: memref<128x16xbf16, #tpu.memory_space<vmem>>) attributes {dimension_semantics = [#tpu.dimension_semantics<parallel>], iteration_bounds = array<i64: 1>, scalar_prefetch = 0 : i64, scratch_operands = 0 : i64, tpu.core_type = #tpu.core_type<tc>, window_params = [{transform_indices = @transform_0, window_bounds = array<i64: 9, 128, 16>}, {pipeline_mode = #tpu.pipeline_mode<synchronous>, transform_indices = @transform_1, window_bounds = array<i64: 9, 16>}, {pipeline_mode = #tpu.pipeline_mode<synchronous>, transform_indices = @transform_2, window_bounds = array<i64: 1, 16>}, {transform_indices = @transform_3, window_bounds = array<i64: 128, 16>}]} {
    %c0 = arith.constant 0 : index
    %c0_0 = arith.constant 0 : index
    %0 = vector.load %arg2[%c0, %c0_0] : memref<9x16xbf16, #tpu.memory_space<vmem>>, vector<9x16xbf16>
    %1 = arith.extf %0 : vector<9x16xbf16> to vector<9x16xf32>
    %c0_1 = arith.constant 0 : index
    %c0_2 = arith.constant 0 : index
    %c0_3 = arith.constant 0 : index
    %2 = vector.load %arg1[%c0_1, %c0_2, %c0_3] : memref<9x128x16xbf16, #tpu.memory_space<vmem>>, vector<1x128x16xbf16>
    %3 = vector.shape_cast %2 : vector<1x128x16xbf16> to vector<128x16xbf16>
    %4 = arith.extf %3 : vector<128x16xbf16> to vector<128x16xf32>
    %5 = vector.extract_strided_slice %1 {offsets = [0, 0], sizes = [1, 16], strides = [1, 1]} : vector<9x16xf32> to vector<1x16xf32>
    %6 = vector.broadcast %5 : vector<1x16xf32> to vector<128x16xf32>
    %7 = arith.mulf %4, %6 : vector<128x16xf32>
    %c1 = arith.constant 1 : index
    %c0_4 = arith.constant 0 : index
    %c0_5 = arith.constant 0 : index
    %8 = vector.load %arg1[%c1, %c0_4, %c0_5] : memref<9x128x16xbf16, #tpu.memory_space<vmem>>, vector<1x128x16xbf16>
    %9 = vector.shape_cast %8 : vector<1x128x16xbf16> to vector<128x16xbf16>
    %10 = arith.extf %9 : vector<128x16xbf16> to vector<128x16xf32>
    %11 = vector.extract_strided_slice %1 {offsets = [1, 0], sizes = [1, 16], strides = [1, 1]} : vector<9x16xf32> to vector<1x16xf32>
    %12 = vector.broadcast %11 : vector<1x16xf32> to vector<128x16xf32>
    %13 = arith.mulf %10, %12 : vector<128x16xf32>
    %14 = arith.addf %7, %13 : vector<128x16xf32>
    %c2 = arith.constant 2 : index
    %c0_6 = arith.constant 0 : index
    %c0_7 = arith.constant 0 : index
    %15 = vector.load %arg1[%c2, %c0_6, %c0_7] : memref<9x128x16xbf16, #tpu.memory_space<vmem>>, vector<1x128x16xbf16>
    %16 = vector.shape_cast %15 : vector<1x128x16xbf16> to vector<128x16xbf16>
    %17 = arith.extf %16 : vector<128x16xbf16> to vector<128x16xf32>
    %18 = vector.extract_strided_slice %1 {offsets = [2, 0], sizes = [1, 16], strides = [1, 1]} : vector<9x16xf32> to vector<1x16xf32>
    %19 = vector.broadcast %18 : vector<1x16xf32> to vector<128x16xf32>
    %20 = arith.mulf %17, %19 : vector<128x16xf32>
    %21 = arith.addf %14, %20 : vector<128x16xf32>
    %c3 = arith.constant 3 : index
    %c0_8 = arith.constant 0 : index
    %c0_9 = arith.constant 0 : index
    %22 = vector.load %arg1[%c3, %c0_8, %c0_9] : memref<9x128x16xbf16, #tpu.memory_space<vmem>>, vector<1x128x16xbf16>
    %23 = vector.shape_cast %22 : vector<1x128x16xbf16> to vector<128x16xbf16>
    %24 = arith.extf %23 : vector<128x16xbf16> to vector<128x16xf32>
    %25 = vector.extract_strided_slice %1 {offsets = [3, 0], sizes = [1, 16], strides = [1, 1]} : vector<9x16xf32> to vector<1x16xf32>
    %26 = vector.broadcast %25 : vector<1x16xf32> to vector<128x16xf32>
    %27 = arith.mulf %24, %26 : vector<128x16xf32>
    %28 = arith.addf %21, %27 : vector<128x16xf32>
    %c4 = arith.constant 4 : index
    %c0_10 = arith.constant 0 : index
    %c0_11 = arith.constant 0 : index
    %29 = vector.load %arg1[%c4, %c0_10, %c0_11] : memref<9x128x16xbf16, #tpu.memory_space<vmem>>, vector<1x128x16xbf16>
    %30 = vector.shape_cast %29 : vector<1x128x16xbf16> to vector<128x16xbf16>
    %31 = arith.extf %30 : vector<128x16xbf16> to vector<128x16xf32>
    %32 = vector.extract_strided_slice %1 {offsets = [4, 0], sizes = [1, 16], strides = [1, 1]} : vector<9x16xf32> to vector<1x16xf32>
    %33 = vector.broadcast %32 : vector<1x16xf32> to vector<128x16xf32>
    %34 = arith.mulf %31, %33 : vector<128x16xf32>
    %35 = arith.addf %28, %34 : vector<128x16xf32>
    %c5 = arith.constant 5 : index
    %c0_12 = arith.constant 0 : index
    %c0_13 = arith.constant 0 : index
    %36 = vector.load %arg1[%c5, %c0_12, %c0_13] : memref<9x128x16xbf16, #tpu.memory_space<vmem>>, vector<1x128x16xbf16>
    %37 = vector.shape_cast %36 : vector<1x128x16xbf16> to vector<128x16xbf16>
    %38 = arith.extf %37 : vector<128x16xbf16> to vector<128x16xf32>
    %39 = vector.extract_strided_slice %1 {offsets = [5, 0], sizes = [1, 16], strides = [1, 1]} : vector<9x16xf32> to vector<1x16xf32>
    %40 = vector.broadcast %39 : vector<1x16xf32> to vector<128x16xf32>
    %41 = arith.mulf %38, %40 : vector<128x16xf32>
    %42 = arith.addf %35, %41 : vector<128x16xf32>
    %c6 = arith.constant 6 : index
    %c0_14 = arith.constant 0 : index
    %c0_15 = arith.constant 0 : index
    %43 = vector.load %arg1[%c6, %c0_14, %c0_15] : memref<9x128x16xbf16, #tpu.memory_space<vmem>>, vector<1x128x16xbf16>
    %44 = vector.shape_cast %43 : vector<1x128x16xbf16> to vector<128x16xbf16>
    %45 = arith.extf %44 : vector<128x16xbf16> to vector<128x16xf32>
    %46 = vector.extract_strided_slice %1 {offsets = [6, 0], sizes = [1, 16], strides = [1, 1]} : vector<9x16xf32> to vector<1x16xf32>
    %47 = vector.broadcast %46 : vector<1x16xf32> to vector<128x16xf32>
    %48 = arith.mulf %45, %47 : vector<128x16xf32>
    %49 = arith.addf %42, %48 : vector<128x16xf32>
    %c7 = arith.constant 7 : index
    %c0_16 = arith.constant 0 : index
    %c0_17 = arith.constant 0 : index
    %50 = vector.load %arg1[%c7, %c0_16, %c0_17] : memref<9x128x16xbf16, #tpu.memory_space<vmem>>, vector<1x128x16xbf16>
    %51 = vector.shape_cast %50 : vector<1x128x16xbf16> to vector<128x16xbf16>
    %52 = arith.extf %51 : vector<128x16xbf16> to vector<128x16xf32>
    %53 = vector.extract_strided_slice %1 {offsets = [7, 0], sizes = [1, 16], strides = [1, 1]} : vector<9x16xf32> to vector<1x16xf32>
    %54 = vector.broadcast %53 : vector<1x16xf32> to vector<128x16xf32>
    %55 = arith.mulf %52, %54 : vector<128x16xf32>
    %56 = arith.addf %49, %55 : vector<128x16xf32>
    %c8 = arith.constant 8 : index
    %c0_18 = arith.constant 0 : index
    %c0_19 = arith.constant 0 : index
    %57 = vector.load %arg1[%c8, %c0_18, %c0_19] : memref<9x128x16xbf16, #tpu.memory_space<vmem>>, vector<1x128x16xbf16>
    %58 = vector.shape_cast %57 : vector<1x128x16xbf16> to vector<128x16xbf16>
    %59 = arith.extf %58 : vector<128x16xbf16> to vector<128x16xf32>
    %60 = vector.extract_strided_slice %1 {offsets = [8, 0], sizes = [1, 16], strides = [1, 1]} : vector<9x16xf32> to vector<1x16xf32>
    %61 = vector.broadcast %60 : vector<1x16xf32> to vector<128x16xf32>
    %62 = arith.mulf %59, %61 : vector<128x16xf32>
    %63 = arith.addf %56, %62 : vector<128x16xf32>
    %c0_20 = arith.constant 0 : index
    %c0_21 = arith.constant 0 : index
    %64 = vector.load %arg3[%c0_20, %c0_21] : memref<1x16xf32, #tpu.memory_space<vmem>>, vector<1x16xf32>
    %65 = vector.broadcast %64 : vector<1x16xf32> to vector<128x16xf32>
    %66 = arith.addf %63, %65 : vector<128x16xf32>
    %cst = arith.constant 0.000000e+00 : f32
    %67 = vector.broadcast %cst : f32 to vector<128x16xf32>
    %68 = arith.maximumf %66, %67 : vector<128x16xf32>
    %69 = arith.truncf %68 : vector<128x16xf32> to vector<128x16xbf16>
    %c0_22 = arith.constant 0 : index
    %c0_23 = arith.constant 0 : index
    %70 = vector.load %arg4[%c0_22, %c0_23] : memref<128x16xbf16, #tpu.memory_space<vmem>>, vector<128x16xbf16>
    tpu.vector_store %arg4[%c0_22, %c0_23], %69 {strides = array<i32>} : memref<128x16xbf16, #tpu.memory_space<vmem>>, vector<128x16xbf16>,
    return
  }
  func.func @transform_0(%arg0: i32) -> (i32, i32, i32) {
    %c0_i32 = arith.constant 0 : i32
    %c0_i32_0 = arith.constant 0 : i32
    %c0_i32_1 = arith.constant 0 : i32
    return %c0_i32, %arg0, %c0_i32_0 : i32, i32, i32
  }
  func.func @transform_1(%arg0: i32) -> (i32, i32) {
    %c0_i32 = arith.constant 0 : i32
    %c0_i32_0 = arith.constant 0 : i32
    %c0_i32_1 = arith.constant 0 : i32
    return %c0_i32, %c0_i32_0 : i32, i32
  }
  func.func @transform_2(%arg0: i32) -> (i32, i32) {
    %c0_i32 = arith.constant 0 : i32
    %c0_i32_0 = arith.constant 0 : i32
    %c0_i32_1 = arith.constant 0 : i32
    return %c0_i32, %c0_i32_0 : i32, i32
  }
  func.func @transform_3(%arg0: i32) -> (i32, i32) {
    %c0_i32 = arith.constant 0 : i32
    %c0_i32_0 = arith.constant 0 : i32
    return %arg0, %c0_i32 : i32, i32
  }
}

module attributes {stable_mosaic.version = 11 : i64} {
  func.func @_se_scale_kernel(%arg0: i32, %arg1: memref<1x64x16xbf16, #tpu.memory_space<vmem>>, %arg2: memref<16x8xbf16, #tpu.memory_space<vmem>>, %arg3: memref<1x8xf32, #tpu.memory_space<vmem>>, %arg4: memref<8x16xbf16, #tpu.memory_space<vmem>>, %arg5: memref<1x16xf32, #tpu.memory_space<vmem>>, %arg6: memref<1x1x16xf32, #tpu.memory_space<vmem>>) attributes {dimension_semantics = [#tpu.dimension_semantics<parallel>], iteration_bounds = array<i64: 2>, scalar_prefetch = 0 : i64, scratch_operands = 0 : i64, tpu.core_type = #tpu.core_type<tc>, window_params = [{transform_indices = @transform_0, window_bounds = array<i64: 1, 64, 16>}, {pipeline_mode = #tpu.pipeline_mode<synchronous>, transform_indices = @transform_1, window_bounds = array<i64: 16, 8>}, {pipeline_mode = #tpu.pipeline_mode<synchronous>, transform_indices = @transform_2, window_bounds = array<i64: 1, 8>}, {pipeline_mode = #tpu.pipeline_mode<synchronous>, transform_indices = @transform_3, window_bounds = array<i64: 8, 16>}, {pipeline_mode = #tpu.pipeline_mode<synchronous>, transform_indices = @transform_4, window_bounds = array<i64: 1, 16>}, {transform_indices = @transform_5, window_bounds = array<i64: 1, 1, 16>}]} {
    %c0 = arith.constant 0 : index
    %c0_0 = arith.constant 0 : index
    %c0_1 = arith.constant 0 : index
    %0 = vector.load %arg1[%c0, %c0_0, %c0_1] : memref<1x64x16xbf16, #tpu.memory_space<vmem>>, vector<1x64x16xbf16>
    %1 = vector.shape_cast %0 : vector<1x64x16xbf16> to vector<64x16xbf16>
    %2 = arith.extf %1 : vector<64x16xbf16> to vector<64x16xf32>
    %cst = arith.constant dense<0.000000e+00> : vector<16xf32>
    %3 = vector.multi_reduction <add>, %2, %cst [0] : vector<64x16xf32> to vector<16xf32>
    %4 = vector.shape_cast %3 : vector<16xf32> to vector<1x16xf32>
    %cst_2 = arith.constant 6.400000e+01 : f32
    %5 = vector.broadcast %cst_2 : f32 to vector<1x16xf32>
    %6 = arith.divf %4, %5 : vector<1x16xf32>
    %7 = arith.truncf %6 : vector<1x16xf32> to vector<1x16xbf16>
    %c0_3 = arith.constant 0 : index
    %c0_4 = arith.constant 0 : index
    %8 = vector.load %arg2[%c0_3, %c0_4] : memref<16x8xbf16, #tpu.memory_space<vmem>>, vector<16x8xbf16>
    %cst_5 = arith.constant dense<0.000000e+00> : vector<1x8xf32>
    %9 = tpu.matmul %7, %8, %cst_5 {dimension_numbers = #tpu.dot_dimension_numbers<[1], [0], [0], [1], [0, 0, 1, 1], [], []>} : vector<1x16xbf16>, vector<16x8xbf16>, vector<1x8xf32> -> vector<1x8xf32>
    %c0_6 = arith.constant 0 : index
    %c0_7 = arith.constant 0 : index
    %10 = vector.load %arg3[%c0_6, %c0_7] : memref<1x8xf32, #tpu.memory_space<vmem>>, vector<1x8xf32>
    %11 = arith.addf %9, %10 : vector<1x8xf32>
    %cst_8 = arith.constant 0.000000e+00 : f32
    %12 = vector.broadcast %cst_8 : f32 to vector<1x8xf32>
    %13 = arith.maximumf %11, %12 : vector<1x8xf32>
    %14 = arith.truncf %13 : vector<1x8xf32> to vector<1x8xbf16>
    %c0_9 = arith.constant 0 : index
    %c0_10 = arith.constant 0 : index
    %15 = vector.load %arg4[%c0_9, %c0_10] : memref<8x16xbf16, #tpu.memory_space<vmem>>, vector<8x16xbf16>
    %cst_11 = arith.constant dense<0.000000e+00> : vector<1x16xf32>
    %16 = tpu.matmul %14, %15, %cst_11 {dimension_numbers = #tpu.dot_dimension_numbers<[1], [0], [0], [1], [0, 0, 1, 1], [], []>} : vector<1x8xbf16>, vector<8x16xbf16>, vector<1x16xf32> -> vector<1x16xf32>
    %c0_12 = arith.constant 0 : index
    %c0_13 = arith.constant 0 : index
    %17 = vector.load %arg5[%c0_12, %c0_13] : memref<1x16xf32, #tpu.memory_space<vmem>>, vector<1x16xf32>
    %18 = arith.addf %16, %17 : vector<1x16xf32>
    %cst_14 = arith.constant 3.000000e+00 : f32
    %19 = vector.broadcast %cst_14 : f32 to vector<1x16xf32>
    %20 = arith.addf %18, %19 : vector<1x16xf32>
    %cst_15 = arith.constant 0.000000e+00 : f32
    %cst_16 = arith.constant 6.000000e+00 : f32
    %21 = vector.broadcast %cst_15 : f32 to vector<1x16xf32>
    %22 = arith.maximumf %21, %20 : vector<1x16xf32>
    %23 = vector.broadcast %cst_16 : f32 to vector<1x16xf32>
    %24 = arith.minimumf %23, %22 : vector<1x16xf32>
    %cst_17 = arith.constant 0.166666672 : f32
    %25 = vector.broadcast %cst_17 : f32 to vector<1x16xf32>
    %26 = arith.mulf %24, %25 : vector<1x16xf32>
    %c0_18 = arith.constant 0 : index
    %c0_19 = arith.constant 0 : index
    %c0_20 = arith.constant 0 : index
    %27 = vector.load %arg6[%c0_18, %c0_19, %c0_20] : memref<1x1x16xf32, #tpu.memory_space<vmem>>, vector<1x1x16xf32>
    %28 = vector.shape_cast %27 : vector<1x1x16xf32> to vector<1x16xf32>
    %29 = vector.shape_cast %26 : vector<1x16xf32> to vector<1x1x16xf32>
    tpu.vector_store %arg6[%c0_18, %c0_19, %c0_20], %29 {strides = array<i32>} : memref<1x1x16xf32, #tpu.memory_space<vmem>>, vector<1x1x16xf32>,
    return
  }
  func.func @transform_0(%arg0: i32) -> (i32, i32, i32) {
    %c0_i32 = arith.constant 0 : i32
    %c0_i32_0 = arith.constant 0 : i32
    %c0_i32_1 = arith.constant 0 : i32
    return %arg0, %c0_i32, %c0_i32_0 : i32, i32, i32
  }
  func.func @transform_1(%arg0: i32) -> (i32, i32) {
    %c0_i32 = arith.constant 0 : i32
    %c0_i32_0 = arith.constant 0 : i32
    %c0_i32_1 = arith.constant 0 : i32
    return %c0_i32, %c0_i32_0 : i32, i32
  }
  func.func @transform_2(%arg0: i32) -> (i32, i32) {
    %c0_i32 = arith.constant 0 : i32
    %c0_i32_0 = arith.constant 0 : i32
    %c0_i32_1 = arith.constant 0 : i32
    return %c0_i32, %c0_i32_0 : i32, i32
  }
  func.func @transform_3(%arg0: i32) -> (i32, i32) {
    %c0_i32 = arith.constant 0 : i32
    %c0_i32_0 = arith.constant 0 : i32
    %c0_i32_1 = arith.constant 0 : i32
    return %c0_i32, %c0_i32_0 : i32, i32
  }
  func.func @transform_4(%arg0: i32) -> (i32, i32) {
    %c0_i32 = arith.constant 0 : i32
    %c0_i32_0 = arith.constant 0 : i32
    %c0_i32_1 = arith.constant 0 : i32
    return %c0_i32, %c0_i32_0 : i32, i32
  }
  func.func @transform_5(%arg0: i32) -> (i32, i32, i32) {
    %c0_i32 = arith.constant 0 : i32
    %c0_i32_0 = arith.constant 0 : i32
    %c0_i32_1 = arith.constant 0 : i32
    return %arg0, %c0_i32, %c0_i32_0 : i32, i32, i32
  }
}

module attributes {stable_mosaic.version = 11 : i64} {
  func.func @kernel(%arg0: i32, %arg1: i32, %arg2: memref<1x64x16xbf16, #tpu.memory_space<vmem>>, %arg3: memref<16x72xbf16, #tpu.memory_space<vmem>>, %arg4: memref<1x72xf32, #tpu.memory_space<vmem>>, %arg5: memref<1x64x72xbf16, #tpu.memory_space<vmem>>) attributes {dimension_semantics = [#tpu.dimension_semantics<parallel>, #tpu.dimension_semantics<parallel>], iteration_bounds = array<i64: 2, 1>, scalar_prefetch = 0 : i64, scratch_operands = 0 : i64, tpu.core_type = #tpu.core_type<tc>, window_params = [{transform_indices = @transform_0, window_bounds = array<i64: 1, 64, 16>}, {pipeline_mode = #tpu.pipeline_mode<synchronous>, transform_indices = @transform_1, window_bounds = array<i64: 16, 72>}, {pipeline_mode = #tpu.pipeline_mode<synchronous>, transform_indices = @transform_2, window_bounds = array<i64: 1, 72>}, {transform_indices = @transform_3, window_bounds = array<i64: 1, 64, 72>}]} {
    %c0 = arith.constant 0 : index
    %c0_0 = arith.constant 0 : index
    %c0_1 = arith.constant 0 : index
    %0 = vector.load %arg2[%c0, %c0_0, %c0_1] : memref<1x64x16xbf16, #tpu.memory_space<vmem>>, vector<1x64x16xbf16>
    %1 = vector.shape_cast %0 : vector<1x64x16xbf16> to vector<64x16xbf16>
    %c0_2 = arith.constant 0 : index
    %c0_3 = arith.constant 0 : index
    %2 = vector.load %arg3[%c0_2, %c0_3] : memref<16x72xbf16, #tpu.memory_space<vmem>>, vector<16x72xbf16>
    %cst = arith.constant dense<0.000000e+00> : vector<64x72xf32>
    %3 = tpu.matmul %1, %2, %cst {dimension_numbers = #tpu.dot_dimension_numbers<[1], [0], [0], [1], [0, 0, 1, 1], [], []>} : vector<64x16xbf16>, vector<16x72xbf16>, vector<64x72xf32> -> vector<64x72xf32>
    %c0_4 = arith.constant 0 : index
    %c0_5 = arith.constant 0 : index
    %4 = vector.load %arg4[%c0_4, %c0_5] : memref<1x72xf32, #tpu.memory_space<vmem>>, vector<1x72xf32>
    %5 = vector.broadcast %4 : vector<1x72xf32> to vector<64x72xf32>
    %6 = arith.addf %3, %5 : vector<64x72xf32>
    %cst_6 = arith.constant 0.000000e+00 : f32
    %7 = vector.broadcast %cst_6 : f32 to vector<64x72xf32>
    %8 = arith.maximumf %6, %7 : vector<64x72xf32>
    %9 = arith.truncf %8 : vector<64x72xf32> to vector<64x72xbf16>
    %c0_7 = arith.constant 0 : index
    %c0_8 = arith.constant 0 : index
    %c0_9 = arith.constant 0 : index
    %10 = vector.load %arg5[%c0_7, %c0_8, %c0_9] : memref<1x64x72xbf16, #tpu.memory_space<vmem>>, vector<1x64x72xbf16>
    %11 = vector.shape_cast %10 : vector<1x64x72xbf16> to vector<64x72xbf16>
    %12 = vector.shape_cast %9 : vector<64x72xbf16> to vector<1x64x72xbf16>
    tpu.vector_store %arg5[%c0_7, %c0_8, %c0_9], %12 {strides = array<i32>} : memref<1x64x72xbf16, #tpu.memory_space<vmem>>, vector<1x64x72xbf16>,
    return
  }
  func.func @transform_0(%arg0: i32, %arg1: i32) -> (i32, i32, i32) {
    %c0_i32 = arith.constant 0 : i32
    %c0_i32_0 = arith.constant 0 : i32
    return %arg0, %arg1, %c0_i32 : i32, i32, i32
  }
  func.func @transform_1(%arg0: i32, %arg1: i32) -> (i32, i32) {
    %c0_i32 = arith.constant 0 : i32
    %c0_i32_0 = arith.constant 0 : i32
    %c0_i32_1 = arith.constant 0 : i32
    return %c0_i32, %c0_i32_0 : i32, i32
  }
  func.func @transform_2(%arg0: i32, %arg1: i32) -> (i32, i32) {
    %c0_i32 = arith.constant 0 : i32
    %c0_i32_0 = arith.constant 0 : i32
    %c0_i32_1 = arith.constant 0 : i32
    return %c0_i32, %c0_i32_0 : i32, i32
  }
  func.func @transform_3(%arg0: i32, %arg1: i32) -> (i32, i32, i32) {
    %c0_i32 = arith.constant 0 : i32
    %c0_i32_0 = arith.constant 0 : i32
    return %arg0, %arg1, %c0_i32 : i32, i32, i32
  }
}

module attributes {stable_mosaic.version = 11 : i64} {
  func.func @kernel(%arg0: i32, %arg1: i32, %arg2: memref<1x16x72xbf16, #tpu.memory_space<vmem>>, %arg3: memref<72x24xbf16, #tpu.memory_space<vmem>>, %arg4: memref<1x24xf32, #tpu.memory_space<vmem>>, %arg5: memref<1x16x24xbf16, #tpu.memory_space<vmem>>) attributes {dimension_semantics = [#tpu.dimension_semantics<parallel>, #tpu.dimension_semantics<parallel>], iteration_bounds = array<i64: 2, 1>, scalar_prefetch = 0 : i64, scratch_operands = 0 : i64, tpu.core_type = #tpu.core_type<tc>, window_params = [{transform_indices = @transform_0, window_bounds = array<i64: 1, 16, 72>}, {pipeline_mode = #tpu.pipeline_mode<synchronous>, transform_indices = @transform_1, window_bounds = array<i64: 72, 24>}, {pipeline_mode = #tpu.pipeline_mode<synchronous>, transform_indices = @transform_2, window_bounds = array<i64: 1, 24>}, {transform_indices = @transform_3, window_bounds = array<i64: 1, 16, 24>}]} {
    %c0 = arith.constant 0 : index
    %c0_0 = arith.constant 0 : index
    %c0_1 = arith.constant 0 : index
    %0 = vector.load %arg2[%c0, %c0_0, %c0_1] : memref<1x16x72xbf16, #tpu.memory_space<vmem>>, vector<1x16x72xbf16>
    %1 = vector.shape_cast %0 : vector<1x16x72xbf16> to vector<16x72xbf16>
    %c0_2 = arith.constant 0 : index
    %c0_3 = arith.constant 0 : index
    %2 = vector.load %arg3[%c0_2, %c0_3] : memref<72x24xbf16, #tpu.memory_space<vmem>>, vector<72x24xbf16>
    %cst = arith.constant dense<0.000000e+00> : vector<16x24xf32>
    %3 = tpu.matmul %1, %2, %cst {dimension_numbers = #tpu.dot_dimension_numbers<[1], [0], [0], [1], [0, 0, 1, 1], [], []>} : vector<16x72xbf16>, vector<72x24xbf16>, vector<16x24xf32> -> vector<16x24xf32>
    %c0_4 = arith.constant 0 : index
    %c0_5 = arith.constant 0 : index
    %4 = vector.load %arg4[%c0_4, %c0_5] : memref<1x24xf32, #tpu.memory_space<vmem>>, vector<1x24xf32>
    %5 = vector.broadcast %4 : vector<1x24xf32> to vector<16x24xf32>
    %6 = arith.addf %3, %5 : vector<16x24xf32>
    %7 = arith.truncf %6 : vector<16x24xf32> to vector<16x24xbf16>
    %c0_6 = arith.constant 0 : index
    %c0_7 = arith.constant 0 : index
    %c0_8 = arith.constant 0 : index
    %8 = vector.load %arg5[%c0_6, %c0_7, %c0_8] : memref<1x16x24xbf16, #tpu.memory_space<vmem>>, vector<1x16x24xbf16>
    %9 = vector.shape_cast %8 : vector<1x16x24xbf16> to vector<16x24xbf16>
    %10 = vector.shape_cast %7 : vector<16x24xbf16> to vector<1x16x24xbf16>
    tpu.vector_store %arg5[%c0_6, %c0_7, %c0_8], %10 {strides = array<i32>} : memref<1x16x24xbf16, #tpu.memory_space<vmem>>, vector<1x16x24xbf16>,
    return
  }
  func.func @transform_0(%arg0: i32, %arg1: i32) -> (i32, i32, i32) {
    %c0_i32 = arith.constant 0 : i32
    %c0_i32_0 = arith.constant 0 : i32
    return %arg0, %arg1, %c0_i32 : i32, i32, i32
  }
  func.func @transform_1(%arg0: i32, %arg1: i32) -> (i32, i32) {
    %c0_i32 = arith.constant 0 : i32
    %c0_i32_0 = arith.constant 0 : i32
    %c0_i32_1 = arith.constant 0 : i32
    return %c0_i32, %c0_i32_0 : i32, i32
  }
  func.func @transform_2(%arg0: i32, %arg1: i32) -> (i32, i32) {
    %c0_i32 = arith.constant 0 : i32
    %c0_i32_0 = arith.constant 0 : i32
    %c0_i32_1 = arith.constant 0 : i32
    return %c0_i32, %c0_i32_0 : i32, i32
  }
  func.func @transform_3(%arg0: i32, %arg1: i32) -> (i32, i32, i32) {
    %c0_i32 = arith.constant 0 : i32
    %c0_i32_0 = arith.constant 0 : i32
    return %arg0, %arg1, %c0_i32 : i32, i32, i32
  }
}

module attributes {stable_mosaic.version = 11 : i64} {
  func.func @kernel(%arg0: i32, %arg1: memref<9x32x72xbf16, #tpu.memory_space<vmem>>, %arg2: memref<9x72xbf16, #tpu.memory_space<vmem>>, %arg3: memref<1x72xf32, #tpu.memory_space<vmem>>, %arg4: memref<32x72xbf16, #tpu.memory_space<vmem>>) attributes {dimension_semantics = [#tpu.dimension_semantics<parallel>], iteration_bounds = array<i64: 1>, scalar_prefetch = 0 : i64, scratch_operands = 0 : i64, tpu.core_type = #tpu.core_type<tc>, window_params = [{transform_indices = @transform_0, window_bounds = array<i64: 9, 32, 72>}, {pipeline_mode = #tpu.pipeline_mode<synchronous>, transform_indices = @transform_1, window_bounds = array<i64: 9, 72>}, {pipeline_mode = #tpu.pipeline_mode<synchronous>, transform_indices = @transform_2, window_bounds = array<i64: 1, 72>}, {transform_indices = @transform_3, window_bounds = array<i64: 32, 72>}]} {
    %c0 = arith.constant 0 : index
    %c0_0 = arith.constant 0 : index
    %0 = vector.load %arg2[%c0, %c0_0] : memref<9x72xbf16, #tpu.memory_space<vmem>>, vector<9x72xbf16>
    %1 = arith.extf %0 : vector<9x72xbf16> to vector<9x72xf32>
    %c0_1 = arith.constant 0 : index
    %c0_2 = arith.constant 0 : index
    %c0_3 = arith.constant 0 : index
    %2 = vector.load %arg1[%c0_1, %c0_2, %c0_3] : memref<9x32x72xbf16, #tpu.memory_space<vmem>>, vector<1x32x72xbf16>
    %3 = vector.shape_cast %2 : vector<1x32x72xbf16> to vector<32x72xbf16>
    %4 = arith.extf %3 : vector<32x72xbf16> to vector<32x72xf32>
    %5 = vector.extract_strided_slice %1 {offsets = [0, 0], sizes = [1, 72], strides = [1, 1]} : vector<9x72xf32> to vector<1x72xf32>
    %6 = vector.broadcast %5 : vector<1x72xf32> to vector<32x72xf32>
    %7 = arith.mulf %4, %6 : vector<32x72xf32>
    %c1 = arith.constant 1 : index
    %c0_4 = arith.constant 0 : index
    %c0_5 = arith.constant 0 : index
    %8 = vector.load %arg1[%c1, %c0_4, %c0_5] : memref<9x32x72xbf16, #tpu.memory_space<vmem>>, vector<1x32x72xbf16>
    %9 = vector.shape_cast %8 : vector<1x32x72xbf16> to vector<32x72xbf16>
    %10 = arith.extf %9 : vector<32x72xbf16> to vector<32x72xf32>
    %11 = vector.extract_strided_slice %1 {offsets = [1, 0], sizes = [1, 72], strides = [1, 1]} : vector<9x72xf32> to vector<1x72xf32>
    %12 = vector.broadcast %11 : vector<1x72xf32> to vector<32x72xf32>
    %13 = arith.mulf %10, %12 : vector<32x72xf32>
    %14 = arith.addf %7, %13 : vector<32x72xf32>
    %c2 = arith.constant 2 : index
    %c0_6 = arith.constant 0 : index
    %c0_7 = arith.constant 0 : index
    %15 = vector.load %arg1[%c2, %c0_6, %c0_7] : memref<9x32x72xbf16, #tpu.memory_space<vmem>>, vector<1x32x72xbf16>
    %16 = vector.shape_cast %15 : vector<1x32x72xbf16> to vector<32x72xbf16>
    %17 = arith.extf %16 : vector<32x72xbf16> to vector<32x72xf32>
    %18 = vector.extract_strided_slice %1 {offsets = [2, 0], sizes = [1, 72], strides = [1, 1]} : vector<9x72xf32> to vector<1x72xf32>
    %19 = vector.broadcast %18 : vector<1x72xf32> to vector<32x72xf32>
    %20 = arith.mulf %17, %19 : vector<32x72xf32>
    %21 = arith.addf %14, %20 : vector<32x72xf32>
    %c3 = arith.constant 3 : index
    %c0_8 = arith.constant 0 : index
    %c0_9 = arith.constant 0 : index
    %22 = vector.load %arg1[%c3, %c0_8, %c0_9] : memref<9x32x72xbf16, #tpu.memory_space<vmem>>, vector<1x32x72xbf16>
    %23 = vector.shape_cast %22 : vector<1x32x72xbf16> to vector<32x72xbf16>
    %24 = arith.extf %23 : vector<32x72xbf16> to vector<32x72xf32>
    %25 = vector.extract_strided_slice %1 {offsets = [3, 0], sizes = [1, 72], strides = [1, 1]} : vector<9x72xf32> to vector<1x72xf32>
    %26 = vector.broadcast %25 : vector<1x72xf32> to vector<32x72xf32>
    %27 = arith.mulf %24, %26 : vector<32x72xf32>
    %28 = arith.addf %21, %27 : vector<32x72xf32>
    %c4 = arith.constant 4 : index
    %c0_10 = arith.constant 0 : index
    %c0_11 = arith.constant 0 : index
    %29 = vector.load %arg1[%c4, %c0_10, %c0_11] : memref<9x32x72xbf16, #tpu.memory_space<vmem>>, vector<1x32x72xbf16>
    %30 = vector.shape_cast %29 : vector<1x32x72xbf16> to vector<32x72xbf16>
    %31 = arith.extf %30 : vector<32x72xbf16> to vector<32x72xf32>
    %32 = vector.extract_strided_slice %1 {offsets = [4, 0], sizes = [1, 72], strides = [1, 1]} : vector<9x72xf32> to vector<1x72xf32>
    %33 = vector.broadcast %32 : vector<1x72xf32> to vector<32x72xf32>
    %34 = arith.mulf %31, %33 : vector<32x72xf32>
    %35 = arith.addf %28, %34 : vector<32x72xf32>
    %c5 = arith.constant 5 : index
    %c0_12 = arith.constant 0 : index
    %c0_13 = arith.constant 0 : index
    %36 = vector.load %arg1[%c5, %c0_12, %c0_13] : memref<9x32x72xbf16, #tpu.memory_space<vmem>>, vector<1x32x72xbf16>
    %37 = vector.shape_cast %36 : vector<1x32x72xbf16> to vector<32x72xbf16>
    %38 = arith.extf %37 : vector<32x72xbf16> to vector<32x72xf32>
    %39 = vector.extract_strided_slice %1 {offsets = [5, 0], sizes = [1, 72], strides = [1, 1]} : vector<9x72xf32> to vector<1x72xf32>
    %40 = vector.broadcast %39 : vector<1x72xf32> to vector<32x72xf32>
    %41 = arith.mulf %38, %40 : vector<32x72xf32>
    %42 = arith.addf %35, %41 : vector<32x72xf32>
    %c6 = arith.constant 6 : index
    %c0_14 = arith.constant 0 : index
    %c0_15 = arith.constant 0 : index
    %43 = vector.load %arg1[%c6, %c0_14, %c0_15] : memref<9x32x72xbf16, #tpu.memory_space<vmem>>, vector<1x32x72xbf16>
    %44 = vector.shape_cast %43 : vector<1x32x72xbf16> to vector<32x72xbf16>
    %45 = arith.extf %44 : vector<32x72xbf16> to vector<32x72xf32>
    %46 = vector.extract_strided_slice %1 {offsets = [6, 0], sizes = [1, 72], strides = [1, 1]} : vector<9x72xf32> to vector<1x72xf32>
    %47 = vector.broadcast %46 : vector<1x72xf32> to vector<32x72xf32>
    %48 = arith.mulf %45, %47 : vector<32x72xf32>
    %49 = arith.addf %42, %48 : vector<32x72xf32>
    %c7 = arith.constant 7 : index
    %c0_16 = arith.constant 0 : index
    %c0_17 = arith.constant 0 : index
    %50 = vector.load %arg1[%c7, %c0_16, %c0_17] : memref<9x32x72xbf16, #tpu.memory_space<vmem>>, vector<1x32x72xbf16>
    %51 = vector.shape_cast %50 : vector<1x32x72xbf16> to vector<32x72xbf16>
    %52 = arith.extf %51 : vector<32x72xbf16> to vector<32x72xf32>
    %53 = vector.extract_strided_slice %1 {offsets = [7, 0], sizes = [1, 72], strides = [1, 1]} : vector<9x72xf32> to vector<1x72xf32>
    %54 = vector.broadcast %53 : vector<1x72xf32> to vector<32x72xf32>
    %55 = arith.mulf %52, %54 : vector<32x72xf32>
    %56 = arith.addf %49, %55 : vector<32x72xf32>
    %c8 = arith.constant 8 : index
    %c0_18 = arith.constant 0 : index
    %c0_19 = arith.constant 0 : index
    %57 = vector.load %arg1[%c8, %c0_18, %c0_19] : memref<9x32x72xbf16, #tpu.memory_space<vmem>>, vector<1x32x72xbf16>
    %58 = vector.shape_cast %57 : vector<1x32x72xbf16> to vector<32x72xbf16>
    %59 = arith.extf %58 : vector<32x72xbf16> to vector<32x72xf32>
    %60 = vector.extract_strided_slice %1 {offsets = [8, 0], sizes = [1, 72], strides = [1, 1]} : vector<9x72xf32> to vector<1x72xf32>
    %61 = vector.broadcast %60 : vector<1x72xf32> to vector<32x72xf32>
    %62 = arith.mulf %59, %61 : vector<32x72xf32>
    %63 = arith.addf %56, %62 : vector<32x72xf32>
    %c0_20 = arith.constant 0 : index
    %c0_21 = arith.constant 0 : index
    %64 = vector.load %arg3[%c0_20, %c0_21] : memref<1x72xf32, #tpu.memory_space<vmem>>, vector<1x72xf32>
    %65 = vector.broadcast %64 : vector<1x72xf32> to vector<32x72xf32>
    %66 = arith.addf %63, %65 : vector<32x72xf32>
    %cst = arith.constant 0.000000e+00 : f32
    %67 = vector.broadcast %cst : f32 to vector<32x72xf32>
    %68 = arith.maximumf %66, %67 : vector<32x72xf32>
    %69 = arith.truncf %68 : vector<32x72xf32> to vector<32x72xbf16>
    %c0_22 = arith.constant 0 : index
    %c0_23 = arith.constant 0 : index
    %70 = vector.load %arg4[%c0_22, %c0_23] : memref<32x72xbf16, #tpu.memory_space<vmem>>, vector<32x72xbf16>
    tpu.vector_store %arg4[%c0_22, %c0_23], %69 {strides = array<i32>} : memref<32x72xbf16, #tpu.memory_space<vmem>>, vector<32x72xbf16>,
    return
  }
  func.func @transform_0(%arg0: i32) -> (i32, i32, i32) {
    %c0_i32 = arith.constant 0 : i32
    %c0_i32_0 = arith.constant 0 : i32
    %c0_i32_1 = arith.constant 0 : i32
    return %c0_i32, %arg0, %c0_i32_0 : i32, i32, i32
  }
  func.func @transform_1(%arg0: i32) -> (i32, i32) {
    %c0_i32 = arith.constant 0 : i32
    %c0_i32_0 = arith.constant 0 : i32
    %c0_i32_1 = arith.constant 0 : i32
    return %c0_i32, %c0_i32_0 : i32, i32
  }
  func.func @transform_2(%arg0: i32) -> (i32, i32) {
    %c0_i32 = arith.constant 0 : i32
    %c0_i32_0 = arith.constant 0 : i32
    %c0_i32_1 = arith.constant 0 : i32
    return %c0_i32, %c0_i32_0 : i32, i32
  }
  func.func @transform_3(%arg0: i32) -> (i32, i32) {
    %c0_i32 = arith.constant 0 : i32
    %c0_i32_0 = arith.constant 0 : i32
    return %arg0, %c0_i32 : i32, i32
  }
}

module attributes {stable_mosaic.version = 11 : i64} {
  func.func @kernel(%arg0: i32, %arg1: i32, %arg2: memref<1x16x24xbf16, #tpu.memory_space<vmem>>, %arg3: memref<24x88xbf16, #tpu.memory_space<vmem>>, %arg4: memref<1x88xf32, #tpu.memory_space<vmem>>, %arg5: memref<1x16x88xbf16, #tpu.memory_space<vmem>>) attributes {dimension_semantics = [#tpu.dimension_semantics<parallel>, #tpu.dimension_semantics<parallel>], iteration_bounds = array<i64: 2, 1>, scalar_prefetch = 0 : i64, scratch_operands = 0 : i64, tpu.core_type = #tpu.core_type<tc>, window_params = [{transform_indices = @transform_0, window_bounds = array<i64: 1, 16, 24>}, {pipeline_mode = #tpu.pipeline_mode<synchronous>, transform_indices = @transform_1, window_bounds = array<i64: 24, 88>}, {pipeline_mode = #tpu.pipeline_mode<synchronous>, transform_indices = @transform_2, window_bounds = array<i64: 1, 88>}, {transform_indices = @transform_3, window_bounds = array<i64: 1, 16, 88>}]} {
    %c0 = arith.constant 0 : index
    %c0_0 = arith.constant 0 : index
    %c0_1 = arith.constant 0 : index
    %0 = vector.load %arg2[%c0, %c0_0, %c0_1] : memref<1x16x24xbf16, #tpu.memory_space<vmem>>, vector<1x16x24xbf16>
    %1 = vector.shape_cast %0 : vector<1x16x24xbf16> to vector<16x24xbf16>
    %c0_2 = arith.constant 0 : index
    %c0_3 = arith.constant 0 : index
    %2 = vector.load %arg3[%c0_2, %c0_3] : memref<24x88xbf16, #tpu.memory_space<vmem>>, vector<24x88xbf16>
    %cst = arith.constant dense<0.000000e+00> : vector<16x88xf32>
    %3 = tpu.matmul %1, %2, %cst {dimension_numbers = #tpu.dot_dimension_numbers<[1], [0], [0], [1], [0, 0, 1, 1], [], []>} : vector<16x24xbf16>, vector<24x88xbf16>, vector<16x88xf32> -> vector<16x88xf32>
    %c0_4 = arith.constant 0 : index
    %c0_5 = arith.constant 0 : index
    %4 = vector.load %arg4[%c0_4, %c0_5] : memref<1x88xf32, #tpu.memory_space<vmem>>, vector<1x88xf32>
    %5 = vector.broadcast %4 : vector<1x88xf32> to vector<16x88xf32>
    %6 = arith.addf %3, %5 : vector<16x88xf32>
    %cst_6 = arith.constant 3.000000e+00 : f32
    %7 = vector.broadcast %cst_6 : f32 to vector<16x88xf32>
    %8 = arith.addf %6, %7 : vector<16x88xf32>
    %cst_7 = arith.constant 0.000000e+00 : f32
    %cst_8 = arith.constant 6.000000e+00 : f32
    %9 = vector.broadcast %cst_7 : f32 to vector<16x88xf32>
    %10 = arith.maximumf %9, %8 : vector<16x88xf32>
    %11 = vector.broadcast %cst_8 : f32 to vector<16x88xf32>
    %12 = arith.minimumf %11, %10 : vector<16x88xf32>
    %13 = arith.mulf %6, %12 : vector<16x88xf32>
    %cst_9 = arith.constant 0.166666672 : f32
    %14 = vector.broadcast %cst_9 : f32 to vector<16x88xf32>
    %15 = arith.mulf %13, %14 : vector<16x88xf32>
    %16 = arith.truncf %15 : vector<16x88xf32> to vector<16x88xbf16>
    %c0_10 = arith.constant 0 : index
    %c0_11 = arith.constant 0 : index
    %c0_12 = arith.constant 0 : index
    %17 = vector.load %arg5[%c0_10, %c0_11, %c0_12] : memref<1x16x88xbf16, #tpu.memory_space<vmem>>, vector<1x16x88xbf16>
    %18 = vector.shape_cast %17 : vector<1x16x88xbf16> to vector<16x88xbf16>
    %19 = vector.shape_cast %16 : vector<16x88xbf16> to vector<1x16x88xbf16>
    tpu.vector_store %arg5[%c0_10, %c0_11, %c0_12], %19 {strides = array<i32>} : memref<1x16x88xbf16, #tpu.memory_space<vmem>>, vector<1x16x88xbf16>,
    return
  }
  func.func @transform_0(%arg0: i32, %arg1: i32) -> (i32, i32, i32) {
    %c0_i32 = arith.constant 0 : i32
    %c0_i32_0 = arith.constant 0 : i32
    return %arg0, %arg1, %c0_i32 : i32, i32, i32
  }
  func.func @transform_1(%arg0: i32, %arg1: i32) -> (i32, i32) {
    %c0_i32 = arith.constant 0 : i32
    %c0_i32_0 = arith.constant 0 : i32
    %c0_i32_1 = arith.constant 0 : i32
    return %c0_i32, %c0_i32_0 : i32, i32
  }
  func.func @transform_2(%arg0: i32, %arg1: i32) -> (i32, i32) {
    %c0_i32 = arith.constant 0 : i32
    %c0_i32_0 = arith.constant 0 : i32
    %c0_i32_1 = arith.constant 0 : i32
    return %c0_i32, %c0_i32_0 : i32, i32
  }
  func.func @transform_3(%arg0: i32, %arg1: i32) -> (i32, i32, i32) {
    %c0_i32 = arith.constant 0 : i32
    %c0_i32_0 = arith.constant 0 : i32
    return %arg0, %arg1, %c0_i32 : i32, i32, i32
  }
}

module attributes {stable_mosaic.version = 11 : i64} {
  func.func @kernel(%arg0: i32, %arg1: memref<1x8x8x88xbf16, #tpu.memory_space<vmem>>, %arg2: memref<25x88xbf16, #tpu.memory_space<vmem>>, %arg3: memref<1x88xf32, #tpu.memory_space<vmem>>, %arg4: memref<1x4x4x88xbf16, #tpu.memory_space<vmem>>) attributes {dimension_semantics = [#tpu.dimension_semantics<parallel>], iteration_bounds = array<i64: 2>, scalar_prefetch = 0 : i64, scratch_operands = 0 : i64, tpu.core_type = #tpu.core_type<tc>, window_params = [{transform_indices = @transform_0, window_bounds = array<i64: 1, 8, 8, 88>}, {pipeline_mode = #tpu.pipeline_mode<synchronous>, transform_indices = @transform_1, window_bounds = array<i64: 25, 88>}, {pipeline_mode = #tpu.pipeline_mode<synchronous>, transform_indices = @transform_2, window_bounds = array<i64: 1, 88>}, {transform_indices = @transform_3, window_bounds = array<i64: 1, 4, 4, 88>}]} {
    %c0 = arith.constant 0 : index
    %c0_0 = arith.constant 0 : index
    %c0_1 = arith.constant 0 : index
    %c0_2 = arith.constant 0 : index
    %0 = vector.load %arg1[%c0, %c0_0, %c0_1, %c0_2] : memref<1x8x8x88xbf16, #tpu.memory_space<vmem>>, vector<1x8x8x88xbf16>
    %1 = vector.shape_cast %0 : vector<1x8x8x88xbf16> to vector<8x8x88xbf16>
    %2 = arith.extf %1 : vector<8x8x88xbf16> to vector<8x8x88xf32>
    %c0_3 = arith.constant 0 : index
    %c0_4 = arith.constant 0 : index
    %3 = vector.load %arg2[%c0_3, %c0_4] : memref<25x88xbf16, #tpu.memory_space<vmem>>, vector<25x88xbf16>
    %4 = arith.extf %3 : vector<25x88xbf16> to vector<25x88xf32>
    %cst = arith.constant 0.000000e+00 : f32
    %5 = vector.broadcast %cst : f32 to vector<4x4x88xf32>
    %6 = vector.extract_strided_slice %2 {offsets = [0, 0, 0], sizes = [4, 4, 88], strides = [1, 1, 1]} : vector<8x8x88xf32> to vector<4x4x88xf32>
    %7 = vector.extract_strided_slice %4 {offsets = [0, 0], sizes = [1, 88], strides = [1, 1]} : vector<25x88xf32> to vector<1x88xf32>
    %8 = vector.shape_cast %7 : vector<1x88xf32> to vector<1x1x88xf32>
    %9 = vector.broadcast %8 : vector<1x1x88xf32> to vector<4x4x88xf32>
    %10 = arith.mulf %6, %9 : vector<4x4x88xf32>
    %11 = arith.addf %5, %10 : vector<4x4x88xf32>
    %12 = vector.extract_strided_slice %2 {offsets = [0, 1, 0], sizes = [4, 4, 88], strides = [1, 1, 1]} : vector<8x8x88xf32> to vector<4x4x88xf32>
    %13 = vector.extract_strided_slice %4 {offsets = [1, 0], sizes = [1, 88], strides = [1, 1]} : vector<25x88xf32> to vector<1x88xf32>
    %14 = vector.shape_cast %13 : vector<1x88xf32> to vector<1x1x88xf32>
    %15 = vector.broadcast %14 : vector<1x1x88xf32> to vector<4x4x88xf32>
    %16 = arith.mulf %12, %15 : vector<4x4x88xf32>
    %17 = arith.addf %11, %16 : vector<4x4x88xf32>
    %18 = vector.extract_strided_slice %2 {offsets = [0, 2, 0], sizes = [4, 4, 88], strides = [1, 1, 1]} : vector<8x8x88xf32> to vector<4x4x88xf32>
    %19 = vector.extract_strided_slice %4 {offsets = [2, 0], sizes = [1, 88], strides = [1, 1]} : vector<25x88xf32> to vector<1x88xf32>
    %20 = vector.shape_cast %19 : vector<1x88xf32> to vector<1x1x88xf32>
    %21 = vector.broadcast %20 : vector<1x1x88xf32> to vector<4x4x88xf32>
    %22 = arith.mulf %18, %21 : vector<4x4x88xf32>
    %23 = arith.addf %17, %22 : vector<4x4x88xf32>
    %24 = vector.extract_strided_slice %2 {offsets = [0, 3, 0], sizes = [4, 4, 88], strides = [1, 1, 1]} : vector<8x8x88xf32> to vector<4x4x88xf32>
    %25 = vector.extract_strided_slice %4 {offsets = [3, 0], sizes = [1, 88], strides = [1, 1]} : vector<25x88xf32> to vector<1x88xf32>
    %26 = vector.shape_cast %25 : vector<1x88xf32> to vector<1x1x88xf32>
    %27 = vector.broadcast %26 : vector<1x1x88xf32> to vector<4x4x88xf32>
    %28 = arith.mulf %24, %27 : vector<4x4x88xf32>
    %29 = arith.addf %23, %28 : vector<4x4x88xf32>
    %30 = vector.extract_strided_slice %2 {offsets = [0, 4, 0], sizes = [4, 4, 88], strides = [1, 1, 1]} : vector<8x8x88xf32> to vector<4x4x88xf32>
    %31 = vector.extract_strided_slice %4 {offsets = [4, 0], sizes = [1, 88], strides = [1, 1]} : vector<25x88xf32> to vector<1x88xf32>
    %32 = vector.shape_cast %31 : vector<1x88xf32> to vector<1x1x88xf32>
    %33 = vector.broadcast %32 : vector<1x1x88xf32> to vector<4x4x88xf32>
    %34 = arith.mulf %30, %33 : vector<4x4x88xf32>
    %35 = arith.addf %29, %34 : vector<4x4x88xf32>
    %36 = vector.extract_strided_slice %2 {offsets = [1, 0, 0], sizes = [4, 4, 88], strides = [1, 1, 1]} : vector<8x8x88xf32> to vector<4x4x88xf32>
    %37 = vector.extract_strided_slice %4 {offsets = [5, 0], sizes = [1, 88], strides = [1, 1]} : vector<25x88xf32> to vector<1x88xf32>
    %38 = vector.shape_cast %37 : vector<1x88xf32> to vector<1x1x88xf32>
    %39 = vector.broadcast %38 : vector<1x1x88xf32> to vector<4x4x88xf32>
    %40 = arith.mulf %36, %39 : vector<4x4x88xf32>
    %41 = arith.addf %35, %40 : vector<4x4x88xf32>
    %42 = vector.extract_strided_slice %2 {offsets = [1, 1, 0], sizes = [4, 4, 88], strides = [1, 1, 1]} : vector<8x8x88xf32> to vector<4x4x88xf32>
    %43 = vector.extract_strided_slice %4 {offsets = [6, 0], sizes = [1, 88], strides = [1, 1]} : vector<25x88xf32> to vector<1x88xf32>
    %44 = vector.shape_cast %43 : vector<1x88xf32> to vector<1x1x88xf32>
    %45 = vector.broadcast %44 : vector<1x1x88xf32> to vector<4x4x88xf32>
    %46 = arith.mulf %42, %45 : vector<4x4x88xf32>
    %47 = arith.addf %41, %46 : vector<4x4x88xf32>
    %48 = vector.extract_strided_slice %2 {offsets = [1, 2, 0], sizes = [4, 4, 88], strides = [1, 1, 1]} : vector<8x8x88xf32> to vector<4x4x88xf32>
    %49 = vector.extract_strided_slice %4 {offsets = [7, 0], sizes = [1, 88], strides = [1, 1]} : vector<25x88xf32> to vector<1x88xf32>
    %50 = vector.shape_cast %49 : vector<1x88xf32> to vector<1x1x88xf32>
    %51 = vector.broadcast %50 : vector<1x1x88xf32> to vector<4x4x88xf32>
    %52 = arith.mulf %48, %51 : vector<4x4x88xf32>
    %53 = arith.addf %47, %52 : vector<4x4x88xf32>
    %54 = vector.extract_strided_slice %2 {offsets = [1, 3, 0], sizes = [4, 4, 88], strides = [1, 1, 1]} : vector<8x8x88xf32> to vector<4x4x88xf32>
    %55 = vector.extract_strided_slice %4 {offsets = [8, 0], sizes = [1, 88], strides = [1, 1]} : vector<25x88xf32> to vector<1x88xf32>
    %56 = vector.shape_cast %55 : vector<1x88xf32> to vector<1x1x88xf32>
    %57 = vector.broadcast %56 : vector<1x1x88xf32> to vector<4x4x88xf32>
    %58 = arith.mulf %54, %57 : vector<4x4x88xf32>
    %59 = arith.addf %53, %58 : vector<4x4x88xf32>
    %60 = vector.extract_strided_slice %2 {offsets = [1, 4, 0], sizes = [4, 4, 88], strides = [1, 1, 1]} : vector<8x8x88xf32> to vector<4x4x88xf32>
    %61 = vector.extract_strided_slice %4 {offsets = [9, 0], sizes = [1, 88], strides = [1, 1]} : vector<25x88xf32> to vector<1x88xf32>
    %62 = vector.shape_cast %61 : vector<1x88xf32> to vector<1x1x88xf32>
    %63 = vector.broadcast %62 : vector<1x1x88xf32> to vector<4x4x88xf32>
    %64 = arith.mulf %60, %63 : vector<4x4x88xf32>
    %65 = arith.addf %59, %64 : vector<4x4x88xf32>
    %66 = vector.extract_strided_slice %2 {offsets = [2, 0, 0], sizes = [4, 4, 88], strides = [1, 1, 1]} : vector<8x8x88xf32> to vector<4x4x88xf32>
    %67 = vector.extract_strided_slice %4 {offsets = [10, 0], sizes = [1, 88], strides = [1, 1]} : vector<25x88xf32> to vector<1x88xf32>
    %68 = vector.shape_cast %67 : vector<1x88xf32> to vector<1x1x88xf32>
    %69 = vector.broadcast %68 : vector<1x1x88xf32> to vector<4x4x88xf32>
    %70 = arith.mulf %66, %69 : vector<4x4x88xf32>
    %71 = arith.addf %65, %70 : vector<4x4x88xf32>
    %72 = vector.extract_strided_slice %2 {offsets = [2, 1, 0], sizes = [4, 4, 88], strides = [1, 1, 1]} : vector<8x8x88xf32> to vector<4x4x88xf32>
    %73 = vector.extract_strided_slice %4 {offsets = [11, 0], sizes = [1, 88], strides = [1, 1]} : vector<25x88xf32> to vector<1x88xf32>
    %74 = vector.shape_cast %73 : vector<1x88xf32> to vector<1x1x88xf32>
    %75 = vector.broadcast %74 : vector<1x1x88xf32> to vector<4x4x88xf32>
    %76 = arith.mulf %72, %75 : vector<4x4x88xf32>
    %77 = arith.addf %71, %76 : vector<4x4x88xf32>
    %78 = vector.extract_strided_slice %2 {offsets = [2, 2, 0], sizes = [4, 4, 88], strides = [1, 1, 1]} : vector<8x8x88xf32> to vector<4x4x88xf32>
    %79 = vector.extract_strided_slice %4 {offsets = [12, 0], sizes = [1, 88], strides = [1, 1]} : vector<25x88xf32> to vector<1x88xf32>
    %80 = vector.shape_cast %79 : vector<1x88xf32> to vector<1x1x88xf32>
    %81 = vector.broadcast %80 : vector<1x1x88xf32> to vector<4x4x88xf32>
    %82 = arith.mulf %78, %81 : vector<4x4x88xf32>
    %83 = arith.addf %77, %82 : vector<4x4x88xf32>
    %84 = vector.extract_strided_slice %2 {offsets = [2, 3, 0], sizes = [4, 4, 88], strides = [1, 1, 1]} : vector<8x8x88xf32> to vector<4x4x88xf32>
    %85 = vector.extract_strided_slice %4 {offsets = [13, 0], sizes = [1, 88], strides = [1, 1]} : vector<25x88xf32> to vector<1x88xf32>
    %86 = vector.shape_cast %85 : vector<1x88xf32> to vector<1x1x88xf32>
    %87 = vector.broadcast %86 : vector<1x1x88xf32> to vector<4x4x88xf32>
    %88 = arith.mulf %84, %87 : vector<4x4x88xf32>
    %89 = arith.addf %83, %88 : vector<4x4x88xf32>
    %90 = vector.extract_strided_slice %2 {offsets = [2, 4, 0], sizes = [4, 4, 88], strides = [1, 1, 1]} : vector<8x8x88xf32> to vector<4x4x88xf32>
    %91 = vector.extract_strided_slice %4 {offsets = [14, 0], sizes = [1, 88], strides = [1, 1]} : vector<25x88xf32> to vector<1x88xf32>
    %92 = vector.shape_cast %91 : vector<1x88xf32> to vector<1x1x88xf32>
    %93 = vector.broadcast %92 : vector<1x1x88xf32> to vector<4x4x88xf32>
    %94 = arith.mulf %90, %93 : vector<4x4x88xf32>
    %95 = arith.addf %89, %94 : vector<4x4x88xf32>
    %96 = vector.extract_strided_slice %2 {offsets = [3, 0, 0], sizes = [4, 4, 88], strides = [1, 1, 1]} : vector<8x8x88xf32> to vector<4x4x88xf32>
    %97 = vector.extract_strided_slice %4 {offsets = [15, 0], sizes = [1, 88], strides = [1, 1]} : vector<25x88xf32> to vector<1x88xf32>
    %98 = vector.shape_cast %97 : vector<1x88xf32> to vector<1x1x88xf32>
    %99 = vector.broadcast %98 : vector<1x1x88xf32> to vector<4x4x88xf32>
    %100 = arith.mulf %96, %99 : vector<4x4x88xf32>
    %101 = arith.addf %95, %100 : vector<4x4x88xf32>
    %102 = vector.extract_strided_slice %2 {offsets = [3, 1, 0], sizes = [4, 4, 88], strides = [1, 1, 1]} : vector<8x8x88xf32> to vector<4x4x88xf32>
    %103 = vector.extract_strided_slice %4 {offsets = [16, 0], sizes = [1, 88], strides = [1, 1]} : vector<25x88xf32> to vector<1x88xf32>
    %104 = vector.shape_cast %103 : vector<1x88xf32> to vector<1x1x88xf32>
    %105 = vector.broadcast %104 : vector<1x1x88xf32> to vector<4x4x88xf32>
    %106 = arith.mulf %102, %105 : vector<4x4x88xf32>
    %107 = arith.addf %101, %106 : vector<4x4x88xf32>
    %108 = vector.extract_strided_slice %2 {offsets = [3, 2, 0], sizes = [4, 4, 88], strides = [1, 1, 1]} : vector<8x8x88xf32> to vector<4x4x88xf32>
    %109 = vector.extract_strided_slice %4 {offsets = [17, 0], sizes = [1, 88], strides = [1, 1]} : vector<25x88xf32> to vector<1x88xf32>
    %110 = vector.shape_cast %109 : vector<1x88xf32> to vector<1x1x88xf32>
    %111 = vector.broadcast %110 : vector<1x1x88xf32> to vector<4x4x88xf32>
    %112 = arith.mulf %108, %111 : vector<4x4x88xf32>
    %113 = arith.addf %107, %112 : vector<4x4x88xf32>
    %114 = vector.extract_strided_slice %2 {offsets = [3, 3, 0], sizes = [4, 4, 88], strides = [1, 1, 1]} : vector<8x8x88xf32> to vector<4x4x88xf32>
    %115 = vector.extract_strided_slice %4 {offsets = [18, 0], sizes = [1, 88], strides = [1, 1]} : vector<25x88xf32> to vector<1x88xf32>
    %116 = vector.shape_cast %115 : vector<1x88xf32> to vector<1x1x88xf32>
    %117 = vector.broadcast %116 : vector<1x1x88xf32> to vector<4x4x88xf32>
    %118 = arith.mulf %114, %117 : vector<4x4x88xf32>
    %119 = arith.addf %113, %118 : vector<4x4x88xf32>
    %120 = vector.extract_strided_slice %2 {offsets = [3, 4, 0], sizes = [4, 4, 88], strides = [1, 1, 1]} : vector<8x8x88xf32> to vector<4x4x88xf32>
    %121 = vector.extract_strided_slice %4 {offsets = [19, 0], sizes = [1, 88], strides = [1, 1]} : vector<25x88xf32> to vector<1x88xf32>
    %122 = vector.shape_cast %121 : vector<1x88xf32> to vector<1x1x88xf32>
    %123 = vector.broadcast %122 : vector<1x1x88xf32> to vector<4x4x88xf32>
    %124 = arith.mulf %120, %123 : vector<4x4x88xf32>
    %125 = arith.addf %119, %124 : vector<4x4x88xf32>
    %126 = vector.extract_strided_slice %2 {offsets = [4, 0, 0], sizes = [4, 4, 88], strides = [1, 1, 1]} : vector<8x8x88xf32> to vector<4x4x88xf32>
    %127 = vector.extract_strided_slice %4 {offsets = [20, 0], sizes = [1, 88], strides = [1, 1]} : vector<25x88xf32> to vector<1x88xf32>
    %128 = vector.shape_cast %127 : vector<1x88xf32> to vector<1x1x88xf32>
    %129 = vector.broadcast %128 : vector<1x1x88xf32> to vector<4x4x88xf32>
    %130 = arith.mulf %126, %129 : vector<4x4x88xf32>
    %131 = arith.addf %125, %130 : vector<4x4x88xf32>
    %132 = vector.extract_strided_slice %2 {offsets = [4, 1, 0], sizes = [4, 4, 88], strides = [1, 1, 1]} : vector<8x8x88xf32> to vector<4x4x88xf32>
    %133 = vector.extract_strided_slice %4 {offsets = [21, 0], sizes = [1, 88], strides = [1, 1]} : vector<25x88xf32> to vector<1x88xf32>
    %134 = vector.shape_cast %133 : vector<1x88xf32> to vector<1x1x88xf32>
    %135 = vector.broadcast %134 : vector<1x1x88xf32> to vector<4x4x88xf32>
    %136 = arith.mulf %132, %135 : vector<4x4x88xf32>
    %137 = arith.addf %131, %136 : vector<4x4x88xf32>
    %138 = vector.extract_strided_slice %2 {offsets = [4, 2, 0], sizes = [4, 4, 88], strides = [1, 1, 1]} : vector<8x8x88xf32> to vector<4x4x88xf32>
    %139 = vector.extract_strided_slice %4 {offsets = [22, 0], sizes = [1, 88], strides = [1, 1]} : vector<25x88xf32> to vector<1x88xf32>
    %140 = vector.shape_cast %139 : vector<1x88xf32> to vector<1x1x88xf32>
    %141 = vector.broadcast %140 : vector<1x1x88xf32> to vector<4x4x88xf32>
    %142 = arith.mulf %138, %141 : vector<4x4x88xf32>
    %143 = arith.addf %137, %142 : vector<4x4x88xf32>
    %144 = vector.extract_strided_slice %2 {offsets = [4, 3, 0], sizes = [4, 4, 88], strides = [1, 1, 1]} : vector<8x8x88xf32> to vector<4x4x88xf32>
    %145 = vector.extract_strided_slice %4 {offsets = [23, 0], sizes = [1, 88], strides = [1, 1]} : vector<25x88xf32> to vector<1x88xf32>
    %146 = vector.shape_cast %145 : vector<1x88xf32> to vector<1x1x88xf32>
    %147 = vector.broadcast %146 : vector<1x1x88xf32> to vector<4x4x88xf32>
    %148 = arith.mulf %144, %147 : vector<4x4x88xf32>
    %149 = arith.addf %143, %148 : vector<4x4x88xf32>
    %150 = vector.extract_strided_slice %2 {offsets = [4, 4, 0], sizes = [4, 4, 88], strides = [1, 1, 1]} : vector<8x8x88xf32> to vector<4x4x88xf32>
    %151 = vector.extract_strided_slice %4 {offsets = [24, 0], sizes = [1, 88], strides = [1, 1]} : vector<25x88xf32> to vector<1x88xf32>
    %152 = vector.shape_cast %151 : vector<1x88xf32> to vector<1x1x88xf32>
    %153 = vector.broadcast %152 : vector<1x1x88xf32> to vector<4x4x88xf32>
    %154 = arith.mulf %150, %153 : vector<4x4x88xf32>
    %155 = arith.addf %149, %154 : vector<4x4x88xf32>
    %c0_5 = arith.constant 0 : index
    %c0_6 = arith.constant 0 : index
    %156 = vector.load %arg3[%c0_5, %c0_6] : memref<1x88xf32, #tpu.memory_space<vmem>>, vector<1x88xf32>
    %157 = vector.shape_cast %156 : vector<1x88xf32> to vector<1x1x88xf32>
    %158 = vector.broadcast %157 : vector<1x1x88xf32> to vector<4x4x88xf32>
    %159 = arith.addf %155, %158 : vector<4x4x88xf32>
    %cst_7 = arith.constant 3.000000e+00 : f32
    %160 = vector.broadcast %cst_7 : f32 to vector<4x4x88xf32>
    %161 = arith.addf %159, %160 : vector<4x4x88xf32>
    %cst_8 = arith.constant 0.000000e+00 : f32
    %cst_9 = arith.constant 6.000000e+00 : f32
    %162 = vector.broadcast %cst_8 : f32 to vector<4x4x88xf32>
    %163 = arith.maximumf %162, %161 : vector<4x4x88xf32>
    %164 = vector.broadcast %cst_9 : f32 to vector<4x4x88xf32>
    %165 = arith.minimumf %164, %163 : vector<4x4x88xf32>
    %166 = arith.mulf %159, %165 : vector<4x4x88xf32>
    %cst_10 = arith.constant 0.166666672 : f32
    %167 = vector.broadcast %cst_10 : f32 to vector<4x4x88xf32>
    %168 = arith.mulf %166, %167 : vector<4x4x88xf32>
    %169 = arith.truncf %168 : vector<4x4x88xf32> to vector<4x4x88xbf16>
    %c0_11 = arith.constant 0 : index
    %c0_12 = arith.constant 0 : index
    %c0_13 = arith.constant 0 : index
    %c0_14 = arith.constant 0 : index
    %170 = vector.load %arg4[%c0_11, %c0_12, %c0_13, %c0_14] : memref<1x4x4x88xbf16, #tpu.memory_space<vmem>>, vector<1x4x4x88xbf16>
    %171 = vector.shape_cast %170 : vector<1x4x4x88xbf16> to vector<4x4x88xbf16>
    %172 = vector.shape_cast %169 : vector<4x4x88xbf16> to vector<1x4x4x88xbf16>
    tpu.vector_store %arg4[%c0_11, %c0_12, %c0_13, %c0_14], %172 {strides = array<i32>} : memref<1x4x4x88xbf16, #tpu.memory_space<vmem>>, vector<1x4x4x88xbf16>,
    return
  }
  func.func @transform_0(%arg0: i32) -> (i32, i32, i32, i32) {
    %c0_i32 = arith.constant 0 : i32
    %c0_i32_0 = arith.constant 0 : i32
    %c0_i32_1 = arith.constant 0 : i32
    %c0_i32_2 = arith.constant 0 : i32
    return %arg0, %c0_i32, %c0_i32_0, %c0_i32_1 : i32, i32, i32, i32
  }
  func.func @transform_1(%arg0: i32) -> (i32, i32) {
    %c0_i32 = arith.constant 0 : i32
    %c0_i32_0 = arith.constant 0 : i32
    %c0_i32_1 = arith.constant 0 : i32
    return %c0_i32, %c0_i32_0 : i32, i32
  }
  func.func @transform_2(%arg0: i32) -> (i32, i32) {
    %c0_i32 = arith.constant 0 : i32
    %c0_i32_0 = arith.constant 0 : i32
    %c0_i32_1 = arith.constant 0 : i32
    return %c0_i32, %c0_i32_0 : i32, i32
  }
  func.func @transform_3(%arg0: i32) -> (i32, i32, i32, i32) {
    %c0_i32 = arith.constant 0 : i32
    %c0_i32_0 = arith.constant 0 : i32
    %c0_i32_1 = arith.constant 0 : i32
    %c0_i32_2 = arith.constant 0 : i32
    return %arg0, %c0_i32, %c0_i32_0, %c0_i32_1 : i32, i32, i32, i32
  }
}

module attributes {stable_mosaic.version = 11 : i64} {
  func.func @_se_scale_kernel(%arg0: i32, %arg1: memref<1x16x88xbf16, #tpu.memory_space<vmem>>, %arg2: memref<88x24xbf16, #tpu.memory_space<vmem>>, %arg3: memref<1x24xf32, #tpu.memory_space<vmem>>, %arg4: memref<24x88xbf16, #tpu.memory_space<vmem>>, %arg5: memref<1x88xf32, #tpu.memory_space<vmem>>, %arg6: memref<1x1x88xf32, #tpu.memory_space<vmem>>) attributes {dimension_semantics = [#tpu.dimension_semantics<parallel>], iteration_bounds = array<i64: 2>, scalar_prefetch = 0 : i64, scratch_operands = 0 : i64, tpu.core_type = #tpu.core_type<tc>, window_params = [{transform_indices = @transform_0, window_bounds = array<i64: 1, 16, 88>}, {pipeline_mode = #tpu.pipeline_mode<synchronous>, transform_indices = @transform_1, window_bounds = array<i64: 88, 24>}, {pipeline_mode = #tpu.pipeline_mode<synchronous>, transform_indices = @transform_2, window_bounds = array<i64: 1, 24>}, {pipeline_mode = #tpu.pipeline_mode<synchronous>, transform_indices = @transform_3, window_bounds = array<i64: 24, 88>}, {pipeline_mode = #tpu.pipeline_mode<synchronous>, transform_indices = @transform_4, window_bounds = array<i64: 1, 88>}, {transform_indices = @transform_5, window_bounds = array<i64: 1, 1, 88>}]} {
    %c0 = arith.constant 0 : index
    %c0_0 = arith.constant 0 : index
    %c0_1 = arith.constant 0 : index
    %0 = vector.load %arg1[%c0, %c0_0, %c0_1] : memref<1x16x88xbf16, #tpu.memory_space<vmem>>, vector<1x16x88xbf16>
    %1 = vector.shape_cast %0 : vector<1x16x88xbf16> to vector<16x88xbf16>
    %2 = arith.extf %1 : vector<16x88xbf16> to vector<16x88xf32>
    %cst = arith.constant dense<0.000000e+00> : vector<88xf32>
    %3 = vector.multi_reduction <add>, %2, %cst [0] : vector<16x88xf32> to vector<88xf32>
    %4 = vector.shape_cast %3 : vector<88xf32> to vector<1x88xf32>
    %cst_2 = arith.constant 1.600000e+01 : f32
    %5 = vector.broadcast %cst_2 : f32 to vector<1x88xf32>
    %6 = arith.divf %4, %5 : vector<1x88xf32>
    %7 = arith.truncf %6 : vector<1x88xf32> to vector<1x88xbf16>
    %c0_3 = arith.constant 0 : index
    %c0_4 = arith.constant 0 : index
    %8 = vector.load %arg2[%c0_3, %c0_4] : memref<88x24xbf16, #tpu.memory_space<vmem>>, vector<88x24xbf16>
    %cst_5 = arith.constant dense<0.000000e+00> : vector<1x24xf32>
    %9 = tpu.matmul %7, %8, %cst_5 {dimension_numbers = #tpu.dot_dimension_numbers<[1], [0], [0], [1], [0, 0, 1, 1], [], []>} : vector<1x88xbf16>, vector<88x24xbf16>, vector<1x24xf32> -> vector<1x24xf32>
    %c0_6 = arith.constant 0 : index
    %c0_7 = arith.constant 0 : index
    %10 = vector.load %arg3[%c0_6, %c0_7] : memref<1x24xf32, #tpu.memory_space<vmem>>, vector<1x24xf32>
    %11 = arith.addf %9, %10 : vector<1x24xf32>
    %cst_8 = arith.constant 0.000000e+00 : f32
    %12 = vector.broadcast %cst_8 : f32 to vector<1x24xf32>
    %13 = arith.maximumf %11, %12 : vector<1x24xf32>
    %14 = arith.truncf %13 : vector<1x24xf32> to vector<1x24xbf16>
    %c0_9 = arith.constant 0 : index
    %c0_10 = arith.constant 0 : index
    %15 = vector.load %arg4[%c0_9, %c0_10] : memref<24x88xbf16, #tpu.memory_space<vmem>>, vector<24x88xbf16>
    %cst_11 = arith.constant dense<0.000000e+00> : vector<1x88xf32>
    %16 = tpu.matmul %14, %15, %cst_11 {dimension_numbers = #tpu.dot_dimension_numbers<[1], [0], [0], [1], [0, 0, 1, 1], [], []>} : vector<1x24xbf16>, vector<24x88xbf16>, vector<1x88xf32> -> vector<1x88xf32>
    %c0_12 = arith.constant 0 : index
    %c0_13 = arith.constant 0 : index
    %17 = vector.load %arg5[%c0_12, %c0_13] : memref<1x88xf32, #tpu.memory_space<vmem>>, vector<1x88xf32>
    %18 = arith.addf %16, %17 : vector<1x88xf32>
    %cst_14 = arith.constant 3.000000e+00 : f32
    %19 = vector.broadcast %cst_14 : f32 to vector<1x88xf32>
    %20 = arith.addf %18, %19 : vector<1x88xf32>
    %cst_15 = arith.constant 0.000000e+00 : f32
    %cst_16 = arith.constant 6.000000e+00 : f32
    %21 = vector.broadcast %cst_15 : f32 to vector<1x88xf32>
    %22 = arith.maximumf %21, %20 : vector<1x88xf32>
    %23 = vector.broadcast %cst_16 : f32 to vector<1x88xf32>
    %24 = arith.minimumf %23, %22 : vector<1x88xf32>
    %cst_17 = arith.constant 0.166666672 : f32
    %25 = vector.broadcast %cst_17 : f32 to vector<1x88xf32>
    %26 = arith.mulf %24, %25 : vector<1x88xf32>
    %c0_18 = arith.constant 0 : index
    %c0_19 = arith.constant 0 : index
    %c0_20 = arith.constant 0 : index
    %27 = vector.load %arg6[%c0_18, %c0_19, %c0_20] : memref<1x1x88xf32, #tpu.memory_space<vmem>>, vector<1x1x88xf32>
    %28 = vector.shape_cast %27 : vector<1x1x88xf32> to vector<1x88xf32>
    %29 = vector.shape_cast %26 : vector<1x88xf32> to vector<1x1x88xf32>
    tpu.vector_store %arg6[%c0_18, %c0_19, %c0_20], %29 {strides = array<i32>} : memref<1x1x88xf32, #tpu.memory_space<vmem>>, vector<1x1x88xf32>,
    return
  }
  func.func @transform_0(%arg0: i32) -> (i32, i32, i32) {
    %c0_i32 = arith.constant 0 : i32
    %c0_i32_0 = arith.constant 0 : i32
    %c0_i32_1 = arith.constant 0 : i32
    return %arg0, %c0_i32, %c0_i32_0 : i32, i32, i32
  }
  func.func @transform_1(%arg0: i32) -> (i32, i32) {
    %c0_i32 = arith.constant 0 : i32
    %c0_i32_0 = arith.constant 0 : i32
    %c0_i32_1 = arith.constant 0 : i32
    return %c0_i32, %c0_i32_0 : i32, i32
  }
  func.func @transform_2(%arg0: i32) -> (i32, i32) {
    %c0_i32 = arith.constant 0 : i32
    %c0_i32_0 = arith.constant 0 : i32
    %c0_i32_1 = arith.constant 0 : i32
    return %c0_i32, %c0_i32_0 : i32, i32
  }
  func.func @transform_3(%arg0: i32) -> (i32, i32) {
    %c0_i32 = arith.constant 0 : i32
    %c0_i32_0 = arith.constant 0 : i32
    %c0_i32_1 = arith.constant 0 : i32
    return %c0_i32, %c0_i32_0 : i32, i32
  }
  func.func @transform_4(%arg0: i32) -> (i32, i32) {
    %c0_i32 = arith.constant 0 : i32
    %c0_i32_0 = arith.constant 0 : i32
    %c0_i32_1 = arith.constant 0 : i32
    return %c0_i32, %c0_i32_0 : i32, i32
  }
  func.func @transform_5(%arg0: i32) -> (i32, i32, i32) {
    %c0_i32 = arith.constant 0 : i32
    %c0_i32_0 = arith.constant 0 : i32
    %c0_i32_1 = arith.constant 0 : i32
    return %arg0, %c0_i32, %c0_i32_0 : i32, i32, i32
  }
}

module attributes {stable_mosaic.version = 11 : i64} {
  func.func @kernel(%arg0: i32, %arg1: i32, %arg2: memref<1x16x88xbf16, #tpu.memory_space<vmem>>, %arg3: memref<88x24xbf16, #tpu.memory_space<vmem>>, %arg4: memref<1x24xf32, #tpu.memory_space<vmem>>, %arg5: memref<1x1x88xf32, #tpu.memory_space<vmem>>, %arg6: memref<1x16x24xbf16, #tpu.memory_space<vmem>>, %arg7: memref<1x16x24xbf16, #tpu.memory_space<vmem>>) attributes {dimension_semantics = [#tpu.dimension_semantics<parallel>, #tpu.dimension_semantics<parallel>], iteration_bounds = array<i64: 2, 1>, scalar_prefetch = 0 : i64, scratch_operands = 0 : i64, tpu.core_type = #tpu.core_type<tc>, window_params = [{transform_indices = @transform_0, window_bounds = array<i64: 1, 16, 88>}, {pipeline_mode = #tpu.pipeline_mode<synchronous>, transform_indices = @transform_1, window_bounds = array<i64: 88, 24>}, {pipeline_mode = #tpu.pipeline_mode<synchronous>, transform_indices = @transform_2, window_bounds = array<i64: 1, 24>}, {transform_indices = @transform_3, window_bounds = array<i64: 1, 1, 88>}, {transform_indices = @transform_4, window_bounds = array<i64: 1, 16, 24>}, {transform_indices = @transform_5, window_bounds = array<i64: 1, 16, 24>}]} {
    %c0 = arith.constant 0 : index
    %c0_0 = arith.constant 0 : index
    %c0_1 = arith.constant 0 : index
    %0 = vector.load %arg2[%c0, %c0_0, %c0_1] : memref<1x16x88xbf16, #tpu.memory_space<vmem>>, vector<1x16x88xbf16>
    %1 = vector.shape_cast %0 : vector<1x16x88xbf16> to vector<16x88xbf16>
    %2 = arith.extf %1 : vector<16x88xbf16> to vector<16x88xf32>
    %c0_2 = arith.constant 0 : index
    %c0_3 = arith.constant 0 : index
    %c0_4 = arith.constant 0 : index
    %3 = vector.load %arg5[%c0_2, %c0_3, %c0_4] : memref<1x1x88xf32, #tpu.memory_space<vmem>>, vector<1x1x88xf32>
    %4 = vector.shape_cast %3 : vector<1x1x88xf32> to vector<1x88xf32>
    %5 = vector.broadcast %4 : vector<1x88xf32> to vector<16x88xf32>
    %6 = arith.mulf %2, %5 : vector<16x88xf32>
    %7 = arith.truncf %6 : vector<16x88xf32> to vector<16x88xbf16>
    %c0_5 = arith.constant 0 : index
    %c0_6 = arith.constant 0 : index
    %8 = vector.load %arg3[%c0_5, %c0_6] : memref<88x24xbf16, #tpu.memory_space<vmem>>, vector<88x24xbf16>
    %cst = arith.constant dense<0.000000e+00> : vector<16x24xf32>
    %9 = tpu.matmul %7, %8, %cst {dimension_numbers = #tpu.dot_dimension_numbers<[1], [0], [0], [1], [0, 0, 1, 1], [], []>} : vector<16x88xbf16>, vector<88x24xbf16>, vector<16x24xf32> -> vector<16x24xf32>
    %c0_7 = arith.constant 0 : index
    %c0_8 = arith.constant 0 : index
    %10 = vector.load %arg4[%c0_7, %c0_8] : memref<1x24xf32, #tpu.memory_space<vmem>>, vector<1x24xf32>
    %11 = vector.broadcast %10 : vector<1x24xf32> to vector<16x24xf32>
    %12 = arith.addf %9, %11 : vector<16x24xf32>
    %c0_9 = arith.constant 0 : index
    %c0_10 = arith.constant 0 : index
    %c0_11 = arith.constant 0 : index
    %13 = vector.load %arg6[%c0_9, %c0_10, %c0_11] : memref<1x16x24xbf16, #tpu.memory_space<vmem>>, vector<1x16x24xbf16>
    %14 = vector.shape_cast %13 : vector<1x16x24xbf16> to vector<16x24xbf16>
    %15 = arith.extf %14 : vector<16x24xbf16> to vector<16x24xf32>
    %16 = arith.addf %12, %15 : vector<16x24xf32>
    %17 = arith.truncf %16 : vector<16x24xf32> to vector<16x24xbf16>
    %c0_12 = arith.constant 0 : index
    %c0_13 = arith.constant 0 : index
    %c0_14 = arith.constant 0 : index
    %18 = vector.load %arg7[%c0_12, %c0_13, %c0_14] : memref<1x16x24xbf16, #tpu.memory_space<vmem>>, vector<1x16x24xbf16>
    %19 = vector.shape_cast %18 : vector<1x16x24xbf16> to vector<16x24xbf16>
    %20 = vector.shape_cast %17 : vector<16x24xbf16> to vector<1x16x24xbf16>
    tpu.vector_store %arg7[%c0_12, %c0_13, %c0_14], %20 {strides = array<i32>} : memref<1x16x24xbf16, #tpu.memory_space<vmem>>, vector<1x16x24xbf16>,
    return
  }
  func.func @transform_0(%arg0: i32, %arg1: i32) -> (i32, i32, i32) {
    %c0_i32 = arith.constant 0 : i32
    %c0_i32_0 = arith.constant 0 : i32
    return %arg0, %arg1, %c0_i32 : i32, i32, i32
  }
  func.func @transform_1(%arg0: i32, %arg1: i32) -> (i32, i32) {
    %c0_i32 = arith.constant 0 : i32
    %c0_i32_0 = arith.constant 0 : i32
    %c0_i32_1 = arith.constant 0 : i32
    return %c0_i32, %c0_i32_0 : i32, i32
  }
  func.func @transform_2(%arg0: i32, %arg1: i32) -> (i32, i32) {
    %c0_i32 = arith.constant 0 : i32
    %c0_i32_0 = arith.constant 0 : i32
    %c0_i32_1 = arith.constant 0 : i32
    return %c0_i32, %c0_i32_0 : i32, i32
  }
  func.func @transform_3(%arg0: i32, %arg1: i32) -> (i32, i32, i32) {
    %c0_i32 = arith.constant 0 : i32
    %c0_i32_0 = arith.constant 0 : i32
    %c0_i32_1 = arith.constant 0 : i32
    return %arg0, %c0_i32, %c0_i32_0 : i32, i32, i32
  }
  func.func @transform_4(%arg0: i32, %arg1: i32) -> (i32, i32, i32) {
    %c0_i32 = arith.constant 0 : i32
    %c0_i32_0 = arith.constant 0 : i32
    return %arg0, %arg1, %c0_i32 : i32, i32, i32
  }
  func.func @transform_5(%arg0: i32, %arg1: i32) -> (i32, i32, i32) {
    %c0_i32 = arith.constant 0 : i32
    %c0_i32_0 = arith.constant 0 : i32
    return %arg0, %arg1, %c0_i32 : i32, i32, i32
  }
}

module attributes {stable_mosaic.version = 11 : i64} {
  func.func @kernel(%arg0: i32, %arg1: i32, %arg2: memref<1x16x24xbf16, #tpu.memory_space<vmem>>, %arg3: memref<24x144xbf16, #tpu.memory_space<vmem>>, %arg4: memref<1x144xf32, #tpu.memory_space<vmem>>, %arg5: memref<1x16x144xbf16, #tpu.memory_space<vmem>>) attributes {dimension_semantics = [#tpu.dimension_semantics<parallel>, #tpu.dimension_semantics<parallel>], iteration_bounds = array<i64: 2, 1>, scalar_prefetch = 0 : i64, scratch_operands = 0 : i64, tpu.core_type = #tpu.core_type<tc>, window_params = [{transform_indices = @transform_0, window_bounds = array<i64: 1, 16, 24>}, {pipeline_mode = #tpu.pipeline_mode<synchronous>, transform_indices = @transform_1, window_bounds = array<i64: 24, 144>}, {pipeline_mode = #tpu.pipeline_mode<synchronous>, transform_indices = @transform_2, window_bounds = array<i64: 1, 144>}, {transform_indices = @transform_3, window_bounds = array<i64: 1, 16, 144>}]} {
    %c0 = arith.constant 0 : index
    %c0_0 = arith.constant 0 : index
    %c0_1 = arith.constant 0 : index
    %0 = vector.load %arg2[%c0, %c0_0, %c0_1] : memref<1x16x24xbf16, #tpu.memory_space<vmem>>, vector<1x16x24xbf16>
    %1 = vector.shape_cast %0 : vector<1x16x24xbf16> to vector<16x24xbf16>
    %c0_2 = arith.constant 0 : index
    %c0_3 = arith.constant 0 : index
    %2 = vector.load %arg3[%c0_2, %c0_3] : memref<24x144xbf16, #tpu.memory_space<vmem>>, vector<24x144xbf16>
    %cst = arith.constant dense<0.000000e+00> : vector<16x144xf32>
    %3 = tpu.matmul %1, %2, %cst {dimension_numbers = #tpu.dot_dimension_numbers<[1], [0], [0], [1], [0, 0, 1, 1], [], []>} : vector<16x24xbf16>, vector<24x144xbf16>, vector<16x144xf32> -> vector<16x144xf32>
    %c0_4 = arith.constant 0 : index
    %c0_5 = arith.constant 0 : index
    %4 = vector.load %arg4[%c0_4, %c0_5] : memref<1x144xf32, #tpu.memory_space<vmem>>, vector<1x144xf32>
    %5 = vector.broadcast %4 : vector<1x144xf32> to vector<16x144xf32>
    %6 = arith.addf %3, %5 : vector<16x144xf32>
    %cst_6 = arith.constant 3.000000e+00 : f32
    %7 = vector.broadcast %cst_6 : f32 to vector<16x144xf32>
    %8 = arith.addf %6, %7 : vector<16x144xf32>
    %cst_7 = arith.constant 0.000000e+00 : f32
    %cst_8 = arith.constant 6.000000e+00 : f32
    %9 = vector.broadcast %cst_7 : f32 to vector<16x144xf32>
    %10 = arith.maximumf %9, %8 : vector<16x144xf32>
    %11 = vector.broadcast %cst_8 : f32 to vector<16x144xf32>
    %12 = arith.minimumf %11, %10 : vector<16x144xf32>
    %13 = arith.mulf %6, %12 : vector<16x144xf32>
    %cst_9 = arith.constant 0.166666672 : f32
    %14 = vector.broadcast %cst_9 : f32 to vector<16x144xf32>
    %15 = arith.mulf %13, %14 : vector<16x144xf32>
    %16 = arith.truncf %15 : vector<16x144xf32> to vector<16x144xbf16>
    %c0_10 = arith.constant 0 : index
    %c0_11 = arith.constant 0 : index
    %c0_12 = arith.constant 0 : index
    %17 = vector.load %arg5[%c0_10, %c0_11, %c0_12] : memref<1x16x144xbf16, #tpu.memory_space<vmem>>, vector<1x16x144xbf16>
    %18 = vector.shape_cast %17 : vector<1x16x144xbf16> to vector<16x144xbf16>
    %19 = vector.shape_cast %16 : vector<16x144xbf16> to vector<1x16x144xbf16>
    tpu.vector_store %arg5[%c0_10, %c0_11, %c0_12], %19 {strides = array<i32>} : memref<1x16x144xbf16, #tpu.memory_space<vmem>>, vector<1x16x144xbf16>,
    return
  }
  func.func @transform_0(%arg0: i32, %arg1: i32) -> (i32, i32, i32) {
    %c0_i32 = arith.constant 0 : i32
    %c0_i32_0 = arith.constant 0 : i32
    return %arg0, %arg1, %c0_i32 : i32, i32, i32
  }
  func.func @transform_1(%arg0: i32, %arg1: i32) -> (i32, i32) {
    %c0_i32 = arith.constant 0 : i32
    %c0_i32_0 = arith.constant 0 : i32
    %c0_i32_1 = arith.constant 0 : i32
    return %c0_i32, %c0_i32_0 : i32, i32
  }
  func.func @transform_2(%arg0: i32, %arg1: i32) -> (i32, i32) {
    %c0_i32 = arith.constant 0 : i32
    %c0_i32_0 = arith.constant 0 : i32
    %c0_i32_1 = arith.constant 0 : i32
    return %c0_i32, %c0_i32_0 : i32, i32
  }
  func.func @transform_3(%arg0: i32, %arg1: i32) -> (i32, i32, i32) {
    %c0_i32 = arith.constant 0 : i32
    %c0_i32_0 = arith.constant 0 : i32
    return %arg0, %arg1, %c0_i32 : i32, i32, i32
  }
}

module attributes {stable_mosaic.version = 11 : i64} {
  func.func @_head_kernel(%arg0: i32, %arg1: memref<2x16x144xbf16, #tpu.memory_space<vmem>>, %arg2: memref<144x128xbf16, #tpu.memory_space<vmem>>, %arg3: memref<1x128xf32, #tpu.memory_space<vmem>>, %arg4: memref<128x10xbf16, #tpu.memory_space<vmem>>, %arg5: memref<1x10xf32, #tpu.memory_space<vmem>>, %arg6: memref<2x10xf32, #tpu.memory_space<vmem>>) attributes {dimension_semantics = [#tpu.dimension_semantics<arbitrary>], iteration_bounds = array<i64: 1>, scalar_prefetch = 0 : i64, scratch_operands = 0 : i64, tpu.core_type = #tpu.core_type<tc>, window_params = [{pipeline_mode = #tpu.pipeline_mode<synchronous>, transform_indices = @transform_0, window_bounds = array<i64: 2, 16, 144>}, {pipeline_mode = #tpu.pipeline_mode<synchronous>, transform_indices = @transform_1, window_bounds = array<i64: 144, 128>}, {pipeline_mode = #tpu.pipeline_mode<synchronous>, transform_indices = @transform_2, window_bounds = array<i64: 1, 128>}, {pipeline_mode = #tpu.pipeline_mode<synchronous>, transform_indices = @transform_3, window_bounds = array<i64: 128, 10>}, {pipeline_mode = #tpu.pipeline_mode<synchronous>, transform_indices = @transform_4, window_bounds = array<i64: 1, 10>}, {pipeline_mode = #tpu.pipeline_mode<synchronous>, transform_indices = @transform_5, window_bounds = array<i64: 2, 10>}]} {
    %c0 = arith.constant 0 : index
    %c0_0 = arith.constant 0 : index
    %c0_1 = arith.constant 0 : index
    %0 = vector.load %arg1[%c0, %c0_0, %c0_1] : memref<2x16x144xbf16, #tpu.memory_space<vmem>>, vector<2x16x144xbf16>
    %1 = arith.extf %0 : vector<2x16x144xbf16> to vector<2x16x144xf32>
    %cst = arith.constant dense<0.000000e+00> : vector<2x144xf32>
    %2 = vector.multi_reduction <add>, %1, %cst [1] : vector<2x16x144xf32> to vector<2x144xf32>
    %cst_2 = arith.constant 1.600000e+01 : f32
    %3 = vector.broadcast %cst_2 : f32 to vector<2x144xf32>
    %4 = arith.divf %2, %3 : vector<2x144xf32>
    %5 = arith.truncf %4 : vector<2x144xf32> to vector<2x144xbf16>
    %c0_3 = arith.constant 0 : index
    %c0_4 = arith.constant 0 : index
    %6 = vector.load %arg2[%c0_3, %c0_4] : memref<144x128xbf16, #tpu.memory_space<vmem>>, vector<144x128xbf16>
    %cst_5 = arith.constant dense<0.000000e+00> : vector<2x128xf32>
    %7 = tpu.matmul %5, %6, %cst_5 {dimension_numbers = #tpu.dot_dimension_numbers<[1], [0], [0], [1], [0, 0, 1, 1], [], []>} : vector<2x144xbf16>, vector<144x128xbf16>, vector<2x128xf32> -> vector<2x128xf32>
    %c0_6 = arith.constant 0 : index
    %c0_7 = arith.constant 0 : index
    %8 = vector.load %arg3[%c0_6, %c0_7] : memref<1x128xf32, #tpu.memory_space<vmem>>, vector<1x128xf32>
    %9 = vector.broadcast %8 : vector<1x128xf32> to vector<2x128xf32>
    %10 = arith.addf %7, %9 : vector<2x128xf32>
    %cst_8 = arith.constant 3.000000e+00 : f32
    %11 = vector.broadcast %cst_8 : f32 to vector<2x128xf32>
    %12 = arith.addf %10, %11 : vector<2x128xf32>
    %cst_9 = arith.constant 0.000000e+00 : f32
    %cst_10 = arith.constant 6.000000e+00 : f32
    %13 = vector.broadcast %cst_9 : f32 to vector<2x128xf32>
    %14 = arith.maximumf %13, %12 : vector<2x128xf32>
    %15 = vector.broadcast %cst_10 : f32 to vector<2x128xf32>
    %16 = arith.minimumf %15, %14 : vector<2x128xf32>
    %17 = arith.mulf %10, %16 : vector<2x128xf32>
    %cst_11 = arith.constant 0.166666672 : f32
    %18 = vector.broadcast %cst_11 : f32 to vector<2x128xf32>
    %19 = arith.mulf %17, %18 : vector<2x128xf32>
    %20 = arith.truncf %19 : vector<2x128xf32> to vector<2x128xbf16>
    %c0_12 = arith.constant 0 : index
    %c0_13 = arith.constant 0 : index
    %21 = vector.load %arg4[%c0_12, %c0_13] : memref<128x10xbf16, #tpu.memory_space<vmem>>, vector<128x10xbf16>
    %cst_14 = arith.constant dense<0.000000e+00> : vector<2x10xf32>
    %22 = tpu.matmul %20, %21, %cst_14 {dimension_numbers = #tpu.dot_dimension_numbers<[1], [0], [0], [1], [0, 0, 1, 1], [], []>} : vector<2x128xbf16>, vector<128x10xbf16>, vector<2x10xf32> -> vector<2x10xf32>
    %c0_15 = arith.constant 0 : index
    %c0_16 = arith.constant 0 : index
    %23 = vector.load %arg5[%c0_15, %c0_16] : memref<1x10xf32, #tpu.memory_space<vmem>>, vector<1x10xf32>
    %24 = vector.broadcast %23 : vector<1x10xf32> to vector<2x10xf32>
    %25 = arith.addf %22, %24 : vector<2x10xf32>
    %c0_17 = arith.constant 0 : index
    %c0_18 = arith.constant 0 : index
    %26 = vector.load %arg6[%c0_17, %c0_18] : memref<2x10xf32, #tpu.memory_space<vmem>>, vector<2x10xf32>
    tpu.vector_store %arg6[%c0_17, %c0_18], %25 {strides = array<i32>} : memref<2x10xf32, #tpu.memory_space<vmem>>, vector<2x10xf32>,
    return
  }
  func.func @transform_0(%arg0: i32) -> (i32, i32, i32) {
    %c0_i32 = arith.constant 0 : i32
    %c0_i32_0 = arith.constant 0 : i32
    %c0_i32_1 = arith.constant 0 : i32
    %c0_i32_2 = arith.constant 0 : i32
    return %c0_i32, %c0_i32_0, %c0_i32_1 : i32, i32, i32
  }
  func.func @transform_1(%arg0: i32) -> (i32, i32) {
    %c0_i32 = arith.constant 0 : i32
    %c0_i32_0 = arith.constant 0 : i32
    %c0_i32_1 = arith.constant 0 : i32
    return %c0_i32, %c0_i32_0 : i32, i32
  }
  func.func @transform_2(%arg0: i32) -> (i32, i32) {
    %c0_i32 = arith.constant 0 : i32
    %c0_i32_0 = arith.constant 0 : i32
    %c0_i32_1 = arith.constant 0 : i32
    return %c0_i32, %c0_i32_0 : i32, i32
  }
  func.func @transform_3(%arg0: i32) -> (i32, i32) {
    %c0_i32 = arith.constant 0 : i32
    %c0_i32_0 = arith.constant 0 : i32
    %c0_i32_1 = arith.constant 0 : i32
    return %c0_i32, %c0_i32_0 : i32, i32
  }
  func.func @transform_4(%arg0: i32) -> (i32, i32) {
    %c0_i32 = arith.constant 0 : i32
    %c0_i32_0 = arith.constant 0 : i32
    %c0_i32_1 = arith.constant 0 : i32
    return %c0_i32, %c0_i32_0 : i32, i32
  }
  func.func @transform_5(%arg0: i32) -> (i32, i32) {
    %c0_i32 = arith.constant 0 : i32
    %c0_i32_0 = arith.constant 0 : i32
    %c0_i32_1 = arith.constant 0 : i32
    return %c0_i32, %c0_i32_0 : i32, i32
  }
}

</mosaic_0001>

<llo_original>
// kernel: fwd.13
$region0: #{fwd.13}
  #allocation0 [shape = 'u32[]', space=smem, size = 0x4, offset = 0x4, fixed_abs, tag = 'smem constant byte address 0x4 - core index']
  #allocation1 [shape = 'u32[144,128]{1,0:T(1,128)}', space=vmem, size = 0x12000, scoped, tag = 'internal scratch']
  %s0 = inlined_call_operand.vmem [shape: bf16[2,256,27], index: 0, kind: input, shape index: {}]
  %s1 = inlined_call_operand.vmem [shape: bf16[27,16], index: 1, kind: input, shape index: {}]
  %s2 = inlined_call_operand.vmem [shape: f32[1,16], index: 2, kind: input, shape index: {}]
  %s3 = inlined_call_operand.vmem [shape: bf16[2,256,16], index: 3, kind: output, shape index: {}]
  %s4 = sld [smem:[#allocation0]]
  $region45: #{fwd.13} parent=0
    _
  %s6 = ssub.s32 1, %s4
  %s7 = scalar_select 0, %s6, %s4
  loop: start=0, step=1, limit=4
  $region2: #{fwd.13} parent=0 // loop_pre_header
    _
  $region3: #{fwd.13} parent=0 // loop_header
    %s9 = sphi 0, %s13
    %p10 = scmp.ge.s32.totalorder %s9, 4
    %s16 = sphi 0, %s28
    %s17 = sphi 0, %s24
    %s18 = sphi 0, %s16
    %s19 = sphi 0, %s17
    %s20 = sphi 0, %s18
    %s21 = sphi 0, %s19
    %s33 = sphi 0, %s35
    %s36 = sphi 0, %s33
    %s37 = sphi 0, %s36
    %s53 = sphi 0, %s37
    %s57 = sphi 0, %s57
    %s59 = sphi 0, %s57
    %s60 = sphi 0, %s59
    %s74 = sphi 0, %s60
    %s78 = sphi 0, %s78
    %s80 = sphi 0, %s78
    %s81 = sphi 0, %s80
    %s95 = sphi 0, %s81
    %s103 = sphi 0, %s105
    %s106 = sphi 0, %s103
    %s107 = sphi 0, %s106
    %s123 = sphi 0, %s107
  $region4: #{fwd.13} parent=0 // loop_header_branch
    %12 = sbr.rel (%p10) target = $region8
  $region5: #{fwd.13} parent=0 // loop_body
    %s14 = ssub.s32 %s9, 1
    %s15 = ssub.s32 %s9, 2
    %s22 = sadd.s32 1, %s17
    %p23 = scmp.ge.s32.totalorder %s22, 1
    %s24 = scalar_select %p23, 0, %s22
    %s25 = sadd.s32 1, %s16
    %s26 = scalar_select %p23, %s25, %s16
    %p27 = scmp.ge.s32.totalorder %s26, 2
    %s28 = scalar_select %p27, 0, %s26
    %s29 = ssub.s32 %s16, %s28
    %s30 = ssub.s32 %s17, %s24
    %s31 = sor.u32 %s29, %s30
    %p32 = scmp.eq.s32.totalorder %s31, 0
    %s34 = sadd.s32 %s33, 1
    %s35 = scalar_select %p32, %s33, %s34
    %p38 = pneg %p32
    %p39 = scmp.eq.s32.totalorder %s9, 1
    %p40 = por %p38, %p39
    %p41 = scmp.ne.s32.totalorder %s33, %s36
    %p42 = scmp.eq.s32.totalorder %s9, 0
    %p43 = por %p41, %p42
    %p44 = scmp.ne.s32.totalorder %s33, %s36
    %p45 = scmp.eq.s32.totalorder %s14, 1
    %p46 = por %p44, %p45
    %p47 = scmp.ne.s32.totalorder %s36, %s37
    %p48 = scmp.eq.s32.totalorder %s14, 0
    %p49 = por %p47, %p48
    %p50 = scmp.ne.s32.totalorder %s36, %s37
    %p51 = scmp.eq.s32.totalorder %s15, 1
    %p52 = por %p50, %p51
    %p54 = scmp.ne.s32.totalorder %s37, %s53
    %p55 = scmp.eq.s32.totalorder %s15, 0
    %p56 = por %p54, %p55
    %s58 = sadd.s32 %s57, 1
    %p61 = scmp.eq.s32.totalorder %s9, 1
    %p62 = scmp.ne.s32.totalorder %s57, %s59
    %p63 = scmp.eq.s32.totalorder %s9, 0
    %p64 = por %p62, %p63
    %p65 = scmp.ne.s32.totalorder %s57, %s59
    %p66 = scmp.eq.s32.totalorder %s14, 1
    %p67 = por %p65, %p66
    %p68 = scmp.ne.s32.totalorder %s59, %s60
    %p69 = scmp.eq.s32.totalorder %s14, 0
    %p70 = por %p68, %p69
    %p71 = scmp.ne.s32.totalorder %s59, %s60
    %p72 = scmp.eq.s32.totalorder %s15, 1
    %p73 = por %p71, %p72
    %p75 = scmp.ne.s32.totalorder %s60, %s74
    %p76 = scmp.eq.s32.totalorder %s15, 0
    %p77 = por %p75, %p76
    %s79 = sadd.s32 %s78, 1
    %p82 = scmp.eq.s32.totalorder %s9, 1
    %p83 = scmp.ne.s32.totalorder %s78, %s80
    %p84 = scmp.eq.s32.totalorder %s9, 0
    %p85 = por %p83, %p84
    %p86 = scmp.ne.s32.totalorder %s78, %s80
    %p87 = scmp.eq.s32.totalorder %s14, 1
    %p88 = por %p86, %p87
    %p89 = scmp.ne.s32.totalorder %s80, %s81
    %p90 = scmp.eq.s32.totalorder %s14, 0
    %p91 = por %p89, %p90
    %p92 = scmp.ne.s32.totalorder %s80, %s81
    %p93 = scmp.eq.s32.totalorder %s15, 1
    %p94 = por %p92, %p93
    %p96 = scmp.ne.s32.totalorder %s81, %s95
    %p97 = scmp.eq.s32.totalorder %s15, 0
    %p98 = por %p96, %p97
    %s99 = ssub.s32 %s16, %s28
    %s100 = ssub.s32 %s17, %s24
    %s101 = sor.u32 %s99, %s100
    %p102 = scmp.eq.s32.totalorder %s101, 0
    %s104 = sadd.s32 %s103, 1
    %s105 = scalar_select %p102, %s103, %s104
    %p108 = pneg %p102
    %p109 = scmp.eq.s32.totalorder %s9, 1
    %p110 = por %p108, %p109
    %p111 = scmp.ne.s32.totalorder %s103, %s106
    %p112 = scmp.eq.s32.totalorder %s9, 0
    %p113 = por %p111, %p112
    %p114 = scmp.ne.s32.totalorder %s103, %s106
    %p115 = scmp.eq.s32.totalorder %s14, 1
    %p116 = por %p114, %p115
    %p117 = scmp.ne.s32.totalorder %s106, %s107
    %p118 = scmp.eq.s32.totalorder %s14, 0
    %p119 = por %p117, %p118
    %p120 = scmp.ne.s32.totalorder %s106, %s107
    %p121 = scmp.eq.s32.totalorder %s15, 1
    %p122 = por %p120, %p121
    %p124 = scmp.ne.s32.totalorder %s107, %s123
    %p125 = scmp.eq.s32.totalorder %s15, 0
    %p126 = por %p124, %p125
    %p127 = scmp.le.s32.totalorder 1, %s9
    %p128 = scmp.lt.s32.totalorder %s9, 3
    %p129 = pnand %p127, %p128
    %p130 = pneg %p129
    // Predicated region
    $region9: #{fwd.13} parent=5 // pred_check
      _
    $region10: #{fwd.13} parent=5 // pred_check_branch
      %132 = sbr.rel (%p129) target = $region12
    $region11: #{fwd.13} parent=5 // pred_region
      %s133 = ssub.s32 %s9, 1
      // Predicated region
      $region13: #{fwd.13} parent=11 // pred_check
        %p134 = pneg %p70
      $region14: #{fwd.13} parent=11 // pred_check_branch
        %136 = sbr.rel (%p134) target = $region16
      $region15: #{fwd.13} parent=11 // pred_region
        _
      $region16: #{fwd.13} parent=11 // pred_fallthru
        _
      // Predicated region
      $region17: #{fwd.13} parent=11 // pred_check
        %p137 = pneg %p91
      $region18: #{fwd.13} parent=11 // pred_check_branch
        %139 = sbr.rel (%p137) target = $region20
      $region19: #{fwd.13} parent=11 // pred_region
        _
      $region20: #{fwd.13} parent=11 // pred_fallthru
        _
    $region12: #{fwd.13} parent=5 // pred_fallthru
      _
    %p140 = scmp.lt.s32.totalorder %s9, 2
    // Predicated region
    $region21: #{fwd.13} parent=5 // pred_check
      %p141 = pneg %p140
    $region22: #{fwd.13} parent=5 // pred_check_branch
      %143 = sbr.rel (%p141) target = $region24
    $region23: #{fwd.13} parent=5 // pred_region
      // Predicated region
      $region25: #{fwd.13} parent=23 // pred_check
        %p144 = pneg %p43
      $region26: #{fwd.13} parent=23 // pred_check_branch
        %146 = sbr.rel (%p144) target = $region28
      $region27: #{fwd.13} parent=23 // pred_region
        %s147 = smul.u32 32, %s17
        %p148 = scmp.lt.s32.totalorder %s16, 1
        %s149 = scalar_select %p148, %s16, 1
        %p150 = scmp.lt.s32.totalorder %s147, 31
        %s151 = scalar_select %p150, %s147, 31
        %s152 = smul.addr %s149, 32
        %s153 = sadd.s32 %s151, %s152
        %s154 = smul.addr %s153, 4
        %s155 = scalar_lea.vmem %s0, %s154
        %s156 = smul.u32 32, %s17
      $region28: #{fwd.13} parent=23 // pred_fallthru
        _
    $region24: #{fwd.13} parent=5 // pred_fallthru
      _
    %p157 = scmp.le.s32.totalorder 1, %s9
    %p158 = scmp.lt.s32.totalorder %s9, 3
    %p159 = pnand %p157, %p158
    %p160 = pneg %p159
    // Predicated region
    $region29: #{fwd.13} parent=5 // pred_check
      _
    $region30: #{fwd.13} parent=5 // pred_check_branch
      %162 = sbr.rel (%p159) target = $region32
    $region31: #{fwd.13} parent=5 // pred_region
      %s163 = ssub.s32 %s9, 1
      %s164 = smul.u32 32, %s19
      %p165 = scmp.lt.s32.totalorder %s18, 1
      %s166 = scalar_select %p165, %s18, 1
      %p167 = scmp.lt.s32.totalorder %s164, 31
      %s168 = scalar_select %p167, %s164, 31
      %s169 = smul.addr %s166, 32
      %s170 = sadd.s32 %s168, %s169
      %s171 = smul.addr %s170, 4
      %s172 = scalar_lea.vmem %s0, %s171
      %p173 = pneg %p49
      %p174 = pneg %p46
      %p175 = pneg %p70
      %p176 = pneg %p67
      %p177 = pneg %p91
      %p178 = pneg %p88
      %p179 = pneg %p119
      %p180 = pneg %p116
      %s181 = smul.u32 32, %s19
      %p182 = scmp.lt.s32.totalorder %s18, 1
      %s183 = scalar_select %p182, %s18, 1
      %p184 = scmp.lt.s32.totalorder %s181, 31
      %s185 = scalar_select %p184, %s181, 31
      %s186 = smul.addr %s183, 32
      %s187 = sadd.s32 %s185, %s186
      %s188 = smul.addr %s187, 4
      %s189 = scalar_lea.vmem %s3, %s188
      %s190 = smul.u32 32, %s19
      %p191 = scmp.lt.s32.totalorder %s18, 1
      %s192 = scalar_select %p191, %s18, 1
      %p193 = scmp.lt.s32.totalorder %s190, 31
      %s194 = scalar_select %p193, %s190, 31
      %s195 = smul.addr %s192, 32
      %s196 = sadd.s32 %s194, %s195
      %s197 = smul.addr %s196, 4
      %s198 = scalar_lea.vmem %s0, %s197
      %s199 = smul.u32 32, %s19
      %s200 = smul.u32 32, %s19
      %p201 = scmp.lt.s32.totalorder %s18, 1
      %s202 = scalar_select %p201, %s18, 1
      %p203 = scmp.lt.s32.totalorder %s200, 31
      %s204 = scalar_select %p203, %s200, 31
      %s205 = smul.addr %s202, 32
      %s206 = sadd.s32 %s204, %s205
      %s207 = smul.addr %s206, 4
      %s208 = scalar_lea.vmem %s3, %s207
      %s209 = smul.u32 32, %s19
      %v211 = vld [vmem:[%s198] sm:$0xf]
      %v212 = vld [vmem:[%s198 + $0x4] sm:$0xf]
      %v213 = vld [vmem:[%s198 + $0x8] sm:$0xf]
      %v214 = vld [vmem:[%s198 + $0xc] sm:$0xf]
      %v215 = vld [vmem:[%s198 + $0x10] sm:$0xf]
      %v216 = vld [vmem:[%s198 + $0x14] sm:$0xf]
      %v217 = vld [vmem:[%s198 + $0x18] sm:$0xf]
      %v218 = vld [vmem:[%s198 + $0x1c] sm:$0xf]
      %v219 = vld [vmem:[%s198 + $0x20] sm:$0xf]
      %v220 = vld [vmem:[%s198 + $0x24] sm:$0xf]
      %v221 = vld [vmem:[%s198 + $0x28] sm:$0xf]
      %v222 = vld [vmem:[%s198 + $0x2c] sm:$0xf]
      %v223 = vld [vmem:[%s198 + $0x30] sm:$0xf]
      %v224 = vld [vmem:[%s198 + $0x34] sm:$0xf]
      %v225 = vld [vmem:[%s198 + $0x38] sm:$0xf]
      %v226 = vld [vmem:[%s198 + $0x3c] sm:$0xf]
      %v227 = vld [vmem:[%s198 + $0x40] sm:$0xf]
      %v228 = vld [vmem:[%s198 + $0x44] sm:$0xf]
      %v229 = vld [vmem:[%s198 + $0x48] sm:$0xf]
      %v230 = vld [vmem:[%s198 + $0x4c] sm:$0xf]
      %v231 = vld [vmem:[%s198 + $0x50] sm:$0xf]
      %v232 = vld [vmem:[%s198 + $0x54] sm:$0xf]
      %v233 = vld [vmem:[%s198 + $0x58] sm:$0xf]
      %v234 = vld [vmem:[%s198 + $0x5c] sm:$0xf]
      %v235 = vld [vmem:[%s198 + $0x60] sm:$0xf]
      %v236 = vld [vmem:[%s198 + $0x64] sm:$0xf]
      %v237 = vld [vmem:[%s198 + $0x68] sm:$0xf]
      %v238 = vld [vmem:[%s198 + $0x6c] sm:$0xf]
      %v239 = vld [vmem:[%s198 + $0x70] sm:$0xf]
      %v240 = vld [vmem:[%s198 + $0x74] sm:$0xf]
      %v241 = vld [vmem:[%s198 + $0x78] sm:$0xf]
      %v242 = vld [vmem:[%s198 + $0x7c] sm:$0xf]
      %v243 = vld [vmem:[%s1] sm:$0xf]
      %v244 = vld [vmem:[%s1 + $0x4] sm:$0xf]
      %v245 = vld [vmem:[%s1 + $0x8] sm:$0xf]
      %v246 = vld [vmem:[%s1 + $0xc] sm:$0x3]
      %v247 = vld [vmem:[%s2] sm:$0x1]
      %v249 = vlaneseq
      %v250 = vshrl.u32 %v249, 7
      %v251 = vsub.s32 0, %v250
      %v252 = vrot.slane %v247, %v251
      %v286 = vunpack.c.l.b16 %v211
      %v287 = vunpack.c.l.b16 %v212
      %v288 = vunpack.c.l.b16 %v213
      %v289 = vunpack.c.l.b16 %v214
      %v290 = vunpack.c.l.b16 %v215
      %v291 = vunpack.c.l.b16 %v216
      %v292 = vunpack.c.l.b16 %v217
      %v293 = vunpack.c.l.b16 %v218
      %v294 = vunpack.c.l.b16 %v219
      %v295 = vunpack.c.l.b16 %v220
      %v296 = vunpack.c.l.b16 %v221
      %v297 = vunpack.c.l.b16 %v222
      %v298 = vunpack.c.l.b16 %v223
      %v299 = vunpack.c.l.b16 %v224
      %v300 = vunpack.c.l.b16 %v225
      %v301 = vunpack.c.l.b16 %v226
      %v302 = vunpack.c.l.b16 %v227
      %v303 = vunpack.c.l.b16 %v228
      %v304 = vunpack.c.l.b16 %v229
      %v305 = vunpack.c.l.b16 %v230
      %v306 = vunpack.c.l.b16 %v231
      %v307 = vunpack.c.l.b16 %v232
      %v308 = vunpack.c.l.b16 %v233
      %v309 = vunpack.c.l.b16 %v234
      %v310 = vunpack.c.l.b16 %v235
      %v311 = vunpack.c.l.b16 %v236
      %v312 = vunpack.c.l.b16 %v237
      %v313 = vunpack.c.l.b16 %v238
      %v314 = vunpack.c.l.b16 %v239
      %v315 = vunpack.c.l.b16 %v240
      %v316 = vunpack.c.l.b16 %v241
      %v317 = vunpack.c.l.b16 %v242
      %v318 = vpack.c.b16 %v287, %v286
      %v319 = vpack.c.b16 %v289, %v288
      %v320 = vpack.c.b16 %v291, %v290
      %v321 = vpack.c.b16 %v293, %v292
      %v322 = vpack.c.b16 %v295, %v294
      %v323 = vpack.c.b16 %v297, %v296
      %v324 = vpack.c.b16 %v299, %v298
      %v325 = vpack.c.b16 %v301, %v300
      %v326 = vpack.c.b16 %v303, %v302
      %v327 = vpack.c.b16 %v305, %v304
      %v328 = vpack.c.b16 %v307, %v306
      %v329 = vpack.c.b16 %v309, %v308
      %v330 = vpack.c.b16 %v311, %v310
      %v331 = vpack.c.b16 %v313, %v312
      %v332 = vpack.c.b16 %v315, %v314
      %v333 = vpack.c.b16 %v317, %v316
      %v338 = vunpack.c.l.b16 %v243
      %v339 = vunpack.c.l.b16 %v244
      %v340 = vunpack.c.l.b16 %v245
      %v341 = vunpack.c.l.b16 %v246
      %v342 = vpack.c.b16 %v339, %v338
      %v343 = vpack.c.b16 %v341, %v340
      %vm345 = vcmask 220160
      %v347 = vsel %vm345, %v318, 0
      %v350 = vsel %vm345, %v319, 0
      %v353 = vsel %vm345, %v320, 0
      %v356 = vsel %vm345, %v321, 0
      %v359 = vsel %vm345, %v322, 0
      %v362 = vsel %vm345, %v323, 0
      %v365 = vsel %vm345, %v324, 0
      %v368 = vsel %vm345, %v325, 0
      %v371 = vsel %vm345, %v326, 0
      %v374 = vsel %vm345, %v327, 0
      %v377 = vsel %vm345, %v328, 0
      %v380 = vsel %vm345, %v329, 0
      %v383 = vsel %vm345, %v330, 0
      %v386 = vsel %vm345, %v331, 0
      %v389 = vsel %vm345, %v332, 0
      %v392 = vsel %vm345, %v333, 0
      %vm394 = vcmask 1044480
      %vm395 = vcmask 1045504
      %v396 = vsel %vm394, 4294967295, 65535
      %v397 = vsel %vm395, %v396, 0
      %v399 = vand.u32 %v343, %v397
      %401 = vmatprep.subr.bf16.mxu0 0
      %402 = vmatpush1.bf16.msra.mxu0 0
      %403 = vmatprep.subr.bf16.mxu0 0
      %404 = vmatpush1.bf16.msra.mxu0 0
      %405 = vmatprep.subr.bf16.mxu0 0
      %406 = vmatpush1.bf16.msra.mxu0 0
      %407 = vmatprep.subr.bf16.mxu0 0
      %408 = vmatpush1.bf16.msra.mxu0 0
      %409 = vmatprep.subr.bf16.mxu0 0
      %410 = vmatpush1.bf16.msra.mxu0 0
      %411 = vmatprep.subr.bf16.mxu0 0
      %412 = vmatpush1.bf16.msra.mxu0 0
      %413 = vmatprep.subr.bf16.mxu0 0
      %414 = vmatpush1.bf16.msra.mxu0 %v399
      %415 = vmatprep.subr.bf16.mxu0 0
      %416 = vmatpush1.bf16.msra.mxu0 %v342
      %417 = vmatprep.subr.bf16.mxu0 0
      %418 = vmatpush2.bf16.msra.mxu0 0
      %419 = vmatprep.subr.bf16.mxu0 0
      %420 = vmatpush2.bf16.msra.mxu0 0
      %421 = vmatprep.subr.bf16.mxu0 0
      %422 = vmatpush2.bf16.msra.mxu0 0
      %423 = vmatprep.subr.bf16.mxu0 0
      %424 = vmatpush2.bf16.msra.mxu0 0
      %425 = vmatprep.subr.bf16.mxu0 0
      %426 = vmatpush2.bf16.msra.mxu0 0
      %427 = vmatprep.subr.bf16.mxu0 0
      %428 = vmatpush2.bf16.msra.mxu0 0
      %429 = vmatprep.subr.bf16.mxu0 0
      %430 = vmatpush2.bf16.msra.mxu0 0
      %431 = vmatprep.subr.bf16.mxu0 0
      %432 = vmatpush2.bf16.msra.mxu0 0
      %433 = vmatprep.mubr.bf16.mxu0 0
      %434 = vmatmul.mubr.bf16.gmra.mxu0 %v347
      %v435 = vpop.f32.mrf.mxu0
      %v436 = vadd.f32 %v252, %v435
      %v437 = vpop.f32.mrf.mxu0
      %v438 = vpop.f32.mrf.mxu0
      %v439 = vadd.f32 %v252, %v438
      %v440 = vpop.f32.mrf.mxu0
      %441 = vmatprep.mubr.bf16.mxu0 0
      %442 = vmatmul.mubr.bf16.gmra.mxu0 %v350
      %v443 = vpop.f32.mrf.mxu0
      %v444 = vadd.f32 %v252, %v443
      %v445 = vpop.f32.mrf.mxu0
      %v446 = vpop.f32.mrf.mxu0
      %v447 = vadd.f32 %v252, %v446
      %v448 = vpop.f32.mrf.mxu0
      %449 = vmatprep.mubr.bf16.mxu0 0
      %450 = vmatmul.mubr.bf16.gmra.mxu0 %v353
      %v451 = vpop.f32.mrf.mxu0
      %v452 = vadd.f32 %v252, %v451
      %v453 = vpop.f32.mrf.mxu0
      %v454 = vpop.f32.mrf.mxu0
      %v455 = vadd.f32 %v252, %v454
      %v456 = vpop.f32.mrf.mxu0
      %457 = vmatprep.mubr.bf16.mxu0 0
      %458 = vmatmul.mubr.bf16.gmra.mxu0 %v356
      %v459 = vpop.f32.mrf.mxu0
      %v460 = vadd.f32 %v252, %v459
      %v461 = vpop.f32.mrf.mxu0
      %v462 = vpop.f32.mrf.mxu0
      %v463 = vadd.f32 %v252, %v462
      %v464 = vpop.f32.mrf.mxu0
      %465 = vmatprep.mubr.bf16.mxu0 0
      %466 = vmatmul.mubr.bf16.gmra.mxu0 %v359
      %v467 = vpop.f32.mrf.mxu0
      %v468 = vadd.f32 %v252, %v467
      %v469 = vpop.f32.mrf.mxu0
      %v470 = vpop.f32.mrf.mxu0
      %v471 = vadd.f32 %v252, %v470
      %v472 = vpop.f32.mrf.mxu0
      %473 = vmatprep.mubr.bf16.mxu0 0
      %474 = vmatmul.mubr.bf16.gmra.mxu0 %v362
      %v475 = vpop.f32.mrf.mxu0
      %v476 = vadd.f32 %v252, %v475
      %v477 = vpop.f32.mrf.mxu0
      %v478 = vpop.f32.mrf.mxu0
      %v479 = vadd.f32 %v252, %v478
      %v480 = vpop.f32.mrf.mxu0
      %481 = vmatprep.mubr.bf16.mxu0 0
      %482 = vmatmul.mubr.bf16.gmra.mxu0 %v365
      %v483 = vpop.f32.mrf.mxu0
      %v484 = vadd.f32 %v252, %v483
      %v485 = vpop.f32.mrf.mxu0
      %v486 = vpop.f32.mrf.mxu0
      %v487 = vadd.f32 %v252, %v486
      %v488 = vpop.f32.mrf.mxu0
      %489 = vmatprep.mubr.bf16.mxu0 0
      %490 = vmatmul.mubr.bf16.gmra.mxu0 %v368
      %v491 = vpop.f32.mrf.mxu0
      %v492 = vadd.f32 %v252, %v491
      %v493 = vpop.f32.mrf.mxu0
      %v494 = vpop.f32.mrf.mxu0
      %v495 = vadd.f32 %v252, %v494
      %v496 = vpop.f32.mrf.mxu0
      %497 = vmatprep.mubr.bf16.mxu0 0
      %498 = vmatmul.mubr.bf16.gmra.mxu0 %v371
      %v499 = vpop.f32.mrf.mxu0
      %v500 = vadd.f32 %v252, %v499
      %v501 = vpop.f32.mrf.mxu0
      %v502 = vpop.f32.mrf.mxu0
      %v503 = vadd.f32 %v252, %v502
      %v504 = vpop.f32.mrf.mxu0
      %505 = vmatprep.mubr.bf16.mxu0 0
      %506 = vmatmul.mubr.bf16.gmra.mxu0 %v374
      %v507 = vpop.f32.mrf.mxu0
      %v508 = vadd.f32 %v252, %v507
      %v509 = vpop.f32.mrf.mxu0
      %v510 = vpop.f32.mrf.mxu0
      %v511 = vadd.f32 %v252, %v510
      %v512 = vpop.f32.mrf.mxu0
      %513 = vmatprep.mubr.bf16.mxu0 0
      %514 = vmatmul.mubr.bf16.gmra.mxu0 %v377
      %v515 = vpop.f32.mrf.mxu0
      %v516 = vadd.f32 %v252, %v515
      %v517 = vpop.f32.mrf.mxu0
      %v518 = vpop.f32.mrf.mxu0
      %v519 = vadd.f32 %v252, %v518
      %v520 = vpop.f32.mrf.mxu0
      %521 = vmatprep.mubr.bf16.mxu0 0
      %522 = vmatmul.mubr.bf16.gmra.mxu0 %v380
      %v523 = vpop.f32.mrf.mxu0
      %v524 = vadd.f32 %v252, %v523
      %v525 = vpop.f32.mrf.mxu0
      %v526 = vpop.f32.mrf.mxu0
      %v527 = vadd.f32 %v252, %v526
      %v528 = vpop.f32.mrf.mxu0
      %529 = vmatprep.mubr.bf16.mxu0 0
      %530 = vmatmul.mubr.bf16.gmra.mxu0 %v383
      %v531 = vpop.f32.mrf.mxu0
      %v532 = vadd.f32 %v252, %v531
      %v533 = vpop.f32.mrf.mxu0
      %v534 = vpop.f32.mrf.mxu0
      %v535 = vadd.f32 %v252, %v534
      %v536 = vpop.f32.mrf.mxu0
      %537 = vmatprep.mubr.bf16.mxu0 0
      %538 = vmatmul.mubr.bf16.gmra.mxu0 %v386
      %v539 = vpop.f32.mrf.mxu0
      %v540 = vadd.f32 %v252, %v539
      %v541 = vpop.f32.mrf.mxu0
      %v542 = vpop.f32.mrf.mxu0
      %v543 = vadd.f32 %v252, %v542
      %v544 = vpop.f32.mrf.mxu0
      %545 = vmatprep.mubr.bf16.mxu0 0
      %546 = vmatmul.mubr.bf16.gmra.mxu0 %v389
      %v547 = vpop.f32.mrf.mxu0
      %v548 = vadd.f32 %v252, %v547
      %v549 = vpop.f32.mrf.mxu0
      %v550 = vpop.f32.mrf.mxu0
      %v551 = vadd.f32 %v252, %v550
      %v552 = vpop.f32.mrf.mxu0
      %553 = vmatprep.mubr.bf16.mxu0 0
      %554 = vmatmul.mubr.bf16.gmra.mxu0 %v392
      %v555 = vpop.f32.mrf.mxu0
      %v556 = vadd.f32 %v252, %v555
      %v557 = vpop.f32.mrf.mxu0
      %v558 = vpop.f32.mrf.mxu0
      %v559 = vadd.f32 %v252, %v558
      %v560 = vpop.f32.mrf.mxu0
      %561 = vdwg.mxu0
      %v562 = vadd.f32 %v436, 3.0
      %v563 = vadd.f32 %v439, 3.0
      %v564 = vadd.f32 %v444, 3.0
      %v565 = vadd.f32 %v447, 3.0
      %v566 = vadd.f32 %v452, 3.0
      %v567 = vadd.f32 %v455, 3.0
      %v568 = vadd.f32 %v460, 3.0
      %v569 = vadd.f32 %v463, 3.0
      %v570 = vadd.f32 %v468, 3.0
      %v571 = vadd.f32 %v471, 3.0
      %v572 = vadd.f32 %v476, 3.0
      %v573 = vadd.f32 %v479, 3.0
      %v574 = vadd.f32 %v484, 3.0
      %v575 = vadd.f32 %v487, 3.0
      %v576 = vadd.f32 %v492, 3.0
      %v577 = vadd.f32 %v495, 3.0
      %v578 = vadd.f32 %v500, 3.0
      %v579 = vadd.f32 %v503, 3.0
      %v580 = vadd.f32 %v508, 3.0
      %v581 = vadd.f32 %v511, 3.0
      %v582 = vadd.f32 %v516, 3.0
      %v583 = vadd.f32 %v519, 3.0
      %v584 = vadd.f32 %v524, 3.0
      %v585 = vadd.f32 %v527, 3.0
      %v586 = vadd.f32 %v532, 3.0
      %v587 = vadd.f32 %v535, 3.0
      %v588 = vadd.f32 %v540, 3.0
      %v589 = vadd.f32 %v543, 3.0
      %v590 = vadd.f32 %v548, 3.0
      %v591 = vadd.f32 %v551, 3.0
      %v592 = vadd.f32 %v556, 3.0
      %v593 = vadd.f32 %v559, 3.0
      %v594 = vmax.f32 %v562, 0.0
      %v595 = vmax.f32 %v563, 0.0
      %v596 = vmax.f32 %v564, 0.0
      %v597 = vmax.f32 %v565, 0.0
      %v598 = vmax.f32 %v566, 0.0
      %v599 = vmax.f32 %v567, 0.0
      %v600 = vmax.f32 %v568, 0.0
      %v601 = vmax.f32 %v569, 0.0
      %v602 = vmax.f32 %v570, 0.0
      %v603 = vmax.f32 %v571, 0.0
      %v604 = vmax.f32 %v572, 0.0
      %v605 = vmax.f32 %v573, 0.0
      %v606 = vmax.f32 %v574, 0.0
      %v607 = vmax.f32 %v575, 0.0
      %v608 = vmax.f32 %v576, 0.0
      %v609 = vmax.f32 %v577, 0.0
      %v610 = vmax.f32 %v578, 0.0
      %v611 = vmax.f32 %v579, 0.0
      %v612 = vmax.f32 %v580, 0.0
      %v613 = vmax.f32 %v581, 0.0
      %v614 = vmax.f32 %v582, 0.0
      %v615 = vmax.f32 %v583, 0.0
      %v616 = vmax.f32 %v584, 0.0
      %v617 = vmax.f32 %v585, 0.0
      %v618 = vmax.f32 %v586, 0.0
      %v619 = vmax.f32 %v587, 0.0
      %v620 = vmax.f32 %v588, 0.0
      %v621 = vmax.f32 %v589, 0.0
      %v622 = vmax.f32 %v590, 0.0
      %v623 = vmax.f32 %v591, 0.0
      %v624 = vmax.f32 %v592, 0.0
      %v625 = vmax.f32 %v593, 0.0
      %v626 = vmin.f32 %v594, 6.0
      %v627 = vmin.f32 %v595, 6.0
      %v628 = vmin.f32 %v596, 6.0
      %v629 = vmin.f32 %v597, 6.0
      %v630 = vmin.f32 %v598, 6.0
      %v631 = vmin.f32 %v599, 6.0
      %v632 = vmin.f32 %v600, 6.0
      %v633 = vmin.f32 %v601, 6.0
      %v634 = vmin.f32 %v602, 6.0
      %v635 = vmin.f32 %v603, 6.0
      %v636 = vmin.f32 %v604, 6.0
      %v637 = vmin.f32 %v605, 6.0
      %v638 = vmin.f32 %v606, 6.0
      %v639 = vmin.f32 %v607, 6.0
      %v640 = vmin.f32 %v608, 6.0
      %v641 = vmin.f32 %v609, 6.0
      %v642 = vmin.f32 %v610, 6.0
      %v643 = vmin.f32 %v611, 6.0
      %v644 = vmin.f32 %v612, 6.0
      %v645 = vmin.f32 %v613, 6.0
      %v646 = vmin.f32 %v614, 6.0
      %v647 = vmin.f32 %v615, 6.0
      %v648 = vmin.f32 %v616, 6.0
      %v649 = vmin.f32 %v617, 6.0
      %v650 = vmin.f32 %v618, 6.0
      %v651 = vmin.f32 %v619, 6.0
      %v652 = vmin.f32 %v620, 6.0
      %v653 = vmin.f32 %v621, 6.0
      %v654 = vmin.f32 %v622, 6.0
      %v655 = vmin.f32 %v623, 6.0
      %v656 = vmin.f32 %v624, 6.0
      %v657 = vmin.f32 %v625, 6.0
      %v658 = vmul.f32 %v436, %v626
      %v659 = vmul.f32 %v439, %v627
      %v660 = vmul.f32 %v444, %v628
      %v661 = vmul.f32 %v447, %v629
      %v662 = vmul.f32 %v452, %v630
      %v663 = vmul.f32 %v455, %v631
      %v664 = vmul.f32 %v460, %v632
      %v665 = vmul.f32 %v463, %v633
      %v666 = vmul.f32 %v468, %v634
      %v667 = vmul.f32 %v471, %v635
      %v668 = vmul.f32 %v476, %v636
      %v669 = vmul.f32 %v479, %v637
      %v670 = vmul.f32 %v484, %v638
      %v671 = vmul.f32 %v487, %v639
      %v672 = vmul.f32 %v492, %v640
      %v673 = vmul.f32 %v495, %v641
      %v674 = vmul.f32 %v500, %v642
      %v675 = vmul.f32 %v503, %v643
      %v676 = vmul.f32 %v508, %v644
      %v677 = vmul.f32 %v511, %v645
      %v678 = vmul.f32 %v516, %v646
      %v679 = vmul.f32 %v519, %v647
      %v680 = vmul.f32 %v524, %v648
      %v681 = vmul.f32 %v527, %v649
      %v682 = vmul.f32 %v532, %v650
      %v683 = vmul.f32 %v535, %v651
      %v684 = vmul.f32 %v540, %v652
      %v685 = vmul.f32 %v543, %v653
      %v686 = vmul.f32 %v548, %v654
      %v687 = vmul.f32 %v551, %v655
      %v688 = vmul.f32 %v556, %v656
      %v689 = vmul.f32 %v559, %v657
      %v690 = vmul.f32 %v658, 0.16666667
      %v691 = vmul.f32 %v659, 0.16666667
      %v692 = vmul.f32 %v660, 0.16666667
      %v693 = vmul.f32 %v661, 0.16666667
      %v694 = vmul.f32 %v662, 0.16666667
      %v695 = vmul.f32 %v663, 0.16666667
      %v696 = vmul.f32 %v664, 0.16666667
      %v697 = vmul.f32 %v665, 0.16666667
      %v698 = vmul.f32 %v666, 0.16666667
      %v699 = vmul.f32 %v667, 0.16666667
      %v700 = vmul.f32 %v668, 0.16666667
      %v701 = vmul.f32 %v669, 0.16666667
      %v702 = vmul.f32 %v670, 0.16666667
      %v703 = vmul.f32 %v671, 0.16666667
      %v704 = vmul.f32 %v672, 0.16666667
      %v705 = vmul.f32 %v673, 0.16666667
      %v706 = vmul.f32 %v674, 0.16666667
      %v707 = vmul.f32 %v675, 0.16666667
      %v708 = vmul.f32 %v676, 0.16666667
      %v709 = vmul.f32 %v677, 0.16666667
      %v710 = vmul.f32 %v678, 0.16666667
      %v711 = vmul.f32 %v679, 0.16666667
      %v712 = vmul.f32 %v680, 0.16666667
      %v713 = vmul.f32 %v681, 0.16666667
      %v714 = vmul.f32 %v682, 0.16666667
      %v715 = vmul.f32 %v683, 0.16666667
      %v716 = vmul.f32 %v684, 0.16666667
      %v717 = vmul.f32 %v685, 0.16666667
      %v718 = vmul.f32 %v686, 0.16666667
      %v719 = vmul.f32 %v687, 0.16666667
      %v720 = vmul.f32 %v688, 0.16666667
      %v721 = vmul.f32 %v689, 0.16666667
      %v722 = vpack.c.bf16 %v691, %v690
      %v723 = vpack.c.bf16 %v693, %v692
      %v724 = vpack.c.bf16 %v695, %v694
      %v725 = vpack.c.bf16 %v697, %v696
      %v726 = vpack.c.bf16 %v699, %v698
      %v727 = vpack.c.bf16 %v701, %v700
      %v728 = vpack.c.bf16 %v703, %v702
      %v729 = vpack.c.bf16 %v705, %v704
      %v730 = vpack.c.bf16 %v707, %v706
      %v731 = vpack.c.bf16 %v709, %v708
      %v732 = vpack.c.bf16 %v711, %v710
      %v733 = vpack.c.bf16 %v713, %v712
      %v734 = vpack.c.bf16 %v715, %v714
      %v735 = vpack.c.bf16 %v717, %v716
      %v736 = vpack.c.bf16 %v719, %v718
      %v737 = vpack.c.bf16 %v721, %v720
      %v754 = vunpack.c.l.b16 %v722
      %v755 = vunpack.c.h.b16 %v722
      %v756 = vunpack.c.l.b16 %v723
      %v757 = vunpack.c.h.b16 %v723
      %v758 = vunpack.c.l.b16 %v724
      %v759 = vunpack.c.h.b16 %v724
      %v760 = vunpack.c.l.b16 %v725
      %v761 = vunpack.c.h.b16 %v725
      %v762 = vunpack.c.l.b16 %v726
      %v763 = vunpack.c.h.b16 %v726
      %v764 = vunpack.c.l.b16 %v727
      %v765 = vunpack.c.h.b16 %v727
      %v766 = vunpack.c.l.b16 %v728
      %v767 = vunpack.c.h.b16 %v728
      %v768 = vunpack.c.l.b16 %v729
      %v769 = vunpack.c.h.b16 %v729
      %v770 = vunpack.c.l.b16 %v730
      %v771 = vunpack.c.h.b16 %v730
      %v772 = vunpack.c.l.b16 %v731
      %v773 = vunpack.c.h.b16 %v731
      %v774 = vunpack.c.l.b16 %v732
      %v775 = vunpack.c.h.b16 %v732
      %v776 = vunpack.c.l.b16 %v733
      %v777 = vunpack.c.h.b16 %v733
      %v778 = vunpack.c.l.b16 %v734
      %v779 = vunpack.c.h.b16 %v734
      %v780 = vunpack.c.l.b16 %v735
      %v781 = vunpack.c.h.b16 %v735
      %v782 = vunpack.c.l.b16 %v736
      %v783 = vunpack.c.h.b16 %v736
      %v784 = vunpack.c.l.b16 %v737
      %v785 = vunpack.c.h.b16 %v737
      %v786 = vpack.c.b16 %v754, %v754
      %v787 = vpack.c.b16 %v755, %v755
      %v788 = vpack.c.b16 %v756, %v756
      %v789 = vpack.c.b16 %v757, %v757
      %v790 = vpack.c.b16 %v758, %v758
      %v791 = vpack.c.b16 %v759, %v759
      %v792 = vpack.c.b16 %v760, %v760
      %v793 = vpack.c.b16 %v761, %v761
      %v794 = vpack.c.b16 %v762, %v762
      %v795 = vpack.c.b16 %v763, %v763
      %v796 = vpack.c.b16 %v764, %v764
      %v797 = vpack.c.b16 %v765, %v765
      %v798 = vpack.c.b16 %v766, %v766
      %v799 = vpack.c.b16 %v767, %v767
      %v800 = vpack.c.b16 %v768, %v768
      %v801 = vpack.c.b16 %v769, %v769
      %v802 = vpack.c.b16 %v770, %v770
      %v803 = vpack.c.b16 %v771, %v771
      %v804 = vpack.c.b16 %v772, %v772
      %v805 = vpack.c.b16 %v773, %v773
      %v806 = vpack.c.b16 %v774, %v774
      %v807 = vpack.c.b16 %v775, %v775
      %v808 = vpack.c.b16 %v776, %v776
      %v809 = vpack.c.b16 %v777, %v777
      %v810 = vpack.c.b16 %v778, %v778
      %v811 = vpack.c.b16 %v779, %v779
      %v812 = vpack.c.b16 %v780, %v780
      %v813 = vpack.c.b16 %v781, %v781
      %v814 = vpack.c.b16 %v782, %v782
      %v815 = vpack.c.b16 %v783, %v783
      %v816 = vpack.c.b16 %v784, %v784
      %v817 = vpack.c.b16 %v785, %v785
      %vm850 = vcmask 125952
      %851 = vst.msk [vmem:[%s208] sm:$0xf] %vm850, %v786
      %852 = vst.msk [vmem:[%s208 + $0x4] sm:$0xf] %vm850, %v787
      %853 = vst.msk [vmem:[%s208 + $0x8] sm:$0xf] %vm850, %v788
      %854 = vst.msk [vmem:[%s208 + $0xc] sm:$0xf] %vm850, %v789
      %855 = vst.msk [vmem:[%s208 + $0x10] sm:$0xf] %vm850, %v790
      %856 = vst.msk [vmem:[%s208 + $0x14] sm:$0xf] %vm850, %v791
      %857 = vst.msk [vmem:[%s208 + $0x18] sm:$0xf] %vm850, %v792
      %858 = vst.msk [vmem:[%s208 + $0x1c] sm:$0xf] %vm850, %v793
      %859 = vst.msk [vmem:[%s208 + $0x20] sm:$0xf] %vm850, %v794
      %860 = vst.msk [vmem:[%s208 + $0x24] sm:$0xf] %vm850, %v795
      %861 = vst.msk [vmem:[%s208 + $0x28] sm:$0xf] %vm850, %v796
      %862 = vst.msk [vmem:[%s208 + $0x2c] sm:$0xf] %vm850, %v797
      %863 = vst.msk [vmem:[%s208 + $0x30] sm:$0xf] %vm850, %v798
      %864 = vst.msk [vmem:[%s208 + $0x34] sm:$0xf] %vm850, %v799
      %865 = vst.msk [vmem:[%s208 + $0x38] sm:$0xf] %vm850, %v800
      %866 = vst.msk [vmem:[%s208 + $0x3c] sm:$0xf] %vm850, %v801
      %867 = vst.msk [vmem:[%s208 + $0x40] sm:$0xf] %vm850, %v802
      %868 = vst.msk [vmem:[%s208 + $0x44] sm:$0xf] %vm850, %v803
      %869 = vst.msk [vmem:[%s208 + $0x48] sm:$0xf] %vm850, %v804
      %870 = vst.msk [vmem:[%s208 + $0x4c] sm:$0xf] %vm850, %v805
      %871 = vst.msk [vmem:[%s208 + $0x50] sm:$0xf] %vm850, %v806
      %872 = vst.msk [vmem:[%s208 + $0x54] sm:$0xf] %vm850, %v807
      %873 = vst.msk [vmem:[%s208 + $0x58] sm:$0xf] %vm850, %v808
      %874 = vst.msk [vmem:[%s208 + $0x5c] sm:$0xf] %vm850, %v809
      %875 = vst.msk [vmem:[%s208 + $0x60] sm:$0xf] %vm850, %v810
      %876 = vst.msk [vmem:[%s208 + $0x64] sm:$0xf] %vm850, %v811
      %877 = vst.msk [vmem:[%s208 + $0x68] sm:$0xf] %vm850, %v812
      %878 = vst.msk [vmem:[%s208 + $0x6c] sm:$0xf] %vm850, %v813
      %879 = vst.msk [vmem:[%s208 + $0x70] sm:$0xf] %vm850, %v814
      %880 = vst.msk [vmem:[%s208 + $0x74] sm:$0xf] %vm850, %v815
      %881 = vst.msk [vmem:[%s208 + $0x78] sm:$0xf] %vm850, %v816
      %882 = vst.msk [vmem:[%s208 + $0x7c] sm:$0xf] %vm850, %v817
      %s883 = smul.u32 32, %s19
      %p884 = scmp.lt.s32.totalorder %s18, 1
      %s885 = scalar_select %p884, %s18, 1
      %p886 = scmp.lt.s32.totalorder %s883, 31
      %s887 = scalar_select %p886, %s883, 31
      %s888 = smul.addr %s885, 32
      %s889 = sadd.s32 %s887, %s888
      %s890 = smul.addr %s889, 4
      %s891 = scalar_lea.vmem %s3, %s890
      // Predicated region
      $region33: #{fwd.13} parent=31 // pred_check
        %p892 = pneg %p116
      $region34: #{fwd.13} parent=31 // pred_check_branch
        %894 = sbr.rel (%p892) target = $region36
      $region35: #{fwd.13} parent=31 // pred_region
        %s895 = smul.u32 32, %s19
      $region36: #{fwd.13} parent=31 // pred_fallthru
        _
    $region32: #{fwd.13} parent=5 // pred_fallthru
      _
    %p896 = scmp.le.s32.totalorder 2, %s9
    // Predicated region
    $region37: #{fwd.13} parent=5 // pred_check
      %p897 = pneg %p896
    $region38: #{fwd.13} parent=5 // pred_check_branch
      %899 = sbr.rel (%p897) target = $region40
    $region39: #{fwd.13} parent=5 // pred_region
      %s900 = ssub.s32 %s9, 2
      // Predicated region
      $region41: #{fwd.13} parent=39 // pred_check
        %p901 = pneg %p122
      $region42: #{fwd.13} parent=39 // pred_check_branch
        %903 = sbr.rel (%p901) target = $region44
      $region43: #{fwd.13} parent=39 // pred_region
        %s904 = smul.u32 32, %s21
        %p905 = scmp.lt.s32.totalorder %s20, 1
        %s906 = scalar_select %p905, %s20, 1
        %p907 = scmp.lt.s32.totalorder %s904, 31
        %s908 = scalar_select %p907, %s904, 31
        %s909 = smul.addr %s906, 32
        %s910 = sadd.s32 %s908, %s909
        %s911 = smul.addr %s910, 4
        %s912 = scalar_lea.vmem %s3, %s911
      $region44: #{fwd.13} parent=39 // pred_fallthru
        _
    $region40: #{fwd.13} parent=5 // pred_fallthru
      _
  $region6: #{fwd.13} parent=0 // loop_footer
    %s13 = sadd.s32 1, %s9
  $region7: #{fwd.13} parent=0 // loop_footer_branch
    %8 = sbr.rel target = $region3
  $region8: #{fwd.13} parent=0 // loop_exit
    _

// kernel: fwd.16
$region0: #{fwd.16}
  #allocation0 [shape = 'u32[]', space=smem, size = 0x4, offset = 0x4, fixed_abs, tag = 'smem constant byte address 0x4 - core index']
  #allocation1 [shape = 'u32[144,128]{1,0:T(1,128)}', space=vmem, size = 0x12000, scoped, tag = 'internal scratch']
  %s0 = inlined_call_operand.vmem [shape: bf16[2,64,16], index: 0, kind: input, shape index: {}]
  %s1 = inlined_call_operand.vmem [shape: bf16[16,16], index: 1, kind: input, shape index: {}]
  %s2 = inlined_call_operand.vmem [shape: f32[1,16], index: 2, kind: input, shape index: {}]
  %s3 = inlined_call_operand.vmem [shape: f32[2,1,16], index: 3, kind: input, shape index: {}]
  %s4 = inlined_call_operand.vmem [shape: bf16[2,64,16], index: 4, kind: output, shape index: {}]
  %s5 = sld [smem:[#allocation0]]
  $region49: #{fwd.16} parent=0
    _
  %s7 = ssub.s32 1, %s5
  %s8 = scalar_select 0, %s7, %s5
  loop: start=0, step=1, limit=4
  $region2: #{fwd.16} parent=0 // loop_pre_header
    _
  $region3: #{fwd.16} parent=0 // loop_header
    %s10 = sphi 0, %s14
    %p11 = scmp.ge.s32.totalorder %s10, 4
    %s17 = sphi 0, %s29
    %s18 = sphi 0, %s25
    %s19 = sphi 0, %s17
    %s20 = sphi 0, %s18
    %s21 = sphi 0, %s19
    %s22 = sphi 0, %s20
    %s34 = sphi 0, %s36
    %s37 = sphi 0, %s34
    %s38 = sphi 0, %s37
    %s54 = sphi 0, %s38
    %s58 = sphi 0, %s58
    %s60 = sphi 0, %s58
    %s61 = sphi 0, %s60
    %s75 = sphi 0, %s61
    %s79 = sphi 0, %s79
    %s81 = sphi 0, %s79
    %s82 = sphi 0, %s81
    %s96 = sphi 0, %s82
    %s102 = sphi 0, %s104
    %s105 = sphi 0, %s102
    %s106 = sphi 0, %s105
    %s122 = sphi 0, %s106
    %s130 = sphi 0, %s132
    %s133 = sphi 0, %s130
    %s134 = sphi 0, %s133
    %s150 = sphi 0, %s134
  $region4: #{fwd.16} parent=0 // loop_header_branch
    %13 = sbr.rel (%p11) target = $region8
  $region5: #{fwd.16} parent=0 // loop_body
    %s15 = ssub.s32 %s10, 1
    %s16 = ssub.s32 %s10, 2
    %s23 = sadd.s32 1, %s18
    %p24 = scmp.ge.s32.totalorder %s23, 1
    %s25 = scalar_select %p24, 0, %s23
    %s26 = sadd.s32 1, %s17
    %s27 = scalar_select %p24, %s26, %s17
    %p28 = scmp.ge.s32.totalorder %s27, 2
    %s29 = scalar_select %p28, 0, %s27
    %s30 = ssub.s32 %s17, %s29
    %s31 = ssub.s32 %s18, %s25
    %s32 = sor.u32 %s30, %s31
    %p33 = scmp.eq.s32.totalorder %s32, 0
    %s35 = sadd.s32 %s34, 1
    %s36 = scalar_select %p33, %s34, %s35
    %p39 = pneg %p33
    %p40 = scmp.eq.s32.totalorder %s10, 1
    %p41 = por %p39, %p40
    %p42 = scmp.ne.s32.totalorder %s34, %s37
    %p43 = scmp.eq.s32.totalorder %s10, 0
    %p44 = por %p42, %p43
    %p45 = scmp.ne.s32.totalorder %s34, %s37
    %p46 = scmp.eq.s32.totalorder %s15, 1
    %p47 = por %p45, %p46
    %p48 = scmp.ne.s32.totalorder %s37, %s38
    %p49 = scmp.eq.s32.totalorder %s15, 0
    %p50 = por %p48, %p49
    %p51 = scmp.ne.s32.totalorder %s37, %s38
    %p52 = scmp.eq.s32.totalorder %s16, 1
    %p53 = por %p51, %p52
    %p55 = scmp.ne.s32.totalorder %s38, %s54
    %p56 = scmp.eq.s32.totalorder %s16, 0
    %p57 = por %p55, %p56
    %s59 = sadd.s32 %s58, 1
    %p62 = scmp.eq.s32.totalorder %s10, 1
    %p63 = scmp.ne.s32.totalorder %s58, %s60
    %p64 = scmp.eq.s32.totalorder %s10, 0
    %p65 = por %p63, %p64
    %p66 = scmp.ne.s32.totalorder %s58, %s60
    %p67 = scmp.eq.s32.totalorder %s15, 1
    %p68 = por %p66, %p67
    %p69 = scmp.ne.s32.totalorder %s60, %s61
    %p70 = scmp.eq.s32.totalorder %s15, 0
    %p71 = por %p69, %p70
    %p72 = scmp.ne.s32.totalorder %s60, %s61
    %p73 = scmp.eq.s32.totalorder %s16, 1
    %p74 = por %p72, %p73
    %p76 = scmp.ne.s32.totalorder %s61, %s75
    %p77 = scmp.eq.s32.totalorder %s16, 0
    %p78 = por %p76, %p77
    %s80 = sadd.s32 %s79, 1
    %p83 = scmp.eq.s32.totalorder %s10, 1
    %p84 = scmp.ne.s32.totalorder %s79, %s81
    %p85 = scmp.eq.s32.totalorder %s10, 0
    %p86 = por %p84, %p85
    %p87 = scmp.ne.s32.totalorder %s79, %s81
    %p88 = scmp.eq.s32.totalorder %s15, 1
    %p89 = por %p87, %p88
    %p90 = scmp.ne.s32.totalorder %s81, %s82
    %p91 = scmp.eq.s32.totalorder %s15, 0
    %p92 = por %p90, %p91
    %p93 = scmp.ne.s32.totalorder %s81, %s82
    %p94 = scmp.eq.s32.totalorder %s16, 1
    %p95 = por %p93, %p94
    %p97 = scmp.ne.s32.totalorder %s82, %s96
    %p98 = scmp.eq.s32.totalorder %s16, 0
    %p99 = por %p97, %p98
    %s100 = ssub.s32 %s17, %s29
    %p101 = scmp.eq.s32.totalorder %s100, 0
    %s103 = sadd.s32 %s102, 1
    %s104 = scalar_select %p101, %s102, %s103
    %p107 = pneg %p101
    %p108 = scmp.eq.s32.totalorder %s10, 1
    %p109 = por %p107, %p108
    %p110 = scmp.ne.s32.totalorder %s102, %s105
    %p111 = scmp.eq.s32.totalorder %s10, 0
    %p112 = por %p110, %p111
    %p113 = scmp.ne.s32.totalorder %s102, %s105
    %p114 = scmp.eq.s32.totalorder %s15, 1
    %p115 = por %p113, %p114
    %p116 = scmp.ne.s32.totalorder %s105, %s106
    %p117 = scmp.eq.s32.totalorder %s15, 0
    %p118 = por %p116, %p117
    %p119 = scmp.ne.s32.totalorder %s105, %s106
    %p120 = scmp.eq.s32.totalorder %s16, 1
    %p121 = por %p119, %p120
    %p123 = scmp.ne.s32.totalorder %s106, %s122
    %p124 = scmp.eq.s32.totalorder %s16, 0
    %p125 = por %p123, %p124
    %s126 = ssub.s32 %s17, %s29
    %s127 = ssub.s32 %s18, %s25
    %s128 = sor.u32 %s126, %s127
    %p129 = scmp.eq.s32.totalorder %s128, 0
    %s131 = sadd.s32 %s130, 1
    %s132 = scalar_select %p129, %s130, %s131
    %p135 = pneg %p129
    %p136 = scmp.eq.s32.totalorder %s10, 1
    %p137 = por %p135, %p136
    %p138 = scmp.ne.s32.totalorder %s130, %s133
    %p139 = scmp.eq.s32.totalorder %s10, 0
    %p140 = por %p138, %p139
    %p141 = scmp.ne.s32.totalorder %s130, %s133
    %p142 = scmp.eq.s32.totalorder %s15, 1
    %p143 = por %p141, %p142
    %p144 = scmp.ne.s32.totalorder %s133, %s134
    %p145 = scmp.eq.s32.totalorder %s15, 0
    %p146 = por %p144, %p145
    %p147 = scmp.ne.s32.totalorder %s133, %s134
    %p148 = scmp.eq.s32.totalorder %s16, 1
    %p149 = por %p147, %p148
    %p151 = scmp.ne.s32.totalorder %s134, %s150
    %p152 = scmp.eq.s32.totalorder %s16, 0
    %p153 = por %p151, %p152
    %p154 = scmp.le.s32.totalorder 1, %s10
    %p155 = scmp.lt.s32.totalorder %s10, 3
    %p156 = pnand %p154, %p155
    %p157 = pneg %p156
    // Predicated region
    $region9: #{fwd.16} parent=5 // pred_check
      _
    $region10: #{fwd.16} parent=5 // pred_check_branch
      %159 = sbr.rel (%p156) target = $region12
    $region11: #{fwd.16} parent=5 // pred_region
      %s160 = ssub.s32 %s10, 1
      // Predicated region
      $region13: #{fwd.16} parent=11 // pred_check
        %p161 = pneg %p71
      $region14: #{fwd.16} parent=11 // pred_check_branch
        %163 = sbr.rel (%p161) target = $region16
      $region15: #{fwd.16} parent=11 // pred_region
        _
      $region16: #{fwd.16} parent=11 // pred_fallthru
        _
      // Predicated region
      $region17: #{fwd.16} parent=11 // pred_check
        %p164 = pneg %p92
      $region18: #{fwd.16} parent=11 // pred_check_branch
        %166 = sbr.rel (%p164) target = $region20
      $region19: #{fwd.16} parent=11 // pred_region
        _
      $region20: #{fwd.16} parent=11 // pred_fallthru
        _
    $region12: #{fwd.16} parent=5 // pred_fallthru
      _
    %p167 = scmp.lt.s32.totalorder %s10, 2
    // Predicated region
    $region21: #{fwd.16} parent=5 // pred_check
      %p168 = pneg %p167
    $region22: #{fwd.16} parent=5 // pred_check_branch
      %170 = sbr.rel (%p168) target = $region24
    $region23: #{fwd.16} parent=5 // pred_region
      // Predicated region
      $region25: #{fwd.16} parent=23 // pred_check
        %p171 = pneg %p44
      $region26: #{fwd.16} parent=23 // pred_check_branch
        %173 = sbr.rel (%p171) target = $region28
      $region27: #{fwd.16} parent=23 // pred_region
        %s174 = smul.u32 8, %s18
        %p175 = scmp.lt.s32.totalorder %s17, 1
        %s176 = scalar_select %p175, %s17, 1
        %p177 = scmp.lt.s32.totalorder %s174, 7
        %s178 = scalar_select %p177, %s174, 7
        %s179 = smul.addr %s176, 8
        %s180 = sadd.s32 %s178, %s179
        %s181 = smul.addr %s180, 4
        %s182 = scalar_lea.vmem %s0, %s181
        %s183 = smul.u32 8, %s18
      $region28: #{fwd.16} parent=23 // pred_fallthru
        _
      // Predicated region
      $region29: #{fwd.16} parent=23 // pred_check
        %p184 = pneg %p112
      $region30: #{fwd.16} parent=23 // pred_check_branch
        %186 = sbr.rel (%p184) target = $region32
      $region31: #{fwd.16} parent=23 // pred_region
        %p187 = scmp.lt.s32.totalorder %s17, 1
        %s188 = scalar_select %p187, %s17, 1
        %s189 = scalar_lea.vmem %s3, %s188
      $region32: #{fwd.16} parent=23 // pred_fallthru
        _
    $region24: #{fwd.16} parent=5 // pred_fallthru
      _
    %p190 = scmp.le.s32.totalorder 1, %s10
    %p191 = scmp.lt.s32.totalorder %s10, 3
    %p192 = pnand %p190, %p191
    %p193 = pneg %p192
    // Predicated region
    $region33: #{fwd.16} parent=5 // pred_check
      _
    $region34: #{fwd.16} parent=5 // pred_check_branch
      %195 = sbr.rel (%p192) target = $region36
    $region35: #{fwd.16} parent=5 // pred_region
      %s196 = ssub.s32 %s10, 1
      %s197 = smul.u32 8, %s20
      %p198 = scmp.lt.s32.totalorder %s19, 1
      %s199 = scalar_select %p198, %s19, 1
      %p200 = scmp.lt.s32.totalorder %s197, 7
      %s201 = scalar_select %p200, %s197, 7
      %s202 = smul.addr %s199, 8
      %s203 = sadd.s32 %s201, %s202
      %s204 = smul.addr %s203, 4
      %s205 = scalar_lea.vmem %s0, %s204
      %p206 = pneg %p50
      %p207 = pneg %p47
      %p208 = pneg %p71
      %p209 = pneg %p68
      %p210 = pneg %p92
      %p211 = pneg %p89
      %p212 = scmp.lt.s32.totalorder %s19, 1
      %s213 = scalar_select %p212, %s19, 1
      %s214 = scalar_lea.vmem %s3, %s213
      %p215 = pneg %p118
      %p216 = pneg %p115
      %p217 = pneg %p146
      %p218 = pneg %p143
      %s219 = smul.u32 8, %s20
      %p220 = scmp.lt.s32.totalorder %s19, 1
      %s221 = scalar_select %p220, %s19, 1
      %p222 = scmp.lt.s32.totalorder %s219, 7
      %s223 = scalar_select %p222, %s219, 7
      %s224 = smul.addr %s221, 8
      %s225 = sadd.s32 %s223, %s224
      %s226 = smul.addr %s225, 4
      %s227 = scalar_lea.vmem %s4, %s226
      %s228 = smul.u32 8, %s20
      %p229 = scmp.lt.s32.totalorder %s19, 1
      %s230 = scalar_select %p229, %s19, 1
      %p231 = scmp.lt.s32.totalorder %s228, 7
      %s232 = scalar_select %p231, %s228, 7
      %s233 = smul.addr %s230, 8
      %s234 = sadd.s32 %s232, %s233
      %s235 = smul.addr %s234, 4
      %s236 = scalar_lea.vmem %s0, %s235
      %s237 = smul.u32 8, %s20
      %p238 = scmp.lt.s32.totalorder %s19, 1
      %s239 = scalar_select %p238, %s19, 1
      %s240 = scalar_lea.vmem %s3, %s239
      %s241 = smul.u32 8, %s20
      %p242 = scmp.lt.s32.totalorder %s19, 1
      %s243 = scalar_select %p242, %s19, 1
      %p244 = scmp.lt.s32.totalorder %s241, 7
      %s245 = scalar_select %p244, %s241, 7
      %s246 = smul.addr %s243, 8
      %s247 = sadd.s32 %s245, %s246
      %s248 = smul.addr %s247, 4
      %s249 = scalar_lea.vmem %s4, %s248
      %s250 = smul.u32 8, %s20
      %v252 = vld [vmem:[%s236] sm:$0xf]
      %v253 = vld [vmem:[%s236 + $0x4] sm:$0xf]
      %v254 = vld [vmem:[%s236 + $0x8] sm:$0xf]
      %v255 = vld [vmem:[%s236 + $0xc] sm:$0xf]
      %v256 = vld [vmem:[%s236 + $0x10] sm:$0xf]
      %v257 = vld [vmem:[%s236 + $0x14] sm:$0xf]
      %v258 = vld [vmem:[%s236 + $0x18] sm:$0xf]
      %v259 = vld [vmem:[%s236 + $0x1c] sm:$0xf]
      %v260 = vunpack.c.l.bf16 %v252
      %v261 = vunpack.c.l.bf16 %v253
      %v262 = vunpack.c.l.bf16 %v254
      %v263 = vunpack.c.l.bf16 %v255
      %v264 = vunpack.c.l.bf16 %v256
      %v265 = vunpack.c.l.bf16 %v257
      %v266 = vunpack.c.l.bf16 %v258
      %v267 = vunpack.c.l.bf16 %v259
      %v268 = vld [vmem:[%s240] sm:$0x1]
      %v270 = vlaneseq
      %v271 = vshrl.u32 %v270, 7
      %v272 = vsub.s32 0, %v271
      %v273 = vrot.slane %v268, %v272
      %v275 = vmul.f32 %v260, %v273
      %v276 = vmul.f32 %v261, %v273
      %v277 = vmul.f32 %v262, %v273
      %v278 = vmul.f32 %v263, %v273
      %v279 = vmul.f32 %v264, %v273
      %v280 = vmul.f32 %v265, %v273
      %v281 = vmul.f32 %v266, %v273
      %v282 = vmul.f32 %v267, %v273
      %v283 = vpack.c.bf16 %v276, %v275
      %v284 = vpack.c.bf16 %v278, %v277
      %v285 = vpack.c.bf16 %v280, %v279
      %v286 = vpack.c.bf16 %v282, %v281
      %v287 = vld [vmem:[%s1] sm:$0xf]
      %v288 = vld [vmem:[%s1 + $0x4] sm:$0xf]
      %v289 = vld [vmem:[%s2] sm:$0x1]
      %v291 = vlaneseq
      %v292 = vshrl.u32 %v291, 7
      %v293 = vsub.s32 0, %v292
      %v294 = vrot.slane %v289, %v293
      %v298 = vunpack.c.l.b16 %v287
      %v299 = vunpack.c.l.b16 %v288
      %v300 = vpack.c.b16 %v299, %v298
      %vm302 = vcmask 130048
      %v304 = vsel %vm302, %v283, 0
      %v307 = vsel %vm302, %v284, 0
      %v310 = vsel %vm302, %v285, 0
      %v313 = vsel %vm302, %v286, 0
      %315 = vmatprep.subr.bf16.mxu0 0
      %316 = vmatpush1.bf16.msra.mxu0 0
      %317 = vmatprep.subr.bf16.mxu0 0
      %318 = vmatpush1.bf16.msra.mxu0 0
      %319 = vmatprep.subr.bf16.mxu0 0
      %320 = vmatpush1.bf16.msra.mxu0 0
      %321 = vmatprep.subr.bf16.mxu0 0
      %322 = vmatpush1.bf16.msra.mxu0 0
      %323 = vmatprep.subr.bf16.mxu0 0
      %324 = vmatpush1.bf16.msra.mxu0 0
      %325 = vmatprep.subr.bf16.mxu0 0
      %326 = vmatpush1.bf16.msra.mxu0 0
      %327 = vmatprep.subr.bf16.mxu0 0
      %328 = vmatpush1.bf16.msra.mxu0 0
      %329 = vmatprep.subr.bf16.mxu0 0
      %330 = vmatpush1.bf16.msra.mxu0 %v300
      %331 = vmatprep.subr.bf16.mxu0 0
      %332 = vmatpush2.bf16.msra.mxu0 0
      %333 = vmatprep.subr.bf16.mxu0 0
      %334 = vmatpush2.bf16.msra.mxu0 0
      %335 = vmatprep.subr.bf16.mxu0 0
      %336 = vmatpush2.bf16.msra.mxu0 0
      %337 = vmatprep.subr.bf16.mxu0 0
      %338 = vmatpush2.bf16.msra.mxu0 0
      %339 = vmatprep.subr.bf16.mxu0 0
      %340 = vmatpush2.bf16.msra.mxu0 0
      %341 = vmatprep.subr.bf16.mxu0 0
      %342 = vmatpush2.bf16.msra.mxu0 0
      %343 = vmatprep.subr.bf16.mxu0 0
      %344 = vmatpush2.bf16.msra.mxu0 0
      %345 = vmatprep.subr.bf16.mxu0 0
      %346 = vmatpush2.bf16.msra.mxu0 0
      %347 = vmatprep.mubr.bf16.mxu0 0
      %348 = vmatmul.mubr.bf16.gmra.mxu0 %v304
      %v349 = vpop.f32.mrf.mxu0
      %v350 = vadd.f32 %v294, %v349
      %v351 = vpop.f32.mrf.mxu0
      %v352 = vpop.f32.mrf.mxu0
      %v353 = vadd.f32 %v294, %v352
      %v354 = vpop.f32.mrf.mxu0
      %355 = vmatprep.mubr.bf16.mxu0 0
      %356 = vmatmul.mubr.bf16.gmra.mxu0 %v307
      %v357 = vpop.f32.mrf.mxu0
      %v358 = vadd.f32 %v294, %v357
      %v359 = vpop.f32.mrf.mxu0
      %v360 = vpop.f32.mrf.mxu0
      %v361 = vadd.f32 %v294, %v360
      %v362 = vpop.f32.mrf.mxu0
      %363 = vmatprep.mubr.bf16.mxu0 0
      %364 = vmatmul.mubr.bf16.gmra.mxu0 %v310
      %v365 = vpop.f32.mrf.mxu0
      %v366 = vadd.f32 %v294, %v365
      %v367 = vpop.f32.mrf.mxu0
      %v368 = vpop.f32.mrf.mxu0
      %v369 = vadd.f32 %v294, %v368
      %v370 = vpop.f32.mrf.mxu0
      %371 = vmatprep.mubr.bf16.mxu0 0
      %372 = vmatmul.mubr.bf16.gmra.mxu0 %v313
      %v373 = vpop.f32.mrf.mxu0
      %v374 = vadd.f32 %v294, %v373
      %v375 = vpop.f32.mrf.mxu0
      %v376 = vpop.f32.mrf.mxu0
      %v377 = vadd.f32 %v294, %v376
      %v378 = vpop.f32.mrf.mxu0
      %379 = vdwg.mxu0
      %v380 = vpack.c.bf16 %v353, %v350
      %v381 = vpack.c.bf16 %v361, %v358
      %v382 = vpack.c.bf16 %v369, %v366
      %v383 = vpack.c.bf16 %v377, %v374
      %v388 = vunpack.c.l.b16 %v380
      %v389 = vunpack.c.h.b16 %v380
      %v390 = vunpack.c.l.b16 %v381
      %v391 = vunpack.c.h.b16 %v381
      %v392 = vunpack.c.l.b16 %v382
      %v393 = vunpack.c.h.b16 %v382
      %v394 = vunpack.c.l.b16 %v383
      %v395 = vunpack.c.h.b16 %v383
      %v396 = vpack.c.b16 %v388, %v388
      %v397 = vpack.c.b16 %v389, %v389
      %v398 = vpack.c.b16 %v390, %v390
      %v399 = vpack.c.b16 %v391, %v391
      %v400 = vpack.c.b16 %v392, %v392
      %v401 = vpack.c.b16 %v393, %v393
      %v402 = vpack.c.b16 %v394, %v394
      %v403 = vpack.c.b16 %v395, %v395
      %vm412 = vcmask 125952
      %413 = vst.msk [vmem:[%s249] sm:$0xf] %vm412, %v396
      %414 = vst.msk [vmem:[%s249 + $0x4] sm:$0xf] %vm412, %v397
      %415 = vst.msk [vmem:[%s249 + $0x8] sm:$0xf] %vm412, %v398
      %416 = vst.msk [vmem:[%s249 + $0xc] sm:$0xf] %vm412, %v399
      %417 = vst.msk [vmem:[%s249 + $0x10] sm:$0xf] %vm412, %v400
      %418 = vst.msk [vmem:[%s249 + $0x14] sm:$0xf] %vm412, %v401
      %419 = vst.msk [vmem:[%s249 + $0x18] sm:$0xf] %vm412, %v402
      %420 = vst.msk [vmem:[%s249 + $0x1c] sm:$0xf] %vm412, %v403
      %s421 = smul.u32 8, %s20
      %p422 = scmp.lt.s32.totalorder %s19, 1
      %s423 = scalar_select %p422, %s19, 1
      %p424 = scmp.lt.s32.totalorder %s421, 7
      %s425 = scalar_select %p424, %s421, 7
      %s426 = smul.addr %s423, 8
      %s427 = sadd.s32 %s425, %s426
      %s428 = smul.addr %s427, 4
      %s429 = scalar_lea.vmem %s4, %s428
      // Predicated region
      $region37: #{fwd.16} parent=35 // pred_check
        %p430 = pneg %p143
      $region38: #{fwd.16} parent=35 // pred_check_branch
        %432 = sbr.rel (%p430) target = $region40
      $region39: #{fwd.16} parent=35 // pred_region
        %s433 = smul.u32 8, %s20
      $region40: #{fwd.16} parent=35 // pred_fallthru
        _
    $region36: #{fwd.16} parent=5 // pred_fallthru
      _
    %p434 = scmp.le.s32.totalorder 2, %s10
    // Predicated region
    $region41: #{fwd.16} parent=5 // pred_check
      %p435 = pneg %p434
    $region42: #{fwd.16} parent=5 // pred_check_branch
      %437 = sbr.rel (%p435) target = $region44
    $region43: #{fwd.16} parent=5 // pred_region
      %s438 = ssub.s32 %s10, 2
      // Predicated region
      $region45: #{fwd.16} parent=43 // pred_check
        %p439 = pneg %p149
      $region46: #{fwd.16} parent=43 // pred_check_branch
        %441 = sbr.rel (%p439) target = $region48
      $region47: #{fwd.16} parent=43 // pred_region
        %s442 = smul.u32 8, %s22
        %p443 = scmp.lt.s32.totalorder %s21, 1
        %s444 = scalar_select %p443, %s21, 1
        %p445 = scmp.lt.s32.totalorder %s442, 7
        %s446 = scalar_select %p445, %s442, 7
        %s447 = smul.addr %s444, 8
        %s448 = sadd.s32 %s446, %s447
        %s449 = smul.addr %s448, 4
        %s450 = scalar_lea.vmem %s4, %s449
      $region48: #{fwd.16} parent=43 // pred_fallthru
        _
    $region44: #{fwd.16} parent=5 // pred_fallthru
      _
  $region6: #{fwd.16} parent=0 // loop_footer
    %s14 = sadd.s32 1, %s10
  $region7: #{fwd.16} parent=0 // loop_footer_branch
    %9 = sbr.rel target = $region3
  $region8: #{fwd.16} parent=0 // loop_exit
    _

// kernel: fwd.15
$region0: #{fwd.15}
  #allocation0 [shape = 'u32[]', space=smem, size = 0x4, offset = 0x4, fixed_abs, tag = 'smem constant byte address 0x4 - core index']
  #allocation1 [shape = 'u32[144,128]{1,0:T(1,128)}', space=vmem, size = 0x12000, scoped, tag = 'internal scratch']
  %s0 = inlined_call_operand.vmem [shape: bf16[2,64,16], index: 0, kind: input, shape index: {}]
  %s1 = inlined_call_operand.vmem [shape: bf16[16,8], index: 1, kind: input, shape index: {}]
  %s2 = inlined_call_operand.vmem [shape: f32[1,8], index: 2, kind: input, shape index: {}]
  %s3 = inlined_call_operand.vmem [shape: bf16[8,16], index: 3, kind: input, shape index: {}]
  %s4 = inlined_call_operand.vmem [shape: f32[1,16], index: 4, kind: input, shape index: {}]
  %s5 = inlined_call_operand.vmem [shape: f32[2,1,16], index: 5, kind: output, shape index: {}]
  %s6 = sld [smem:[#allocation0]]
  $region53: #{fwd.15} parent=0
    _
  %s8 = ssub.s32 1, %s6
  %s9 = scalar_select 0, %s8, %s6
  loop: start=0, step=1, limit=4
  $region2: #{fwd.15} parent=0 // loop_pre_header
    _
  $region3: #{fwd.15} parent=0 // loop_header
    %s11 = sphi 0, %s15
    %p12 = scmp.ge.s32.totalorder %s11, 4
    %s21 = sphi 0, %s23
    %s24 = sphi 0, %s21
    %s25 = sphi 0, %s24
    %s41 = sphi 0, %s25
    %s45 = sphi 0, %s45
    %s47 = sphi 0, %s45
    %s48 = sphi 0, %s47
    %s62 = sphi 0, %s48
    %s66 = sphi 0, %s66
    %s68 = sphi 0, %s66
    %s69 = sphi 0, %s68
    %s83 = sphi 0, %s69
    %s87 = sphi 0, %s87
    %s89 = sphi 0, %s87
    %s90 = sphi 0, %s89
    %s104 = sphi 0, %s90
    %s108 = sphi 0, %s108
    %s110 = sphi 0, %s108
    %s111 = sphi 0, %s110
    %s125 = sphi 0, %s111
    %s131 = sphi 0, %s133
    %s134 = sphi 0, %s131
    %s135 = sphi 0, %s134
    %s151 = sphi 0, %s135
  $region4: #{fwd.15} parent=0 // loop_header_branch
    %14 = sbr.rel (%p12) target = $region8
  $region5: #{fwd.15} parent=0 // loop_body
    %s16 = ssub.s32 %s11, 1
    %s17 = ssub.s32 %s11, 2
    %s18 = sadd.s32 %s11, 1
    %s19 = ssub.s32 %s11, %s18
    %p20 = scmp.eq.s32.totalorder %s19, 0
    %s22 = sadd.s32 %s21, 1
    %s23 = scalar_select %p20, %s21, %s22
    %p26 = pneg %p20
    %p27 = scmp.eq.s32.totalorder %s11, 1
    %p28 = por %p26, %p27
    %p29 = scmp.ne.s32.totalorder %s21, %s24
    %p30 = scmp.eq.s32.totalorder %s11, 0
    %p31 = por %p29, %p30
    %p32 = scmp.ne.s32.totalorder %s21, %s24
    %p33 = scmp.eq.s32.totalorder %s16, 1
    %p34 = por %p32, %p33
    %p35 = scmp.ne.s32.totalorder %s24, %s25
    %p36 = scmp.eq.s32.totalorder %s16, 0
    %p37 = por %p35, %p36
    %p38 = scmp.ne.s32.totalorder %s24, %s25
    %p39 = scmp.eq.s32.totalorder %s17, 1
    %p40 = por %p38, %p39
    %p42 = scmp.ne.s32.totalorder %s25, %s41
    %p43 = scmp.eq.s32.totalorder %s17, 0
    %p44 = por %p42, %p43
    %s46 = sadd.s32 %s45, 1
    %p49 = scmp.eq.s32.totalorder %s11, 1
    %p50 = scmp.ne.s32.totalorder %s45, %s47
    %p51 = scmp.eq.s32.totalorder %s11, 0
    %p52 = por %p50, %p51
    %p53 = scmp.ne.s32.totalorder %s45, %s47
    %p54 = scmp.eq.s32.totalorder %s16, 1
    %p55 = por %p53, %p54
    %p56 = scmp.ne.s32.totalorder %s47, %s48
    %p57 = scmp.eq.s32.totalorder %s16, 0
    %p58 = por %p56, %p57
    %p59 = scmp.ne.s32.totalorder %s47, %s48
    %p60 = scmp.eq.s32.totalorder %s17, 1
    %p61 = por %p59, %p60
    %p63 = scmp.ne.s32.totalorder %s48, %s62
    %p64 = scmp.eq.s32.totalorder %s17, 0
    %p65 = por %p63, %p64
    %s67 = sadd.s32 %s66, 1
    %p70 = scmp.eq.s32.totalorder %s11, 1
    %p71 = scmp.ne.s32.totalorder %s66, %s68
    %p72 = scmp.eq.s32.totalorder %s11, 0
    %p73 = por %p71, %p72
    %p74 = scmp.ne.s32.totalorder %s66, %s68
    %p75 = scmp.eq.s32.totalorder %s16, 1
    %p76 = por %p74, %p75
    %p77 = scmp.ne.s32.totalorder %s68, %s69
    %p78 = scmp.eq.s32.totalorder %s16, 0
    %p79 = por %p77, %p78
    %p80 = scmp.ne.s32.totalorder %s68, %s69
    %p81 = scmp.eq.s32.totalorder %s17, 1
    %p82 = por %p80, %p81
    %p84 = scmp.ne.s32.totalorder %s69, %s83
    %p85 = scmp.eq.s32.totalorder %s17, 0
    %p86 = por %p84, %p85
    %s88 = sadd.s32 %s87, 1
    %p91 = scmp.eq.s32.totalorder %s11, 1
    %p92 = scmp.ne.s32.totalorder %s87, %s89
    %p93 = scmp.eq.s32.totalorder %s11, 0
    %p94 = por %p92, %p93
    %p95 = scmp.ne.s32.totalorder %s87, %s89
    %p96 = scmp.eq.s32.totalorder %s16, 1
    %p97 = por %p95, %p96
    %p98 = scmp.ne.s32.totalorder %s89, %s90
    %p99 = scmp.eq.s32.totalorder %s16, 0
    %p100 = por %p98, %p99
    %p101 = scmp.ne.s32.totalorder %s89, %s90
    %p102 = scmp.eq.s32.totalorder %s17, 1
    %p103 = por %p101, %p102
    %p105 = scmp.ne.s32.totalorder %s90, %s104
    %p106 = scmp.eq.s32.totalorder %s17, 0
    %p107 = por %p105, %p106
    %s109 = sadd.s32 %s108, 1
    %p112 = scmp.eq.s32.totalorder %s11, 1
    %p113 = scmp.ne.s32.totalorder %s108, %s110
    %p114 = scmp.eq.s32.totalorder %s11, 0
    %p115 = por %p113, %p114
    %p116 = scmp.ne.s32.totalorder %s108, %s110
    %p117 = scmp.eq.s32.totalorder %s16, 1
    %p118 = por %p116, %p117
    %p119 = scmp.ne.s32.totalorder %s110, %s111
    %p120 = scmp.eq.s32.totalorder %s16, 0
    %p121 = por %p119, %p120
    %p122 = scmp.ne.s32.totalorder %s110, %s111
    %p123 = scmp.eq.s32.totalorder %s17, 1
    %p124 = por %p122, %p123
    %p126 = scmp.ne.s32.totalorder %s111, %s125
    %p127 = scmp.eq.s32.totalorder %s17, 0
    %p128 = por %p126, %p127
    %s129 = ssub.s32 %s11, %s18
    %p130 = scmp.eq.s32.totalorder %s129, 0
    %s132 = sadd.s32 %s131, 1
    %s133 = scalar_select %p130, %s131, %s132
    %p136 = pneg %p130
    %p137 = scmp.eq.s32.totalorder %s11, 1
    %p138 = por %p136, %p137
    %p139 = scmp.ne.s32.totalorder %s131, %s134
    %p140 = scmp.eq.s32.totalorder %s11, 0
    %p141 = por %p139, %p140
    %p142 = scmp.ne.s32.totalorder %s131, %s134
    %p143 = scmp.eq.s32.totalorder %s16, 1
    %p144 = por %p142, %p143
    %p145 = scmp.ne.s32.totalorder %s134, %s135
    %p146 = scmp.eq.s32.totalorder %s16, 0
    %p147 = por %p145, %p146
    %p148 = scmp.ne.s32.totalorder %s134, %s135
    %p149 = scmp.eq.s32.totalorder %s17, 1
    %p150 = por %p148, %p149
    %p152 = scmp.ne.s32.totalorder %s135, %s151
    %p153 = scmp.eq.s32.totalorder %s17, 0
    %p154 = por %p152, %p153
    %p155 = scmp.le.s32.totalorder 1, %s11
    %p156 = scmp.lt.s32.totalorder %s11, 3
    %p157 = pnand %p155, %p156
    %p158 = pneg %p157
    // Predicated region
    $region9: #{fwd.15} parent=5 // pred_check
      _
    $region10: #{fwd.15} parent=5 // pred_check_branch
      %160 = sbr.rel (%p157) target = $region12
    $region11: #{fwd.15} parent=5 // pred_region
      %s161 = ssub.s32 %s11, 1
      // Predicated region
      $region13: #{fwd.15} parent=11 // pred_check
        %p162 = pneg %p58
      $region14: #{fwd.15} parent=11 // pred_check_branch
        %164 = sbr.rel (%p162) target = $region16
      $region15: #{fwd.15} parent=11 // pred_region
        _
      $region16: #{fwd.15} parent=11 // pred_fallthru
        _
      // Predicated region
      $region17: #{fwd.15} parent=11 // pred_check
        %p165 = pneg %p79
      $region18: #{fwd.15} parent=11 // pred_check_branch
        %167 = sbr.rel (%p165) target = $region20
      $region19: #{fwd.15} parent=11 // pred_region
        _
      $region20: #{fwd.15} parent=11 // pred_fallthru
        _
      // Predicated region
      $region21: #{fwd.15} parent=11 // pred_check
        %p168 = pneg %p100
      $region22: #{fwd.15} parent=11 // pred_check_branch
        %170 = sbr.rel (%p168) target = $region24
      $region23: #{fwd.15} parent=11 // pred_region
        _
      $region24: #{fwd.15} parent=11 // pred_fallthru
        _
      // Predicated region
      $region25: #{fwd.15} parent=11 // pred_check
        %p171 = pneg %p121
      $region26: #{fwd.15} parent=11 // pred_check_branch
        %173 = sbr.rel (%p171) target = $region28
      $region27: #{fwd.15} parent=11 // pred_region
        _
      $region28: #{fwd.15} parent=11 // pred_fallthru
        _
    $region12: #{fwd.15} parent=5 // pred_fallthru
      _
    %p174 = scmp.lt.s32.totalorder %s11, 2
    // Predicated region
    $region29: #{fwd.15} parent=5 // pred_check
      %p175 = pneg %p174
    $region30: #{fwd.15} parent=5 // pred_check_branch
      %177 = sbr.rel (%p175) target = $region32
    $region31: #{fwd.15} parent=5 // pred_region
      // Predicated region
      $region33: #{fwd.15} parent=31 // pred_check
        %p178 = pneg %p31
      $region34: #{fwd.15} parent=31 // pred_check_branch
        %180 = sbr.rel (%p178) target = $region36
      $region35: #{fwd.15} parent=31 // pred_region
        %p181 = scmp.lt.s32.totalorder %s11, 1
        %s182 = scalar_select %p181, %s11, 1
        %s183 = smul.addr %s182, 8
        %s184 = smul.addr %s183, 4
        %s185 = scalar_lea.vmem %s0, %s184
      $region36: #{fwd.15} parent=31 // pred_fallthru
        _
    $region32: #{fwd.15} parent=5 // pred_fallthru
      _
    %p186 = scmp.le.s32.totalorder 1, %s11
    %p187 = scmp.lt.s32.totalorder %s11, 3
    %p188 = pnand %p186, %p187
    %p189 = pneg %p188
    // Predicated region
    $region37: #{fwd.15} parent=5 // pred_check
      _
    $region38: #{fwd.15} parent=5 // pred_check_branch
      %191 = sbr.rel (%p188) target = $region40
    $region39: #{fwd.15} parent=5 // pred_region
      %s192 = ssub.s32 %s11, 1
      %p193 = scmp.lt.s32.totalorder %s16, 1
      %s194 = scalar_select %p193, %s16, 1
      %s195 = smul.addr %s194, 8
      %s196 = smul.addr %s195, 4
      %s197 = scalar_lea.vmem %s0, %s196
      %p198 = pneg %p37
      %p199 = pneg %p34
      %p200 = pneg %p58
      %p201 = pneg %p55
      %p202 = pneg %p79
      %p203 = pneg %p76
      %p204 = pneg %p100
      %p205 = pneg %p97
      %p206 = pneg %p121
      %p207 = pneg %p118
      %p208 = pneg %p147
      %p209 = pneg %p144
      %p210 = scmp.lt.s32.totalorder %s16, 1
      %s211 = scalar_select %p210, %s16, 1
      %s212 = scalar_lea.vmem %s5, %s211
      %p213 = scmp.lt.s32.totalorder %s16, 1
      %s214 = scalar_select %p213, %s16, 1
      %s215 = smul.addr %s214, 8
      %s216 = smul.addr %s215, 4
      %s217 = scalar_lea.vmem %s0, %s216
      %p218 = scmp.lt.s32.totalorder %s16, 1
      %s219 = scalar_select %p218, %s16, 1
      %s220 = scalar_lea.vmem %s5, %s219
      %v222 = vld [vmem:[%s217] sm:$0xf]
      %v223 = vld [vmem:[%s217 + $0x4] sm:$0xf]
      %v224 = vld [vmem:[%s217 + $0x8] sm:$0xf]
      %v225 = vld [vmem:[%s217 + $0xc] sm:$0xf]
      %v226 = vld [vmem:[%s217 + $0x10] sm:$0xf]
      %v227 = vld [vmem:[%s217 + $0x14] sm:$0xf]
      %v228 = vld [vmem:[%s217 + $0x18] sm:$0xf]
      %v229 = vld [vmem:[%s217 + $0x1c] sm:$0xf]
      %v230 = vunpack.c.l.bf16 %v222
      %v231 = vunpack.c.l.bf16 %v223
      %v232 = vunpack.c.l.bf16 %v224
      %v233 = vunpack.c.l.bf16 %v225
      %v234 = vunpack.c.l.bf16 %v226
      %v235 = vunpack.c.l.bf16 %v227
      %v236 = vunpack.c.l.bf16 %v228
      %v237 = vunpack.c.l.bf16 %v229
      %vm238 = vcmask 130048
      %v239 = vsel %vm238, %v230, 0.0
      %v240 = vsel %vm238, %v231, 0.0
      %v241 = vadd.f32 %v239, %v240
      %v242 = vsel %vm238, %v232, 0.0
      %v243 = vadd.f32 %v241, %v242
      %v244 = vsel %vm238, %v233, 0.0
      %v245 = vadd.f32 %v243, %v244
      %v246 = vsel %vm238, %v234, 0.0
      %v247 = vadd.f32 %v245, %v246
      %v248 = vsel %vm238, %v235, 0.0
      %v249 = vadd.f32 %v247, %v248
      %v250 = vsel %vm238, %v236, 0.0
      %v251 = vadd.f32 %v249, %v250
      %v252 = vsel %vm238, %v237, 0.0
      %v253 = vadd.f32 %v251, %v252
      %v254 = vrot.slane %v253, 4
      %v255 = vadd.f32 %v253, %v254
      %v256 = vrot.slane %v255, 2
      %v257 = vadd.f32 %v255, %v256
      %v258 = vrot.slane %v257, 1
      %v259 = vadd.f32 %v257, %v258
      %v260 = vrcp.pop 64.0
      %v261 = vmul.f32 %v259, %v260
      %v262 = vpack.c.bf16 %v261, %v261
      %v263 = vld [vmem:[%s1] sm:$0xf]
      %v264 = vld [vmem:[%s1 + $0x4] sm:$0xf]
      %v265 = vld [vmem:[%s2] sm:$0x1]
      %v268 = vunpack.c.l.b16 %v263
      %v269 = vunpack.c.l.b16 %v264
      %v270 = vpack.c.b16 %v269, %v268
      %v273 = vsel %vm238, %v262, 0
      %275 = vmatprep.subr.bf16.mxu0 0
      %276 = vmatpush1.bf16.msra.mxu0 0
      %277 = vmatprep.subr.bf16.mxu0 0
      %278 = vmatpush1.bf16.msra.mxu0 0
      %279 = vmatprep.subr.bf16.mxu0 0
      %280 = vmatpush1.bf16.msra.mxu0 0
      %281 = vmatprep.subr.bf16.mxu0 0
      %282 = vmatpush1.bf16.msra.mxu0 0
      %283 = vmatprep.subr.bf16.mxu0 0
      %284 = vmatpush1.bf16.msra.mxu0 0
      %285 = vmatprep.subr.bf16.mxu0 0
      %286 = vmatpush1.bf16.msra.mxu0 0
      %287 = vmatprep.subr.bf16.mxu0 0
      %288 = vmatpush1.bf16.msra.mxu0 0
      %289 = vmatprep.subr.bf16.mxu0 0
      %290 = vmatpush1.bf16.msra.mxu0 %v270
      %291 = vmatprep.subr.bf16.mxu0 0
      %292 = vmatpush2.bf16.msra.mxu0 0
      %293 = vmatprep.subr.bf16.mxu0 0
      %294 = vmatpush2.bf16.msra.mxu0 0
      %295 = vmatprep.subr.bf16.mxu0 0
      %296 = vmatpush2.bf16.msra.mxu0 0
      %297 = vmatprep.subr.bf16.mxu0 0
      %298 = vmatpush2.bf16.msra.mxu0 0
      %299 = vmatprep.subr.bf16.mxu0 0
      %300 = vmatpush2.bf16.msra.mxu0 0
      %301 = vmatprep.subr.bf16.mxu0 0
      %302 = vmatpush2.bf16.msra.mxu0 0
      %303 = vmatprep.subr.bf16.mxu0 0
      %304 = vmatpush2.bf16.msra.mxu0 0
      %305 = vmatprep.subr.bf16.mxu0 0
      %306 = vmatpush2.bf16.msra.mxu0 0
      %307 = vmatprep.mubr.bf16.mxu0 0
      %308 = vmatmul.mubr.bf16.gmra.mxu0 %v273
      %v309 = vpop.f32.mrf.mxu0
      %v310 = vadd.f32 %v265, %v309
      %v311 = vpop.f32.mrf.mxu0
      %v312 = vpop.f32.mrf.mxu0
      %v313 = vpop.f32.mrf.mxu0
      %314 = vdwg.mxu0
      %v315 = vmax.f32 %v310, 0.0
      %v316 = vpack.c.bf16 %v315, %v315
      %v317 = vld [vmem:[%s3] sm:$0xf]
      %v318 = vld [vmem:[%s4] sm:$0x1]
      %vm319 = vcmask 64512
      %v321 = vsel %vm319, %v316, 0
      %vm323 = vcmask 1043456
      %v325 = vsel %vm323, %v317, 0
      %327 = vmatprep.subr.bf16.mxu0 0
      %328 = vmatpush1.bf16.msra.mxu0 0
      %329 = vmatprep.subr.bf16.mxu0 0
      %330 = vmatpush1.bf16.msra.mxu0 0
      %331 = vmatprep.subr.bf16.mxu0 0
      %332 = vmatpush1.bf16.msra.mxu0 0
      %333 = vmatprep.subr.bf16.mxu0 0
      %334 = vmatpush1.bf16.msra.mxu0 0
      %335 = vmatprep.subr.bf16.mxu0 0
      %336 = vmatpush1.bf16.msra.mxu0 0
      %337 = vmatprep.subr.bf16.mxu0 0
      %338 = vmatpush1.bf16.msra.mxu0 0
      %339 = vmatprep.subr.bf16.mxu0 0
      %340 = vmatpush1.bf16.msra.mxu0 0
      %341 = vmatprep.subr.bf16.mxu0 0
      %342 = vmatpush1.bf16.msra.mxu0 %v325
      %343 = vmatprep.subr.bf16.mxu0 0
      %344 = vmatpush2.bf16.msra.mxu0 0
      %345 = vmatprep.subr.bf16.mxu0 0
      %346 = vmatpush2.bf16.msra.mxu0 0
      %347 = vmatprep.subr.bf16.mxu0 0
      %348 = vmatpush2.bf16.msra.mxu0 0
      %349 = vmatprep.subr.bf16.mxu0 0
      %350 = vmatpush2.bf16.msra.mxu0 0
      %351 = vmatprep.subr.bf16.mxu0 0
      %352 = vmatpush2.bf16.msra.mxu0 0
      %353 = vmatprep.subr.bf16.mxu0 0
      %354 = vmatpush2.bf16.msra.mxu0 0
      %355 = vmatprep.subr.bf16.mxu0 0
      %356 = vmatpush2.bf16.msra.mxu0 0
      %357 = vmatprep.subr.bf16.mxu0 0
      %358 = vmatpush2.bf16.msra.mxu0 0
      %359 = vmatprep.mubr.bf16.mxu0 0
      %360 = vmatmul.mubr.bf16.gmra.mxu0 %v321
      %v361 = vpop.f32.mrf.mxu0
      %v362 = vadd.f32 %v318, %v361
      %v363 = vpop.f32.mrf.mxu0
      %v364 = vpop.f32.mrf.mxu0
      %v365 = vpop.f32.mrf.mxu0
      %366 = vdwg.mxu0
      %v367 = vadd.f32 %v362, 3.0
      %v368 = vmax.f32 %v367, 0.0
      %v369 = vmin.f32 %v368, 6.0
      %v370 = vmul.f32 %v369, 0.16666667
      %vm371 = vcmask 122880
      %372 = vst.msk [vmem:[%s220] sm:$0x1] %vm371, %v370
      %p373 = scmp.lt.s32.totalorder %s16, 1
      %s374 = scalar_select %p373, %s16, 1
      %s375 = scalar_lea.vmem %s5, %s374
      // Predicated region
      $region41: #{fwd.15} parent=39 // pred_check
        %p376 = pneg %p144
      $region42: #{fwd.15} parent=39 // pred_check_branch
        %378 = sbr.rel (%p376) target = $region44
      $region43: #{fwd.15} parent=39 // pred_region
        _
      $region44: #{fwd.15} parent=39 // pred_fallthru
        _
    $region40: #{fwd.15} parent=5 // pred_fallthru
      _
    %p379 = scmp.le.s32.totalorder 2, %s11
    // Predicated region
    $region45: #{fwd.15} parent=5 // pred_check
      %p380 = pneg %p379
    $region46: #{fwd.15} parent=5 // pred_check_branch
      %382 = sbr.rel (%p380) target = $region48
    $region47: #{fwd.15} parent=5 // pred_region
      %s383 = ssub.s32 %s11, 2
      // Predicated region
      $region49: #{fwd.15} parent=47 // pred_check
        %p384 = pneg %p150
      $region50: #{fwd.15} parent=47 // pred_check_branch
        %386 = sbr.rel (%p384) target = $region52
      $region51: #{fwd.15} parent=47 // pred_region
        %p387 = scmp.lt.s32.totalorder %s17, 1
        %s388 = scalar_select %p387, %s17, 1
        %s389 = scalar_lea.vmem %s5, %s388
      $region52: #{fwd.15} parent=47 // pred_fallthru
        _
    $region48: #{fwd.15} parent=5 // pred_fallthru
      _
  $region6: #{fwd.15} parent=0 // loop_footer
    %s15 = sadd.s32 1, %s11
  $region7: #{fwd.15} parent=0 // loop_footer_branch
    %10 = sbr.rel target = $region3
  $region8: #{fwd.15} parent=0 // loop_exit
    _

// kernel: fwd.17
$region0: #{fwd.17}
  #allocation0 [shape = 'u32[]', space=smem, size = 0x4, offset = 0x4, fixed_abs, tag = 'smem constant byte address 0x4 - core index']
  #allocation1 [shape = 'u32[144,128]{1,0:T(1,128)}', space=vmem, size = 0x12000, scoped, tag = 'internal scratch']
  %s0 = inlined_call_operand.vmem [shape: bf16[2,64,16], index: 0, kind: input, shape index: {}]
  %s1 = inlined_call_operand.vmem [shape: bf16[16,72], index: 1, kind: input, shape index: {}]
  %s2 = inlined_call_operand.vmem [shape: f32[1,72], index: 2, kind: input, shape index: {}]
  %s3 = inlined_call_operand.vmem [shape: bf16[2,64,72], index: 3, kind: output, shape index: {}]
  %s4 = sld [smem:[#allocation0]]
  $region45: #{fwd.17} parent=0
    _
  %s6 = ssub.s32 1, %s4
  %s7 = scalar_select 0, %s6, %s4
  loop: start=0, step=1, limit=4
  $region2: #{fwd.17} parent=0 // loop_pre_header
    _
  $region3: #{fwd.17} parent=0 // loop_header
    %s9 = sphi 0, %s13
    %p10 = scmp.ge.s32.totalorder %s9, 4
    %s16 = sphi 0, %s28
    %s17 = sphi 0, %s24
    %s18 = sphi 0, %s16
    %s19 = sphi 0, %s17
    %s20 = sphi 0, %s18
    %s21 = sphi 0, %s19
    %s33 = sphi 0, %s35
    %s36 = sphi 0, %s33
    %s37 = sphi 0, %s36
    %s53 = sphi 0, %s37
    %s57 = sphi 0, %s57
    %s59 = sphi 0, %s57
    %s60 = sphi 0, %s59
    %s74 = sphi 0, %s60
    %s78 = sphi 0, %s78
    %s80 = sphi 0, %s78
    %s81 = sphi 0, %s80
    %s95 = sphi 0, %s81
    %s103 = sphi 0, %s105
    %s106 = sphi 0, %s103
    %s107 = sphi 0, %s106
    %s123 = sphi 0, %s107
  $region4: #{fwd.17} parent=0 // loop_header_branch
    %12 = sbr.rel (%p10) target = $region8
  $region5: #{fwd.17} parent=0 // loop_body
    %s14 = ssub.s32 %s9, 1
    %s15 = ssub.s32 %s9, 2
    %s22 = sadd.s32 1, %s17
    %p23 = scmp.ge.s32.totalorder %s22, 1
    %s24 = scalar_select %p23, 0, %s22
    %s25 = sadd.s32 1, %s16
    %s26 = scalar_select %p23, %s25, %s16
    %p27 = scmp.ge.s32.totalorder %s26, 2
    %s28 = scalar_select %p27, 0, %s26
    %s29 = ssub.s32 %s16, %s28
    %s30 = ssub.s32 %s17, %s24
    %s31 = sor.u32 %s29, %s30
    %p32 = scmp.eq.s32.totalorder %s31, 0
    %s34 = sadd.s32 %s33, 1
    %s35 = scalar_select %p32, %s33, %s34
    %p38 = pneg %p32
    %p39 = scmp.eq.s32.totalorder %s9, 1
    %p40 = por %p38, %p39
    %p41 = scmp.ne.s32.totalorder %s33, %s36
    %p42 = scmp.eq.s32.totalorder %s9, 0
    %p43 = por %p41, %p42
    %p44 = scmp.ne.s32.totalorder %s33, %s36
    %p45 = scmp.eq.s32.totalorder %s14, 1
    %p46 = por %p44, %p45
    %p47 = scmp.ne.s32.totalorder %s36, %s37
    %p48 = scmp.eq.s32.totalorder %s14, 0
    %p49 = por %p47, %p48
    %p50 = scmp.ne.s32.totalorder %s36, %s37
    %p51 = scmp.eq.s32.totalorder %s15, 1
    %p52 = por %p50, %p51
    %p54 = scmp.ne.s32.totalorder %s37, %s53
    %p55 = scmp.eq.s32.totalorder %s15, 0
    %p56 = por %p54, %p55
    %s58 = sadd.s32 %s57, 1
    %p61 = scmp.eq.s32.totalorder %s9, 1
    %p62 = scmp.ne.s32.totalorder %s57, %s59
    %p63 = scmp.eq.s32.totalorder %s9, 0
    %p64 = por %p62, %p63
    %p65 = scmp.ne.s32.totalorder %s57, %s59
    %p66 = scmp.eq.s32.totalorder %s14, 1
    %p67 = por %p65, %p66
    %p68 = scmp.ne.s32.totalorder %s59, %s60
    %p69 = scmp.eq.s32.totalorder %s14, 0
    %p70 = por %p68, %p69
    %p71 = scmp.ne.s32.totalorder %s59, %s60
    %p72 = scmp.eq.s32.totalorder %s15, 1
    %p73 = por %p71, %p72
    %p75 = scmp.ne.s32.totalorder %s60, %s74
    %p76 = scmp.eq.s32.totalorder %s15, 0
    %p77 = por %p75, %p76
    %s79 = sadd.s32 %s78, 1
    %p82 = scmp.eq.s32.totalorder %s9, 1
    %p83 = scmp.ne.s32.totalorder %s78, %s80
    %p84 = scmp.eq.s32.totalorder %s9, 0
    %p85 = por %p83, %p84
    %p86 = scmp.ne.s32.totalorder %s78, %s80
    %p87 = scmp.eq.s32.totalorder %s14, 1
    %p88 = por %p86, %p87
    %p89 = scmp.ne.s32.totalorder %s80, %s81
    %p90 = scmp.eq.s32.totalorder %s14, 0
    %p91 = por %p89, %p90
    %p92 = scmp.ne.s32.totalorder %s80, %s81
    %p93 = scmp.eq.s32.totalorder %s15, 1
    %p94 = por %p92, %p93
    %p96 = scmp.ne.s32.totalorder %s81, %s95
    %p97 = scmp.eq.s32.totalorder %s15, 0
    %p98 = por %p96, %p97
    %s99 = ssub.s32 %s16, %s28
    %s100 = ssub.s32 %s17, %s24
    %s101 = sor.u32 %s99, %s100
    %p102 = scmp.eq.s32.totalorder %s101, 0
    %s104 = sadd.s32 %s103, 1
    %s105 = scalar_select %p102, %s103, %s104
    %p108 = pneg %p102
    %p109 = scmp.eq.s32.totalorder %s9, 1
    %p110 = por %p108, %p109
    %p111 = scmp.ne.s32.totalorder %s103, %s106
    %p112 = scmp.eq.s32.totalorder %s9, 0
    %p113 = por %p111, %p112
    %p114 = scmp.ne.s32.totalorder %s103, %s106
    %p115 = scmp.eq.s32.totalorder %s14, 1
    %p116 = por %p114, %p115
    %p117 = scmp.ne.s32.totalorder %s106, %s107
    %p118 = scmp.eq.s32.totalorder %s14, 0
    %p119 = por %p117, %p118
    %p120 = scmp.ne.s32.totalorder %s106, %s107
    %p121 = scmp.eq.s32.totalorder %s15, 1
    %p122 = por %p120, %p121
    %p124 = scmp.ne.s32.totalorder %s107, %s123
    %p125 = scmp.eq.s32.totalorder %s15, 0
    %p126 = por %p124, %p125
    %p127 = scmp.le.s32.totalorder 1, %s9
    %p128 = scmp.lt.s32.totalorder %s9, 3
    %p129 = pnand %p127, %p128
    %p130 = pneg %p129
    // Predicated region
    $region9: #{fwd.17} parent=5 // pred_check
      _
    $region10: #{fwd.17} parent=5 // pred_check_branch
      %132 = sbr.rel (%p129) target = $region12
    $region11: #{fwd.17} parent=5 // pred_region
      %s133 = ssub.s32 %s9, 1
      // Predicated region
      $region13: #{fwd.17} parent=11 // pred_check
        %p134 = pneg %p70
      $region14: #{fwd.17} parent=11 // pred_check_branch
        %136 = sbr.rel (%p134) target = $region16
      $region15: #{fwd.17} parent=11 // pred_region
        _
      $region16: #{fwd.17} parent=11 // pred_fallthru
        _
      // Predicated region
      $region17: #{fwd.17} parent=11 // pred_check
        %p137 = pneg %p91
      $region18: #{fwd.17} parent=11 // pred_check_branch
        %139 = sbr.rel (%p137) target = $region20
      $region19: #{fwd.17} parent=11 // pred_region
        _
      $region20: #{fwd.17} parent=11 // pred_fallthru
        _
    $region12: #{fwd.17} parent=5 // pred_fallthru
      _
    %p140 = scmp.lt.s32.totalorder %s9, 2
    // Predicated region
    $region21: #{fwd.17} parent=5 // pred_check
      %p141 = pneg %p140
    $region22: #{fwd.17} parent=5 // pred_check_branch
      %143 = sbr.rel (%p141) target = $region24
    $region23: #{fwd.17} parent=5 // pred_region
      // Predicated region
      $region25: #{fwd.17} parent=23 // pred_check
        %p144 = pneg %p43
      $region26: #{fwd.17} parent=23 // pred_check_branch
        %146 = sbr.rel (%p144) target = $region28
      $region27: #{fwd.17} parent=23 // pred_region
        %s147 = smul.u32 8, %s17
        %p148 = scmp.lt.s32.totalorder %s16, 1
        %s149 = scalar_select %p148, %s16, 1
        %p150 = scmp.lt.s32.totalorder %s147, 7
        %s151 = scalar_select %p150, %s147, 7
        %s152 = smul.addr %s149, 8
        %s153 = sadd.s32 %s151, %s152
        %s154 = smul.addr %s153, 4
        %s155 = scalar_lea.vmem %s0, %s154
        %s156 = smul.u32 8, %s17
      $region28: #{fwd.17} parent=23 // pred_fallthru
        _
    $region24: #{fwd.17} parent=5 // pred_fallthru
      _
    %p157 = scmp.le.s32.totalorder 1, %s9
    %p158 = scmp.lt.s32.totalorder %s9, 3
    %p159 = pnand %p157, %p158
    %p160 = pneg %p159
    // Predicated region
    $region29: #{fwd.17} parent=5 // pred_check
      _
    $region30: #{fwd.17} parent=5 // pred_check_branch
      %162 = sbr.rel (%p159) target = $region32
    $region31: #{fwd.17} parent=5 // pred_region
      %s163 = ssub.s32 %s9, 1
      %s164 = smul.u32 8, %s19
      %p165 = scmp.lt.s32.totalorder %s18, 1
      %s166 = scalar_select %p165, %s18, 1
      %p167 = scmp.lt.s32.totalorder %s164, 7
      %s168 = scalar_select %p167, %s164, 7
      %s169 = smul.addr %s166, 8
      %s170 = sadd.s32 %s168, %s169
      %s171 = smul.addr %s170, 4
      %s172 = scalar_lea.vmem %s0, %s171
      %p173 = pneg %p49
      %p174 = pneg %p46
      %p175 = pneg %p70
      %p176 = pneg %p67
      %p177 = pneg %p91
      %p178 = pneg %p88
      %p179 = pneg %p119
      %p180 = pneg %p116
      %s181 = smul.u32 8, %s19
      %p182 = scmp.lt.s32.totalorder %s18, 1
      %s183 = scalar_select %p182, %s18, 1
      %p184 = scmp.lt.s32.totalorder %s181, 7
      %s185 = scalar_select %p184, %s181, 7
      %s186 = smul.addr %s183, 8
      %s187 = sadd.s32 %s185, %s186
      %s188 = smul.addr %s187, 4
      %s189 = scalar_lea.vmem %s3, %s188
      %s190 = smul.u32 8, %s19
      %p191 = scmp.lt.s32.totalorder %s18, 1
      %s192 = scalar_select %p191, %s18, 1
      %p193 = scmp.lt.s32.totalorder %s190, 7
      %s194 = scalar_select %p193, %s190, 7
      %s195 = smul.addr %s192, 8
      %s196 = sadd.s32 %s194, %s195
      %s197 = smul.addr %s196, 4
      %s198 = scalar_lea.vmem %s0, %s197
      %s199 = smul.u32 8, %s19
      %s200 = smul.u32 8, %s19
      %p201 = scmp.lt.s32.totalorder %s18, 1
      %s202 = scalar_select %p201, %s18, 1
      %p203 = scmp.lt.s32.totalorder %s200, 7
      %s204 = scalar_select %p203, %s200, 7
      %s205 = smul.addr %s202, 8
      %s206 = sadd.s32 %s204, %s205
      %s207 = smul.addr %s206, 4
      %s208 = scalar_lea.vmem %s3, %s207
      %s209 = smul.u32 8, %s19
      %v211 = vld [vmem:[%s198] sm:$0xf]
      %v212 = vld [vmem:[%s198 + $0x4] sm:$0xf]
      %v213 = vld [vmem:[%s198 + $0x8] sm:$0xf]
      %v214 = vld [vmem:[%s198 + $0xc] sm:$0xf]
      %v215 = vld [vmem:[%s198 + $0x10] sm:$0xf]
      %v216 = vld [vmem:[%s198 + $0x14] sm:$0xf]
      %v217 = vld [vmem:[%s198 + $0x18] sm:$0xf]
      %v218 = vld [vmem:[%s198 + $0x1c] sm:$0xf]
      %v219 = vld [vmem:[%s1] sm:$0xf]
      %v220 = vld [vmem:[%s1 + $0x4] sm:$0xf]
      %v221 = vld [vmem:[%s2] sm:$0x1]
      %v223 = vlaneseq
      %v224 = vshrl.u32 %v223, 7
      %v225 = vsub.s32 0, %v224
      %v226 = vrot.slane %v221, %v225
      %v236 = vunpack.c.l.b16 %v211
      %v237 = vunpack.c.l.b16 %v212
      %v238 = vunpack.c.l.b16 %v213
      %v239 = vunpack.c.l.b16 %v214
      %v240 = vunpack.c.l.b16 %v215
      %v241 = vunpack.c.l.b16 %v216
      %v242 = vunpack.c.l.b16 %v217
      %v243 = vunpack.c.l.b16 %v218
      %v244 = vpack.c.b16 %v237, %v236
      %v245 = vpack.c.b16 %v239, %v238
      %v246 = vpack.c.b16 %v241, %v240
      %v247 = vpack.c.b16 %v243, %v242
      %v250 = vunpack.c.l.b16 %v219
      %v251 = vunpack.c.l.b16 %v220
      %v252 = vpack.c.b16 %v251, %v250
      %vm254 = vcmask 130048
      %v256 = vsel %vm254, %v244, 0
      %v259 = vsel %vm254, %v245, 0
      %v262 = vsel %vm254, %v246, 0
      %v265 = vsel %vm254, %v247, 0
      %267 = vmatprep.subr.bf16.mxu0 0
      %268 = vmatpush1.bf16.msra.mxu0 0
      %269 = vmatprep.subr.bf16.mxu0 0
      %270 = vmatpush1.bf16.msra.mxu0 0
      %271 = vmatprep.subr.bf16.mxu0 0
      %272 = vmatpush1.bf16.msra.mxu0 0
      %273 = vmatprep.subr.bf16.mxu0 0
      %274 = vmatpush1.bf16.msra.mxu0 0
      %275 = vmatprep.subr.bf16.mxu0 0
      %276 = vmatpush1.bf16.msra.mxu0 0
      %277 = vmatprep.subr.bf16.mxu0 0
      %278 = vmatpush1.bf16.msra.mxu0 0
      %279 = vmatprep.subr.bf16.mxu0 0
      %280 = vmatpush1.bf16.msra.mxu0 0
      %281 = vmatprep.subr.bf16.mxu0 0
      %282 = vmatpush1.bf16.msra.mxu0 %v252
      %283 = vmatprep.subr.bf16.mxu0 0
      %284 = vmatpush2.bf16.msra.mxu0 0
      %285 = vmatprep.subr.bf16.mxu0 0
      %286 = vmatpush2.bf16.msra.mxu0 0
      %287 = vmatprep.subr.bf16.mxu0 0
      %288 = vmatpush2.bf16.msra.mxu0 0
      %289 = vmatprep.subr.bf16.mxu0 0
      %290 = vmatpush2.bf16.msra.mxu0 0
      %291 = vmatprep.subr.bf16.mxu0 0
      %292 = vmatpush2.bf16.msra.mxu0 0
      %293 = vmatprep.subr.bf16.mxu0 0
      %294 = vmatpush2.bf16.msra.mxu0 0
      %295 = vmatprep.subr.bf16.mxu0 0
      %296 = vmatpush2.bf16.msra.mxu0 0
      %297 = vmatprep.subr.bf16.mxu0 0
      %298 = vmatpush2.bf16.msra.mxu0 0
      %299 = vmatprep.mubr.bf16.mxu0 0
      %300 = vmatmul.mubr.bf16.gmra.mxu0 %v256
      %v301 = vpop.f32.mrf.mxu0
      %v302 = vadd.f32 %v226, %v301
      %v303 = vpop.f32.mrf.mxu0
      %v304 = vpop.f32.mrf.mxu0
      %v305 = vadd.f32 %v226, %v304
      %v306 = vpop.f32.mrf.mxu0
      %307 = vmatprep.mubr.bf16.mxu0 0
      %308 = vmatmul.mubr.bf16.gmra.mxu0 %v259
      %v309 = vpop.f32.mrf.mxu0
      %v310 = vadd.f32 %v226, %v309
      %v311 = vpop.f32.mrf.mxu0
      %v312 = vpop.f32.mrf.mxu0
      %v313 = vadd.f32 %v226, %v312
      %v314 = vpop.f32.mrf.mxu0
      %315 = vmatprep.mubr.bf16.mxu0 0
      %316 = vmatmul.mubr.bf16.gmra.mxu0 %v262
      %v317 = vpop.f32.mrf.mxu0
      %v318 = vadd.f32 %v226, %v317
      %v319 = vpop.f32.mrf.mxu0
      %v320 = vpop.f32.mrf.mxu0
      %v321 = vadd.f32 %v226, %v320
      %v322 = vpop.f32.mrf.mxu0
      %323 = vmatprep.mubr.bf16.mxu0 0
      %324 = vmatmul.mubr.bf16.gmra.mxu0 %v265
      %v325 = vpop.f32.mrf.mxu0
      %v326 = vadd.f32 %v226, %v325
      %v327 = vpop.f32.mrf.mxu0
      %v328 = vpop.f32.mrf.mxu0
      %v329 = vadd.f32 %v226, %v328
      %v330 = vpop.f32.mrf.mxu0
      %331 = vdwg.mxu0
      %v332 = vmax.f32 %v302, 0.0
      %v333 = vmax.f32 %v305, 0.0
      %v334 = vmax.f32 %v310, 0.0
      %v335 = vmax.f32 %v313, 0.0
      %v336 = vmax.f32 %v318, 0.0
      %v337 = vmax.f32 %v321, 0.0
      %v338 = vmax.f32 %v326, 0.0
      %v339 = vmax.f32 %v329, 0.0
      %v340 = vpack.c.bf16 %v333, %v332
      %v341 = vpack.c.bf16 %v335, %v334
      %v342 = vpack.c.bf16 %v337, %v336
      %v343 = vpack.c.bf16 %v339, %v338
      %v348 = vunpack.c.l.b16 %v340
      %v349 = vunpack.c.h.b16 %v340
      %v350 = vunpack.c.l.b16 %v341
      %v351 = vunpack.c.h.b16 %v341
      %v352 = vunpack.c.l.b16 %v342
      %v353 = vunpack.c.h.b16 %v342
      %v354 = vunpack.c.l.b16 %v343
      %v355 = vunpack.c.h.b16 %v343
      %v356 = vpack.c.b16 %v348, %v348
      %v357 = vpack.c.b16 %v349, %v349
      %v358 = vpack.c.b16 %v350, %v350
      %v359 = vpack.c.b16 %v351, %v351
      %v360 = vpack.c.b16 %v352, %v352
      %v361 = vpack.c.b16 %v353, %v353
      %v362 = vpack.c.b16 %v354, %v354
      %v363 = vpack.c.b16 %v355, %v355
      %vm372 = vcmask 584704
      %373 = vst.msk [vmem:[%s208] sm:$0xf] %vm372, %v356
      %374 = vst.msk [vmem:[%s208 + $0x4] sm:$0xf] %vm372, %v357
      %375 = vst.msk [vmem:[%s208 + $0x8] sm:$0xf] %vm372, %v358
      %376 = vst.msk [vmem:[%s208 + $0xc] sm:$0xf] %vm372, %v359
      %377 = vst.msk [vmem:[%s208 + $0x10] sm:$0xf] %vm372, %v360
      %378 = vst.msk [vmem:[%s208 + $0x14] sm:$0xf] %vm372, %v361
      %379 = vst.msk [vmem:[%s208 + $0x18] sm:$0xf] %vm372, %v362
      %380 = vst.msk [vmem:[%s208 + $0x1c] sm:$0xf] %vm372, %v363
      %s381 = smul.u32 8, %s19
      %p382 = scmp.lt.s32.totalorder %s18, 1
      %s383 = scalar_select %p382, %s18, 1
      %p384 = scmp.lt.s32.totalorder %s381, 7
      %s385 = scalar_select %p384, %s381, 7
      %s386 = smul.addr %s383, 8
      %s387 = sadd.s32 %s385, %s386
      %s388 = smul.addr %s387, 4
      %s389 = scalar_lea.vmem %s3, %s388
      // Predicated region
      $region33: #{fwd.17} parent=31 // pred_check
        %p390 = pneg %p116
      $region34: #{fwd.17} parent=31 // pred_check_branch
        %392 = sbr.rel (%p390) target = $region36
      $region35: #{fwd.17} parent=31 // pred_region
        %s393 = smul.u32 8, %s19
      $region36: #{fwd.17} parent=31 // pred_fallthru
        _
    $region32: #{fwd.17} parent=5 // pred_fallthru
      _
    %p394 = scmp.le.s32.totalorder 2, %s9
    // Predicated region
    $region37: #{fwd.17} parent=5 // pred_check
      %p395 = pneg %p394
    $region38: #{fwd.17} parent=5 // pred_check_branch
      %397 = sbr.rel (%p395) target = $region40
    $region39: #{fwd.17} parent=5 // pred_region
      %s398 = ssub.s32 %s9, 2
      // Predicated region
      $region41: #{fwd.17} parent=39 // pred_check
        %p399 = pneg %p122
      $region42: #{fwd.17} parent=39 // pred_check_branch
        %401 = sbr.rel (%p399) target = $region44
      $region43: #{fwd.17} parent=39 // pred_region
        %s402 = smul.u32 8, %s21
        %p403 = scmp.lt.s32.totalorder %s20, 1
        %s404 = scalar_select %p403, %s20, 1
        %p405 = scmp.lt.s32.totalorder %s402, 7
        %s406 = scalar_select %p405, %s402, 7
        %s407 = smul.addr %s404, 8
        %s408 = sadd.s32 %s406, %s407
        %s409 = smul.addr %s408, 4
        %s410 = scalar_lea.vmem %s3, %s409
      $region44: #{fwd.17} parent=39 // pred_fallthru
        _
    $region40: #{fwd.17} parent=5 // pred_fallthru
      _
  $region6: #{fwd.17} parent=0 // loop_footer
    %s13 = sadd.s32 1, %s9
  $region7: #{fwd.17} parent=0 // loop_footer_branch
    %8 = sbr.rel target = $region3
  $region8: #{fwd.17} parent=0 // loop_exit
    _

// kernel: fwd.14
$region0: #{fwd.14}
  #allocation0 [shape = 'u32[]', space=smem, size = 0x4, offset = 0x4, fixed_abs, tag = 'smem constant byte address 0x4 - core index']
  #allocation1 [shape = 'u32[144,128]{1,0:T(1,128)}', space=vmem, size = 0x12000, scoped, tag = 'internal scratch']
  %s0 = inlined_call_operand.vmem [shape: bf16[9,128,16], index: 0, kind: input, shape index: {}]
  %s1 = inlined_call_operand.vmem [shape: bf16[9,16], index: 1, kind: input, shape index: {}]
  %s2 = inlined_call_operand.vmem [shape: f32[1,16], index: 2, kind: input, shape index: {}]
  %s3 = inlined_call_operand.vmem [shape: bf16[128,16], index: 3, kind: output, shape index: {}]
  %s4 = sld [smem:[#allocation0]]
  $region22: #{fwd.14} parent=0
    _
  %s6 = ssub.s32 1, %s4
  %s7 = scalar_select 0, %s6, %s4
  // Predicated region
  $region2: #{fwd.14} parent=0 // pred_check
    _
  $region3: #{fwd.14} parent=0 // pred_check_branch
    %9 = sbr.rel (0) target = $region5
  $region4: #{fwd.14} parent=0 // pred_region
    _
  $region5: #{fwd.14} parent=0 // pred_fallthru
    _
  // Predicated region
  $region6: #{fwd.14} parent=0 // pred_check
    _
  $region7: #{fwd.14} parent=0 // pred_check_branch
    %11 = sbr.rel (0) target = $region9
  $region8: #{fwd.14} parent=0 // pred_region
    _
  $region9: #{fwd.14} parent=0 // pred_fallthru
    _
  // Predicated region
  $region10: #{fwd.14} parent=0 // pred_check
    _
  $region11: #{fwd.14} parent=0 // pred_check_branch
    %13 = sbr.rel (0) target = $region13
  $region12: #{fwd.14} parent=0 // pred_region
    _
  $region13: #{fwd.14} parent=0 // pred_fallthru
    _
  %v14 = vld [vmem:[%s1] sm:$0xf]
  %v15 = vld [vmem:[%s1 + $0x4] sm:$0x1]
  %v16 = vunpack.c.l.bf16 %v14
  %v17 = vunpack.c.l.bf16 %v15
  %v18 = vld [vmem:[%s0] sm:$0xf]
  %v19 = vld [vmem:[%s0 + $0x4] sm:$0xf]
  %v20 = vld [vmem:[%s0 + $0x8] sm:$0xf]
  %v21 = vld [vmem:[%s0 + $0xc] sm:$0xf]
  %v22 = vld [vmem:[%s0 + $0x10] sm:$0xf]
  %v23 = vld [vmem:[%s0 + $0x14] sm:$0xf]
  %v24 = vld [vmem:[%s0 + $0x18] sm:$0xf]
  %v25 = vld [vmem:[%s0 + $0x1c] sm:$0xf]
  %v26 = vld [vmem:[%s0 + $0x20] sm:$0xf]
  %v27 = vld [vmem:[%s0 + $0x24] sm:$0xf]
  %v28 = vld [vmem:[%s0 + $0x28] sm:$0xf]
  %v29 = vld [vmem:[%s0 + $0x2c] sm:$0xf]
  %v30 = vld [vmem:[%s0 + $0x30] sm:$0xf]
  %v31 = vld [vmem:[%s0 + $0x34] sm:$0xf]
  %v32 = vld [vmem:[%s0 + $0x38] sm:$0xf]
  %v33 = vld [vmem:[%s0 + $0x3c] sm:$0xf]
  %v34 = vunpack.c.l.bf16 %v18
  %v35 = vunpack.c.l.bf16 %v19
  %v36 = vunpack.c.l.bf16 %v20
  %v37 = vunpack.c.l.bf16 %v21
  %v38 = vunpack.c.l.bf16 %v22
  %v39 = vunpack.c.l.bf16 %v23
  %v40 = vunpack.c.l.bf16 %v24
  %v41 = vunpack.c.l.bf16 %v25
  %v42 = vunpack.c.l.bf16 %v26
  %v43 = vunpack.c.l.bf16 %v27
  %v44 = vunpack.c.l.bf16 %v28
  %v45 = vunpack.c.l.bf16 %v29
  %v46 = vunpack.c.l.bf16 %v30
  %v47 = vunpack.c.l.bf16 %v31
  %v48 = vunpack.c.l.bf16 %v32
  %v49 = vunpack.c.l.bf16 %v33
  %v50 = vlaneseq
  %v51 = vshrl.u32 %v50, 7
  %v52 = vsub.s32 0, %v51
  %v53 = vrot.slane %v16, %v52
  %v54 = vmul.f32 %v34, %v53
  %v55 = vmul.f32 %v35, %v53
  %v56 = vmul.f32 %v36, %v53
  %v57 = vmul.f32 %v37, %v53
  %v58 = vmul.f32 %v38, %v53
  %v59 = vmul.f32 %v39, %v53
  %v60 = vmul.f32 %v40, %v53
  %v61 = vmul.f32 %v41, %v53
  %v62 = vmul.f32 %v42, %v53
  %v63 = vmul.f32 %v43, %v53
  %v64 = vmul.f32 %v44, %v53
  %v65 = vmul.f32 %v45, %v53
  %v66 = vmul.f32 %v46, %v53
  %v67 = vmul.f32 %v47, %v53
  %v68 = vmul.f32 %v48, %v53
  %v69 = vmul.f32 %v49, %v53
  %s70 = scalar_lea.vmem %s0, 64
  %v71 = vld [vmem:[%s70] sm:$0xf]
  %v72 = vld [vmem:[%s70 + $0x4] sm:$0xf]
  %v73 = vld [vmem:[%s70 + $0x8] sm:$0xf]
  %v74 = vld [vmem:[%s70 + $0xc] sm:$0xf]
  %v75 = vld [vmem:[%s70 + $0x10] sm:$0xf]
  %v76 = vld [vmem:[%s70 + $0x14] sm:$0xf]
  %v77 = vld [vmem:[%s70 + $0x18] sm:$0xf]
  %v78 = vld [vmem:[%s70 + $0x1c] sm:$0xf]
  %v79 = vld [vmem:[%s70 + $0x20] sm:$0xf]
  %v80 = vld [vmem:[%s70 + $0x24] sm:$0xf]
  %v81 = vld [vmem:[%s70 + $0x28] sm:$0xf]
  %v82 = vld [vmem:[%s70 + $0x2c] sm:$0xf]
  %v83 = vld [vmem:[%s70 + $0x30] sm:$0xf]
  %v84 = vld [vmem:[%s70 + $0x34] sm:$0xf]
  %v85 = vld [vmem:[%s70 + $0x38] sm:$0xf]
  %v86 = vld [vmem:[%s70 + $0x3c] sm:$0xf]
  %v87 = vunpack.c.l.bf16 %v71
  %v88 = vunpack.c.l.bf16 %v72
  %v89 = vunpack.c.l.bf16 %v73
  %v90 = vunpack.c.l.bf16 %v74
  %v91 = vunpack.c.l.bf16 %v75
  %v92 = vunpack.c.l.bf16 %v76
  %v93 = vunpack.c.l.bf16 %v77
  %v94 = vunpack.c.l.bf16 %v78
  %v95 = vunpack.c.l.bf16 %v79
  %v96 = vunpack.c.l.bf16 %v80
  %v97 = vunpack.c.l.bf16 %v81
  %v98 = vunpack.c.l.bf16 %v82
  %v99 = vunpack.c.l.bf16 %v83
  %v100 = vunpack.c.l.bf16 %v84
  %v101 = vunpack.c.l.bf16 %v85
  %v102 = vunpack.c.l.bf16 %v86
  %v103 = vlaneseq
  %v104 = vshrl.u32 %v103, 7
  %v105 = vsub.s32 1, %v104
  %v106 = vrot.slane %v16, %v105
  %v107 = vmul.f32 %v87, %v106
  %v108 = vmul.f32 %v88, %v106
  %v109 = vmul.f32 %v89, %v106
  %v110 = vmul.f32 %v90, %v106
  %v111 = vmul.f32 %v91, %v106
  %v112 = vmul.f32 %v92, %v106
  %v113 = vmul.f32 %v93, %v106
  %v114 = vmul.f32 %v94, %v106
  %v115 = vmul.f32 %v95, %v106
  %v116 = vmul.f32 %v96, %v106
  %v117 = vmul.f32 %v97, %v106
  %v118 = vmul.f32 %v98, %v106
  %v119 = vmul.f32 %v99, %v106
  %v120 = vmul.f32 %v100, %v106
  %v121 = vmul.f32 %v101, %v106
  %v122 = vmul.f32 %v102, %v106
  %v123 = vadd.f32 %v54, %v107
  %v124 = vadd.f32 %v55, %v108
  %v125 = vadd.f32 %v56, %v109
  %v126 = vadd.f32 %v57, %v110
  %v127 = vadd.f32 %v58, %v111
  %v128 = vadd.f32 %v59, %v112
  %v129 = vadd.f32 %v60, %v113
  %v130 = vadd.f32 %v61, %v114
  %v131 = vadd.f32 %v62, %v115
  %v132 = vadd.f32 %v63, %v116
  %v133 = vadd.f32 %v64, %v117
  %v134 = vadd.f32 %v65, %v118
  %v135 = vadd.f32 %v66, %v119
  %v136 = vadd.f32 %v67, %v120
  %v137 = vadd.f32 %v68, %v121
  %v138 = vadd.f32 %v69, %v122
  %s139 = scalar_lea.vmem %s0, 128
  %v140 = vld [vmem:[%s139] sm:$0xf]
  %v141 = vld [vmem:[%s139 + $0x4] sm:$0xf]
  %v142 = vld [vmem:[%s139 + $0x8] sm:$0xf]
  %v143 = vld [vmem:[%s139 + $0xc] sm:$0xf]
  %v144 = vld [vmem:[%s139 + $0x10] sm:$0xf]
  %v145 = vld [vmem:[%s139 + $0x14] sm:$0xf]
  %v146 = vld [vmem:[%s139 + $0x18] sm:$0xf]
  %v147 = vld [vmem:[%s139 + $0x1c] sm:$0xf]
  %v148 = vld [vmem:[%s139 + $0x20] sm:$0xf]
  %v149 = vld [vmem:[%s139 + $0x24] sm:$0xf]
  %v150 = vld [vmem:[%s139 + $0x28] sm:$0xf]
  %v151 = vld [vmem:[%s139 + $0x2c] sm:$0xf]
  %v152 = vld [vmem:[%s139 + $0x30] sm:$0xf]
  %v153 = vld [vmem:[%s139 + $0x34] sm:$0xf]
  %v154 = vld [vmem:[%s139 + $0x38] sm:$0xf]
  %v155 = vld [vmem:[%s139 + $0x3c] sm:$0xf]
  %v156 = vunpack.c.l.bf16 %v140
  %v157 = vunpack.c.l.bf16 %v141
  %v158 = vunpack.c.l.bf16 %v142
  %v159 = vunpack.c.l.bf16 %v143
  %v160 = vunpack.c.l.bf16 %v144
  %v161 = vunpack.c.l.bf16 %v145
  %v162 = vunpack.c.l.bf16 %v146
  %v163 = vunpack.c.l.bf16 %v147
  %v164 = vunpack.c.l.bf16 %v148
  %v165 = vunpack.c.l.bf16 %v149
  %v166 = vunpack.c.l.bf16 %v150
  %v167 = vunpack.c.l.bf16 %v151
  %v168 = vunpack.c.l.bf16 %v152
  %v169 = vunpack.c.l.bf16 %v153
  %v170 = vunpack.c.l.bf16 %v154
  %v171 = vunpack.c.l.bf16 %v155
  %v172 = vlaneseq
  %v173 = vshrl.u32 %v172, 7
  %v174 = vsub.s32 2, %v173
  %v175 = vrot.slane %v16, %v174
  %v176 = vmul.f32 %v156, %v175
  %v177 = vmul.f32 %v157, %v175
  %v178 = vmul.f32 %v158, %v175
  %v179 = vmul.f32 %v159, %v175
  %v180 = vmul.f32 %v160, %v175
  %v181 = vmul.f32 %v161, %v175
  %v182 = vmul.f32 %v162, %v175
  %v183 = vmul.f32 %v163, %v175
  %v184 = vmul.f32 %v164, %v175
  %v185 = vmul.f32 %v165, %v175
  %v186 = vmul.f32 %v166, %v175
  %v187 = vmul.f32 %v167, %v175
  %v188 = vmul.f32 %v168, %v175
  %v189 = vmul.f32 %v169, %v175
  %v190 = vmul.f32 %v170, %v175
  %v191 = vmul.f32 %v171, %v175
  %v192 = vadd.f32 %v123, %v176
  %v193 = vadd.f32 %v124, %v177
  %v194 = vadd.f32 %v125, %v178
  %v195 = vadd.f32 %v126, %v179
  %v196 = vadd.f32 %v127, %v180
  %v197 = vadd.f32 %v128, %v181
  %v198 = vadd.f32 %v129, %v182
  %v199 = vadd.f32 %v130, %v183
  %v200 = vadd.f32 %v131, %v184
  %v201 = vadd.f32 %v132, %v185
  %v202 = vadd.f32 %v133, %v186
  %v203 = vadd.f32 %v134, %v187
  %v204 = vadd.f32 %v135, %v188
  %v205 = vadd.f32 %v136, %v189
  %v206 = vadd.f32 %v137, %v190
  %v207 = vadd.f32 %v138, %v191
  %s208 = scalar_lea.vmem %s0, 192
  %v209 = vld [vmem:[%s208] sm:$0xf]
  %v210 = vld [vmem:[%s208 + $0x4] sm:$0xf]
  %v211 = vld [vmem:[%s208 + $0x8] sm:$0xf]
  %v212 = vld [vmem:[%s208 + $0xc] sm:$0xf]
  %v213 = vld [vmem:[%s208 + $0x10] sm:$0xf]
  %v214 = vld [vmem:[%s208 + $0x14] sm:$0xf]
  %v215 = vld [vmem:[%s208 + $0x18] sm:$0xf]
  %v216 = vld [vmem:[%s208 + $0x1c] sm:$0xf]
  %v217 = vld [vmem:[%s208 + $0x20] sm:$0xf]
  %v218 = vld [vmem:[%s208 + $0x24] sm:$0xf]
  %v219 = vld [vmem:[%s208 + $0x28] sm:$0xf]
  %v220 = vld [vmem:[%s208 + $0x2c] sm:$0xf]
  %v221 = vld [vmem:[%s208 + $0x30] sm:$0xf]
  %v222 = vld [vmem:[%s208 + $0x34] sm:$0xf]
  %v223 = vld [vmem:[%s208 + $0x38] sm:$0xf]
  %v224 = vld [vmem:[%s208 + $0x3c] sm:$0xf]
  %v225 = vunpack.c.l.bf16 %v209
  %v226 = vunpack.c.l.bf16 %v210
  %v227 = vunpack.c.l.bf16 %v211
  %v228 = vunpack.c.l.bf16 %v212
  %v229 = vunpack.c.l.bf16 %v213
  %v230 = vunpack.c.l.bf16 %v214
  %v231 = vunpack.c.l.bf16 %v215
  %v232 = vunpack.c.l.bf16 %v216
  %v233 = vunpack.c.l.bf16 %v217
  %v234 = vunpack.c.l.bf16 %v218
  %v235 = vunpack.c.l.bf16 %v219
  %v236 = vunpack.c.l.bf16 %v220
  %v237 = vunpack.c.l.bf16 %v221
  %v238 = vunpack.c.l.bf16 %v222
  %v239 = vunpack.c.l.bf16 %v223
  %v240 = vunpack.c.l.bf16 %v224
  %v241 = vlaneseq
  %v242 = vshrl.u32 %v241, 7
  %v243 = vsub.s32 3, %v242
  %v244 = vrot.slane %v16, %v243
  %v245 = vmul.f32 %v225, %v244
  %v246 = vmul.f32 %v226, %v244
  %v247 = vmul.f32 %v227, %v244
  %v248 = vmul.f32 %v228, %v244
  %v249 = vmul.f32 %v229, %v244
  %v250 = vmul.f32 %v230, %v244
  %v251 = vmul.f32 %v231, %v244
  %v252 = vmul.f32 %v232, %v244
  %v253 = vmul.f32 %v233, %v244
  %v254 = vmul.f32 %v234, %v244
  %v255 = vmul.f32 %v235, %v244
  %v256 = vmul.f32 %v236, %v244
  %v257 = vmul.f32 %v237, %v244
  %v258 = vmul.f32 %v238, %v244
  %v259 = vmul.f32 %v239, %v244
  %v260 = vmul.f32 %v240, %v244
  %v261 = vadd.f32 %v192, %v245
  %v262 = vadd.f32 %v193, %v246
  %v263 = vadd.f32 %v194, %v247
  %v264 = vadd.f32 %v195, %v248
  %v265 = vadd.f32 %v196, %v249
  %v266 = vadd.f32 %v197, %v250
  %v267 = vadd.f32 %v198, %v251
  %v268 = vadd.f32 %v199, %v252
  %v269 = vadd.f32 %v200, %v253
  %v270 = vadd.f32 %v201, %v254
  %v271 = vadd.f32 %v202, %v255
  %v272 = vadd.f32 %v203, %v256
  %v273 = vadd.f32 %v204, %v257
  %v274 = vadd.f32 %v205, %v258
  %v275 = vadd.f32 %v206, %v259
  %v276 = vadd.f32 %v207, %v260
  %s277 = scalar_lea.vmem %s0, 256
  %v278 = vld [vmem:[%s277] sm:$0xf]
  %v279 = vld [vmem:[%s277 + $0x4] sm:$0xf]
  %v280 = vld [vmem:[%s277 + $0x8] sm:$0xf]
  %v281 = vld [vmem:[%s277 + $0xc] sm:$0xf]
  %v282 = vld [vmem:[%s277 + $0x10] sm:$0xf]
  %v283 = vld [vmem:[%s277 + $0x14] sm:$0xf]
  %v284 = vld [vmem:[%s277 + $0x18] sm:$0xf]
  %v285 = vld [vmem:[%s277 + $0x1c] sm:$0xf]
  %v286 = vld [vmem:[%s277 + $0x20] sm:$0xf]
  %v287 = vld [vmem:[%s277 + $0x24] sm:$0xf]
  %v288 = vld [vmem:[%s277 + $0x28] sm:$0xf]
  %v289 = vld [vmem:[%s277 + $0x2c] sm:$0xf]
  %v290 = vld [vmem:[%s277 + $0x30] sm:$0xf]
  %v291 = vld [vmem:[%s277 + $0x34] sm:$0xf]
  %v292 = vld [vmem:[%s277 + $0x38] sm:$0xf]
  %v293 = vld [vmem:[%s277 + $0x3c] sm:$0xf]
  %v294 = vunpack.c.l.bf16 %v278
  %v295 = vunpack.c.l.bf16 %v279
  %v296 = vunpack.c.l.bf16 %v280
  %v297 = vunpack.c.l.bf16 %v281
  %v298 = vunpack.c.l.bf16 %v282
  %v299 = vunpack.c.l.bf16 %v283
  %v300 = vunpack.c.l.bf16 %v284
  %v301 = vunpack.c.l.bf16 %v285
  %v302 = vunpack.c.l.bf16 %v286
  %v303 = vunpack.c.l.bf16 %v287
  %v304 = vunpack.c.l.bf16 %v288
  %v305 = vunpack.c.l.bf16 %v289
  %v306 = vunpack.c.l.bf16 %v290
  %v307 = vunpack.c.l.bf16 %v291
  %v308 = vunpack.c.l.bf16 %v292
  %v309 = vunpack.c.l.bf16 %v293
  %v310 = vlaneseq
  %v311 = vshrl.u32 %v310, 7
  %v312 = vsub.s32 4, %v311
  %v313 = vrot.slane %v16, %v312
  %v314 = vmul.f32 %v294, %v313
  %v315 = vmul.f32 %v295, %v313
  %v316 = vmul.f32 %v296, %v313
  %v317 = vmul.f32 %v297, %v313
  %v318 = vmul.f32 %v298, %v313
  %v319 = vmul.f32 %v299, %v313
  %v320 = vmul.f32 %v300, %v313
  %v321 = vmul.f32 %v301, %v313
  %v322 = vmul.f32 %v302, %v313
  %v323 = vmul.f32 %v303, %v313
  %v324 = vmul.f32 %v304, %v313
  %v325 = vmul.f32 %v305, %v313
  %v326 = vmul.f32 %v306, %v313
  %v327 = vmul.f32 %v307, %v313
  %v328 = vmul.f32 %v308, %v313
  %v329 = vmul.f32 %v309, %v313
  %v330 = vadd.f32 %v261, %v314
  %v331 = vadd.f32 %v262, %v315
  %v332 = vadd.f32 %v263, %v316
  %v333 = vadd.f32 %v264, %v317
  %v334 = vadd.f32 %v265, %v318
  %v335 = vadd.f32 %v266, %v319
  %v336 = vadd.f32 %v267, %v320
  %v337 = vadd.f32 %v268, %v321
  %v338 = vadd.f32 %v269, %v322
  %v339 = vadd.f32 %v270, %v323
  %v340 = vadd.f32 %v271, %v324
  %v341 = vadd.f32 %v272, %v325
  %v342 = vadd.f32 %v273, %v326
  %v343 = vadd.f32 %v274, %v327
  %v344 = vadd.f32 %v275, %v328
  %v345 = vadd.f32 %v276, %v329
  %s346 = scalar_lea.vmem %s0, 320
  %v347 = vld [vmem:[%s346] sm:$0xf]
  %v348 = vld [vmem:[%s346 + $0x4] sm:$0xf]
  %v349 = vld [vmem:[%s346 + $0x8] sm:$0xf]
  %v350 = vld [vmem:[%s346 + $0xc] sm:$0xf]
  %v351 = vld [vmem:[%s346 + $0x10] sm:$0xf]
  %v352 = vld [vmem:[%s346 + $0x14] sm:$0xf]
  %v353 = vld [vmem:[%s346 + $0x18] sm:$0xf]
  %v354 = vld [vmem:[%s346 + $0x1c] sm:$0xf]
  %v355 = vld [vmem:[%s346 + $0x20] sm:$0xf]
  %v356 = vld [vmem:[%s346 + $0x24] sm:$0xf]
  %v357 = vld [vmem:[%s346 + $0x28] sm:$0xf]
  %v358 = vld [vmem:[%s346 + $0x2c] sm:$0xf]
  %v359 = vld [vmem:[%s346 + $0x30] sm:$0xf]
  %v360 = vld [vmem:[%s346 + $0x34] sm:$0xf]
  %v361 = vld [vmem:[%s346 + $0x38] sm:$0xf]
  %v362 = vld [vmem:[%s346 + $0x3c] sm:$0xf]
  %v363 = vunpack.c.l.bf16 %v347
  %v364 = vunpack.c.l.bf16 %v348
  %v365 = vunpack.c.l.bf16 %v349
  %v366 = vunpack.c.l.bf16 %v350
  %v367 = vunpack.c.l.bf16 %v351
  %v368 = vunpack.c.l.bf16 %v352
  %v369 = vunpack.c.l.bf16 %v353
  %v370 = vunpack.c.l.bf16 %v354
  %v371 = vunpack.c.l.bf16 %v355
  %v372 = vunpack.c.l.bf16 %v356
  %v373 = vunpack.c.l.bf16 %v357
  %v374 = vunpack.c.l.bf16 %v358
  %v375 = vunpack.c.l.bf16 %v359
  %v376 = vunpack.c.l.bf16 %v360
  %v377 = vunpack.c.l.bf16 %v361
  %v378 = vunpack.c.l.bf16 %v362
  %v379 = vlaneseq
  %v380 = vshrl.u32 %v379, 7
  %v381 = vsub.s32 5, %v380
  %v382 = vrot.slane %v16, %v381
  %v383 = vmul.f32 %v363, %v382
  %v384 = vmul.f32 %v364, %v382
  %v385 = vmul.f32 %v365, %v382
  %v386 = vmul.f32 %v366, %v382
  %v387 = vmul.f32 %v367, %v382
  %v388 = vmul.f32 %v368, %v382
  %v389 = vmul.f32 %v369, %v382
  %v390 = vmul.f32 %v370, %v382
  %v391 = vmul.f32 %v371, %v382
  %v392 = vmul.f32 %v372, %v382
  %v393 = vmul.f32 %v373, %v382
  %v394 = vmul.f32 %v374, %v382
  %v395 = vmul.f32 %v375, %v382
  %v396 = vmul.f32 %v376, %v382
  %v397 = vmul.f32 %v377, %v382
  %v398 = vmul.f32 %v378, %v382
  %v399 = vadd.f32 %v330, %v383
  %v400 = vadd.f32 %v331, %v384
  %v401 = vadd.f32 %v332, %v385
  %v402 = vadd.f32 %v333, %v386
  %v403 = vadd.f32 %v334, %v387
  %v404 = vadd.f32 %v335, %v388
  %v405 = vadd.f32 %v336, %v389
  %v406 = vadd.f32 %v337, %v390
  %v407 = vadd.f32 %v338, %v391
  %v408 = vadd.f32 %v339, %v392
  %v409 = vadd.f32 %v340, %v393
  %v410 = vadd.f32 %v341, %v394
  %v411 = vadd.f32 %v342, %v395
  %v412 = vadd.f32 %v343, %v396
  %v413 = vadd.f32 %v344, %v397
  %v414 = vadd.f32 %v345, %v398
  %s415 = scalar_lea.vmem %s0, 384
  %v416 = vld [vmem:[%s415] sm:$0xf]
  %v417 = vld [vmem:[%s415 + $0x4] sm:$0xf]
  %v418 = vld [vmem:[%s415 + $0x8] sm:$0xf]
  %v419 = vld [vmem:[%s415 + $0xc] sm:$0xf]
  %v420 = vld [vmem:[%s415 + $0x10] sm:$0xf]
  %v421 = vld [vmem:[%s415 + $0x14] sm:$0xf]
  %v422 = vld [vmem:[%s415 + $0x18] sm:$0xf]
  %v423 = vld [vmem:[%s415 + $0x1c] sm:$0xf]
  %v424 = vld [vmem:[%s415 + $0x20] sm:$0xf]
  %v425 = vld [vmem:[%s415 + $0x24] sm:$0xf]
  %v426 = vld [vmem:[%s415 + $0x28] sm:$0xf]
  %v427 = vld [vmem:[%s415 + $0x2c] sm:$0xf]
  %v428 = vld [vmem:[%s415 + $0x30] sm:$0xf]
  %v429 = vld [vmem:[%s415 + $0x34] sm:$0xf]
  %v430 = vld [vmem:[%s415 + $0x38] sm:$0xf]
  %v431 = vld [vmem:[%s415 + $0x3c] sm:$0xf]
  %v432 = vunpack.c.l.bf16 %v416
  %v433 = vunpack.c.l.bf16 %v417
  %v434 = vunpack.c.l.bf16 %v418
  %v435 = vunpack.c.l.bf16 %v419
  %v436 = vunpack.c.l.bf16 %v420
  %v437 = vunpack.c.l.bf16 %v421
  %v438 = vunpack.c.l.bf16 %v422
  %v439 = vunpack.c.l.bf16 %v423
  %v440 = vunpack.c.l.bf16 %v424
  %v441 = vunpack.c.l.bf16 %v425
  %v442 = vunpack.c.l.bf16 %v426
  %v443 = vunpack.c.l.bf16 %v427
  %v444 = vunpack.c.l.bf16 %v428
  %v445 = vunpack.c.l.bf16 %v429
  %v446 = vunpack.c.l.bf16 %v430
  %v447 = vunpack.c.l.bf16 %v431
  %v448 = vlaneseq
  %v449 = vshrl.u32 %v448, 7
  %v450 = vsub.s32 6, %v449
  %v451 = vrot.slane %v16, %v450
  %v452 = vmul.f32 %v432, %v451
  %v453 = vmul.f32 %v433, %v451
  %v454 = vmul.f32 %v434, %v451
  %v455 = vmul.f32 %v435, %v451
  %v456 = vmul.f32 %v436, %v451
  %v457 = vmul.f32 %v437, %v451
  %v458 = vmul.f32 %v438, %v451
  %v459 = vmul.f32 %v439, %v451
  %v460 = vmul.f32 %v440, %v451
  %v461 = vmul.f32 %v441, %v451
  %v462 = vmul.f32 %v442, %v451
  %v463 = vmul.f32 %v443, %v451
  %v464 = vmul.f32 %v444, %v451
  %v465 = vmul.f32 %v445, %v451
  %v466 = vmul.f32 %v446, %v451
  %v467 = vmul.f32 %v447, %v451
  %v468 = vadd.f32 %v399, %v452
  %v469 = vadd.f32 %v400, %v453
  %v470 = vadd.f32 %v401, %v454
  %v471 = vadd.f32 %v402, %v455
  %v472 = vadd.f32 %v403, %v456
  %v473 = vadd.f32 %v404, %v457
  %v474 = vadd.f32 %v405, %v458
  %v475 = vadd.f32 %v406, %v459
  %v476 = vadd.f32 %v407, %v460
  %v477 = vadd.f32 %v408, %v461
  %v478 = vadd.f32 %v409, %v462
  %v479 = vadd.f32 %v410, %v463
  %v480 = vadd.f32 %v411, %v464
  %v481 = vadd.f32 %v412, %v465
  %v482 = vadd.f32 %v413, %v466
  %v483 = vadd.f32 %v414, %v467
  %s484 = scalar_lea.vmem %s0, 448
  %v485 = vld [vmem:[%s484] sm:$0xf]
  %v486 = vld [vmem:[%s484 + $0x4] sm:$0xf]
  %v487 = vld [vmem:[%s484 + $0x8] sm:$0xf]
  %v488 = vld [vmem:[%s484 + $0xc] sm:$0xf]
  %v489 = vld [vmem:[%s484 + $0x10] sm:$0xf]
  %v490 = vld [vmem:[%s484 + $0x14] sm:$0xf]
  %v491 = vld [vmem:[%s484 + $0x18] sm:$0xf]
  %v492 = vld [vmem:[%s484 + $0x1c] sm:$0xf]
  %v493 = vld [vmem:[%s484 + $0x20] sm:$0xf]
  %v494 = vld [vmem:[%s484 + $0x24] sm:$0xf]
  %v495 = vld [vmem:[%s484 + $0x28] sm:$0xf]
  %v496 = vld [vmem:[%s484 + $0x2c] sm:$0xf]
  %v497 = vld [vmem:[%s484 + $0x30] sm:$0xf]
  %v498 = vld [vmem:[%s484 + $0x34] sm:$0xf]
  %v499 = vld [vmem:[%s484 + $0x38] sm:$0xf]
  %v500 = vld [vmem:[%s484 + $0x3c] sm:$0xf]
  %v501 = vunpack.c.l.bf16 %v485
  %v502 = vunpack.c.l.bf16 %v486
  %v503 = vunpack.c.l.bf16 %v487
  %v504 = vunpack.c.l.bf16 %v488
  %v505 = vunpack.c.l.bf16 %v489
  %v506 = vunpack.c.l.bf16 %v490
  %v507 = vunpack.c.l.bf16 %v491
  %v508 = vunpack.c.l.bf16 %v492
  %v509 = vunpack.c.l.bf16 %v493
  %v510 = vunpack.c.l.bf16 %v494
  %v511 = vunpack.c.l.bf16 %v495
  %v512 = vunpack.c.l.bf16 %v496
  %v513 = vunpack.c.l.bf16 %v497
  %v514 = vunpack.c.l.bf16 %v498
  %v515 = vunpack.c.l.bf16 %v499
  %v516 = vunpack.c.l.bf16 %v500
  %v517 = vlaneseq
  %v518 = vshrl.u32 %v517, 7
  %v519 = vsub.s32 7, %v518
  %v520 = vrot.slane %v16, %v519
  %v521 = vmul.f32 %v501, %v520
  %v522 = vmul.f32 %v502, %v520
  %v523 = vmul.f32 %v503, %v520
  %v524 = vmul.f32 %v504, %v520
  %v525 = vmul.f32 %v505, %v520
  %v526 = vmul.f32 %v506, %v520
  %v527 = vmul.f32 %v507, %v520
  %v528 = vmul.f32 %v508, %v520
  %v529 = vmul.f32 %v509, %v520
  %v530 = vmul.f32 %v510, %v520
  %v531 = vmul.f32 %v511, %v520
  %v532 = vmul.f32 %v512, %v520
  %v533 = vmul.f32 %v513, %v520
  %v534 = vmul.f32 %v514, %v520
  %v535 = vmul.f32 %v515, %v520
  %v536 = vmul.f32 %v516, %v520
  %v537 = vadd.f32 %v468, %v521
  %v538 = vadd.f32 %v469, %v522
  %v539 = vadd.f32 %v470, %v523
  %v540 = vadd.f32 %v471, %v524
  %v541 = vadd.f32 %v472, %v525
  %v542 = vadd.f32 %v473, %v526
  %v543 = vadd.f32 %v474, %v527
  %v544 = vadd.f32 %v475, %v528
  %v545 = vadd.f32 %v476, %v529
  %v546 = vadd.f32 %v477, %v530
  %v547 = vadd.f32 %v478, %v531
  %v548 = vadd.f32 %v479, %v532
  %v549 = vadd.f32 %v480, %v533
  %v550 = vadd.f32 %v481, %v534
  %v551 = vadd.f32 %v482, %v535
  %v552 = vadd.f32 %v483, %v536
  %s553 = scalar_lea.vmem %s0, 512
  %v554 = vld [vmem:[%s553] sm:$0xf]
  %v555 = vld [vmem:[%s553 + $0x4] sm:$0xf]
  %v556 = vld [vmem:[%s553 + $0x8] sm:$0xf]
  %v557 = vld [vmem:[%s553 + $0xc] sm:$0xf]
  %v558 = vld [vmem:[%s553 + $0x10] sm:$0xf]
  %v559 = vld [vmem:[%s553 + $0x14] sm:$0xf]
  %v560 = vld [vmem:[%s553 + $0x18] sm:$0xf]
  %v561 = vld [vmem:[%s553 + $0x1c] sm:$0xf]
  %v562 = vld [vmem:[%s553 + $0x20] sm:$0xf]
  %v563 = vld [vmem:[%s553 + $0x24] sm:$0xf]
  %v564 = vld [vmem:[%s553 + $0x28] sm:$0xf]
  %v565 = vld [vmem:[%s553 + $0x2c] sm:$0xf]
  %v566 = vld [vmem:[%s553 + $0x30] sm:$0xf]
  %v567 = vld [vmem:[%s553 + $0x34] sm:$0xf]
  %v568 = vld [vmem:[%s553 + $0x38] sm:$0xf]
  %v569 = vld [vmem:[%s553 + $0x3c] sm:$0xf]
  %v570 = vunpack.c.l.bf16 %v554
  %v571 = vunpack.c.l.bf16 %v555
  %v572 = vunpack.c.l.bf16 %v556
  %v573 = vunpack.c.l.bf16 %v557
  %v574 = vunpack.c.l.bf16 %v558
  %v575 = vunpack.c.l.bf16 %v559
  %v576 = vunpack.c.l.bf16 %v560
  %v577 = vunpack.c.l.bf16 %v561
  %v578 = vunpack.c.l.bf16 %v562
  %v579 = vunpack.c.l.bf16 %v563
  %v580 = vunpack.c.l.bf16 %v564
  %v581 = vunpack.c.l.bf16 %v565
  %v582 = vunpack.c.l.bf16 %v566
  %v583 = vunpack.c.l.bf16 %v567
  %v584 = vunpack.c.l.bf16 %v568
  %v585 = vunpack.c.l.bf16 %v569
  %v586 = vlaneseq
  %v587 = vshrl.u32 %v586, 7
  %v588 = vsub.s32 0, %v587
  %v589 = vrot.slane %v17, %v588
  %v590 = vmul.f32 %v570, %v589
  %v591 = vmul.f32 %v571, %v589
  %v592 = vmul.f32 %v572, %v589
  %v593 = vmul.f32 %v573, %v589
  %v594 = vmul.f32 %v574, %v589
  %v595 = vmul.f32 %v575, %v589
  %v596 = vmul.f32 %v576, %v589
  %v597 = vmul.f32 %v577, %v589
  %v598 = vmul.f32 %v578, %v589
  %v599 = vmul.f32 %v579, %v589
  %v600 = vmul.f32 %v580, %v589
  %v601 = vmul.f32 %v581, %v589
  %v602 = vmul.f32 %v582, %v589
  %v603 = vmul.f32 %v583, %v589
  %v604 = vmul.f32 %v584, %v589
  %v605 = vmul.f32 %v585, %v589
  %v606 = vadd.f32 %v537, %v590
  %v607 = vadd.f32 %v538, %v591
  %v608 = vadd.f32 %v539, %v592
  %v609 = vadd.f32 %v540, %v593
  %v610 = vadd.f32 %v541, %v594
  %v611 = vadd.f32 %v542, %v595
  %v612 = vadd.f32 %v543, %v596
  %v613 = vadd.f32 %v544, %v597
  %v614 = vadd.f32 %v545, %v598
  %v615 = vadd.f32 %v546, %v599
  %v616 = vadd.f32 %v547, %v600
  %v617 = vadd.f32 %v548, %v601
  %v618 = vadd.f32 %v549, %v602
  %v619 = vadd.f32 %v550, %v603
  %v620 = vadd.f32 %v551, %v604
  %v621 = vadd.f32 %v552, %v605
  %v622 = vld [vmem:[%s2] sm:$0x1]
  %v624 = vlaneseq
  %v625 = vshrl.u32 %v624, 7
  %v626 = vsub.s32 0, %v625
  %v627 = vrot.slane %v622, %v626
  %v629 = vadd.f32 %v606, %v627
  %v630 = vadd.f32 %v607, %v627
  %v631 = vadd.f32 %v608, %v627
  %v632 = vadd.f32 %v609, %v627
  %v633 = vadd.f32 %v610, %v627
  %v634 = vadd.f32 %v611, %v627
  %v635 = vadd.f32 %v612, %v627
  %v636 = vadd.f32 %v613, %v627
  %v637 = vadd.f32 %v614, %v627
  %v638 = vadd.f32 %v615, %v627
  %v639 = vadd.f32 %v616, %v627
  %v640 = vadd.f32 %v617, %v627
  %v641 = vadd.f32 %v618, %v627
  %v642 = vadd.f32 %v619, %v627
  %v643 = vadd.f32 %v620, %v627
  %v644 = vadd.f32 %v621, %v627
  %v645 = vmax.f32 %v629, 0.0
  %v646 = vmax.f32 %v630, 0.0
  %v647 = vmax.f32 %v631, 0.0
  %v648 = vmax.f32 %v632, 0.0
  %v649 = vmax.f32 %v633, 0.0
  %v650 = vmax.f32 %v634, 0.0
  %v651 = vmax.f32 %v635, 0.0
  %v652 = vmax.f32 %v636, 0.0
  %v653 = vmax.f32 %v637, 0.0
  %v654 = vmax.f32 %v638, 0.0
  %v655 = vmax.f32 %v639, 0.0
  %v656 = vmax.f32 %v640, 0.0
  %v657 = vmax.f32 %v641, 0.0
  %v658 = vmax.f32 %v642, 0.0
  %v659 = vmax.f32 %v643, 0.0
  %v660 = vmax.f32 %v644, 0.0
  %v661 = vpack.c.bf16 %v646, %v645
  %v662 = vpack.c.bf16 %v648, %v647
  %v663 = vpack.c.bf16 %v650, %v649
  %v664 = vpack.c.bf16 %v652, %v651
  %v665 = vpack.c.bf16 %v654, %v653
  %v666 = vpack.c.bf16 %v656, %v655
  %v667 = vpack.c.bf16 %v658, %v657
  %v668 = vpack.c.bf16 %v660, %v659
  %v677 = vunpack.c.l.b16 %v661
  %v678 = vunpack.c.h.b16 %v661
  %v679 = vunpack.c.l.b16 %v662
  %v680 = vunpack.c.h.b16 %v662
  %v681 = vunpack.c.l.b16 %v663
  %v682 = vunpack.c.h.b16 %v663
  %v683 = vunpack.c.l.b16 %v664
  %v684 = vunpack.c.h.b16 %v664
  %v685 = vunpack.c.l.b16 %v665
  %v686 = vunpack.c.h.b16 %v665
  %v687 = vunpack.c.l.b16 %v666
  %v688 = vunpack.c.h.b16 %v666
  %v689 = vunpack.c.l.b16 %v667
  %v690 = vunpack.c.h.b16 %v667
  %v691 = vunpack.c.l.b16 %v668
  %v692 = vunpack.c.h.b16 %v668
  %v693 = vpack.c.b16 %v677, %v677
  %v694 = vpack.c.b16 %v678, %v678
  %v695 = vpack.c.b16 %v679, %v679
  %v696 = vpack.c.b16 %v680, %v680
  %v697 = vpack.c.b16 %v681, %v681
  %v698 = vpack.c.b16 %v682, %v682
  %v699 = vpack.c.b16 %v683, %v683
  %v700 = vpack.c.b16 %v684, %v684
  %v701 = vpack.c.b16 %v685, %v685
  %v702 = vpack.c.b16 %v686, %v686
  %v703 = vpack.c.b16 %v687, %v687
  %v704 = vpack.c.b16 %v688, %v688
  %v705 = vpack.c.b16 %v689, %v689
  %v706 = vpack.c.b16 %v690, %v690
  %v707 = vpack.c.b16 %v691, %v691
  %v708 = vpack.c.b16 %v692, %v692
  %vm725 = vcmask 125952
  %726 = vst.msk [vmem:[%s3] sm:$0xf] %vm725, %v693
  %727 = vst.msk [vmem:[%s3 + $0x4] sm:$0xf] %vm725, %v694
  %728 = vst.msk [vmem:[%s3 + $0x8] sm:$0xf] %vm725, %v695
  %729 = vst.msk [vmem:[%s3 + $0xc] sm:$0xf] %vm725, %v696
  %730 = vst.msk [vmem:[%s3 + $0x10] sm:$0xf] %vm725, %v697
  %731 = vst.msk [vmem:[%s3 + $0x14] sm:$0xf] %vm725, %v698
  %732 = vst.msk [vmem:[%s3 + $0x18] sm:$0xf] %vm725, %v699
  %733 = vst.msk [vmem:[%s3 + $0x1c] sm:$0xf] %vm725, %v700
  %734 = vst.msk [vmem:[%s3 + $0x20] sm:$0xf] %vm725, %v701
  %735 = vst.msk [vmem:[%s3 + $0x24] sm:$0xf] %vm725, %v702
  %736 = vst.msk [vmem:[%s3 + $0x28] sm:$0xf] %vm725, %v703
  %737 = vst.msk [vmem:[%s3 + $0x2c] sm:$0xf] %vm725, %v704
  %738 = vst.msk [vmem:[%s3 + $0x30] sm:$0xf] %vm725, %v705
  %739 = vst.msk [vmem:[%s3 + $0x34] sm:$0xf] %vm725, %v706
  %740 = vst.msk [vmem:[%s3 + $0x38] sm:$0xf] %vm725, %v707
  %741 = vst.msk [vmem:[%s3 + $0x3c] sm:$0xf] %vm725, %v708
  // Predicated region
  $region14: #{fwd.14} parent=0 // pred_check
    _
  $region15: #{fwd.14} parent=0 // pred_check_branch
    %743 = sbr.rel (0) target = $region17
  $region16: #{fwd.14} parent=0 // pred_region
    _
  $region17: #{fwd.14} parent=0 // pred_fallthru
    _
  // Predicated region
  $region18: #{fwd.14} parent=0 // pred_check
    _
  $region19: #{fwd.14} parent=0 // pred_check_branch
    %745 = sbr.rel (0) target = $region21
  $region20: #{fwd.14} parent=0 // pred_region
    _
  $region21: #{fwd.14} parent=0 // pred_fallthru
    _

// kernel: fwd.19
$region0: #{fwd.19}
  #allocation0 [shape = 'u32[]', space=smem, size = 0x4, offset = 0x4, fixed_abs, tag = 'smem constant byte address 0x4 - core index']
  #allocation1 [shape = 'u32[144,128]{1,0:T(1,128)}', space=vmem, size = 0x12000, scoped, tag = 'internal scratch']
  %s0 = inlined_call_operand.vmem [shape: bf16[2,16,72], index: 0, kind: input, shape index: {}]
  %s1 = inlined_call_operand.vmem [shape: bf16[72,24], index: 1, kind: input, shape index: {}]
  %s2 = inlined_call_operand.vmem [shape: f32[1,24], index: 2, kind: input, shape index: {}]
  %s3 = inlined_call_operand.vmem [shape: bf16[2,16,24], index: 3, kind: output, shape index: {}]
  %s4 = sld [smem:[#allocation0]]
  $region45: #{fwd.19} parent=0
    _
  %s6 = ssub.s32 1, %s4
  %s7 = scalar_select 0, %s6, %s4
  loop: start=0, step=1, limit=4
  $region2: #{fwd.19} parent=0 // loop_pre_header
    _
  $region3: #{fwd.19} parent=0 // loop_header
    %s9 = sphi 0, %s13
    %p10 = scmp.ge.s32.totalorder %s9, 4
    %s16 = sphi 0, %s28
    %s17 = sphi 0, %s24
    %s18 = sphi 0, %s16
    %s19 = sphi 0, %s17
    %s20 = sphi 0, %s18
    %s21 = sphi 0, %s19
    %s33 = sphi 0, %s35
    %s36 = sphi 0, %s33
    %s37 = sphi 0, %s36
    %s53 = sphi 0, %s37
    %s57 = sphi 0, %s57
    %s59 = sphi 0, %s57
    %s60 = sphi 0, %s59
    %s74 = sphi 0, %s60
    %s78 = sphi 0, %s78
    %s80 = sphi 0, %s78
    %s81 = sphi 0, %s80
    %s95 = sphi 0, %s81
    %s103 = sphi 0, %s105
    %s106 = sphi 0, %s103
    %s107 = sphi 0, %s106
    %s123 = sphi 0, %s107
  $region4: #{fwd.19} parent=0 // loop_header_branch
    %12 = sbr.rel (%p10) target = $region8
  $region5: #{fwd.19} parent=0 // loop_body
    %s14 = ssub.s32 %s9, 1
    %s15 = ssub.s32 %s9, 2
    %s22 = sadd.s32 1, %s17
    %p23 = scmp.ge.s32.totalorder %s22, 1
    %s24 = scalar_select %p23, 0, %s22
    %s25 = sadd.s32 1, %s16
    %s26 = scalar_select %p23, %s25, %s16
    %p27 = scmp.ge.s32.totalorder %s26, 2
    %s28 = scalar_select %p27, 0, %s26
    %s29 = ssub.s32 %s16, %s28
    %s30 = ssub.s32 %s17, %s24
    %s31 = sor.u32 %s29, %s30
    %p32 = scmp.eq.s32.totalorder %s31, 0
    %s34 = sadd.s32 %s33, 1
    %s35 = scalar_select %p32, %s33, %s34
    %p38 = pneg %p32
    %p39 = scmp.eq.s32.totalorder %s9, 1
    %p40 = por %p38, %p39
    %p41 = scmp.ne.s32.totalorder %s33, %s36
    %p42 = scmp.eq.s32.totalorder %s9, 0
    %p43 = por %p41, %p42
    %p44 = scmp.ne.s32.totalorder %s33, %s36
    %p45 = scmp.eq.s32.totalorder %s14, 1
    %p46 = por %p44, %p45
    %p47 = scmp.ne.s32.totalorder %s36, %s37
    %p48 = scmp.eq.s32.totalorder %s14, 0
    %p49 = por %p47, %p48
    %p50 = scmp.ne.s32.totalorder %s36, %s37
    %p51 = scmp.eq.s32.totalorder %s15, 1
    %p52 = por %p50, %p51
    %p54 = scmp.ne.s32.totalorder %s37, %s53
    %p55 = scmp.eq.s32.totalorder %s15, 0
    %p56 = por %p54, %p55
    %s58 = sadd.s32 %s57, 1
    %p61 = scmp.eq.s32.totalorder %s9, 1
    %p62 = scmp.ne.s32.totalorder %s57, %s59
    %p63 = scmp.eq.s32.totalorder %s9, 0
    %p64 = por %p62, %p63
    %p65 = scmp.ne.s32.totalorder %s57, %s59
    %p66 = scmp.eq.s32.totalorder %s14, 1
    %p67 = por %p65, %p66
    %p68 = scmp.ne.s32.totalorder %s59, %s60
    %p69 = scmp.eq.s32.totalorder %s14, 0
    %p70 = por %p68, %p69
    %p71 = scmp.ne.s32.totalorder %s59, %s60
    %p72 = scmp.eq.s32.totalorder %s15, 1
    %p73 = por %p71, %p72
    %p75 = scmp.ne.s32.totalorder %s60, %s74
    %p76 = scmp.eq.s32.totalorder %s15, 0
    %p77 = por %p75, %p76
    %s79 = sadd.s32 %s78, 1
    %p82 = scmp.eq.s32.totalorder %s9, 1
    %p83 = scmp.ne.s32.totalorder %s78, %s80
    %p84 = scmp.eq.s32.totalorder %s9, 0
    %p85 = por %p83, %p84
    %p86 = scmp.ne.s32.totalorder %s78, %s80
    %p87 = scmp.eq.s32.totalorder %s14, 1
    %p88 = por %p86, %p87
    %p89 = scmp.ne.s32.totalorder %s80, %s81
    %p90 = scmp.eq.s32.totalorder %s14, 0
    %p91 = por %p89, %p90
    %p92 = scmp.ne.s32.totalorder %s80, %s81
    %p93 = scmp.eq.s32.totalorder %s15, 1
    %p94 = por %p92, %p93
    %p96 = scmp.ne.s32.totalorder %s81, %s95
    %p97 = scmp.eq.s32.totalorder %s15, 0
    %p98 = por %p96, %p97
    %s99 = ssub.s32 %s16, %s28
    %s100 = ssub.s32 %s17, %s24
    %s101 = sor.u32 %s99, %s100
    %p102 = scmp.eq.s32.totalorder %s101, 0
    %s104 = sadd.s32 %s103, 1
    %s105 = scalar_select %p102, %s103, %s104
    %p108 = pneg %p102
    %p109 = scmp.eq.s32.totalorder %s9, 1
    %p110 = por %p108, %p109
    %p111 = scmp.ne.s32.totalorder %s103, %s106
    %p112 = scmp.eq.s32.totalorder %s9, 0
    %p113 = por %p111, %p112
    %p114 = scmp.ne.s32.totalorder %s103, %s106
    %p115 = scmp.eq.s32.totalorder %s14, 1
    %p116 = por %p114, %p115
    %p117 = scmp.ne.s32.totalorder %s106, %s107
    %p118 = scmp.eq.s32.totalorder %s14, 0
    %p119 = por %p117, %p118
    %p120 = scmp.ne.s32.totalorder %s106, %s107
    %p121 = scmp.eq.s32.totalorder %s15, 1
    %p122 = por %p120, %p121
    %p124 = scmp.ne.s32.totalorder %s107, %s123
    %p125 = scmp.eq.s32.totalorder %s15, 0
    %p126 = por %p124, %p125
    %p127 = scmp.le.s32.totalorder 1, %s9
    %p128 = scmp.lt.s32.totalorder %s9, 3
    %p129 = pnand %p127, %p128
    %p130 = pneg %p129
    // Predicated region
    $region9: #{fwd.19} parent=5 // pred_check
      _
    $region10: #{fwd.19} parent=5 // pred_check_branch
      %132 = sbr.rel (%p129) target = $region12
    $region11: #{fwd.19} parent=5 // pred_region
      %s133 = ssub.s32 %s9, 1
      // Predicated region
      $region13: #{fwd.19} parent=11 // pred_check
        %p134 = pneg %p70
      $region14: #{fwd.19} parent=11 // pred_check_branch
        %136 = sbr.rel (%p134) target = $region16
      $region15: #{fwd.19} parent=11 // pred_region
        _
      $region16: #{fwd.19} parent=11 // pred_fallthru
        _
      // Predicated region
      $region17: #{fwd.19} parent=11 // pred_check
        %p137 = pneg %p91
      $region18: #{fwd.19} parent=11 // pred_check_branch
        %139 = sbr.rel (%p137) target = $region20
      $region19: #{fwd.19} parent=11 // pred_region
        _
      $region20: #{fwd.19} parent=11 // pred_fallthru
        _
    $region12: #{fwd.19} parent=5 // pred_fallthru
      _
    %p140 = scmp.lt.s32.totalorder %s9, 2
    // Predicated region
    $region21: #{fwd.19} parent=5 // pred_check
      %p141 = pneg %p140
    $region22: #{fwd.19} parent=5 // pred_check_branch
      %143 = sbr.rel (%p141) target = $region24
    $region23: #{fwd.19} parent=5 // pred_region
      // Predicated region
      $region25: #{fwd.19} parent=23 // pred_check
        %p144 = pneg %p43
      $region26: #{fwd.19} parent=23 // pred_check_branch
        %146 = sbr.rel (%p144) target = $region28
      $region27: #{fwd.19} parent=23 // pred_region
        %s147 = smul.u32 2, %s17
        %p148 = scmp.lt.s32.totalorder %s16, 1
        %s149 = scalar_select %p148, %s16, 1
        %p150 = scmp.lt.s32.totalorder %s147, 1
        %s151 = scalar_select %p150, %s147, 1
        %s152 = smul.addr %s149, 2
        %s153 = sadd.s32 %s151, %s152
        %s154 = smul.addr %s153, 4
        %s155 = scalar_lea.vmem %s0, %s154
        %s156 = smul.u32 2, %s17
      $region28: #{fwd.19} parent=23 // pred_fallthru
        _
    $region24: #{fwd.19} parent=5 // pred_fallthru
      _
    %p157 = scmp.le.s32.totalorder 1, %s9
    %p158 = scmp.lt.s32.totalorder %s9, 3
    %p159 = pnand %p157, %p158
    %p160 = pneg %p159
    // Predicated region
    $region29: #{fwd.19} parent=5 // pred_check
      _
    $region30: #{fwd.19} parent=5 // pred_check_branch
      %162 = sbr.rel (%p159) target = $region32
    $region31: #{fwd.19} parent=5 // pred_region
      %s163 = ssub.s32 %s9, 1
      %s164 = smul.u32 2, %s19
      %p165 = scmp.lt.s32.totalorder %s18, 1
      %s166 = scalar_select %p165, %s18, 1
      %p167 = scmp.lt.s32.totalorder %s164, 1
      %s168 = scalar_select %p167, %s164, 1
      %s169 = smul.addr %s166, 2
      %s170 = sadd.s32 %s168, %s169
      %s171 = smul.addr %s170, 4
      %s172 = scalar_lea.vmem %s0, %s171
      %p173 = pneg %p49
      %p174 = pneg %p46
      %p175 = pneg %p70
      %p176 = pneg %p67
      %p177 = pneg %p91
      %p178 = pneg %p88
      %p179 = pneg %p119
      %p180 = pneg %p116
      %s181 = smul.u32 2, %s19
      %p182 = scmp.lt.s32.totalorder %s18, 1
      %s183 = scalar_select %p182, %s18, 1
      %p184 = scmp.lt.s32.totalorder %s181, 1
      %s185 = scalar_select %p184, %s181, 1
      %s186 = smul.addr %s183, 2
      %s187 = sadd.s32 %s185, %s186
      %s188 = smul.addr %s187, 4
      %s189 = scalar_lea.vmem %s3, %s188
      %s190 = smul.u32 2, %s19
      %p191 = scmp.lt.s32.totalorder %s18, 1
      %s192 = scalar_select %p191, %s18, 1
      %p193 = scmp.lt.s32.totalorder %s190, 1
      %s194 = scalar_select %p193, %s190, 1
      %s195 = smul.addr %s192, 2
      %s196 = sadd.s32 %s194, %s195
      %s197 = smul.addr %s196, 4
      %s198 = scalar_lea.vmem %s0, %s197
      %s199 = smul.u32 2, %s19
      %s200 = smul.u32 2, %s19
      %p201 = scmp.lt.s32.totalorder %s18, 1
      %s202 = scalar_select %p201, %s18, 1
      %p203 = scmp.lt.s32.totalorder %s200, 1
      %s204 = scalar_select %p203, %s200, 1
      %s205 = smul.addr %s202, 2
      %s206 = sadd.s32 %s204, %s205
      %s207 = smul.addr %s206, 4
      %s208 = scalar_lea.vmem %s3, %s207
      %s209 = smul.u32 2, %s19
      %v211 = vld [vmem:[%s198] sm:$0xf]
      %v212 = vld [vmem:[%s198 + $0x4] sm:$0xf]
      %v213 = vld [vmem:[%s1] sm:$0xf]
      %v214 = vld [vmem:[%s1 + $0x4] sm:$0xf]
      %v215 = vld [vmem:[%s1 + $0x8] sm:$0xf]
      %v216 = vld [vmem:[%s1 + $0xc] sm:$0xf]
      %v217 = vld [vmem:[%s1 + $0x10] sm:$0xf]
      %v218 = vld [vmem:[%s1 + $0x14] sm:$0xf]
      %v219 = vld [vmem:[%s1 + $0x18] sm:$0xf]
      %v220 = vld [vmem:[%s1 + $0x1c] sm:$0xf]
      %v221 = vld [vmem:[%s1 + $0x20] sm:$0xf]
      %v222 = vld [vmem:[%s2] sm:$0x1]
      %v224 = vlaneseq
      %v225 = vshrl.u32 %v224, 7
      %v226 = vsub.s32 0, %v225
      %v227 = vrot.slane %v222, %v226
      %v231 = vunpack.c.l.b16 %v211
      %v232 = vunpack.c.l.b16 %v212
      %v233 = vpack.c.b16 %v232, %v231
      %v243 = vunpack.c.l.b16 %v213
      %v244 = vunpack.c.l.b16 %v214
      %v245 = vunpack.c.l.b16 %v215
      %v246 = vunpack.c.l.b16 %v216
      %v247 = vunpack.c.l.b16 %v217
      %v248 = vunpack.c.l.b16 %v218
      %v249 = vunpack.c.l.b16 %v219
      %v250 = vunpack.c.l.b16 %v220
      %v251 = vunpack.c.l.b16 %v221
      %v252 = vpack.c.b16 %v244, %v243
      %v253 = vpack.c.b16 %v246, %v245
      %v254 = vpack.c.b16 %v248, %v247
      %v255 = vpack.c.b16 %v250, %v249
      %v256 = vpack.c.b16 %v251, %v251
      %vm261 = vcmask 588800
      %v263 = vsel %vm261, %v233, 0
      %vm265 = vcmask 1043456
      %v267 = vsel %vm265, %v256, 0
      %269 = vmatprep.subr.bf16.mxu0 0
      %270 = vmatpush1.bf16.msra.mxu0 0
      %271 = vmatprep.subr.bf16.mxu0 0
      %272 = vmatpush1.bf16.msra.mxu0 0
      %273 = vmatprep.subr.bf16.mxu0 0
      %274 = vmatpush1.bf16.msra.mxu0 0
      %275 = vmatprep.subr.bf16.mxu0 0
      %276 = vmatpush1.bf16.msra.mxu0 %v267
      %277 = vmatprep.subr.bf16.mxu0 0
      %278 = vmatpush1.bf16.msra.mxu0 %v255
      %279 = vmatprep.subr.bf16.mxu0 0
      %280 = vmatpush1.bf16.msra.mxu0 %v254
      %281 = vmatprep.subr.bf16.mxu0 0
      %282 = vmatpush1.bf16.msra.mxu0 %v253
      %283 = vmatprep.subr.bf16.mxu0 0
      %284 = vmatpush1.bf16.msra.mxu0 %v252
      %285 = vmatprep.subr.bf16.mxu0 0
      %286 = vmatpush2.bf16.msra.mxu0 0
      %287 = vmatprep.subr.bf16.mxu0 0
      %288 = vmatpush2.bf16.msra.mxu0 0
      %289 = vmatprep.subr.bf16.mxu0 0
      %290 = vmatpush2.bf16.msra.mxu0 0
      %291 = vmatprep.subr.bf16.mxu0 0
      %292 = vmatpush2.bf16.msra.mxu0 0
      %293 = vmatprep.subr.bf16.mxu0 0
      %294 = vmatpush2.bf16.msra.mxu0 0
      %295 = vmatprep.subr.bf16.mxu0 0
      %296 = vmatpush2.bf16.msra.mxu0 0
      %297 = vmatprep.subr.bf16.mxu0 0
      %298 = vmatpush2.bf16.msra.mxu0 0
      %299 = vmatprep.subr.bf16.mxu0 0
      %300 = vmatpush2.bf16.msra.mxu0 0
      %301 = vmatprep.mubr.bf16.mxu0 0
      %302 = vmatmul.mubr.bf16.gmra.mxu0 %v263
      %v303 = vpop.f32.mrf.mxu0
      %v304 = vadd.f32 %v227, %v303
      %v305 = vpop.f32.mrf.mxu0
      %v306 = vpop.f32.mrf.mxu0
      %v307 = vadd.f32 %v227, %v306
      %v308 = vpop.f32.mrf.mxu0
      %309 = vdwg.mxu0
      %v310 = vpack.c.bf16 %v307, %v304
      %v312 = vunpack.c.l.b16 %v310
      %v313 = vunpack.c.h.b16 %v310
      %v314 = vpack.c.b16 %v312, %v312
      %v315 = vpack.c.b16 %v313, %v313
      %vm318 = vcmask 191488
      %319 = vst.msk [vmem:[%s208] sm:$0xf] %vm318, %v314
      %320 = vst.msk [vmem:[%s208 + $0x4] sm:$0xf] %vm318, %v315
      %s321 = smul.u32 2, %s19
      %p322 = scmp.lt.s32.totalorder %s18, 1
      %s323 = scalar_select %p322, %s18, 1
      %p324 = scmp.lt.s32.totalorder %s321, 1
      %s325 = scalar_select %p324, %s321, 1
      %s326 = smul.addr %s323, 2
      %s327 = sadd.s32 %s325, %s326
      %s328 = smul.addr %s327, 4
      %s329 = scalar_lea.vmem %s3, %s328
      // Predicated region
      $region33: #{fwd.19} parent=31 // pred_check
        %p330 = pneg %p116
      $region34: #{fwd.19} parent=31 // pred_check_branch
        %332 = sbr.rel (%p330) target = $region36
      $region35: #{fwd.19} parent=31 // pred_region
        %s333 = smul.u32 2, %s19
      $region36: #{fwd.19} parent=31 // pred_fallthru
        _
    $region32: #{fwd.19} parent=5 // pred_fallthru
      _
    %p334 = scmp.le.s32.totalorder 2, %s9
    // Predicated region
    $region37: #{fwd.19} parent=5 // pred_check
      %p335 = pneg %p334
    $region38: #{fwd.19} parent=5 // pred_check_branch
      %337 = sbr.rel (%p335) target = $region40
    $region39: #{fwd.19} parent=5 // pred_region
      %s338 = ssub.s32 %s9, 2
      // Predicated region
      $region41: #{fwd.19} parent=39 // pred_check
        %p339 = pneg %p122
      $region42: #{fwd.19} parent=39 // pred_check_branch
        %341 = sbr.rel (%p339) target = $region44
      $region43: #{fwd.19} parent=39 // pred_region
        %s342 = smul.u32 2, %s21
        %p343 = scmp.lt.s32.totalorder %s20, 1
        %s344 = scalar_select %p343, %s20, 1
        %p345 = scmp.lt.s32.totalorder %s342, 1
        %s346 = scalar_select %p345, %s342, 1
        %s347 = smul.addr %s344, 2
        %s348 = sadd.s32 %s346, %s347
        %s349 = smul.addr %s348, 4
        %s350 = scalar_lea.vmem %s3, %s349
      $region44: #{fwd.19} parent=39 // pred_fallthru
        _
    $region40: #{fwd.19} parent=5 // pred_fallthru
      _
  $region6: #{fwd.19} parent=0 // loop_footer
    %s13 = sadd.s32 1, %s9
  $region7: #{fwd.19} parent=0 // loop_footer_branch
    %8 = sbr.rel target = $region3
  $region8: #{fwd.19} parent=0 // loop_exit
    _

// kernel: fwd.20
$region0: #{fwd.20}
  #allocation0 [shape = 'u32[]', space=smem, size = 0x4, offset = 0x4, fixed_abs, tag = 'smem constant byte address 0x4 - core index']
  #allocation1 [shape = 'u32[144,128]{1,0:T(1,128)}', space=vmem, size = 0x12000, scoped, tag = 'internal scratch']
  %s0 = inlined_call_operand.vmem [shape: bf16[2,16,24], index: 0, kind: input, shape index: {}]
  %s1 = inlined_call_operand.vmem [shape: bf16[24,88], index: 1, kind: input, shape index: {}]
  %s2 = inlined_call_operand.vmem [shape: f32[1,88], index: 2, kind: input, shape index: {}]
  %s3 = inlined_call_operand.vmem [shape: bf16[2,16,88], index: 3, kind: output, shape index: {}]
  %s4 = sld [smem:[#allocation0]]
  $region45: #{fwd.20} parent=0
    _
  %s6 = ssub.s32 1, %s4
  %s7 = scalar_select 0, %s6, %s4
  loop: start=0, step=1, limit=4
  $region2: #{fwd.20} parent=0 // loop_pre_header
    _
  $region3: #{fwd.20} parent=0 // loop_header
    %s9 = sphi 0, %s13
    %p10 = scmp.ge.s32.totalorder %s9, 4
    %s16 = sphi 0, %s28
    %s17 = sphi 0, %s24
    %s18 = sphi 0, %s16
    %s19 = sphi 0, %s17
    %s20 = sphi 0, %s18
    %s21 = sphi 0, %s19
    %s33 = sphi 0, %s35
    %s36 = sphi 0, %s33
    %s37 = sphi 0, %s36
    %s53 = sphi 0, %s37
    %s57 = sphi 0, %s57
    %s59 = sphi 0, %s57
    %s60 = sphi 0, %s59
    %s74 = sphi 0, %s60
    %s78 = sphi 0, %s78
    %s80 = sphi 0, %s78
    %s81 = sphi 0, %s80
    %s95 = sphi 0, %s81
    %s103 = sphi 0, %s105
    %s106 = sphi 0, %s103
    %s107 = sphi 0, %s106
    %s123 = sphi 0, %s107
  $region4: #{fwd.20} parent=0 // loop_header_branch
    %12 = sbr.rel (%p10) target = $region8
  $region5: #{fwd.20} parent=0 // loop_body
    %s14 = ssub.s32 %s9, 1
    %s15 = ssub.s32 %s9, 2
    %s22 = sadd.s32 1, %s17
    %p23 = scmp.ge.s32.totalorder %s22, 1
    %s24 = scalar_select %p23, 0, %s22
    %s25 = sadd.s32 1, %s16
    %s26 = scalar_select %p23, %s25, %s16
    %p27 = scmp.ge.s32.totalorder %s26, 2
    %s28 = scalar_select %p27, 0, %s26
    %s29 = ssub.s32 %s16, %s28
    %s30 = ssub.s32 %s17, %s24
    %s31 = sor.u32 %s29, %s30
    %p32 = scmp.eq.s32.totalorder %s31, 0
    %s34 = sadd.s32 %s33, 1
    %s35 = scalar_select %p32, %s33, %s34
    %p38 = pneg %p32
    %p39 = scmp.eq.s32.totalorder %s9, 1
    %p40 = por %p38, %p39
    %p41 = scmp.ne.s32.totalorder %s33, %s36
    %p42 = scmp.eq.s32.totalorder %s9, 0
    %p43 = por %p41, %p42
    %p44 = scmp.ne.s32.totalorder %s33, %s36
    %p45 = scmp.eq.s32.totalorder %s14, 1
    %p46 = por %p44, %p45
    %p47 = scmp.ne.s32.totalorder %s36, %s37
    %p48 = scmp.eq.s32.totalorder %s14, 0
    %p49 = por %p47, %p48
    %p50 = scmp.ne.s32.totalorder %s36, %s37
    %p51 = scmp.eq.s32.totalorder %s15, 1
    %p52 = por %p50, %p51
    %p54 = scmp.ne.s32.totalorder %s37, %s53
    %p55 = scmp.eq.s32.totalorder %s15, 0
    %p56 = por %p54, %p55
    %s58 = sadd.s32 %s57, 1
    %p61 = scmp.eq.s32.totalorder %s9, 1
    %p62 = scmp.ne.s32.totalorder %s57, %s59
    %p63 = scmp.eq.s32.totalorder %s9, 0
    %p64 = por %p62, %p63
    %p65 = scmp.ne.s32.totalorder %s57, %s59
    %p66 = scmp.eq.s32.totalorder %s14, 1
    %p67 = por %p65, %p66
    %p68 = scmp.ne.s32.totalorder %s59, %s60
    %p69 = scmp.eq.s32.totalorder %s14, 0
    %p70 = por %p68, %p69
    %p71 = scmp.ne.s32.totalorder %s59, %s60
    %p72 = scmp.eq.s32.totalorder %s15, 1
    %p73 = por %p71, %p72
    %p75 = scmp.ne.s32.totalorder %s60, %s74
    %p76 = scmp.eq.s32.totalorder %s15, 0
    %p77 = por %p75, %p76
    %s79 = sadd.s32 %s78, 1
    %p82 = scmp.eq.s32.totalorder %s9, 1
    %p83 = scmp.ne.s32.totalorder %s78, %s80
    %p84 = scmp.eq.s32.totalorder %s9, 0
    %p85 = por %p83, %p84
    %p86 = scmp.ne.s32.totalorder %s78, %s80
    %p87 = scmp.eq.s32.totalorder %s14, 1
    %p88 = por %p86, %p87
    %p89 = scmp.ne.s32.totalorder %s80, %s81
    %p90 = scmp.eq.s32.totalorder %s14, 0
    %p91 = por %p89, %p90
    %p92 = scmp.ne.s32.totalorder %s80, %s81
    %p93 = scmp.eq.s32.totalorder %s15, 1
    %p94 = por %p92, %p93
    %p96 = scmp.ne.s32.totalorder %s81, %s95
    %p97 = scmp.eq.s32.totalorder %s15, 0
    %p98 = por %p96, %p97
    %s99 = ssub.s32 %s16, %s28
    %s100 = ssub.s32 %s17, %s24
    %s101 = sor.u32 %s99, %s100
    %p102 = scmp.eq.s32.totalorder %s101, 0
    %s104 = sadd.s32 %s103, 1
    %s105 = scalar_select %p102, %s103, %s104
    %p108 = pneg %p102
    %p109 = scmp.eq.s32.totalorder %s9, 1
    %p110 = por %p108, %p109
    %p111 = scmp.ne.s32.totalorder %s103, %s106
    %p112 = scmp.eq.s32.totalorder %s9, 0
    %p113 = por %p111, %p112
    %p114 = scmp.ne.s32.totalorder %s103, %s106
    %p115 = scmp.eq.s32.totalorder %s14, 1
    %p116 = por %p114, %p115
    %p117 = scmp.ne.s32.totalorder %s106, %s107
    %p118 = scmp.eq.s32.totalorder %s14, 0
    %p119 = por %p117, %p118
    %p120 = scmp.ne.s32.totalorder %s106, %s107
    %p121 = scmp.eq.s32.totalorder %s15, 1
    %p122 = por %p120, %p121
    %p124 = scmp.ne.s32.totalorder %s107, %s123
    %p125 = scmp.eq.s32.totalorder %s15, 0
    %p126 = por %p124, %p125
    %p127 = scmp.le.s32.totalorder 1, %s9
    %p128 = scmp.lt.s32.totalorder %s9, 3
    %p129 = pnand %p127, %p128
    %p130 = pneg %p129
    // Predicated region
    $region9: #{fwd.20} parent=5 // pred_check
      _
    $region10: #{fwd.20} parent=5 // pred_check_branch
      %132 = sbr.rel (%p129) target = $region12
    $region11: #{fwd.20} parent=5 // pred_region
      %s133 = ssub.s32 %s9, 1
      // Predicated region
      $region13: #{fwd.20} parent=11 // pred_check
        %p134 = pneg %p70
      $region14: #{fwd.20} parent=11 // pred_check_branch
        %136 = sbr.rel (%p134) target = $region16
      $region15: #{fwd.20} parent=11 // pred_region
        _
      $region16: #{fwd.20} parent=11 // pred_fallthru
        _
      // Predicated region
      $region17: #{fwd.20} parent=11 // pred_check
        %p137 = pneg %p91
      $region18: #{fwd.20} parent=11 // pred_check_branch
        %139 = sbr.rel (%p137) target = $region20
      $region19: #{fwd.20} parent=11 // pred_region
        _
      $region20: #{fwd.20} parent=11 // pred_fallthru
        _
    $region12: #{fwd.20} parent=5 // pred_fallthru
      _
    %p140 = scmp.lt.s32.totalorder %s9, 2
    // Predicated region
    $region21: #{fwd.20} parent=5 // pred_check
      %p141 = pneg %p140
    $region22: #{fwd.20} parent=5 // pred_check_branch
      %143 = sbr.rel (%p141) target = $region24
    $region23: #{fwd.20} parent=5 // pred_region
      // Predicated region
      $region25: #{fwd.20} parent=23 // pred_check
        %p144 = pneg %p43
      $region26: #{fwd.20} parent=23 // pred_check_branch
        %146 = sbr.rel (%p144) target = $region28
      $region27: #{fwd.20} parent=23 // pred_region
        %s147 = smul.u32 2, %s17
        %p148 = scmp.lt.s32.totalorder %s16, 1
        %s149 = scalar_select %p148, %s16, 1
        %p150 = scmp.lt.s32.totalorder %s147, 1
        %s151 = scalar_select %p150, %s147, 1
        %s152 = smul.addr %s149, 2
        %s153 = sadd.s32 %s151, %s152
        %s154 = smul.addr %s153, 4
        %s155 = scalar_lea.vmem %s0, %s154
        %s156 = smul.u32 2, %s17
      $region28: #{fwd.20} parent=23 // pred_fallthru
        _
    $region24: #{fwd.20} parent=5 // pred_fallthru
      _
    %p157 = scmp.le.s32.totalorder 1, %s9
    %p158 = scmp.lt.s32.totalorder %s9, 3
    %p159 = pnand %p157, %p158
    %p160 = pneg %p159
    // Predicated region
    $region29: #{fwd.20} parent=5 // pred_check
      _
    $region30: #{fwd.20} parent=5 // pred_check_branch
      %162 = sbr.rel (%p159) target = $region32
    $region31: #{fwd.20} parent=5 // pred_region
      %s163 = ssub.s32 %s9, 1
      %s164 = smul.u32 2, %s19
      %p165 = scmp.lt.s32.totalorder %s18, 1
      %s166 = scalar_select %p165, %s18, 1
      %p167 = scmp.lt.s32.totalorder %s164, 1
      %s168 = scalar_select %p167, %s164, 1
      %s169 = smul.addr %s166, 2
      %s170 = sadd.s32 %s168, %s169
      %s171 = smul.addr %s170, 4
      %s172 = scalar_lea.vmem %s0, %s171
      %p173 = pneg %p49
      %p174 = pneg %p46
      %p175 = pneg %p70
      %p176 = pneg %p67
      %p177 = pneg %p91
      %p178 = pneg %p88
      %p179 = pneg %p119
      %p180 = pneg %p116
      %s181 = smul.u32 2, %s19
      %p182 = scmp.lt.s32.totalorder %s18, 1
      %s183 = scalar_select %p182, %s18, 1
      %p184 = scmp.lt.s32.totalorder %s181, 1
      %s185 = scalar_select %p184, %s181, 1
      %s186 = smul.addr %s183, 2
      %s187 = sadd.s32 %s185, %s186
      %s188 = smul.addr %s187, 4
      %s189 = scalar_lea.vmem %s3, %s188
      %s190 = smul.u32 2, %s19
      %p191 = scmp.lt.s32.totalorder %s18, 1
      %s192 = scalar_select %p191, %s18, 1
      %p193 = scmp.lt.s32.totalorder %s190, 1
      %s194 = scalar_select %p193, %s190, 1
      %s195 = smul.addr %s192, 2
      %s196 = sadd.s32 %s194, %s195
      %s197 = smul.addr %s196, 4
      %s198 = scalar_lea.vmem %s0, %s197
      %s199 = smul.u32 2, %s19
      %s200 = smul.u32 2, %s19
      %p201 = scmp.lt.s32.totalorder %s18, 1
      %s202 = scalar_select %p201, %s18, 1
      %p203 = scmp.lt.s32.totalorder %s200, 1
      %s204 = scalar_select %p203, %s200, 1
      %s205 = smul.addr %s202, 2
      %s206 = sadd.s32 %s204, %s205
      %s207 = smul.addr %s206, 4
      %s208 = scalar_lea.vmem %s3, %s207
      %s209 = smul.u32 2, %s19
      %v211 = vld [vmem:[%s198] sm:$0xf]
      %v212 = vld [vmem:[%s198 + $0x4] sm:$0xf]
      %v213 = vld [vmem:[%s1] sm:$0xf]
      %v214 = vld [vmem:[%s1 + $0x4] sm:$0xf]
      %v215 = vld [vmem:[%s1 + $0x8] sm:$0xf]
      %v216 = vld [vmem:[%s2] sm:$0x1]
      %v218 = vlaneseq
      %v219 = vshrl.u32 %v218, 7
      %v220 = vsub.s32 0, %v219
      %v221 = vrot.slane %v216, %v220
      %v225 = vunpack.c.l.b16 %v211
      %v226 = vunpack.c.l.b16 %v212
      %v227 = vpack.c.b16 %v226, %v225
      %v231 = vunpack.c.l.b16 %v213
      %v232 = vunpack.c.l.b16 %v214
      %v233 = vunpack.c.l.b16 %v215
      %v234 = vpack.c.b16 %v232, %v231
      %v235 = vpack.c.b16 %v233, %v233
      %vm237 = vcmask 195584
      %v239 = vsel %vm237, %v227, 0
      %vm241 = vcmask 1043456
      %v243 = vsel %vm241, %v235, 0
      %245 = vmatprep.subr.bf16.mxu0 0
      %246 = vmatpush1.bf16.msra.mxu0 0
      %247 = vmatprep.subr.bf16.mxu0 0
      %248 = vmatpush1.bf16.msra.mxu0 0
      %249 = vmatprep.subr.bf16.mxu0 0
      %250 = vmatpush1.bf16.msra.mxu0 0
      %251 = vmatprep.subr.bf16.mxu0 0
      %252 = vmatpush1.bf16.msra.mxu0 0
      %253 = vmatprep.subr.bf16.mxu0 0
      %254 = vmatpush1.bf16.msra.mxu0 0
      %255 = vmatprep.subr.bf16.mxu0 0
      %256 = vmatpush1.bf16.msra.mxu0 0
      %257 = vmatprep.subr.bf16.mxu0 0
      %258 = vmatpush1.bf16.msra.mxu0 %v243
      %259 = vmatprep.subr.bf16.mxu0 0
      %260 = vmatpush1.bf16.msra.mxu0 %v234
      %261 = vmatprep.subr.bf16.mxu0 0
      %262 = vmatpush2.bf16.msra.mxu0 0
      %263 = vmatprep.subr.bf16.mxu0 0
      %264 = vmatpush2.bf16.msra.mxu0 0
      %265 = vmatprep.subr.bf16.mxu0 0
      %266 = vmatpush2.bf16.msra.mxu0 0
      %267 = vmatprep.subr.bf16.mxu0 0
      %268 = vmatpush2.bf16.msra.mxu0 0
      %269 = vmatprep.subr.bf16.mxu0 0
      %270 = vmatpush2.bf16.msra.mxu0 0
      %271 = vmatprep.subr.bf16.mxu0 0
      %272 = vmatpush2.bf16.msra.mxu0 0
      %273 = vmatprep.subr.bf16.mxu0 0
      %274 = vmatpush2.bf16.msra.mxu0 0
      %275 = vmatprep.subr.bf16.mxu0 0
      %276 = vmatpush2.bf16.msra.mxu0 0
      %277 = vmatprep.mubr.bf16.mxu0 0
      %278 = vmatmul.mubr.bf16.gmra.mxu0 %v239
      %v279 = vpop.f32.mrf.mxu0
      %v280 = vadd.f32 %v221, %v279
      %v281 = vpop.f32.mrf.mxu0
      %v282 = vpop.f32.mrf.mxu0
      %v283 = vadd.f32 %v221, %v282
      %v284 = vpop.f32.mrf.mxu0
      %285 = vdwg.mxu0
      %v286 = vadd.f32 %v280, 3.0
      %v287 = vadd.f32 %v283, 3.0
      %v288 = vmax.f32 %v286, 0.0
      %v289 = vmax.f32 %v287, 0.0
      %v290 = vmin.f32 %v288, 6.0
      %v291 = vmin.f32 %v289, 6.0
      %v292 = vmul.f32 %v280, %v290
      %v293 = vmul.f32 %v283, %v291
      %v294 = vmul.f32 %v292, 0.16666667
      %v295 = vmul.f32 %v293, 0.16666667
      %v296 = vpack.c.bf16 %v295, %v294
      %v298 = vunpack.c.l.b16 %v296
      %v299 = vunpack.c.h.b16 %v296
      %v300 = vpack.c.b16 %v298, %v298
      %v301 = vpack.c.b16 %v299, %v299
      %vm304 = vcmask 715776
      %305 = vst.msk [vmem:[%s208] sm:$0xf] %vm304, %v300
      %306 = vst.msk [vmem:[%s208 + $0x4] sm:$0xf] %vm304, %v301
      %s307 = smul.u32 2, %s19
      %p308 = scmp.lt.s32.totalorder %s18, 1
      %s309 = scalar_select %p308, %s18, 1
      %p310 = scmp.lt.s32.totalorder %s307, 1
      %s311 = scalar_select %p310, %s307, 1
      %s312 = smul.addr %s309, 2
      %s313 = sadd.s32 %s311, %s312
      %s314 = smul.addr %s313, 4
      %s315 = scalar_lea.vmem %s3, %s314
      // Predicated region
      $region33: #{fwd.20} parent=31 // pred_check
        %p316 = pneg %p116
      $region34: #{fwd.20} parent=31 // pred_check_branch
        %318 = sbr.rel (%p316) target = $region36
      $region35: #{fwd.20} parent=31 // pred_region
        %s319 = smul.u32 2, %s19
      $region36: #{fwd.20} parent=31 // pred_fallthru
        _
    $region32: #{fwd.20} parent=5 // pred_fallthru
      _
    %p320 = scmp.le.s32.totalorder 2, %s9
    // Predicated region
    $region37: #{fwd.20} parent=5 // pred_check
      %p321 = pneg %p320
    $region38: #{fwd.20} parent=5 // pred_check_branch
      %323 = sbr.rel (%p321) target = $region40
    $region39: #{fwd.20} parent=5 // pred_region
      %s324 = ssub.s32 %s9, 2
      // Predicated region
      $region41: #{fwd.20} parent=39 // pred_check
        %p325 = pneg %p122
      $region42: #{fwd.20} parent=39 // pred_check_branch
        %327 = sbr.rel (%p325) target = $region44
      $region43: #{fwd.20} parent=39 // pred_region
        %s328 = smul.u32 2, %s21
        %p329 = scmp.lt.s32.totalorder %s20, 1
        %s330 = scalar_select %p329, %s20, 1
        %p331 = scmp.lt.s32.totalorder %s328, 1
        %s332 = scalar_select %p331, %s328, 1
        %s333 = smul.addr %s330, 2
        %s334 = sadd.s32 %s332, %s333
        %s335 = smul.addr %s334, 4
        %s336 = scalar_lea.vmem %s3, %s335
      $region44: #{fwd.20} parent=39 // pred_fallthru
        _
    $region40: #{fwd.20} parent=5 // pred_fallthru
      _
  $region6: #{fwd.20} parent=0 // loop_footer
    %s13 = sadd.s32 1, %s9
  $region7: #{fwd.20} parent=0 // loop_footer_branch
    %8 = sbr.rel target = $region3
  $region8: #{fwd.20} parent=0 // loop_exit
    _

// kernel: fwd.18
$region0: #{fwd.18}
  #allocation0 [shape = 'u32[]', space=smem, size = 0x4, offset = 0x4, fixed_abs, tag = 'smem constant byte address 0x4 - core index']
  #allocation1 [shape = 'u32[144,128]{1,0:T(1,128)}', space=vmem, size = 0x12000, scoped, tag = 'internal scratch']
  %s0 = inlined_call_operand.vmem [shape: bf16[9,32,72], index: 0, kind: input, shape index: {}]
  %s1 = inlined_call_operand.vmem [shape: bf16[9,72], index: 1, kind: input, shape index: {}]
  %s2 = inlined_call_operand.vmem [shape: f32[1,72], index: 2, kind: input, shape index: {}]
  %s3 = inlined_call_operand.vmem [shape: bf16[32,72], index: 3, kind: output, shape index: {}]
  %s4 = sld [smem:[#allocation0]]
  $region22: #{fwd.18} parent=0
    _
  %s6 = ssub.s32 1, %s4
  %s7 = scalar_select 0, %s6, %s4
  // Predicated region
  $region2: #{fwd.18} parent=0 // pred_check
    _
  $region3: #{fwd.18} parent=0 // pred_check_branch
    %9 = sbr.rel (0) target = $region5
  $region4: #{fwd.18} parent=0 // pred_region
    _
  $region5: #{fwd.18} parent=0 // pred_fallthru
    _
  // Predicated region
  $region6: #{fwd.18} parent=0 // pred_check
    _
  $region7: #{fwd.18} parent=0 // pred_check_branch
    %11 = sbr.rel (0) target = $region9
  $region8: #{fwd.18} parent=0 // pred_region
    _
  $region9: #{fwd.18} parent=0 // pred_fallthru
    _
  // Predicated region
  $region10: #{fwd.18} parent=0 // pred_check
    _
  $region11: #{fwd.18} parent=0 // pred_check_branch
    %13 = sbr.rel (0) target = $region13
  $region12: #{fwd.18} parent=0 // pred_region
    _
  $region13: #{fwd.18} parent=0 // pred_fallthru
    _
  %v14 = vld [vmem:[%s1] sm:$0xf]
  %v15 = vld [vmem:[%s1 + $0x4] sm:$0x1]
  %v16 = vunpack.c.l.bf16 %v14
  %v17 = vunpack.c.l.bf16 %v15
  %v18 = vld [vmem:[%s0] sm:$0xf]
  %v19 = vld [vmem:[%s0 + $0x4] sm:$0xf]
  %v20 = vld [vmem:[%s0 + $0x8] sm:$0xf]
  %v21 = vld [vmem:[%s0 + $0xc] sm:$0xf]
  %v22 = vunpack.c.l.bf16 %v18
  %v23 = vunpack.c.l.bf16 %v19
  %v24 = vunpack.c.l.bf16 %v20
  %v25 = vunpack.c.l.bf16 %v21
  %v26 = vlaneseq
  %v27 = vshrl.u32 %v26, 7
  %v28 = vsub.s32 0, %v27
  %v29 = vrot.slane %v16, %v28
  %v30 = vmul.f32 %v22, %v29
  %v31 = vmul.f32 %v23, %v29
  %v32 = vmul.f32 %v24, %v29
  %v33 = vmul.f32 %v25, %v29
  %s34 = scalar_lea.vmem %s0, 16
  %v35 = vld [vmem:[%s34] sm:$0xf]
  %v36 = vld [vmem:[%s34 + $0x4] sm:$0xf]
  %v37 = vld [vmem:[%s34 + $0x8] sm:$0xf]
  %v38 = vld [vmem:[%s34 + $0xc] sm:$0xf]
  %v39 = vunpack.c.l.bf16 %v35
  %v40 = vunpack.c.l.bf16 %v36
  %v41 = vunpack.c.l.bf16 %v37
  %v42 = vunpack.c.l.bf16 %v38
  %v43 = vlaneseq
  %v44 = vshrl.u32 %v43, 7
  %v45 = vsub.s32 1, %v44
  %v46 = vrot.slane %v16, %v45
  %v47 = vmul.f32 %v39, %v46
  %v48 = vmul.f32 %v40, %v46
  %v49 = vmul.f32 %v41, %v46
  %v50 = vmul.f32 %v42, %v46
  %v51 = vadd.f32 %v30, %v47
  %v52 = vadd.f32 %v31, %v48
  %v53 = vadd.f32 %v32, %v49
  %v54 = vadd.f32 %v33, %v50
  %s55 = scalar_lea.vmem %s0, 32
  %v56 = vld [vmem:[%s55] sm:$0xf]
  %v57 = vld [vmem:[%s55 + $0x4] sm:$0xf]
  %v58 = vld [vmem:[%s55 + $0x8] sm:$0xf]
  %v59 = vld [vmem:[%s55 + $0xc] sm:$0xf]
  %v60 = vunpack.c.l.bf16 %v56
  %v61 = vunpack.c.l.bf16 %v57
  %v62 = vunpack.c.l.bf16 %v58
  %v63 = vunpack.c.l.bf16 %v59
  %v64 = vlaneseq
  %v65 = vshrl.u32 %v64, 7
  %v66 = vsub.s32 2, %v65
  %v67 = vrot.slane %v16, %v66
  %v68 = vmul.f32 %v60, %v67
  %v69 = vmul.f32 %v61, %v67
  %v70 = vmul.f32 %v62, %v67
  %v71 = vmul.f32 %v63, %v67
  %v72 = vadd.f32 %v51, %v68
  %v73 = vadd.f32 %v52, %v69
  %v74 = vadd.f32 %v53, %v70
  %v75 = vadd.f32 %v54, %v71
  %s76 = scalar_lea.vmem %s0, 48
  %v77 = vld [vmem:[%s76] sm:$0xf]
  %v78 = vld [vmem:[%s76 + $0x4] sm:$0xf]
  %v79 = vld [vmem:[%s76 + $0x8] sm:$0xf]
  %v80 = vld [vmem:[%s76 + $0xc] sm:$0xf]
  %v81 = vunpack.c.l.bf16 %v77
  %v82 = vunpack.c.l.bf16 %v78
  %v83 = vunpack.c.l.bf16 %v79
  %v84 = vunpack.c.l.bf16 %v80
  %v85 = vlaneseq
  %v86 = vshrl.u32 %v85, 7
  %v87 = vsub.s32 3, %v86
  %v88 = vrot.slane %v16, %v87
  %v89 = vmul.f32 %v81, %v88
  %v90 = vmul.f32 %v82, %v88
  %v91 = vmul.f32 %v83, %v88
  %v92 = vmul.f32 %v84, %v88
  %v93 = vadd.f32 %v72, %v89
  %v94 = vadd.f32 %v73, %v90
  %v95 = vadd.f32 %v74, %v91
  %v96 = vadd.f32 %v75, %v92
  %s97 = scalar_lea.vmem %s0, 64
  %v98 = vld [vmem:[%s97] sm:$0xf]
  %v99 = vld [vmem:[%s97 + $0x4] sm:$0xf]
  %v100 = vld [vmem:[%s97 + $0x8] sm:$0xf]
  %v101 = vld [vmem:[%s97 + $0xc] sm:$0xf]
  %v102 = vunpack.c.l.bf16 %v98
  %v103 = vunpack.c.l.bf16 %v99
  %v104 = vunpack.c.l.bf16 %v100
  %v105 = vunpack.c.l.bf16 %v101
  %v106 = vlaneseq
  %v107 = vshrl.u32 %v106, 7
  %v108 = vsub.s32 4, %v107
  %v109 = vrot.slane %v16, %v108
  %v110 = vmul.f32 %v102, %v109
  %v111 = vmul.f32 %v103, %v109
  %v112 = vmul.f32 %v104, %v109
  %v113 = vmul.f32 %v105, %v109
  %v114 = vadd.f32 %v93, %v110
  %v115 = vadd.f32 %v94, %v111
  %v116 = vadd.f32 %v95, %v112
  %v117 = vadd.f32 %v96, %v113
  %s118 = scalar_lea.vmem %s0, 80
  %v119 = vld [vmem:[%s118] sm:$0xf]
  %v120 = vld [vmem:[%s118 + $0x4] sm:$0xf]
  %v121 = vld [vmem:[%s118 + $0x8] sm:$0xf]
  %v122 = vld [vmem:[%s118 + $0xc] sm:$0xf]
  %v123 = vunpack.c.l.bf16 %v119
  %v124 = vunpack.c.l.bf16 %v120
  %v125 = vunpack.c.l.bf16 %v121
  %v126 = vunpack.c.l.bf16 %v122
  %v127 = vlaneseq
  %v128 = vshrl.u32 %v127, 7
  %v129 = vsub.s32 5, %v128
  %v130 = vrot.slane %v16, %v129
  %v131 = vmul.f32 %v123, %v130
  %v132 = vmul.f32 %v124, %v130
  %v133 = vmul.f32 %v125, %v130
  %v134 = vmul.f32 %v126, %v130
  %v135 = vadd.f32 %v114, %v131
  %v136 = vadd.f32 %v115, %v132
  %v137 = vadd.f32 %v116, %v133
  %v138 = vadd.f32 %v117, %v134
  %s139 = scalar_lea.vmem %s0, 96
  %v140 = vld [vmem:[%s139] sm:$0xf]
  %v141 = vld [vmem:[%s139 + $0x4] sm:$0xf]
  %v142 = vld [vmem:[%s139 + $0x8] sm:$0xf]
  %v143 = vld [vmem:[%s139 + $0xc] sm:$0xf]
  %v144 = vunpack.c.l.bf16 %v140
  %v145 = vunpack.c.l.bf16 %v141
  %v146 = vunpack.c.l.bf16 %v142
  %v147 = vunpack.c.l.bf16 %v143
  %v148 = vlaneseq
  %v149 = vshrl.u32 %v148, 7
  %v150 = vsub.s32 6, %v149
  %v151 = vrot.slane %v16, %v150
  %v152 = vmul.f32 %v144, %v151
  %v153 = vmul.f32 %v145, %v151
  %v154 = vmul.f32 %v146, %v151
  %v155 = vmul.f32 %v147, %v151
  %v156 = vadd.f32 %v135, %v152
  %v157 = vadd.f32 %v136, %v153
  %v158 = vadd.f32 %v137, %v154
  %v159 = vadd.f32 %v138, %v155
  %s160 = scalar_lea.vmem %s0, 112
  %v161 = vld [vmem:[%s160] sm:$0xf]
  %v162 = vld [vmem:[%s160 + $0x4] sm:$0xf]
  %v163 = vld [vmem:[%s160 + $0x8] sm:$0xf]
  %v164 = vld [vmem:[%s160 + $0xc] sm:$0xf]
  %v165 = vunpack.c.l.bf16 %v161
  %v166 = vunpack.c.l.bf16 %v162
  %v167 = vunpack.c.l.bf16 %v163
  %v168 = vunpack.c.l.bf16 %v164
  %v169 = vlaneseq
  %v170 = vshrl.u32 %v169, 7
  %v171 = vsub.s32 7, %v170
  %v172 = vrot.slane %v16, %v171
  %v173 = vmul.f32 %v165, %v172
  %v174 = vmul.f32 %v166, %v172
  %v175 = vmul.f32 %v167, %v172
  %v176 = vmul.f32 %v168, %v172
  %v177 = vadd.f32 %v156, %v173
  %v178 = vadd.f32 %v157, %v174
  %v179 = vadd.f32 %v158, %v175
  %v180 = vadd.f32 %v159, %v176
  %s181 = scalar_lea.vmem %s0, 128
  %v182 = vld [vmem:[%s181] sm:$0xf]
  %v183 = vld [vmem:[%s181 + $0x4] sm:$0xf]
  %v184 = vld [vmem:[%s181 + $0x8] sm:$0xf]
  %v185 = vld [vmem:[%s181 + $0xc] sm:$0xf]
  %v186 = vunpack.c.l.bf16 %v182
  %v187 = vunpack.c.l.bf16 %v183
  %v188 = vunpack.c.l.bf16 %v184
  %v189 = vunpack.c.l.bf16 %v185
  %v190 = vlaneseq
  %v191 = vshrl.u32 %v190, 7
  %v192 = vsub.s32 0, %v191
  %v193 = vrot.slane %v17, %v192
  %v194 = vmul.f32 %v186, %v193
  %v195 = vmul.f32 %v187, %v193
  %v196 = vmul.f32 %v188, %v193
  %v197 = vmul.f32 %v189, %v193
  %v198 = vadd.f32 %v177, %v194
  %v199 = vadd.f32 %v178, %v195
  %v200 = vadd.f32 %v179, %v196
  %v201 = vadd.f32 %v180, %v197
  %v202 = vld [vmem:[%s2] sm:$0x1]
  %v204 = vlaneseq
  %v205 = vshrl.u32 %v204, 7
  %v206 = vsub.s32 0, %v205
  %v207 = vrot.slane %v202, %v206
  %v209 = vadd.f32 %v198, %v207
  %v210 = vadd.f32 %v199, %v207
  %v211 = vadd.f32 %v200, %v207
  %v212 = vadd.f32 %v201, %v207
  %v213 = vmax.f32 %v209, 0.0
  %v214 = vmax.f32 %v210, 0.0
  %v215 = vmax.f32 %v211, 0.0
  %v216 = vmax.f32 %v212, 0.0
  %v217 = vpack.c.bf16 %v214, %v213
  %v218 = vpack.c.bf16 %v216, %v215
  %v221 = vunpack.c.l.b16 %v217
  %v222 = vunpack.c.h.b16 %v217
  %v223 = vunpack.c.l.b16 %v218
  %v224 = vunpack.c.h.b16 %v218
  %v225 = vpack.c.b16 %v221, %v221
  %v226 = vpack.c.b16 %v222, %v222
  %v227 = vpack.c.b16 %v223, %v223
  %v228 = vpack.c.b16 %v224, %v224
  %vm233 = vcmask 584704
  %234 = vst.msk [vmem:[%s3] sm:$0xf] %vm233, %v225
  %235 = vst.msk [vmem:[%s3 + $0x4] sm:$0xf] %vm233, %v226
  %236 = vst.msk [vmem:[%s3 + $0x8] sm:$0xf] %vm233, %v227
  %237 = vst.msk [vmem:[%s3 + $0xc] sm:$0xf] %vm233, %v228
  // Predicated region
  $region14: #{fwd.18} parent=0 // pred_check
    _
  $region15: #{fwd.18} parent=0 // pred_check_branch
    %239 = sbr.rel (0) target = $region17
  $region16: #{fwd.18} parent=0 // pred_region
    _
  $region17: #{fwd.18} parent=0 // pred_fallthru
    _
  // Predicated region
  $region18: #{fwd.18} parent=0 // pred_check
    _
  $region19: #{fwd.18} parent=0 // pred_check_branch
    %241 = sbr.rel (0) target = $region21
  $region20: #{fwd.18} parent=0 // pred_region
    _
  $region21: #{fwd.18} parent=0 // pred_fallthru
    _

// kernel: fwd.21
$region0: #{fwd.21}
  #allocation0 [shape = 'u32[]', space=smem, size = 0x4, offset = 0x4, fixed_abs, tag = 'smem constant byte address 0x4 - core index']
  #allocation1 [shape = 'u32[144,128]{1,0:T(1,128)}', space=vmem, size = 0x12000, scoped, tag = 'internal scratch']
  %s0 = inlined_call_operand.vmem [shape: bf16[2,8,8,88], index: 0, kind: input, shape index: {}]
  %s1 = inlined_call_operand.vmem [shape: bf16[25,88], index: 1, kind: input, shape index: {}]
  %s2 = inlined_call_operand.vmem [shape: f32[1,88], index: 2, kind: input, shape index: {}]
  %s3 = inlined_call_operand.vmem [shape: bf16[2,4,4,88], index: 3, kind: output, shape index: {}]
  %s4 = sld [smem:[#allocation0]]
  $region45: #{fwd.21} parent=0
    _
  %s6 = ssub.s32 1, %s4
  %s7 = scalar_select 0, %s6, %s4
  loop: start=0, step=1, limit=4
  $region2: #{fwd.21} parent=0 // loop_pre_header
    _
  $region3: #{fwd.21} parent=0 // loop_header
    %s9 = sphi 0, %s13
    %p10 = scmp.ge.s32.totalorder %s9, 4
    %s19 = sphi 0, %s21
    %s22 = sphi 0, %s19
    %s23 = sphi 0, %s22
    %s39 = sphi 0, %s23
    %s43 = sphi 0, %s43
    %s45 = sphi 0, %s43
    %s46 = sphi 0, %s45
    %s60 = sphi 0, %s46
    %s64 = sphi 0, %s64
    %s66 = sphi 0, %s64
    %s67 = sphi 0, %s66
    %s81 = sphi 0, %s67
    %s87 = sphi 0, %s89
    %s90 = sphi 0, %s87
    %s91 = sphi 0, %s90
    %s107 = sphi 0, %s91
  $region4: #{fwd.21} parent=0 // loop_header_branch
    %12 = sbr.rel (%p10) target = $region8
  $region5: #{fwd.21} parent=0 // loop_body
    %s14 = ssub.s32 %s9, 1
    %s15 = ssub.s32 %s9, 2
    %s16 = sadd.s32 %s9, 1
    %s17 = ssub.s32 %s9, %s16
    %p18 = scmp.eq.s32.totalorder %s17, 0
    %s20 = sadd.s32 %s19, 1
    %s21 = scalar_select %p18, %s19, %s20
    %p24 = pneg %p18
    %p25 = scmp.eq.s32.totalorder %s9, 1
    %p26 = por %p24, %p25
    %p27 = scmp.ne.s32.totalorder %s19, %s22
    %p28 = scmp.eq.s32.totalorder %s9, 0
    %p29 = por %p27, %p28
    %p30 = scmp.ne.s32.totalorder %s19, %s22
    %p31 = scmp.eq.s32.totalorder %s14, 1
    %p32 = por %p30, %p31
    %p33 = scmp.ne.s32.totalorder %s22, %s23
    %p34 = scmp.eq.s32.totalorder %s14, 0
    %p35 = por %p33, %p34
    %p36 = scmp.ne.s32.totalorder %s22, %s23
    %p37 = scmp.eq.s32.totalorder %s15, 1
    %p38 = por %p36, %p37
    %p40 = scmp.ne.s32.totalorder %s23, %s39
    %p41 = scmp.eq.s32.totalorder %s15, 0
    %p42 = por %p40, %p41
    %s44 = sadd.s32 %s43, 1
    %p47 = scmp.eq.s32.totalorder %s9, 1
    %p48 = scmp.ne.s32.totalorder %s43, %s45
    %p49 = scmp.eq.s32.totalorder %s9, 0
    %p50 = por %p48, %p49
    %p51 = scmp.ne.s32.totalorder %s43, %s45
    %p52 = scmp.eq.s32.totalorder %s14, 1
    %p53 = por %p51, %p52
    %p54 = scmp.ne.s32.totalorder %s45, %s46
    %p55 = scmp.eq.s32.totalorder %s14, 0
    %p56 = por %p54, %p55
    %p57 = scmp.ne.s32.totalorder %s45, %s46
    %p58 = scmp.eq.s32.totalorder %s15, 1
    %p59 = por %p57, %p58
    %p61 = scmp.ne.s32.totalorder %s46, %s60
    %p62 = scmp.eq.s32.totalorder %s15, 0
    %p63 = por %p61, %p62
    %s65 = sadd.s32 %s64, 1
    %p68 = scmp.eq.s32.totalorder %s9, 1
    %p69 = scmp.ne.s32.totalorder %s64, %s66
    %p70 = scmp.eq.s32.totalorder %s9, 0
    %p71 = por %p69, %p70
    %p72 = scmp.ne.s32.totalorder %s64, %s66
    %p73 = scmp.eq.s32.totalorder %s14, 1
    %p74 = por %p72, %p73
    %p75 = scmp.ne.s32.totalorder %s66, %s67
    %p76 = scmp.eq.s32.totalorder %s14, 0
    %p77 = por %p75, %p76
    %p78 = scmp.ne.s32.totalorder %s66, %s67
    %p79 = scmp.eq.s32.totalorder %s15, 1
    %p80 = por %p78, %p79
    %p82 = scmp.ne.s32.totalorder %s67, %s81
    %p83 = scmp.eq.s32.totalorder %s15, 0
    %p84 = por %p82, %p83
    %s85 = ssub.s32 %s9, %s16
    %p86 = scmp.eq.s32.totalorder %s85, 0
    %s88 = sadd.s32 %s87, 1
    %s89 = scalar_select %p86, %s87, %s88
    %p92 = pneg %p86
    %p93 = scmp.eq.s32.totalorder %s9, 1
    %p94 = por %p92, %p93
    %p95 = scmp.ne.s32.totalorder %s87, %s90
    %p96 = scmp.eq.s32.totalorder %s9, 0
    %p97 = por %p95, %p96
    %p98 = scmp.ne.s32.totalorder %s87, %s90
    %p99 = scmp.eq.s32.totalorder %s14, 1
    %p100 = por %p98, %p99
    %p101 = scmp.ne.s32.totalorder %s90, %s91
    %p102 = scmp.eq.s32.totalorder %s14, 0
    %p103 = por %p101, %p102
    %p104 = scmp.ne.s32.totalorder %s90, %s91
    %p105 = scmp.eq.s32.totalorder %s15, 1
    %p106 = por %p104, %p105
    %p108 = scmp.ne.s32.totalorder %s91, %s107
    %p109 = scmp.eq.s32.totalorder %s15, 0
    %p110 = por %p108, %p109
    %p111 = scmp.le.s32.totalorder 1, %s9
    %p112 = scmp.lt.s32.totalorder %s9, 3
    %p113 = pnand %p111, %p112
    %p114 = pneg %p113
    // Predicated region
    $region9: #{fwd.21} parent=5 // pred_check
      _
    $region10: #{fwd.21} parent=5 // pred_check_branch
      %116 = sbr.rel (%p113) target = $region12
    $region11: #{fwd.21} parent=5 // pred_region
      %s117 = ssub.s32 %s9, 1
      // Predicated region
      $region13: #{fwd.21} parent=11 // pred_check
        %p118 = pneg %p56
      $region14: #{fwd.21} parent=11 // pred_check_branch
        %120 = sbr.rel (%p118) target = $region16
      $region15: #{fwd.21} parent=11 // pred_region
        _
      $region16: #{fwd.21} parent=11 // pred_fallthru
        _
      // Predicated region
      $region17: #{fwd.21} parent=11 // pred_check
        %p121 = pneg %p77
      $region18: #{fwd.21} parent=11 // pred_check_branch
        %123 = sbr.rel (%p121) target = $region20
      $region19: #{fwd.21} parent=11 // pred_region
        _
      $region20: #{fwd.21} parent=11 // pred_fallthru
        _
    $region12: #{fwd.21} parent=5 // pred_fallthru
      _
    %p124 = scmp.lt.s32.totalorder %s9, 2
    // Predicated region
    $region21: #{fwd.21} parent=5 // pred_check
      %p125 = pneg %p124
    $region22: #{fwd.21} parent=5 // pred_check_branch
      %127 = sbr.rel (%p125) target = $region24
    $region23: #{fwd.21} parent=5 // pred_region
      // Predicated region
      $region25: #{fwd.21} parent=23 // pred_check
        %p128 = pneg %p29
      $region26: #{fwd.21} parent=23 // pred_check_branch
        %130 = sbr.rel (%p128) target = $region28
      $region27: #{fwd.21} parent=23 // pred_region
        %p131 = scmp.lt.s32.totalorder %s9, 1
        %s132 = scalar_select %p131, %s9, 1
        %s133 = smul.addr %s132, 8
        %s134 = smul.addr %s133, 4
        %s135 = scalar_lea.vmem %s0, %s134
      $region28: #{fwd.21} parent=23 // pred_fallthru
        _
    $region24: #{fwd.21} parent=5 // pred_fallthru
      _
    %p136 = scmp.le.s32.totalorder 1, %s9
    %p137 = scmp.lt.s32.totalorder %s9, 3
    %p138 = pnand %p136, %p137
    %p139 = pneg %p138
    // Predicated region
    $region29: #{fwd.21} parent=5 // pred_check
      _
    $region30: #{fwd.21} parent=5 // pred_check_branch
      %141 = sbr.rel (%p138) target = $region32
    $region31: #{fwd.21} parent=5 // pred_region
      %s142 = ssub.s32 %s9, 1
      %p143 = scmp.lt.s32.totalorder %s14, 1
      %s144 = scalar_select %p143, %s14, 1
      %s145 = smul.addr %s144, 8
      %s146 = smul.addr %s145, 4
      %s147 = scalar_lea.vmem %s0, %s146
      %p148 = pneg %p35
      %p149 = pneg %p32
      %p150 = pneg %p56
      %p151 = pneg %p53
      %p152 = pneg %p77
      %p153 = pneg %p74
      %p154 = pneg %p103
      %p155 = pneg %p100
      %p156 = scmp.lt.s32.totalorder %s14, 1
      %s157 = scalar_select %p156, %s14, 1
      %s158 = smul.addr %s157, 4
      %s159 = smul.addr %s158, 2
      %s160 = scalar_lea.vmem %s3, %s159
      %p161 = scmp.lt.s32.totalorder %s14, 1
      %s162 = scalar_select %p161, %s14, 1
      %s163 = smul.addr %s162, 8
      %s164 = smul.addr %s163, 4
      %s165 = scalar_lea.vmem %s0, %s164
      %p166 = scmp.lt.s32.totalorder %s14, 1
      %s167 = scalar_select %p166, %s14, 1
      %s168 = smul.addr %s167, 4
      %s169 = smul.addr %s168, 2
      %s170 = scalar_lea.vmem %s3, %s169
      %v171 = vld [vmem:[%s165] sm:$0xf]
      %v172 = vld [vmem:[%s165 + $0x4] sm:$0xf]
      %v173 = vld [vmem:[%s165 + $0x8] sm:$0xf]
      %v174 = vld [vmem:[%s165 + $0xc] sm:$0xf]
      %v175 = vld [vmem:[%s165 + $0x10] sm:$0xf]
      %v176 = vld [vmem:[%s165 + $0x14] sm:$0xf]
      %v177 = vld [vmem:[%s165 + $0x18] sm:$0xf]
      %v178 = vld [vmem:[%s165 + $0x1c] sm:$0xf]
      %v179 = vunpack.c.l.bf16 %v171
      %v180 = vunpack.c.l.bf16 %v172
      %v181 = vunpack.c.l.bf16 %v173
      %v182 = vunpack.c.l.bf16 %v174
      %v183 = vunpack.c.l.bf16 %v175
      %v184 = vunpack.c.l.bf16 %v176
      %v185 = vunpack.c.l.bf16 %v177
      %v186 = vunpack.c.l.bf16 %v178
      %v187 = vld [vmem:[%s1] sm:$0xf]
      %v188 = vld [vmem:[%s1 + $0x4] sm:$0xf]
      %v189 = vld [vmem:[%s1 + $0x8] sm:$0xf]
      %v190 = vld [vmem:[%s1 + $0xc] sm:$0x1]
      %v191 = vunpack.c.l.bf16 %v187
      %v192 = vunpack.c.l.bf16 %v188
      %v193 = vunpack.c.l.bf16 %v189
      %v194 = vunpack.c.l.bf16 %v190
      %v195 = vlaneseq
      %v196 = vshrl.u32 %v195, 7
      %v197 = vsub.s32 0, %v196
      %v198 = vrot.slane %v191, %v197
      %v199 = vmul.f32 %v179, %v198
      %v200 = vmul.f32 %v180, %v198
      %v201 = vmul.f32 %v181, %v198
      %v202 = vmul.f32 %v182, %v198
      %v203 = vadd.f32 %v199, 0.0
      %v204 = vadd.f32 %v200, 0.0
      %v205 = vadd.f32 %v201, 0.0
      %v206 = vadd.f32 %v202, 0.0
      %v207 = vlaneseq
      %v208 = vshrl.u32 %v207, 7
      %v209 = vsub.s32 1, %v208
      %v210 = vrot.slane %v191, %v209
      %v211 = vmul.f32 %v179, %v210
      %v212 = vmul.f32 %v180, %v210
      %v213 = vmul.f32 %v181, %v210
      %v214 = vmul.f32 %v182, %v210
      %v219 = vrot.slane %v211, 1
      %v220 = vrot.slane %v212, 1
      %v221 = vrot.slane %v213, 1
      %v222 = vrot.slane %v214, 1
      %v227 = vadd.f32 %v203, %v219
      %v228 = vadd.f32 %v204, %v220
      %v229 = vadd.f32 %v205, %v221
      %v230 = vadd.f32 %v206, %v222
      %v231 = vlaneseq
      %v232 = vshrl.u32 %v231, 7
      %v233 = vsub.s32 2, %v232
      %v234 = vrot.slane %v191, %v233
      %v235 = vmul.f32 %v179, %v234
      %v236 = vmul.f32 %v180, %v234
      %v237 = vmul.f32 %v181, %v234
      %v238 = vmul.f32 %v182, %v234
      %v243 = vrot.slane %v235, 2
      %v244 = vrot.slane %v236, 2
      %v245 = vrot.slane %v237, 2
      %v246 = vrot.slane %v238, 2
      %v251 = vadd.f32 %v227, %v243
      %v252 = vadd.f32 %v228, %v244
      %v253 = vadd.f32 %v229, %v245
      %v254 = vadd.f32 %v230, %v246
      %v255 = vlaneseq
      %v256 = vshrl.u32 %v255, 7
      %v257 = vsub.s32 3, %v256
      %v258 = vrot.slane %v191, %v257
      %v259 = vmul.f32 %v179, %v258
      %v260 = vmul.f32 %v180, %v258
      %v261 = vmul.f32 %v181, %v258
      %v262 = vmul.f32 %v182, %v258
      %v267 = vrot.slane %v259, 3
      %v268 = vrot.slane %v260, 3
      %v269 = vrot.slane %v261, 3
      %v270 = vrot.slane %v262, 3
      %v275 = vadd.f32 %v251, %v267
      %v276 = vadd.f32 %v252, %v268
      %v277 = vadd.f32 %v253, %v269
      %v278 = vadd.f32 %v254, %v270
      %v279 = vlaneseq
      %v280 = vshrl.u32 %v279, 7
      %v281 = vsub.s32 4, %v280
      %v282 = vrot.slane %v191, %v281
      %v283 = vmul.f32 %v179, %v282
      %v284 = vmul.f32 %v180, %v282
      %v285 = vmul.f32 %v181, %v282
      %v286 = vmul.f32 %v182, %v282
      %v291 = vrot.slane %v283, 4
      %v292 = vrot.slane %v284, 4
      %v293 = vrot.slane %v285, 4
      %v294 = vrot.slane %v286, 4
      %v299 = vadd.f32 %v275, %v291
      %v300 = vadd.f32 %v276, %v292
      %v301 = vadd.f32 %v277, %v293
      %v302 = vadd.f32 %v278, %v294
      %v303 = vlaneseq
      %v304 = vshrl.u32 %v303, 7
      %v305 = vsub.s32 5, %v304
      %v306 = vrot.slane %v191, %v305
      %v307 = vmul.f32 %v180, %v306
      %v308 = vmul.f32 %v181, %v306
      %v309 = vmul.f32 %v182, %v306
      %v310 = vmul.f32 %v183, %v306
      %v311 = vadd.f32 %v299, %v307
      %v312 = vadd.f32 %v300, %v308
      %v313 = vadd.f32 %v301, %v309
      %v314 = vadd.f32 %v302, %v310
      %v315 = vlaneseq
      %v316 = vshrl.u32 %v315, 7
      %v317 = vsub.s32 6, %v316
      %v318 = vrot.slane %v191, %v317
      %v319 = vmul.f32 %v180, %v318
      %v320 = vmul.f32 %v181, %v318
      %v321 = vmul.f32 %v182, %v318
      %v322 = vmul.f32 %v183, %v318
      %v327 = vrot.slane %v319, 1
      %v328 = vrot.slane %v320, 1
      %v329 = vrot.slane %v321, 1
      %v330 = vrot.slane %v322, 1
      %v335 = vadd.f32 %v311, %v327
      %v336 = vadd.f32 %v312, %v328
      %v337 = vadd.f32 %v313, %v329
      %v338 = vadd.f32 %v314, %v330
      %v339 = vlaneseq
      %v340 = vshrl.u32 %v339, 7
      %v341 = vsub.s32 7, %v340
      %v342 = vrot.slane %v191, %v341
      %v343 = vmul.f32 %v180, %v342
      %v344 = vmul.f32 %v181, %v342
      %v345 = vmul.f32 %v182, %v342
      %v346 = vmul.f32 %v183, %v342
      %v351 = vrot.slane %v343, 2
      %v352 = vrot.slane %v344, 2
      %v353 = vrot.slane %v345, 2
      %v354 = vrot.slane %v346, 2
      %v359 = vadd.f32 %v335, %v351
      %v360 = vadd.f32 %v336, %v352
      %v361 = vadd.f32 %v337, %v353
      %v362 = vadd.f32 %v338, %v354
      %v363 = vlaneseq
      %v364 = vshrl.u32 %v363, 7
      %v365 = vsub.s32 0, %v364
      %v366 = vrot.slane %v192, %v365
      %v367 = vmul.f32 %v180, %v366
      %v368 = vmul.f32 %v181, %v366
      %v369 = vmul.f32 %v182, %v366
      %v370 = vmul.f32 %v183, %v366
      %v375 = vrot.slane %v367, 3
      %v376 = vrot.slane %v368, 3
      %v377 = vrot.slane %v369, 3
      %v378 = vrot.slane %v370, 3
      %v383 = vadd.f32 %v359, %v375
      %v384 = vadd.f32 %v360, %v376
      %v385 = vadd.f32 %v361, %v377
      %v386 = vadd.f32 %v362, %v378
      %v387 = vlaneseq
      %v388 = vshrl.u32 %v387, 7
      %v389 = vsub.s32 1, %v388
      %v390 = vrot.slane %v192, %v389
      %v391 = vmul.f32 %v180, %v390
      %v392 = vmul.f32 %v181, %v390
      %v393 = vmul.f32 %v182, %v390
      %v394 = vmul.f32 %v183, %v390
      %v399 = vrot.slane %v391, 4
      %v400 = vrot.slane %v392, 4
      %v401 = vrot.slane %v393, 4
      %v402 = vrot.slane %v394, 4
      %v407 = vadd.f32 %v383, %v399
      %v408 = vadd.f32 %v384, %v400
      %v409 = vadd.f32 %v385, %v401
      %v410 = vadd.f32 %v386, %v402
      %v411 = vlaneseq
      %v412 = vshrl.u32 %v411, 7
      %v413 = vsub.s32 2, %v412
      %v414 = vrot.slane %v192, %v413
      %v415 = vmul.f32 %v181, %v414
      %v416 = vmul.f32 %v182, %v414
      %v417 = vmul.f32 %v183, %v414
      %v418 = vmul.f32 %v184, %v414
      %v419 = vadd.f32 %v407, %v415
      %v420 = vadd.f32 %v408, %v416
      %v421 = vadd.f32 %v409, %v417
      %v422 = vadd.f32 %v410, %v418
      %v423 = vlaneseq
      %v424 = vshrl.u32 %v423, 7
      %v425 = vsub.s32 3, %v424
      %v426 = vrot.slane %v192, %v425
      %v427 = vmul.f32 %v181, %v426
      %v428 = vmul.f32 %v182, %v426
      %v429 = vmul.f32 %v183, %v426
      %v430 = vmul.f32 %v184, %v426
      %v435 = vrot.slane %v427, 1
      %v436 = vrot.slane %v428, 1
      %v437 = vrot.slane %v429, 1
      %v438 = vrot.slane %v430, 1
      %v443 = vadd.f32 %v419, %v435
      %v444 = vadd.f32 %v420, %v436
      %v445 = vadd.f32 %v421, %v437
      %v446 = vadd.f32 %v422, %v438
      %v447 = vlaneseq
      %v448 = vshrl.u32 %v447, 7
      %v449 = vsub.s32 4, %v448
      %v450 = vrot.slane %v192, %v449
      %v451 = vmul.f32 %v181, %v450
      %v452 = vmul.f32 %v182, %v450
      %v453 = vmul.f32 %v183, %v450
      %v454 = vmul.f32 %v184, %v450
      %v459 = vrot.slane %v451, 2
      %v460 = vrot.slane %v452, 2
      %v461 = vrot.slane %v453, 2
      %v462 = vrot.slane %v454, 2
      %v467 = vadd.f32 %v443, %v459
      %v468 = vadd.f32 %v444, %v460
      %v469 = vadd.f32 %v445, %v461
      %v470 = vadd.f32 %v446, %v462
      %v471 = vlaneseq
      %v472 = vshrl.u32 %v471, 7
      %v473 = vsub.s32 5, %v472
      %v474 = vrot.slane %v192, %v473
      %v475 = vmul.f32 %v181, %v474
      %v476 = vmul.f32 %v182, %v474
      %v477 = vmul.f32 %v183, %v474
      %v478 = vmul.f32 %v184, %v474
      %v483 = vrot.slane %v475, 3
      %v484 = vrot.slane %v476, 3
      %v485 = vrot.slane %v477, 3
      %v486 = vrot.slane %v478, 3
      %v491 = vadd.f32 %v467, %v483
      %v492 = vadd.f32 %v468, %v484
      %v493 = vadd.f32 %v469, %v485
      %v494 = vadd.f32 %v470, %v486
      %v495 = vlaneseq
      %v496 = vshrl.u32 %v495, 7
      %v497 = vsub.s32 6, %v496
      %v498 = vrot.slane %v192, %v497
      %v499 = vmul.f32 %v181, %v498
      %v500 = vmul.f32 %v182, %v498
      %v501 = vmul.f32 %v183, %v498
      %v502 = vmul.f32 %v184, %v498
      %v507 = vrot.slane %v499, 4
      %v508 = vrot.slane %v500, 4
      %v509 = vrot.slane %v501, 4
      %v510 = vrot.slane %v502, 4
      %v515 = vadd.f32 %v491, %v507
      %v516 = vadd.f32 %v492, %v508
      %v517 = vadd.f32 %v493, %v509
      %v518 = vadd.f32 %v494, %v510
      %v519 = vlaneseq
      %v520 = vshrl.u32 %v519, 7
      %v521 = vsub.s32 7, %v520
      %v522 = vrot.slane %v192, %v521
      %v523 = vmul.f32 %v182, %v522
      %v524 = vmul.f32 %v183, %v522
      %v525 = vmul.f32 %v184, %v522
      %v526 = vmul.f32 %v185, %v522
      %v527 = vadd.f32 %v515, %v523
      %v528 = vadd.f32 %v516, %v524
      %v529 = vadd.f32 %v517, %v525
      %v530 = vadd.f32 %v518, %v526
      %v531 = vlaneseq
      %v532 = vshrl.u32 %v531, 7
      %v533 = vsub.s32 0, %v532
      %v534 = vrot.slane %v193, %v533
      %v535 = vmul.f32 %v182, %v534
      %v536 = vmul.f32 %v183, %v534
      %v537 = vmul.f32 %v184, %v534
      %v538 = vmul.f32 %v185, %v534
      %v543 = vrot.slane %v535, 1
      %v544 = vrot.slane %v536, 1
      %v545 = vrot.slane %v537, 1
      %v546 = vrot.slane %v538, 1
      %v551 = vadd.f32 %v527, %v543
      %v552 = vadd.f32 %v528, %v544
      %v553 = vadd.f32 %v529, %v545
      %v554 = vadd.f32 %v530, %v546
      %v555 = vlaneseq
      %v556 = vshrl.u32 %v555, 7
      %v557 = vsub.s32 1, %v556
      %v558 = vrot.slane %v193, %v557
      %v559 = vmul.f32 %v182, %v558
      %v560 = vmul.f32 %v183, %v558
      %v561 = vmul.f32 %v184, %v558
      %v562 = vmul.f32 %v185, %v558
      %v567 = vrot.slane %v559, 2
      %v568 = vrot.slane %v560, 2
      %v569 = vrot.slane %v561, 2
      %v570 = vrot.slane %v562, 2
      %v575 = vadd.f32 %v551, %v567
      %v576 = vadd.f32 %v552, %v568
      %v577 = vadd.f32 %v553, %v569
      %v578 = vadd.f32 %v554, %v570
      %v579 = vlaneseq
      %v580 = vshrl.u32 %v579, 7
      %v581 = vsub.s32 2, %v580
      %v582 = vrot.slane %v193, %v581
      %v583 = vmul.f32 %v182, %v582
      %v584 = vmul.f32 %v183, %v582
      %v585 = vmul.f32 %v184, %v582
      %v586 = vmul.f32 %v185, %v582
      %v591 = vrot.slane %v583, 3
      %v592 = vrot.slane %v584, 3
      %v593 = vrot.slane %v585, 3
      %v594 = vrot.slane %v586, 3
      %v599 = vadd.f32 %v575, %v591
      %v600 = vadd.f32 %v576, %v592
      %v601 = vadd.f32 %v577, %v593
      %v602 = vadd.f32 %v578, %v594
      %v603 = vlaneseq
      %v604 = vshrl.u32 %v603, 7
      %v605 = vsub.s32 3, %v604
      %v606 = vrot.slane %v193, %v605
      %v607 = vmul.f32 %v182, %v606
      %v608 = vmul.f32 %v183, %v606
      %v609 = vmul.f32 %v184, %v606
      %v610 = vmul.f32 %v185, %v606
      %v615 = vrot.slane %v607, 4
      %v616 = vrot.slane %v608, 4
      %v617 = vrot.slane %v609, 4
      %v618 = vrot.slane %v610, 4
      %v623 = vadd.f32 %v599, %v615
      %v624 = vadd.f32 %v600, %v616
      %v625 = vadd.f32 %v601, %v617
      %v626 = vadd.f32 %v602, %v618
      %v627 = vlaneseq
      %v628 = vshrl.u32 %v627, 7
      %v629 = vsub.s32 4, %v628
      %v630 = vrot.slane %v193, %v629
      %v631 = vmul.f32 %v183, %v630
      %v632 = vmul.f32 %v184, %v630
      %v633 = vmul.f32 %v185, %v630
      %v634 = vmul.f32 %v186, %v630
      %v635 = vadd.f32 %v623, %v631
      %v636 = vadd.f32 %v624, %v632
      %v637 = vadd.f32 %v625, %v633
      %v638 = vadd.f32 %v626, %v634
      %v639 = vlaneseq
      %v640 = vshrl.u32 %v639, 7
      %v641 = vsub.s32 5, %v640
      %v642 = vrot.slane %v193, %v641
      %v643 = vmul.f32 %v183, %v642
      %v644 = vmul.f32 %v184, %v642
      %v645 = vmul.f32 %v185, %v642
      %v646 = vmul.f32 %v186, %v642
      %v651 = vrot.slane %v643, 1
      %v652 = vrot.slane %v644, 1
      %v653 = vrot.slane %v645, 1
      %v654 = vrot.slane %v646, 1
      %v659 = vadd.f32 %v635, %v651
      %v660 = vadd.f32 %v636, %v652
      %v661 = vadd.f32 %v637, %v653
      %v662 = vadd.f32 %v638, %v654
      %v663 = vlaneseq
      %v664 = vshrl.u32 %v663, 7
      %v665 = vsub.s32 6, %v664
      %v666 = vrot.slane %v193, %v665
      %v667 = vmul.f32 %v183, %v666
      %v668 = vmul.f32 %v184, %v666
      %v669 = vmul.f32 %v185, %v666
      %v670 = vmul.f32 %v186, %v666
      %v675 = vrot.slane %v667, 2
      %v676 = vrot.slane %v668, 2
      %v677 = vrot.slane %v669, 2
      %v678 = vrot.slane %v670, 2
      %v683 = vadd.f32 %v659, %v675
      %v684 = vadd.f32 %v660, %v676
      %v685 = vadd.f32 %v661, %v677
      %v686 = vadd.f32 %v662, %v678
      %v687 = vlaneseq
      %v688 = vshrl.u32 %v687, 7
      %v689 = vsub.s32 7, %v688
      %v690 = vrot.slane %v193, %v689
      %v691 = vmul.f32 %v183, %v690
      %v692 = vmul.f32 %v184, %v690
      %v693 = vmul.f32 %v185, %v690
      %v694 = vmul.f32 %v186, %v690
      %v699 = vrot.slane %v691, 3
      %v700 = vrot.slane %v692, 3
      %v701 = vrot.slane %v693, 3
      %v702 = vrot.slane %v694, 3
      %v707 = vadd.f32 %v683, %v699
      %v708 = vadd.f32 %v684, %v700
      %v709 = vadd.f32 %v685, %v701
      %v710 = vadd.f32 %v686, %v702
      %v711 = vlaneseq
      %v712 = vshrl.u32 %v711, 7
      %v713 = vsub.s32 0, %v712
      %v714 = vrot.slane %v194, %v713
      %v715 = vmul.f32 %v183, %v714
      %v716 = vmul.f32 %v184, %v714
      %v717 = vmul.f32 %v185, %v714
      %v718 = vmul.f32 %v186, %v714
      %v723 = vrot.slane %v715, 4
      %v724 = vrot.slane %v716, 4
      %v725 = vrot.slane %v717, 4
      %v726 = vrot.slane %v718, 4
      %v731 = vadd.f32 %v707, %v723
      %v732 = vadd.f32 %v708, %v724
      %v733 = vadd.f32 %v709, %v725
      %v734 = vadd.f32 %v710, %v726
      %v735 = vld [vmem:[%s2] sm:$0x1]
      %v737 = vlaneseq
      %v738 = vshrl.u32 %v737, 7
      %v739 = vsub.s32 0, %v738
      %v740 = vrot.slane %v735, %v739
      %v742 = vadd.f32 %v731, %v740
      %v743 = vadd.f32 %v732, %v740
      %v744 = vadd.f32 %v733, %v740
      %v745 = vadd.f32 %v734, %v740
      %v746 = vadd.f32 %v742, 3.0
      %v747 = vadd.f32 %v743, 3.0
      %v748 = vadd.f32 %v744, 3.0
      %v749 = vadd.f32 %v745, 3.0
      %v750 = vmax.f32 %v746, 0.0
      %v751 = vmax.f32 %v747, 0.0
      %v752 = vmax.f32 %v748, 0.0
      %v753 = vmax.f32 %v749, 0.0
      %v754 = vmin.f32 %v750, 6.0
      %v755 = vmin.f32 %v751, 6.0
      %v756 = vmin.f32 %v752, 6.0
      %v757 = vmin.f32 %v753, 6.0
      %v758 = vmul.f32 %v742, %v754
      %v759 = vmul.f32 %v743, %v755
      %v760 = vmul.f32 %v744, %v756
      %v761 = vmul.f32 %v745, %v757
      %v762 = vmul.f32 %v758, 0.16666667
      %v763 = vmul.f32 %v759, 0.16666667
      %v764 = vmul.f32 %v760, 0.16666667
      %v765 = vmul.f32 %v761, 0.16666667
      %v766 = vpack.c.bf16 %v762, %v762
      %v767 = vpack.c.bf16 %v763, %v763
      %v768 = vpack.c.bf16 %v764, %v764
      %v769 = vpack.c.bf16 %v765, %v765
      %vm770 = vcmask 713728
      %771 = vst.msk [vmem:[%s170] sm:$0x3] %vm770, %v766
      %772 = vst.msk [vmem:[%s170 + $0x2] sm:$0x3] %vm770, %v767
      %773 = vst.msk [vmem:[%s170 + $0x4] sm:$0x3] %vm770, %v768
      %774 = vst.msk [vmem:[%s170 + $0x6] sm:$0x3] %vm770, %v769
      %p775 = scmp.lt.s32.totalorder %s14, 1
      %s776 = scalar_select %p775, %s14, 1
      %s777 = smul.addr %s776, 4
      %s778 = smul.addr %s777, 2
      %s779 = scalar_lea.vmem %s3, %s778
      // Predicated region
      $region33: #{fwd.21} parent=31 // pred_check
        %p780 = pneg %p100
      $region34: #{fwd.21} parent=31 // pred_check_branch
        %782 = sbr.rel (%p780) target = $region36
      $region35: #{fwd.21} parent=31 // pred_region
        _
      $region36: #{fwd.21} parent=31 // pred_fallthru
        _
    $region32: #{fwd.21} parent=5 // pred_fallthru
      _
    %p783 = scmp.le.s32.totalorder 2, %s9
    // Predicated region
    $region37: #{fwd.21} parent=5 // pred_check
      %p784 = pneg %p783
    $region38: #{fwd.21} parent=5 // pred_check_branch
      %786 = sbr.rel (%p784) target = $region40
    $region39: #{fwd.21} parent=5 // pred_region
      %s787 = ssub.s32 %s9, 2
      // Predicated region
      $region41: #{fwd.21} parent=39 // pred_check
        %p788 = pneg %p106
      $region42: #{fwd.21} parent=39 // pred_check_branch
        %790 = sbr.rel (%p788) target = $region44
      $region43: #{fwd.21} parent=39 // pred_region
        %p791 = scmp.lt.s32.totalorder %s15, 1
        %s792 = scalar_select %p791, %s15, 1
        %s793 = smul.addr %s792, 4
        %s794 = smul.addr %s793, 2
        %s795 = scalar_lea.vmem %s3, %s794
      $region44: #{fwd.21} parent=39 // pred_fallthru
        _
    $region40: #{fwd.21} parent=5 // pred_fallthru
      _
  $region6: #{fwd.21} parent=0 // loop_footer
    %s13 = sadd.s32 1, %s9
  $region7: #{fwd.21} parent=0 // loop_footer_branch
    %8 = sbr.rel target = $region3
  $region8: #{fwd.21} parent=0 // loop_exit
    _

// kernel: fwd.22
$region0: #{fwd.22}
  #allocation0 [shape = 'u32[]', space=smem, size = 0x4, offset = 0x4, fixed_abs, tag = 'smem constant byte address 0x4 - core index']
  #allocation1 [shape = 'u32[144,128]{1,0:T(1,128)}', space=vmem, size = 0x12000, scoped, tag = 'internal scratch']
  %s0 = inlined_call_operand.vmem [shape: bf16[2,16,88], index: 0, kind: input, shape index: {}]
  %s1 = inlined_call_operand.vmem [shape: bf16[88,24], index: 1, kind: input, shape index: {}]
  %s2 = inlined_call_operand.vmem [shape: f32[1,24], index: 2, kind: input, shape index: {}]
  %s3 = inlined_call_operand.vmem [shape: bf16[24,88], index: 3, kind: input, shape index: {}]
  %s4 = inlined_call_operand.vmem [shape: f32[1,88], index: 4, kind: input, shape index: {}]
  %s5 = inlined_call_operand.vmem [shape: f32[2,1,88], index: 5, kind: output, shape index: {}]
  %s6 = sld [smem:[#allocation0]]
  $region53: #{fwd.22} parent=0
    _
  %s8 = ssub.s32 1, %s6
  %s9 = scalar_select 0, %s8, %s6
  loop: start=0, step=1, limit=4
  $region2: #{fwd.22} parent=0 // loop_pre_header
    _
  $region3: #{fwd.22} parent=0 // loop_header
    %s11 = sphi 0, %s15
    %p12 = scmp.ge.s32.totalorder %s11, 4
    %s21 = sphi 0, %s23
    %s24 = sphi 0, %s21
    %s25 = sphi 0, %s24
    %s41 = sphi 0, %s25
    %s45 = sphi 0, %s45
    %s47 = sphi 0, %s45
    %s48 = sphi 0, %s47
    %s62 = sphi 0, %s48
    %s66 = sphi 0, %s66
    %s68 = sphi 0, %s66
    %s69 = sphi 0, %s68
    %s83 = sphi 0, %s69
    %s87 = sphi 0, %s87
    %s89 = sphi 0, %s87
    %s90 = sphi 0, %s89
    %s104 = sphi 0, %s90
    %s108 = sphi 0, %s108
    %s110 = sphi 0, %s108
    %s111 = sphi 0, %s110
    %s125 = sphi 0, %s111
    %s131 = sphi 0, %s133
    %s134 = sphi 0, %s131
    %s135 = sphi 0, %s134
    %s151 = sphi 0, %s135
  $region4: #{fwd.22} parent=0 // loop_header_branch
    %14 = sbr.rel (%p12) target = $region8
  $region5: #{fwd.22} parent=0 // loop_body
    %s16 = ssub.s32 %s11, 1
    %s17 = ssub.s32 %s11, 2
    %s18 = sadd.s32 %s11, 1
    %s19 = ssub.s32 %s11, %s18
    %p20 = scmp.eq.s32.totalorder %s19, 0
    %s22 = sadd.s32 %s21, 1
    %s23 = scalar_select %p20, %s21, %s22
    %p26 = pneg %p20
    %p27 = scmp.eq.s32.totalorder %s11, 1
    %p28 = por %p26, %p27
    %p29 = scmp.ne.s32.totalorder %s21, %s24
    %p30 = scmp.eq.s32.totalorder %s11, 0
    %p31 = por %p29, %p30
    %p32 = scmp.ne.s32.totalorder %s21, %s24
    %p33 = scmp.eq.s32.totalorder %s16, 1
    %p34 = por %p32, %p33
    %p35 = scmp.ne.s32.totalorder %s24, %s25
    %p36 = scmp.eq.s32.totalorder %s16, 0
    %p37 = por %p35, %p36
    %p38 = scmp.ne.s32.totalorder %s24, %s25
    %p39 = scmp.eq.s32.totalorder %s17, 1
    %p40 = por %p38, %p39
    %p42 = scmp.ne.s32.totalorder %s25, %s41
    %p43 = scmp.eq.s32.totalorder %s17, 0
    %p44 = por %p42, %p43
    %s46 = sadd.s32 %s45, 1
    %p49 = scmp.eq.s32.totalorder %s11, 1
    %p50 = scmp.ne.s32.totalorder %s45, %s47
    %p51 = scmp.eq.s32.totalorder %s11, 0
    %p52 = por %p50, %p51
    %p53 = scmp.ne.s32.totalorder %s45, %s47
    %p54 = scmp.eq.s32.totalorder %s16, 1
    %p55 = por %p53, %p54
    %p56 = scmp.ne.s32.totalorder %s47, %s48
    %p57 = scmp.eq.s32.totalorder %s16, 0
    %p58 = por %p56, %p57
    %p59 = scmp.ne.s32.totalorder %s47, %s48
    %p60 = scmp.eq.s32.totalorder %s17, 1
    %p61 = por %p59, %p60
    %p63 = scmp.ne.s32.totalorder %s48, %s62
    %p64 = scmp.eq.s32.totalorder %s17, 0
    %p65 = por %p63, %p64
    %s67 = sadd.s32 %s66, 1
    %p70 = scmp.eq.s32.totalorder %s11, 1
    %p71 = scmp.ne.s32.totalorder %s66, %s68
    %p72 = scmp.eq.s32.totalorder %s11, 0
    %p73 = por %p71, %p72
    %p74 = scmp.ne.s32.totalorder %s66, %s68
    %p75 = scmp.eq.s32.totalorder %s16, 1
    %p76 = por %p74, %p75
    %p77 = scmp.ne.s32.totalorder %s68, %s69
    %p78 = scmp.eq.s32.totalorder %s16, 0
    %p79 = por %p77, %p78
    %p80 = scmp.ne.s32.totalorder %s68, %s69
    %p81 = scmp.eq.s32.totalorder %s17, 1
    %p82 = por %p80, %p81
    %p84 = scmp.ne.s32.totalorder %s69, %s83
    %p85 = scmp.eq.s32.totalorder %s17, 0
    %p86 = por %p84, %p85
    %s88 = sadd.s32 %s87, 1
    %p91 = scmp.eq.s32.totalorder %s11, 1
    %p92 = scmp.ne.s32.totalorder %s87, %s89
    %p93 = scmp.eq.s32.totalorder %s11, 0
    %p94 = por %p92, %p93
    %p95 = scmp.ne.s32.totalorder %s87, %s89
    %p96 = scmp.eq.s32.totalorder %s16, 1
    %p97 = por %p95, %p96
    %p98 = scmp.ne.s32.totalorder %s89, %s90
    %p99 = scmp.eq.s32.totalorder %s16, 0
    %p100 = por %p98, %p99
    %p101 = scmp.ne.s32.totalorder %s89, %s90
    %p102 = scmp.eq.s32.totalorder %s17, 1
    %p103 = por %p101, %p102
    %p105 = scmp.ne.s32.totalorder %s90, %s104
    %p106 = scmp.eq.s32.totalorder %s17, 0
    %p107 = por %p105, %p106
    %s109 = sadd.s32 %s108, 1
    %p112 = scmp.eq.s32.totalorder %s11, 1
    %p113 = scmp.ne.s32.totalorder %s108, %s110
    %p114 = scmp.eq.s32.totalorder %s11, 0
    %p115 = por %p113, %p114
    %p116 = scmp.ne.s32.totalorder %s108, %s110
    %p117 = scmp.eq.s32.totalorder %s16, 1
    %p118 = por %p116, %p117
    %p119 = scmp.ne.s32.totalorder %s110, %s111
    %p120 = scmp.eq.s32.totalorder %s16, 0
    %p121 = por %p119, %p120
    %p122 = scmp.ne.s32.totalorder %s110, %s111
    %p123 = scmp.eq.s32.totalorder %s17, 1
    %p124 = por %p122, %p123
    %p126 = scmp.ne.s32.totalorder %s111, %s125
    %p127 = scmp.eq.s32.totalorder %s17, 0
    %p128 = por %p126, %p127
    %s129 = ssub.s32 %s11, %s18
    %p130 = scmp.eq.s32.totalorder %s129, 0
    %s132 = sadd.s32 %s131, 1
    %s133 = scalar_select %p130, %s131, %s132
    %p136 = pneg %p130
    %p137 = scmp.eq.s32.totalorder %s11, 1
    %p138 = por %p136, %p137
    %p139 = scmp.ne.s32.totalorder %s131, %s134
    %p140 = scmp.eq.s32.totalorder %s11, 0
    %p141 = por %p139, %p140
    %p142 = scmp.ne.s32.totalorder %s131, %s134
    %p143 = scmp.eq.s32.totalorder %s16, 1
    %p144 = por %p142, %p143
    %p145 = scmp.ne.s32.totalorder %s134, %s135
    %p146 = scmp.eq.s32.totalorder %s16, 0
    %p147 = por %p145, %p146
    %p148 = scmp.ne.s32.totalorder %s134, %s135
    %p149 = scmp.eq.s32.totalorder %s17, 1
    %p150 = por %p148, %p149
    %p152 = scmp.ne.s32.totalorder %s135, %s151
    %p153 = scmp.eq.s32.totalorder %s17, 0
    %p154 = por %p152, %p153
    %p155 = scmp.le.s32.totalorder 1, %s11
    %p156 = scmp.lt.s32.totalorder %s11, 3
    %p157 = pnand %p155, %p156
    %p158 = pneg %p157
    // Predicated region
    $region9: #{fwd.22} parent=5 // pred_check
      _
    $region10: #{fwd.22} parent=5 // pred_check_branch
      %160 = sbr.rel (%p157) target = $region12
    $region11: #{fwd.22} parent=5 // pred_region
      %s161 = ssub.s32 %s11, 1
      // Predicated region
      $region13: #{fwd.22} parent=11 // pred_check
        %p162 = pneg %p58
      $region14: #{fwd.22} parent=11 // pred_check_branch
        %164 = sbr.rel (%p162) target = $region16
      $region15: #{fwd.22} parent=11 // pred_region
        _
      $region16: #{fwd.22} parent=11 // pred_fallthru
        _
      // Predicated region
      $region17: #{fwd.22} parent=11 // pred_check
        %p165 = pneg %p79
      $region18: #{fwd.22} parent=11 // pred_check_branch
        %167 = sbr.rel (%p165) target = $region20
      $region19: #{fwd.22} parent=11 // pred_region
        _
      $region20: #{fwd.22} parent=11 // pred_fallthru
        _
      // Predicated region
      $region21: #{fwd.22} parent=11 // pred_check
        %p168 = pneg %p100
      $region22: #{fwd.22} parent=11 // pred_check_branch
        %170 = sbr.rel (%p168) target = $region24
      $region23: #{fwd.22} parent=11 // pred_region
        _
      $region24: #{fwd.22} parent=11 // pred_fallthru
        _
      // Predicated region
      $region25: #{fwd.22} parent=11 // pred_check
        %p171 = pneg %p121
      $region26: #{fwd.22} parent=11 // pred_check_branch
        %173 = sbr.rel (%p171) target = $region28
      $region27: #{fwd.22} parent=11 // pred_region
        _
      $region28: #{fwd.22} parent=11 // pred_fallthru
        _
    $region12: #{fwd.22} parent=5 // pred_fallthru
      _
    %p174 = scmp.lt.s32.totalorder %s11, 2
    // Predicated region
    $region29: #{fwd.22} parent=5 // pred_check
      %p175 = pneg %p174
    $region30: #{fwd.22} parent=5 // pred_check_branch
      %177 = sbr.rel (%p175) target = $region32
    $region31: #{fwd.22} parent=5 // pred_region
      // Predicated region
      $region33: #{fwd.22} parent=31 // pred_check
        %p178 = pneg %p31
      $region34: #{fwd.22} parent=31 // pred_check_branch
        %180 = sbr.rel (%p178) target = $region36
      $region35: #{fwd.22} parent=31 // pred_region
        %p181 = scmp.lt.s32.totalorder %s11, 1
        %s182 = scalar_select %p181, %s11, 1
        %s183 = smul.addr %s182, 2
        %s184 = smul.addr %s183, 4
        %s185 = scalar_lea.vmem %s0, %s184
      $region36: #{fwd.22} parent=31 // pred_fallthru
        _
    $region32: #{fwd.22} parent=5 // pred_fallthru
      _
    %p186 = scmp.le.s32.totalorder 1, %s11
    %p187 = scmp.lt.s32.totalorder %s11, 3
    %p188 = pnand %p186, %p187
    %p189 = pneg %p188
    // Predicated region
    $region37: #{fwd.22} parent=5 // pred_check
      _
    $region38: #{fwd.22} parent=5 // pred_check_branch
      %191 = sbr.rel (%p188) target = $region40
    $region39: #{fwd.22} parent=5 // pred_region
      %s192 = ssub.s32 %s11, 1
      %p193 = scmp.lt.s32.totalorder %s16, 1
      %s194 = scalar_select %p193, %s16, 1
      %s195 = smul.addr %s194, 2
      %s196 = smul.addr %s195, 4
      %s197 = scalar_lea.vmem %s0, %s196
      %p198 = pneg %p37
      %p199 = pneg %p34
      %p200 = pneg %p58
      %p201 = pneg %p55
      %p202 = pneg %p79
      %p203 = pneg %p76
      %p204 = pneg %p100
      %p205 = pneg %p97
      %p206 = pneg %p121
      %p207 = pneg %p118
      %p208 = pneg %p147
      %p209 = pneg %p144
      %p210 = scmp.lt.s32.totalorder %s16, 1
      %s211 = scalar_select %p210, %s16, 1
      %s212 = scalar_lea.vmem %s5, %s211
      %p213 = scmp.lt.s32.totalorder %s16, 1
      %s214 = scalar_select %p213, %s16, 1
      %s215 = smul.addr %s214, 2
      %s216 = smul.addr %s215, 4
      %s217 = scalar_lea.vmem %s0, %s216
      %p218 = scmp.lt.s32.totalorder %s16, 1
      %s219 = scalar_select %p218, %s16, 1
      %s220 = scalar_lea.vmem %s5, %s219
      %v222 = vld [vmem:[%s217] sm:$0xf]
      %v223 = vld [vmem:[%s217 + $0x4] sm:$0xf]
      %v224 = vunpack.c.l.bf16 %v222
      %v225 = vunpack.c.l.bf16 %v223
      %vm226 = vcmask 719872
      %v227 = vsel %vm226, %v224, 0.0
      %v228 = vsel %vm226, %v225, 0.0
      %v229 = vadd.f32 %v227, %v228
      %v230 = vrot.slane %v229, 4
      %v231 = vadd.f32 %v229, %v230
      %v232 = vrot.slane %v231, 2
      %v233 = vadd.f32 %v231, %v232
      %v234 = vrot.slane %v233, 1
      %v235 = vadd.f32 %v233, %v234
      %v236 = vrcp.pop 16.0
      %v237 = vmul.f32 %v235, %v236
      %v238 = vpack.c.bf16 %v237, %v237
      %v239 = vld [vmem:[%s1] sm:$0xf]
      %v240 = vld [vmem:[%s1 + $0x4] sm:$0xf]
      %v241 = vld [vmem:[%s1 + $0x8] sm:$0xf]
      %v242 = vld [vmem:[%s1 + $0xc] sm:$0xf]
      %v243 = vld [vmem:[%s1 + $0x10] sm:$0xf]
      %v244 = vld [vmem:[%s1 + $0x14] sm:$0xf]
      %v245 = vld [vmem:[%s1 + $0x18] sm:$0xf]
      %v246 = vld [vmem:[%s1 + $0x1c] sm:$0xf]
      %v247 = vld [vmem:[%s1 + $0x20] sm:$0xf]
      %v248 = vld [vmem:[%s1 + $0x24] sm:$0xf]
      %v249 = vld [vmem:[%s1 + $0x28] sm:$0xf]
      %v250 = vld [vmem:[%s2] sm:$0x1]
      %v262 = vunpack.c.l.b16 %v239
      %v263 = vunpack.c.l.b16 %v240
      %v264 = vunpack.c.l.b16 %v241
      %v265 = vunpack.c.l.b16 %v242
      %v266 = vunpack.c.l.b16 %v243
      %v267 = vunpack.c.l.b16 %v244
      %v268 = vunpack.c.l.b16 %v245
      %v269 = vunpack.c.l.b16 %v246
      %v270 = vunpack.c.l.b16 %v247
      %v271 = vunpack.c.l.b16 %v248
      %v272 = vunpack.c.l.b16 %v249
      %v273 = vpack.c.b16 %v263, %v262
      %v274 = vpack.c.b16 %v265, %v264
      %v275 = vpack.c.b16 %v267, %v266
      %v276 = vpack.c.b16 %v269, %v268
      %v277 = vpack.c.b16 %v271, %v270
      %v278 = vpack.c.b16 %v272, %v272
      %v285 = vsel %vm226, %v238, 0
      %vm287 = vcmask 1043456
      %v289 = vsel %vm287, %v278, 0
      %291 = vmatprep.subr.bf16.mxu0 0
      %292 = vmatpush1.bf16.msra.mxu0 0
      %293 = vmatprep.subr.bf16.mxu0 0
      %294 = vmatpush1.bf16.msra.mxu0 0
      %295 = vmatprep.subr.bf16.mxu0 0
      %296 = vmatpush1.bf16.msra.mxu0 %v289
      %297 = vmatprep.subr.bf16.mxu0 0
      %298 = vmatpush1.bf16.msra.mxu0 %v277
      %299 = vmatprep.subr.bf16.mxu0 0
      %300 = vmatpush1.bf16.msra.mxu0 %v276
      %301 = vmatprep.subr.bf16.mxu0 0
      %302 = vmatpush1.bf16.msra.mxu0 %v275
      %303 = vmatprep.subr.bf16.mxu0 0
      %304 = vmatpush1.bf16.msra.mxu0 %v274
      %305 = vmatprep.subr.bf16.mxu0 0
      %306 = vmatpush1.bf16.msra.mxu0 %v273
      %307 = vmatprep.subr.bf16.mxu0 0
      %308 = vmatpush2.bf16.msra.mxu0 0
      %309 = vmatprep.subr.bf16.mxu0 0
      %310 = vmatpush2.bf16.msra.mxu0 0
      %311 = vmatprep.subr.bf16.mxu0 0
      %312 = vmatpush2.bf16.msra.mxu0 0
      %313 = vmatprep.subr.bf16.mxu0 0
      %314 = vmatpush2.bf16.msra.mxu0 0
      %315 = vmatprep.subr.bf16.mxu0 0
      %316 = vmatpush2.bf16.msra.mxu0 0
      %317 = vmatprep.subr.bf16.mxu0 0
      %318 = vmatpush2.bf16.msra.mxu0 0
      %319 = vmatprep.subr.bf16.mxu0 0
      %320 = vmatpush2.bf16.msra.mxu0 0
      %321 = vmatprep.subr.bf16.mxu0 0
      %322 = vmatpush2.bf16.msra.mxu0 0
      %323 = vmatprep.mubr.bf16.mxu0 0
      %324 = vmatmul.mubr.bf16.gmra.mxu0 %v285
      %v325 = vpop.f32.mrf.mxu0
      %v326 = vadd.f32 %v250, %v325
      %v327 = vpop.f32.mrf.mxu0
      %v328 = vpop.f32.mrf.mxu0
      %v329 = vpop.f32.mrf.mxu0
      %330 = vdwg.mxu0
      %v331 = vmax.f32 %v326, 0.0
      %v332 = vpack.c.bf16 %v331, %v331
      %v333 = vld [vmem:[%s3] sm:$0xf]
      %v334 = vld [vmem:[%s3 + $0x4] sm:$0xf]
      %v335 = vld [vmem:[%s3 + $0x8] sm:$0xf]
      %v336 = vld [vmem:[%s4] sm:$0x1]
      %v340 = vunpack.c.l.b16 %v333
      %v341 = vunpack.c.l.b16 %v334
      %v342 = vunpack.c.l.b16 %v335
      %v343 = vpack.c.b16 %v341, %v340
      %v344 = vpack.c.b16 %v342, %v342
      %vm346 = vcmask 195584
      %v348 = vsel %vm346, %v332, 0
      %v351 = vsel %vm287, %v344, 0
      %353 = vmatprep.subr.bf16.mxu0 0
      %354 = vmatpush1.bf16.msra.mxu0 0
      %355 = vmatprep.subr.bf16.mxu0 0
      %356 = vmatpush1.bf16.msra.mxu0 0
      %357 = vmatprep.subr.bf16.mxu0 0
      %358 = vmatpush1.bf16.msra.mxu0 0
      %359 = vmatprep.subr.bf16.mxu0 0
      %360 = vmatpush1.bf16.msra.mxu0 0
      %361 = vmatprep.subr.bf16.mxu0 0
      %362 = vmatpush1.bf16.msra.mxu0 0
      %363 = vmatprep.subr.bf16.mxu0 0
      %364 = vmatpush1.bf16.msra.mxu0 0
      %365 = vmatprep.subr.bf16.mxu0 0
      %366 = vmatpush1.bf16.msra.mxu0 %v351
      %367 = vmatprep.subr.bf16.mxu0 0
      %368 = vmatpush1.bf16.msra.mxu0 %v343
      %369 = vmatprep.subr.bf16.mxu0 0
      %370 = vmatpush2.bf16.msra.mxu0 0
      %371 = vmatprep.subr.bf16.mxu0 0
      %372 = vmatpush2.bf16.msra.mxu0 0
      %373 = vmatprep.subr.bf16.mxu0 0
      %374 = vmatpush2.bf16.msra.mxu0 0
      %375 = vmatprep.subr.bf16.mxu0 0
      %376 = vmatpush2.bf16.msra.mxu0 0
      %377 = vmatprep.subr.bf16.mxu0 0
      %378 = vmatpush2.bf16.msra.mxu0 0
      %379 = vmatprep.subr.bf16.mxu0 0
      %380 = vmatpush2.bf16.msra.mxu0 0
      %381 = vmatprep.subr.bf16.mxu0 0
      %382 = vmatpush2.bf16.msra.mxu0 0
      %383 = vmatprep.subr.bf16.mxu0 0
      %384 = vmatpush2.bf16.msra.mxu0 0
      %385 = vmatprep.mubr.bf16.mxu0 0
      %386 = vmatmul.mubr.bf16.gmra.mxu0 %v348
      %v387 = vpop.f32.mrf.mxu0
      %v388 = vadd.f32 %v336, %v387
      %v389 = vpop.f32.mrf.mxu0
      %v390 = vpop.f32.mrf.mxu0
      %v391 = vpop.f32.mrf.mxu0
      %392 = vdwg.mxu0
      %v393 = vadd.f32 %v388, 3.0
      %v394 = vmax.f32 %v393, 0.0
      %v395 = vmin.f32 %v394, 6.0
      %v396 = vmul.f32 %v395, 0.16666667
      %vm397 = vcmask 712704
      %398 = vst.msk [vmem:[%s220] sm:$0x1] %vm397, %v396
      %p399 = scmp.lt.s32.totalorder %s16, 1
      %s400 = scalar_select %p399, %s16, 1
      %s401 = scalar_lea.vmem %s5, %s400
      // Predicated region
      $region41: #{fwd.22} parent=39 // pred_check
        %p402 = pneg %p144
      $region42: #{fwd.22} parent=39 // pred_check_branch
        %404 = sbr.rel (%p402) target = $region44
      $region43: #{fwd.22} parent=39 // pred_region
        _
      $region44: #{fwd.22} parent=39 // pred_fallthru
        _
    $region40: #{fwd.22} parent=5 // pred_fallthru
      _
    %p405 = scmp.le.s32.totalorder 2, %s11
    // Predicated region
    $region45: #{fwd.22} parent=5 // pred_check
      %p406 = pneg %p405
    $region46: #{fwd.22} parent=5 // pred_check_branch
      %408 = sbr.rel (%p406) target = $region48
    $region47: #{fwd.22} parent=5 // pred_region
      %s409 = ssub.s32 %s11, 2
      // Predicated region
      $region49: #{fwd.22} parent=47 // pred_check
        %p410 = pneg %p150
      $region50: #{fwd.22} parent=47 // pred_check_branch
        %412 = sbr.rel (%p410) target = $region52
      $region51: #{fwd.22} parent=47 // pred_region
        %p413 = scmp.lt.s32.totalorder %s17, 1
        %s414 = scalar_select %p413, %s17, 1
        %s415 = scalar_lea.vmem %s5, %s414
      $region52: #{fwd.22} parent=47 // pred_fallthru
        _
    $region48: #{fwd.22} parent=5 // pred_fallthru
      _
  $region6: #{fwd.22} parent=0 // loop_footer
    %s15 = sadd.s32 1, %s11
  $region7: #{fwd.22} parent=0 // loop_footer_branch
    %10 = sbr.rel target = $region3
  $region8: #{fwd.22} parent=0 // loop_exit
    _

// kernel: fwd.23
$region0: #{fwd.23}
  #allocation0 [shape = 'u32[]', space=smem, size = 0x4, offset = 0x4, fixed_abs, tag = 'smem constant byte address 0x4 - core index']
  #allocation1 [shape = 'u32[144,128]{1,0:T(1,128)}', space=vmem, size = 0x12000, scoped, tag = 'internal scratch']
  %s0 = inlined_call_operand.vmem [shape: bf16[2,16,88], index: 0, kind: input, shape index: {}]
  %s1 = inlined_call_operand.vmem [shape: bf16[88,24], index: 1, kind: input, shape index: {}]
  %s2 = inlined_call_operand.vmem [shape: f32[1,24], index: 2, kind: input, shape index: {}]
  %s3 = inlined_call_operand.vmem [shape: f32[2,1,88], index: 3, kind: input, shape index: {}]
  %s4 = inlined_call_operand.vmem [shape: bf16[2,16,24], index: 4, kind: input, shape index: {}]
  %s5 = inlined_call_operand.vmem [shape: bf16[2,16,24], index: 5, kind: output, shape index: {}]
  %s6 = sld [smem:[#allocation0]]
  $region53: #{fwd.23} parent=0
    _
  %s8 = ssub.s32 1, %s6
  %s9 = scalar_select 0, %s8, %s6
  loop: start=0, step=1, limit=4
  $region2: #{fwd.23} parent=0 // loop_pre_header
    _
  $region3: #{fwd.23} parent=0 // loop_header
    %s11 = sphi 0, %s15
    %p12 = scmp.ge.s32.totalorder %s11, 4
    %s18 = sphi 0, %s30
    %s19 = sphi 0, %s26
    %s20 = sphi 0, %s18
    %s21 = sphi 0, %s19
    %s22 = sphi 0, %s20
    %s23 = sphi 0, %s21
    %s35 = sphi 0, %s37
    %s38 = sphi 0, %s35
    %s39 = sphi 0, %s38
    %s55 = sphi 0, %s39
    %s59 = sphi 0, %s59
    %s61 = sphi 0, %s59
    %s62 = sphi 0, %s61
    %s76 = sphi 0, %s62
    %s80 = sphi 0, %s80
    %s82 = sphi 0, %s80
    %s83 = sphi 0, %s82
    %s97 = sphi 0, %s83
    %s103 = sphi 0, %s105
    %s106 = sphi 0, %s103
    %s107 = sphi 0, %s106
    %s123 = sphi 0, %s107
    %s131 = sphi 0, %s133
    %s134 = sphi 0, %s131
    %s135 = sphi 0, %s134
    %s151 = sphi 0, %s135
    %s159 = sphi 0, %s161
    %s162 = sphi 0, %s159
    %s163 = sphi 0, %s162
    %s179 = sphi 0, %s163
  $region4: #{fwd.23} parent=0 // loop_header_branch
    %14 = sbr.rel (%p12) target = $region8
  $region5: #{fwd.23} parent=0 // loop_body
    %s16 = ssub.s32 %s11, 1
    %s17 = ssub.s32 %s11, 2
    %s24 = sadd.s32 1, %s19
    %p25 = scmp.ge.s32.totalorder %s24, 1
    %s26 = scalar_select %p25, 0, %s24
    %s27 = sadd.s32 1, %s18
    %s28 = scalar_select %p25, %s27, %s18
    %p29 = scmp.ge.s32.totalorder %s28, 2
    %s30 = scalar_select %p29, 0, %s28
    %s31 = ssub.s32 %s18, %s30
    %s32 = ssub.s32 %s19, %s26
    %s33 = sor.u32 %s31, %s32
    %p34 = scmp.eq.s32.totalorder %s33, 0
    %s36 = sadd.s32 %s35, 1
    %s37 = scalar_select %p34, %s35, %s36
    %p40 = pneg %p34
    %p41 = scmp.eq.s32.totalorder %s11, 1
    %p42 = por %p40, %p41
    %p43 = scmp.ne.s32.totalorder %s35, %s38
    %p44 = scmp.eq.s32.totalorder %s11, 0
    %p45 = por %p43, %p44
    %p46 = scmp.ne.s32.totalorder %s35, %s38
    %p47 = scmp.eq.s32.totalorder %s16, 1
    %p48 = por %p46, %p47
    %p49 = scmp.ne.s32.totalorder %s38, %s39
    %p50 = scmp.eq.s32.totalorder %s16, 0
    %p51 = por %p49, %p50
    %p52 = scmp.ne.s32.totalorder %s38, %s39
    %p53 = scmp.eq.s32.totalorder %s17, 1
    %p54 = por %p52, %p53
    %p56 = scmp.ne.s32.totalorder %s39, %s55
    %p57 = scmp.eq.s32.totalorder %s17, 0
    %p58 = por %p56, %p57
    %s60 = sadd.s32 %s59, 1
    %p63 = scmp.eq.s32.totalorder %s11, 1
    %p64 = scmp.ne.s32.totalorder %s59, %s61
    %p65 = scmp.eq.s32.totalorder %s11, 0
    %p66 = por %p64, %p65
    %p67 = scmp.ne.s32.totalorder %s59, %s61
    %p68 = scmp.eq.s32.totalorder %s16, 1
    %p69 = por %p67, %p68
    %p70 = scmp.ne.s32.totalorder %s61, %s62
    %p71 = scmp.eq.s32.totalorder %s16, 0
    %p72 = por %p70, %p71
    %p73 = scmp.ne.s32.totalorder %s61, %s62
    %p74 = scmp.eq.s32.totalorder %s17, 1
    %p75 = por %p73, %p74
    %p77 = scmp.ne.s32.totalorder %s62, %s76
    %p78 = scmp.eq.s32.totalorder %s17, 0
    %p79 = por %p77, %p78
    %s81 = sadd.s32 %s80, 1
    %p84 = scmp.eq.s32.totalorder %s11, 1
    %p85 = scmp.ne.s32.totalorder %s80, %s82
    %p86 = scmp.eq.s32.totalorder %s11, 0
    %p87 = por %p85, %p86
    %p88 = scmp.ne.s32.totalorder %s80, %s82
    %p89 = scmp.eq.s32.totalorder %s16, 1
    %p90 = por %p88, %p89
    %p91 = scmp.ne.s32.totalorder %s82, %s83
    %p92 = scmp.eq.s32.totalorder %s16, 0
    %p93 = por %p91, %p92
    %p94 = scmp.ne.s32.totalorder %s82, %s83
    %p95 = scmp.eq.s32.totalorder %s17, 1
    %p96 = por %p94, %p95
    %p98 = scmp.ne.s32.totalorder %s83, %s97
    %p99 = scmp.eq.s32.totalorder %s17, 0
    %p100 = por %p98, %p99
    %s101 = ssub.s32 %s18, %s30
    %p102 = scmp.eq.s32.totalorder %s101, 0
    %s104 = sadd.s32 %s103, 1
    %s105 = scalar_select %p102, %s103, %s104
    %p108 = pneg %p102
    %p109 = scmp.eq.s32.totalorder %s11, 1
    %p110 = por %p108, %p109
    %p111 = scmp.ne.s32.totalorder %s103, %s106
    %p112 = scmp.eq.s32.totalorder %s11, 0
    %p113 = por %p111, %p112
    %p114 = scmp.ne.s32.totalorder %s103, %s106
    %p115 = scmp.eq.s32.totalorder %s16, 1
    %p116 = por %p114, %p115
    %p117 = scmp.ne.s32.totalorder %s106, %s107
    %p118 = scmp.eq.s32.totalorder %s16, 0
    %p119 = por %p117, %p118
    %p120 = scmp.ne.s32.totalorder %s106, %s107
    %p121 = scmp.eq.s32.totalorder %s17, 1
    %p122 = por %p120, %p121
    %p124 = scmp.ne.s32.totalorder %s107, %s123
    %p125 = scmp.eq.s32.totalorder %s17, 0
    %p126 = por %p124, %p125
    %s127 = ssub.s32 %s18, %s30
    %s128 = ssub.s32 %s19, %s26
    %s129 = sor.u32 %s127, %s128
    %p130 = scmp.eq.s32.totalorder %s129, 0
    %s132 = sadd.s32 %s131, 1
    %s133 = scalar_select %p130, %s131, %s132
    %p136 = pneg %p130
    %p137 = scmp.eq.s32.totalorder %s11, 1
    %p138 = por %p136, %p137
    %p139 = scmp.ne.s32.totalorder %s131, %s134
    %p140 = scmp.eq.s32.totalorder %s11, 0
    %p141 = por %p139, %p140
    %p142 = scmp.ne.s32.totalorder %s131, %s134
    %p143 = scmp.eq.s32.totalorder %s16, 1
    %p144 = por %p142, %p143
    %p145 = scmp.ne.s32.totalorder %s134, %s135
    %p146 = scmp.eq.s32.totalorder %s16, 0
    %p147 = por %p145, %p146
    %p148 = scmp.ne.s32.totalorder %s134, %s135
    %p149 = scmp.eq.s32.totalorder %s17, 1
    %p150 = por %p148, %p149
    %p152 = scmp.ne.s32.totalorder %s135, %s151
    %p153 = scmp.eq.s32.totalorder %s17, 0
    %p154 = por %p152, %p153
    %s155 = ssub.s32 %s18, %s30
    %s156 = ssub.s32 %s19, %s26
    %s157 = sor.u32 %s155, %s156
    %p158 = scmp.eq.s32.totalorder %s157, 0
    %s160 = sadd.s32 %s159, 1
    %s161 = scalar_select %p158, %s159, %s160
    %p164 = pneg %p158
    %p165 = scmp.eq.s32.totalorder %s11, 1
    %p166 = por %p164, %p165
    %p167 = scmp.ne.s32.totalorder %s159, %s162
    %p168 = scmp.eq.s32.totalorder %s11, 0
    %p169 = por %p167, %p168
    %p170 = scmp.ne.s32.totalorder %s159, %s162
    %p171 = scmp.eq.s32.totalorder %s16, 1
    %p172 = por %p170, %p171
    %p173 = scmp.ne.s32.totalorder %s162, %s163
    %p174 = scmp.eq.s32.totalorder %s16, 0
    %p175 = por %p173, %p174
    %p176 = scmp.ne.s32.totalorder %s162, %s163
    %p177 = scmp.eq.s32.totalorder %s17, 1
    %p178 = por %p176, %p177
    %p180 = scmp.ne.s32.totalorder %s163, %s179
    %p181 = scmp.eq.s32.totalorder %s17, 0
    %p182 = por %p180, %p181
    %p183 = scmp.le.s32.totalorder 1, %s11
    %p184 = scmp.lt.s32.totalorder %s11, 3
    %p185 = pnand %p183, %p184
    %p186 = pneg %p185
    // Predicated region
    $region9: #{fwd.23} parent=5 // pred_check
      _
    $region10: #{fwd.23} parent=5 // pred_check_branch
      %188 = sbr.rel (%p185) target = $region12
    $region11: #{fwd.23} parent=5 // pred_region
      %s189 = ssub.s32 %s11, 1
      // Predicated region
      $region13: #{fwd.23} parent=11 // pred_check
        %p190 = pneg %p72
      $region14: #{fwd.23} parent=11 // pred_check_branch
        %192 = sbr.rel (%p190) target = $region16
      $region15: #{fwd.23} parent=11 // pred_region
        _
      $region16: #{fwd.23} parent=11 // pred_fallthru
        _
      // Predicated region
      $region17: #{fwd.23} parent=11 // pred_check
        %p193 = pneg %p93
      $region18: #{fwd.23} parent=11 // pred_check_branch
        %195 = sbr.rel (%p193) target = $region20
      $region19: #{fwd.23} parent=11 // pred_region
        _
      $region20: #{fwd.23} parent=11 // pred_fallthru
        _
    $region12: #{fwd.23} parent=5 // pred_fallthru
      _
    %p196 = scmp.lt.s32.totalorder %s11, 2
    // Predicated region
    $region21: #{fwd.23} parent=5 // pred_check
      %p197 = pneg %p196
    $region22: #{fwd.23} parent=5 // pred_check_branch
      %199 = sbr.rel (%p197) target = $region24
    $region23: #{fwd.23} parent=5 // pred_region
      // Predicated region
      $region25: #{fwd.23} parent=23 // pred_check
        %p200 = pneg %p45
      $region26: #{fwd.23} parent=23 // pred_check_branch
        %202 = sbr.rel (%p200) target = $region28
      $region27: #{fwd.23} parent=23 // pred_region
        %s203 = smul.u32 2, %s19
        %p204 = scmp.lt.s32.totalorder %s18, 1
        %s205 = scalar_select %p204, %s18, 1
        %p206 = scmp.lt.s32.totalorder %s203, 1
        %s207 = scalar_select %p206, %s203, 1
        %s208 = smul.addr %s205, 2
        %s209 = sadd.s32 %s207, %s208
        %s210 = smul.addr %s209, 4
        %s211 = scalar_lea.vmem %s0, %s210
        %s212 = smul.u32 2, %s19
      $region28: #{fwd.23} parent=23 // pred_fallthru
        _
      // Predicated region
      $region29: #{fwd.23} parent=23 // pred_check
        %p213 = pneg %p113
      $region30: #{fwd.23} parent=23 // pred_check_branch
        %215 = sbr.rel (%p213) target = $region32
      $region31: #{fwd.23} parent=23 // pred_region
        %p216 = scmp.lt.s32.totalorder %s18, 1
        %s217 = scalar_select %p216, %s18, 1
        %s218 = scalar_lea.vmem %s3, %s217
      $region32: #{fwd.23} parent=23 // pred_fallthru
        _
      // Predicated region
      $region33: #{fwd.23} parent=23 // pred_check
        %p219 = pneg %p141
      $region34: #{fwd.23} parent=23 // pred_check_branch
        %221 = sbr.rel (%p219) target = $region36
      $region35: #{fwd.23} parent=23 // pred_region
        %s222 = smul.u32 2, %s19
        %p223 = scmp.lt.s32.totalorder %s18, 1
        %s224 = scalar_select %p223, %s18, 1
        %p225 = scmp.lt.s32.totalorder %s222, 1
        %s226 = scalar_select %p225, %s222, 1
        %s227 = smul.addr %s224, 2
        %s228 = sadd.s32 %s226, %s227
        %s229 = smul.addr %s228, 4
        %s230 = scalar_lea.vmem %s4, %s229
        %s231 = smul.u32 2, %s19
      $region36: #{fwd.23} parent=23 // pred_fallthru
        _
    $region24: #{fwd.23} parent=5 // pred_fallthru
      _
    %p232 = scmp.le.s32.totalorder 1, %s11
    %p233 = scmp.lt.s32.totalorder %s11, 3
    %p234 = pnand %p232, %p233
    %p235 = pneg %p234
    // Predicated region
    $region37: #{fwd.23} parent=5 // pred_check
      _
    $region38: #{fwd.23} parent=5 // pred_check_branch
      %237 = sbr.rel (%p234) target = $region40
    $region39: #{fwd.23} parent=5 // pred_region
      %s238 = ssub.s32 %s11, 1
      %s239 = smul.u32 2, %s21
      %p240 = scmp.lt.s32.totalorder %s20, 1
      %s241 = scalar_select %p240, %s20, 1
      %p242 = scmp.lt.s32.totalorder %s239, 1
      %s243 = scalar_select %p242, %s239, 1
      %s244 = smul.addr %s241, 2
      %s245 = sadd.s32 %s243, %s244
      %s246 = smul.addr %s245, 4
      %s247 = scalar_lea.vmem %s0, %s246
      %p248 = pneg %p51
      %p249 = pneg %p48
      %p250 = pneg %p72
      %p251 = pneg %p69
      %p252 = pneg %p93
      %p253 = pneg %p90
      %p254 = scmp.lt.s32.totalorder %s20, 1
      %s255 = scalar_select %p254, %s20, 1
      %s256 = scalar_lea.vmem %s3, %s255
      %p257 = pneg %p119
      %p258 = pneg %p116
      %s259 = smul.u32 2, %s21
      %p260 = scmp.lt.s32.totalorder %s20, 1
      %s261 = scalar_select %p260, %s20, 1
      %p262 = scmp.lt.s32.totalorder %s259, 1
      %s263 = scalar_select %p262, %s259, 1
      %s264 = smul.addr %s261, 2
      %s265 = sadd.s32 %s263, %s264
      %s266 = smul.addr %s265, 4
      %s267 = scalar_lea.vmem %s4, %s266
      %p268 = pneg %p147
      %p269 = pneg %p144
      %p270 = pneg %p175
      %p271 = pneg %p172
      %s272 = smul.u32 2, %s21
      %p273 = scmp.lt.s32.totalorder %s20, 1
      %s274 = scalar_select %p273, %s20, 1
      %p275 = scmp.lt.s32.totalorder %s272, 1
      %s276 = scalar_select %p275, %s272, 1
      %s277 = smul.addr %s274, 2
      %s278 = sadd.s32 %s276, %s277
      %s279 = smul.addr %s278, 4
      %s280 = scalar_lea.vmem %s5, %s279
      %s281 = smul.u32 2, %s21
      %p282 = scmp.lt.s32.totalorder %s20, 1
      %s283 = scalar_select %p282, %s20, 1
      %p284 = scmp.lt.s32.totalorder %s281, 1
      %s285 = scalar_select %p284, %s281, 1
      %s286 = smul.addr %s283, 2
      %s287 = sadd.s32 %s285, %s286
      %s288 = smul.addr %s287, 4
      %s289 = scalar_lea.vmem %s0, %s288
      %s290 = smul.u32 2, %s21
      %p291 = scmp.lt.s32.totalorder %s20, 1
      %s292 = scalar_select %p291, %s20, 1
      %s293 = scalar_lea.vmem %s3, %s292
      %s294 = smul.u32 2, %s21
      %p295 = scmp.lt.s32.totalorder %s20, 1
      %s296 = scalar_select %p295, %s20, 1
      %p297 = scmp.lt.s32.totalorder %s294, 1
      %s298 = scalar_select %p297, %s294, 1
      %s299 = smul.addr %s296, 2
      %s300 = sadd.s32 %s298, %s299
      %s301 = smul.addr %s300, 4
      %s302 = scalar_lea.vmem %s4, %s301
      %s303 = smul.u32 2, %s21
      %s304 = smul.u32 2, %s21
      %p305 = scmp.lt.s32.totalorder %s20, 1
      %s306 = scalar_select %p305, %s20, 1
      %p307 = scmp.lt.s32.totalorder %s304, 1
      %s308 = scalar_select %p307, %s304, 1
      %s309 = smul.addr %s306, 2
      %s310 = sadd.s32 %s308, %s309
      %s311 = smul.addr %s310, 4
      %s312 = scalar_lea.vmem %s5, %s311
      %s313 = smul.u32 2, %s21
      %v315 = vld [vmem:[%s289] sm:$0xf]
      %v316 = vld [vmem:[%s289 + $0x4] sm:$0xf]
      %v317 = vunpack.c.l.bf16 %v315
      %v318 = vunpack.c.l.bf16 %v316
      %v319 = vld [vmem:[%s293] sm:$0x1]
      %v321 = vlaneseq
      %v322 = vshrl.u32 %v321, 7
      %v323 = vsub.s32 0, %v322
      %v324 = vrot.slane %v319, %v323
      %v326 = vmul.f32 %v317, %v324
      %v327 = vmul.f32 %v318, %v324
      %v328 = vpack.c.bf16 %v327, %v326
      %v329 = vld [vmem:[%s1] sm:$0xf]
      %v330 = vld [vmem:[%s1 + $0x4] sm:$0xf]
      %v331 = vld [vmem:[%s1 + $0x8] sm:$0xf]
      %v332 = vld [vmem:[%s1 + $0xc] sm:$0xf]
      %v333 = vld [vmem:[%s1 + $0x10] sm:$0xf]
      %v334 = vld [vmem:[%s1 + $0x14] sm:$0xf]
      %v335 = vld [vmem:[%s1 + $0x18] sm:$0xf]
      %v336 = vld [vmem:[%s1 + $0x1c] sm:$0xf]
      %v337 = vld [vmem:[%s1 + $0x20] sm:$0xf]
      %v338 = vld [vmem:[%s1 + $0x24] sm:$0xf]
      %v339 = vld [vmem:[%s1 + $0x28] sm:$0xf]
      %v340 = vld [vmem:[%s2] sm:$0x1]
      %v342 = vlaneseq
      %v343 = vshrl.u32 %v342, 7
      %v344 = vsub.s32 0, %v343
      %v345 = vrot.slane %v340, %v344
      %v358 = vunpack.c.l.b16 %v329
      %v359 = vunpack.c.l.b16 %v330
      %v360 = vunpack.c.l.b16 %v331
      %v361 = vunpack.c.l.b16 %v332
      %v362 = vunpack.c.l.b16 %v333
      %v363 = vunpack.c.l.b16 %v334
      %v364 = vunpack.c.l.b16 %v335
      %v365 = vunpack.c.l.b16 %v336
      %v366 = vunpack.c.l.b16 %v337
      %v367 = vunpack.c.l.b16 %v338
      %v368 = vunpack.c.l.b16 %v339
      %v369 = vpack.c.b16 %v359, %v358
      %v370 = vpack.c.b16 %v361, %v360
      %v371 = vpack.c.b16 %v363, %v362
      %v372 = vpack.c.b16 %v365, %v364
      %v373 = vpack.c.b16 %v367, %v366
      %v374 = vpack.c.b16 %v368, %v368
      %vm380 = vcmask 719872
      %v382 = vsel %vm380, %v328, 0
      %vm384 = vcmask 1043456
      %v386 = vsel %vm384, %v374, 0
      %388 = vmatprep.subr.bf16.mxu0 0
      %389 = vmatpush1.bf16.msra.mxu0 0
      %390 = vmatprep.subr.bf16.mxu0 0
      %391 = vmatpush1.bf16.msra.mxu0 0
      %392 = vmatprep.subr.bf16.mxu0 0
      %393 = vmatpush1.bf16.msra.mxu0 %v386
      %394 = vmatprep.subr.bf16.mxu0 0
      %395 = vmatpush1.bf16.msra.mxu0 %v373
      %396 = vmatprep.subr.bf16.mxu0 0
      %397 = vmatpush1.bf16.msra.mxu0 %v372
      %398 = vmatprep.subr.bf16.mxu0 0
      %399 = vmatpush1.bf16.msra.mxu0 %v371
      %400 = vmatprep.subr.bf16.mxu0 0
      %401 = vmatpush1.bf16.msra.mxu0 %v370
      %402 = vmatprep.subr.bf16.mxu0 0
      %403 = vmatpush1.bf16.msra.mxu0 %v369
      %404 = vmatprep.subr.bf16.mxu0 0
      %405 = vmatpush2.bf16.msra.mxu0 0
      %406 = vmatprep.subr.bf16.mxu0 0
      %407 = vmatpush2.bf16.msra.mxu0 0
      %408 = vmatprep.subr.bf16.mxu0 0
      %409 = vmatpush2.bf16.msra.mxu0 0
      %410 = vmatprep.subr.bf16.mxu0 0
      %411 = vmatpush2.bf16.msra.mxu0 0
      %412 = vmatprep.subr.bf16.mxu0 0
      %413 = vmatpush2.bf16.msra.mxu0 0
      %414 = vmatprep.subr.bf16.mxu0 0
      %415 = vmatpush2.bf16.msra.mxu0 0
      %416 = vmatprep.subr.bf16.mxu0 0
      %417 = vmatpush2.bf16.msra.mxu0 0
      %418 = vmatprep.subr.bf16.mxu0 0
      %419 = vmatpush2.bf16.msra.mxu0 0
      %420 = vmatprep.mubr.bf16.mxu0 0
      %421 = vmatmul.mubr.bf16.gmra.mxu0 %v382
      %v422 = vpop.f32.mrf.mxu0
      %v423 = vadd.f32 %v345, %v422
      %v424 = vpop.f32.mrf.mxu0
      %v425 = vpop.f32.mrf.mxu0
      %v426 = vadd.f32 %v345, %v425
      %v427 = vpop.f32.mrf.mxu0
      %428 = vdwg.mxu0
      %v429 = vld [vmem:[%s302] sm:$0xf]
      %v430 = vld [vmem:[%s302 + $0x4] sm:$0xf]
      %v431 = vunpack.c.l.bf16 %v429
      %v432 = vunpack.c.l.bf16 %v430
      %v433 = vadd.f32 %v423, %v431
      %v434 = vadd.f32 %v426, %v432
      %v435 = vpack.c.bf16 %v434, %v433
      %v437 = vunpack.c.l.b16 %v435
      %v438 = vunpack.c.h.b16 %v435
      %v439 = vpack.c.b16 %v437, %v437
      %v440 = vpack.c.b16 %v438, %v438
      %vm443 = vcmask 191488
      %444 = vst.msk [vmem:[%s312] sm:$0xf] %vm443, %v439
      %445 = vst.msk [vmem:[%s312 + $0x4] sm:$0xf] %vm443, %v440
      %s446 = smul.u32 2, %s21
      %p447 = scmp.lt.s32.totalorder %s20, 1
      %s448 = scalar_select %p447, %s20, 1
      %p449 = scmp.lt.s32.totalorder %s446, 1
      %s450 = scalar_select %p449, %s446, 1
      %s451 = smul.addr %s448, 2
      %s452 = sadd.s32 %s450, %s451
      %s453 = smul.addr %s452, 4
      %s454 = scalar_lea.vmem %s5, %s453
      // Predicated region
      $region41: #{fwd.23} parent=39 // pred_check
        %p455 = pneg %p172
      $region42: #{fwd.23} parent=39 // pred_check_branch
        %457 = sbr.rel (%p455) target = $region44
      $region43: #{fwd.23} parent=39 // pred_region
        %s458 = smul.u32 2, %s21
      $region44: #{fwd.23} parent=39 // pred_fallthru
        _
    $region40: #{fwd.23} parent=5 // pred_fallthru
      _
    %p459 = scmp.le.s32.totalorder 2, %s11
    // Predicated region
    $region45: #{fwd.23} parent=5 // pred_check
      %p460 = pneg %p459
    $region46: #{fwd.23} parent=5 // pred_check_branch
      %462 = sbr.rel (%p460) target = $region48
    $region47: #{fwd.23} parent=5 // pred_region
      %s463 = ssub.s32 %s11, 2
      // Predicated region
      $region49: #{fwd.23} parent=47 // pred_check
        %p464 = pneg %p178
      $region50: #{fwd.23} parent=47 // pred_check_branch
        %466 = sbr.rel (%p464) target = $region52
      $region51: #{fwd.23} parent=47 // pred_region
        %s467 = smul.u32 2, %s23
        %p468 = scmp.lt.s32.totalorder %s22, 1
        %s469 = scalar_select %p468, %s22, 1
        %p470 = scmp.lt.s32.totalorder %s467, 1
        %s471 = scalar_select %p470, %s467, 1
        %s472 = smul.addr %s469, 2
        %s473 = sadd.s32 %s471, %s472
        %s474 = smul.addr %s473, 4
        %s475 = scalar_lea.vmem %s5, %s474
      $region52: #{fwd.23} parent=47 // pred_fallthru
        _
    $region48: #{fwd.23} parent=5 // pred_fallthru
      _
  $region6: #{fwd.23} parent=0 // loop_footer
    %s15 = sadd.s32 1, %s11
  $region7: #{fwd.23} parent=0 // loop_footer_branch
    %10 = sbr.rel target = $region3
  $region8: #{fwd.23} parent=0 // loop_exit
    _

// kernel: fwd.24
$region0: #{fwd.24}
  #allocation0 [shape = 'u32[]', space=smem, size = 0x4, offset = 0x4, fixed_abs, tag = 'smem constant byte address 0x4 - core index']
  #allocation1 [shape = 'u32[144,128]{1,0:T(1,128)}', space=vmem, size = 0x12000, scoped, tag = 'internal scratch']
  %s0 = inlined_call_operand.vmem [shape: bf16[2,16,24], index: 0, kind: input, shape index: {}]
  %s1 = inlined_call_operand.vmem [shape: bf16[24,144], index: 1, kind: input, shape index: {}]
  %s2 = inlined_call_operand.vmem [shape: f32[1,144], index: 2, kind: input, shape index: {}]
  %s3 = inlined_call_operand.vmem [shape: bf16[2,16,144], index: 3, kind: output, shape index: {}]
  %s4 = sld [smem:[#allocation0]]
  $region45: #{fwd.24} parent=0
    _
  %s6 = ssub.s32 1, %s4
  %s7 = scalar_select 0, %s6, %s4
  loop: start=0, step=1, limit=4
  $region2: #{fwd.24} parent=0 // loop_pre_header
    _
  $region3: #{fwd.24} parent=0 // loop_header
    %s9 = sphi 0, %s13
    %p10 = scmp.ge.s32.totalorder %s9, 4
    %s16 = sphi 0, %s28
    %s17 = sphi 0, %s24
    %s18 = sphi 0, %s16
    %s19 = sphi 0, %s17
    %s20 = sphi 0, %s18
    %s21 = sphi 0, %s19
    %s33 = sphi 0, %s35
    %s36 = sphi 0, %s33
    %s37 = sphi 0, %s36
    %s53 = sphi 0, %s37
    %s57 = sphi 0, %s57
    %s59 = sphi 0, %s57
    %s60 = sphi 0, %s59
    %s74 = sphi 0, %s60
    %s78 = sphi 0, %s78
    %s80 = sphi 0, %s78
    %s81 = sphi 0, %s80
    %s95 = sphi 0, %s81
    %s103 = sphi 0, %s105
    %s106 = sphi 0, %s103
    %s107 = sphi 0, %s106
    %s123 = sphi 0, %s107
  $region4: #{fwd.24} parent=0 // loop_header_branch
    %12 = sbr.rel (%p10) target = $region8
  $region5: #{fwd.24} parent=0 // loop_body
    %s14 = ssub.s32 %s9, 1
    %s15 = ssub.s32 %s9, 2
    %s22 = sadd.s32 1, %s17
    %p23 = scmp.ge.s32.totalorder %s22, 1
    %s24 = scalar_select %p23, 0, %s22
    %s25 = sadd.s32 1, %s16
    %s26 = scalar_select %p23, %s25, %s16
    %p27 = scmp.ge.s32.totalorder %s26, 2
    %s28 = scalar_select %p27, 0, %s26
    %s29 = ssub.s32 %s16, %s28
    %s30 = ssub.s32 %s17, %s24
    %s31 = sor.u32 %s29, %s30
    %p32 = scmp.eq.s32.totalorder %s31, 0
    %s34 = sadd.s32 %s33, 1
    %s35 = scalar_select %p32, %s33, %s34
    %p38 = pneg %p32
    %p39 = scmp.eq.s32.totalorder %s9, 1
    %p40 = por %p38, %p39
    %p41 = scmp.ne.s32.totalorder %s33, %s36
    %p42 = scmp.eq.s32.totalorder %s9, 0
    %p43 = por %p41, %p42
    %p44 = scmp.ne.s32.totalorder %s33, %s36
    %p45 = scmp.eq.s32.totalorder %s14, 1
    %p46 = por %p44, %p45
    %p47 = scmp.ne.s32.totalorder %s36, %s37
    %p48 = scmp.eq.s32.totalorder %s14, 0
    %p49 = por %p47, %p48
    %p50 = scmp.ne.s32.totalorder %s36, %s37
    %p51 = scmp.eq.s32.totalorder %s15, 1
    %p52 = por %p50, %p51
    %p54 = scmp.ne.s32.totalorder %s37, %s53
    %p55 = scmp.eq.s32.totalorder %s15, 0
    %p56 = por %p54, %p55
    %s58 = sadd.s32 %s57, 1
    %p61 = scmp.eq.s32.totalorder %s9, 1
    %p62 = scmp.ne.s32.totalorder %s57, %s59
    %p63 = scmp.eq.s32.totalorder %s9, 0
    %p64 = por %p62, %p63
    %p65 = scmp.ne.s32.totalorder %s57, %s59
    %p66 = scmp.eq.s32.totalorder %s14, 1
    %p67 = por %p65, %p66
    %p68 = scmp.ne.s32.totalorder %s59, %s60
    %p69 = scmp.eq.s32.totalorder %s14, 0
    %p70 = por %p68, %p69
    %p71 = scmp.ne.s32.totalorder %s59, %s60
    %p72 = scmp.eq.s32.totalorder %s15, 1
    %p73 = por %p71, %p72
    %p75 = scmp.ne.s32.totalorder %s60, %s74
    %p76 = scmp.eq.s32.totalorder %s15, 0
    %p77 = por %p75, %p76
    %s79 = sadd.s32 %s78, 1
    %p82 = scmp.eq.s32.totalorder %s9, 1
    %p83 = scmp.ne.s32.totalorder %s78, %s80
    %p84 = scmp.eq.s32.totalorder %s9, 0
    %p85 = por %p83, %p84
    %p86 = scmp.ne.s32.totalorder %s78, %s80
    %p87 = scmp.eq.s32.totalorder %s14, 1
    %p88 = por %p86, %p87
    %p89 = scmp.ne.s32.totalorder %s80, %s81
    %p90 = scmp.eq.s32.totalorder %s14, 0
    %p91 = por %p89, %p90
    %p92 = scmp.ne.s32.totalorder %s80, %s81
    %p93 = scmp.eq.s32.totalorder %s15, 1
    %p94 = por %p92, %p93
    %p96 = scmp.ne.s32.totalorder %s81, %s95
    %p97 = scmp.eq.s32.totalorder %s15, 0
    %p98 = por %p96, %p97
    %s99 = ssub.s32 %s16, %s28
    %s100 = ssub.s32 %s17, %s24
    %s101 = sor.u32 %s99, %s100
    %p102 = scmp.eq.s32.totalorder %s101, 0
    %s104 = sadd.s32 %s103, 1
    %s105 = scalar_select %p102, %s103, %s104
    %p108 = pneg %p102
    %p109 = scmp.eq.s32.totalorder %s9, 1
    %p110 = por %p108, %p109
    %p111 = scmp.ne.s32.totalorder %s103, %s106
    %p112 = scmp.eq.s32.totalorder %s9, 0
    %p113 = por %p111, %p112
    %p114 = scmp.ne.s32.totalorder %s103, %s106
    %p115 = scmp.eq.s32.totalorder %s14, 1
    %p116 = por %p114, %p115
    %p117 = scmp.ne.s32.totalorder %s106, %s107
    %p118 = scmp.eq.s32.totalorder %s14, 0
    %p119 = por %p117, %p118
    %p120 = scmp.ne.s32.totalorder %s106, %s107
    %p121 = scmp.eq.s32.totalorder %s15, 1
    %p122 = por %p120, %p121
    %p124 = scmp.ne.s32.totalorder %s107, %s123
    %p125 = scmp.eq.s32.totalorder %s15, 0
    %p126 = por %p124, %p125
    %p127 = scmp.le.s32.totalorder 1, %s9
    %p128 = scmp.lt.s32.totalorder %s9, 3
    %p129 = pnand %p127, %p128
    %p130 = pneg %p129
    // Predicated region
    $region9: #{fwd.24} parent=5 // pred_check
      _
    $region10: #{fwd.24} parent=5 // pred_check_branch
      %132 = sbr.rel (%p129) target = $region12
    $region11: #{fwd.24} parent=5 // pred_region
      %s133 = ssub.s32 %s9, 1
      // Predicated region
      $region13: #{fwd.24} parent=11 // pred_check
        %p134 = pneg %p70
      $region14: #{fwd.24} parent=11 // pred_check_branch
        %136 = sbr.rel (%p134) target = $region16
      $region15: #{fwd.24} parent=11 // pred_region
        _
      $region16: #{fwd.24} parent=11 // pred_fallthru
        _
      // Predicated region
      $region17: #{fwd.24} parent=11 // pred_check
        %p137 = pneg %p91
      $region18: #{fwd.24} parent=11 // pred_check_branch
        %139 = sbr.rel (%p137) target = $region20
      $region19: #{fwd.24} parent=11 // pred_region
        _
      $region20: #{fwd.24} parent=11 // pred_fallthru
        _
    $region12: #{fwd.24} parent=5 // pred_fallthru
      _
    %p140 = scmp.lt.s32.totalorder %s9, 2
    // Predicated region
    $region21: #{fwd.24} parent=5 // pred_check
      %p141 = pneg %p140
    $region22: #{fwd.24} parent=5 // pred_check_branch
      %143 = sbr.rel (%p141) target = $region24
    $region23: #{fwd.24} parent=5 // pred_region
      // Predicated region
      $region25: #{fwd.24} parent=23 // pred_check
        %p144 = pneg %p43
      $region26: #{fwd.24} parent=23 // pred_check_branch
        %146 = sbr.rel (%p144) target = $region28
      $region27: #{fwd.24} parent=23 // pred_region
        %s147 = smul.u32 2, %s17
        %p148 = scmp.lt.s32.totalorder %s16, 1
        %s149 = scalar_select %p148, %s16, 1
        %p150 = scmp.lt.s32.totalorder %s147, 1
        %s151 = scalar_select %p150, %s147, 1
        %s152 = smul.addr %s149, 2
        %s153 = sadd.s32 %s151, %s152
        %s154 = smul.addr %s153, 4
        %s155 = scalar_lea.vmem %s0, %s154
        %s156 = smul.u32 2, %s17
      $region28: #{fwd.24} parent=23 // pred_fallthru
        _
    $region24: #{fwd.24} parent=5 // pred_fallthru
      _
    %p157 = scmp.le.s32.totalorder 1, %s9
    %p158 = scmp.lt.s32.totalorder %s9, 3
    %p159 = pnand %p157, %p158
    %p160 = pneg %p159
    // Predicated region
    $region29: #{fwd.24} parent=5 // pred_check
      _
    $region30: #{fwd.24} parent=5 // pred_check_branch
      %162 = sbr.rel (%p159) target = $region32
    $region31: #{fwd.24} parent=5 // pred_region
      %s163 = ssub.s32 %s9, 1
      %s164 = smul.u32 2, %s19
      %p165 = scmp.lt.s32.totalorder %s18, 1
      %s166 = scalar_select %p165, %s18, 1
      %p167 = scmp.lt.s32.totalorder %s164, 1
      %s168 = scalar_select %p167, %s164, 1
      %s169 = smul.addr %s166, 2
      %s170 = sadd.s32 %s168, %s169
      %s171 = smul.addr %s170, 4
      %s172 = scalar_lea.vmem %s0, %s171
      %p173 = pneg %p49
      %p174 = pneg %p46
      %p175 = pneg %p70
      %p176 = pneg %p67
      %p177 = pneg %p91
      %p178 = pneg %p88
      %p179 = pneg %p119
      %p180 = pneg %p116
      %s181 = smul.u32 2, %s19
      %p182 = scmp.lt.s32.totalorder %s18, 1
      %s183 = scalar_select %p182, %s18, 1
      %p184 = scmp.lt.s32.totalorder %s181, 1
      %s185 = scalar_select %p184, %s181, 1
      %s186 = smul.addr %s185, 2
      %s187 = smul.addr %s183, 4
      %s188 = sadd.s32 %s186, %s187
      %s189 = smul.addr %s188, 4
      %s190 = scalar_lea.vmem %s3, %s189
      %s191 = smul.u32 2, %s19
      %p192 = scmp.lt.s32.totalorder %s18, 1
      %s193 = scalar_select %p192, %s18, 1
      %p194 = scmp.lt.s32.totalorder %s191, 1
      %s195 = scalar_select %p194, %s191, 1
      %s196 = smul.addr %s193, 2
      %s197 = sadd.s32 %s195, %s196
      %s198 = smul.addr %s197, 4
      %s199 = scalar_lea.vmem %s0, %s198
      %s200 = smul.u32 2, %s19
      %s201 = smul.u32 2, %s19
      %p202 = scmp.lt.s32.totalorder %s18, 1
      %s203 = scalar_select %p202, %s18, 1
      %p204 = scmp.lt.s32.totalorder %s201, 1
      %s205 = scalar_select %p204, %s201, 1
      %s206 = smul.addr %s205, 2
      %s207 = smul.addr %s203, 4
      %s208 = sadd.s32 %s206, %s207
      %s209 = smul.addr %s208, 4
      %s210 = scalar_lea.vmem %s3, %s209
      %s211 = smul.u32 2, %s19
      %v213 = vld [vmem:[%s199] sm:$0xf]
      %v214 = vld [vmem:[%s199 + $0x4] sm:$0xf]
      %v215 = vld [vmem:[%s1] sm:$0xff]
      %v216 = vld [vmem:[%s1 + $0x8] sm:$0xff]
      %v217 = vld [vmem:[%s1 + $0x10] sm:$0xff]
      %v218 = vld [vmem:[%s2] sm:$0x3]
      %v220 = vlaneseq
      %v221 = vshrl.u32 %v220, 7
      %v222 = vsub.s32 0, %v221
      %v223 = vrot.slane %v218, %v222
      %v224 = vlaneseq
      %v225 = vshrl.u32 %v224, 7
      %v226 = vsub.s32 1, %v225
      %v227 = vrot.slane %v218, %v226
      %v232 = vunpack.c.l.b16 %v213
      %v233 = vunpack.c.l.b16 %v214
      %v234 = vpack.c.b16 %v233, %v232
      %v238 = vunpack.c.l.b16 %v215
      %v239 = vunpack.c.h.b16 %v215
      %v240 = vunpack.c.l.b16 %v216
      %v241 = vunpack.c.h.b16 %v216
      %v242 = vunpack.c.l.b16 %v217
      %v243 = vunpack.c.h.b16 %v217
      %v244 = vpack.c.b16 %v240, %v238
      %v245 = vpack.c.b16 %v241, %v239
      %v246 = vpack.c.b16 %v242, %v242
      %v247 = vpack.c.b16 %v243, %v243
      %vm250 = vcmask 195584
      %v252 = vsel %vm250, %v234, 0
      %vm254 = vcmask 1043456
      %v256 = vsel %vm254, %v246, 0
      %v259 = vsel %vm254, %v247, 0
      %261 = vmatprep.subr.bf16.mxu0 0
      %262 = vmatpush1.bf16.msra.mxu0 0
      %263 = vmatprep.subr.bf16.mxu0 0
      %264 = vmatpush1.bf16.msra.mxu0 0
      %265 = vmatprep.subr.bf16.mxu0 0
      %266 = vmatpush1.bf16.msra.mxu0 0
      %267 = vmatprep.subr.bf16.mxu0 0
      %268 = vmatpush1.bf16.msra.mxu0 0
      %269 = vmatprep.subr.bf16.mxu0 0
      %270 = vmatpush1.bf16.msra.mxu0 0
      %271 = vmatprep.subr.bf16.mxu0 0
      %272 = vmatpush1.bf16.msra.mxu0 0
      %273 = vmatprep.subr.bf16.mxu0 %v259
      %274 = vmatpush1.bf16.msra.mxu0 %v256
      %275 = vmatprep.subr.bf16.mxu0 %v245
      %276 = vmatpush1.bf16.msra.mxu0 %v244
      %277 = vmatprep.subr.bf16.mxu0 0
      %278 = vmatpush2.bf16.msra.mxu0 0
      %279 = vmatprep.subr.bf16.mxu0 0
      %280 = vmatpush2.bf16.msra.mxu0 0
      %281 = vmatprep.subr.bf16.mxu0 0
      %282 = vmatpush2.bf16.msra.mxu0 0
      %283 = vmatprep.subr.bf16.mxu0 0
      %284 = vmatpush2.bf16.msra.mxu0 0
      %285 = vmatprep.subr.bf16.mxu0 0
      %286 = vmatpush2.bf16.msra.mxu0 0
      %287 = vmatprep.subr.bf16.mxu0 0
      %288 = vmatpush2.bf16.msra.mxu0 0
      %289 = vmatprep.subr.bf16.mxu0 0
      %290 = vmatpush2.bf16.msra.mxu0 0
      %291 = vmatprep.subr.bf16.mxu0 0
      %292 = vmatpush2.bf16.msra.mxu0 0
      %293 = vmatprep.mubr.bf16.mxu0 0
      %294 = vmatmul.mubr.bf16.gmra.mxu0 %v252
      %v295 = vpop.f32.mrf.mxu0
      %v296 = vadd.f32 %v223, %v295
      %v297 = vpop.f32.mrf.mxu0
      %v298 = vadd.f32 %v227, %v297
      %v299 = vpop.f32.mrf.mxu0
      %v300 = vadd.f32 %v223, %v299
      %v301 = vpop.f32.mrf.mxu0
      %v302 = vadd.f32 %v227, %v301
      %303 = vdwg.mxu0
      %v304 = vadd.f32 %v296, 3.0
      %v305 = vadd.f32 %v298, 3.0
      %v306 = vadd.f32 %v300, 3.0
      %v307 = vadd.f32 %v302, 3.0
      %v308 = vmax.f32 %v304, 0.0
      %v309 = vmax.f32 %v305, 0.0
      %v310 = vmax.f32 %v306, 0.0
      %v311 = vmax.f32 %v307, 0.0
      %v312 = vmin.f32 %v308, 6.0
      %v313 = vmin.f32 %v309, 6.0
      %v314 = vmin.f32 %v310, 6.0
      %v315 = vmin.f32 %v311, 6.0
      %v316 = vmul.f32 %v296, %v312
      %v317 = vmul.f32 %v298, %v313
      %v318 = vmul.f32 %v300, %v314
      %v319 = vmul.f32 %v302, %v315
      %v320 = vmul.f32 %v316, 0.16666667
      %v321 = vmul.f32 %v317, 0.16666667
      %v322 = vmul.f32 %v318, 0.16666667
      %v323 = vmul.f32 %v319, 0.16666667
      %v324 = vpack.c.bf16 %v322, %v320
      %v325 = vpack.c.bf16 %v323, %v321
      %v328 = vunpack.c.l.b16 %v324
      %v329 = vunpack.c.l.b16 %v325
      %v330 = vunpack.c.h.b16 %v324
      %v331 = vunpack.c.h.b16 %v325
      %v332 = vpack.c.b16 %v329, %v328
      %v333 = vpack.c.b16 %v331, %v330
      %vm336 = vcmask 130052
      %vm337 = vmor %vm336, %vm254
      %338 = vst.msk [vmem:[%s210] sm:$0xff] %vm337, %v332
      %339 = vst.msk [vmem:[%s210 + $0x8] sm:$0xff] %vm337, %v333
      %s340 = smul.u32 2, %s19
      %p341 = scmp.lt.s32.totalorder %s18, 1
      %s342 = scalar_select %p341, %s18, 1
      %p343 = scmp.lt.s32.totalorder %s340, 1
      %s344 = scalar_select %p343, %s340, 1
      %s345 = smul.addr %s344, 2
      %s346 = smul.addr %s342, 4
      %s347 = sadd.s32 %s345, %s346
      %s348 = smul.addr %s347, 4
      %s349 = scalar_lea.vmem %s3, %s348
      // Predicated region
      $region33: #{fwd.24} parent=31 // pred_check
        %p350 = pneg %p116
      $region34: #{fwd.24} parent=31 // pred_check_branch
        %352 = sbr.rel (%p350) target = $region36
      $region35: #{fwd.24} parent=31 // pred_region
        %s353 = smul.u32 2, %s19
      $region36: #{fwd.24} parent=31 // pred_fallthru
        _
    $region32: #{fwd.24} parent=5 // pred_fallthru
      _
    %p354 = scmp.le.s32.totalorder 2, %s9
    // Predicated region
    $region37: #{fwd.24} parent=5 // pred_check
      %p355 = pneg %p354
    $region38: #{fwd.24} parent=5 // pred_check_branch
      %357 = sbr.rel (%p355) target = $region40
    $region39: #{fwd.24} parent=5 // pred_region
      %s358 = ssub.s32 %s9, 2
      // Predicated region
      $region41: #{fwd.24} parent=39 // pred_check
        %p359 = pneg %p122
      $region42: #{fwd.24} parent=39 // pred_check_branch
        %361 = sbr.rel (%p359) target = $region44
      $region43: #{fwd.24} parent=39 // pred_region
        %s362 = smul.u32 2, %s21
        %p363 = scmp.lt.s32.totalorder %s20, 1
        %s364 = scalar_select %p363, %s20, 1
        %p365 = scmp.lt.s32.totalorder %s362, 1
        %s366 = scalar_select %p365, %s362, 1
        %s367 = smul.addr %s366, 2
        %s368 = smul.addr %s364, 4
        %s369 = sadd.s32 %s367, %s368
        %s370 = smul.addr %s369, 4
        %s371 = scalar_lea.vmem %s3, %s370
      $region44: #{fwd.24} parent=39 // pred_fallthru
        _
    $region40: #{fwd.24} parent=5 // pred_fallthru
      _
  $region6: #{fwd.24} parent=0 // loop_footer
    %s13 = sadd.s32 1, %s9
  $region7: #{fwd.24} parent=0 // loop_footer_branch
    %8 = sbr.rel target = $region3
  $region8: #{fwd.24} parent=0 // loop_exit
    _

// kernel: fwd.25
$region0: #{fwd.25}
  #allocation0 [shape = 'u32[]', space=smem, size = 0x4, offset = 0x4, fixed_abs, tag = 'smem constant byte address 0x4 - core index']
  #allocation1 [shape = 'u32[144,128]{1,0:T(1,128)}', space=vmem, size = 0x12000, scoped, tag = 'internal scratch']
  %s0 = inlined_call_operand.vmem [shape: bf16[2,16,144], index: 0, kind: input, shape index: {}]
  %s1 = inlined_call_operand.vmem [shape: bf16[144,128], index: 1, kind: input, shape index: {}]
  %s2 = inlined_call_operand.vmem [shape: f32[1,128], index: 2, kind: input, shape index: {}]
  %s3 = inlined_call_operand.vmem [shape: bf16[128,10], index: 3, kind: input, shape index: {}]
  %s4 = inlined_call_operand.vmem [shape: f32[1,10], index: 4, kind: input, shape index: {}]
  %s5 = inlined_call_operand.hbm [shape: f32[2,10], index: 5, kind: output, shape index: {}]
  %s6 = sld [smem:[#allocation0]]
  $region30: #{fwd.25} parent=0
    _
  %s8 = ssub.s32 1, %s6
  %s9 = scalar_select 0, %s8, %s6
  $region1: #{fwd.25} parent=0
    #allocation2 [shape = 'u8[1024]{0}', space=vmem, size = 0x400, scoped, tag = 'output window, operand 0, single buffered']
    #allocation3 [shape = 's32[1]{0}', space=sflag, size = 0x4, scoped, tag = 'scoped memory for fwd.25']
    %10 = vsyncpa [#allocation3], 0
    // Predicated region
    $region2: #{fwd.25} parent=1 // pred_check
      _
    $region3: #{fwd.25} parent=1 // pred_check_branch
      %12 = sbr.rel (0) target = $region5
    $region4: #{fwd.25} parent=1 // pred_region
      _
    $region5: #{fwd.25} parent=1 // pred_fallthru
      _
    // Predicated region
    $region6: #{fwd.25} parent=1 // pred_check
      _
    $region7: #{fwd.25} parent=1 // pred_check_branch
      %14 = sbr.rel (0) target = $region9
    $region8: #{fwd.25} parent=1 // pred_region
      _
    $region9: #{fwd.25} parent=1 // pred_fallthru
      _
    // Predicated region
    $region10: #{fwd.25} parent=1 // pred_check
      _
    $region11: #{fwd.25} parent=1 // pred_check_branch
      %16 = sbr.rel (0) target = $region13
    $region12: #{fwd.25} parent=1 // pred_region
      _
    $region13: #{fwd.25} parent=1 // pred_fallthru
      _
    // Predicated region
    $region14: #{fwd.25} parent=1 // pred_check
      _
    $region15: #{fwd.25} parent=1 // pred_check_branch
      %18 = sbr.rel (0) target = $region17
    $region16: #{fwd.25} parent=1 // pred_region
      _
    $region17: #{fwd.25} parent=1 // pred_fallthru
      _
    // Predicated region
    $region18: #{fwd.25} parent=1 // pred_check
      _
    $region19: #{fwd.25} parent=1 // pred_check_branch
      %20 = sbr.rel (0) target = $region21
    $region20: #{fwd.25} parent=1 // pred_region
      _
    $region21: #{fwd.25} parent=1 // pred_fallthru
      _
    %v22 = vld [vmem:[%s0] sm:$0xff]
    %v23 = vld [vmem:[%s0 + $0x8] sm:$0xff]
    %v24 = vld [vmem:[%s0 + $0x10] sm:$0xff]
    %v25 = vld [vmem:[%s0 + $0x18] sm:$0xff]
    %v26 = vunpack.c.l.bf16 %v22
    %v27 = vunpack.c.h.bf16 %v22
    %v28 = vunpack.c.l.bf16 %v23
    %v29 = vunpack.c.h.bf16 %v23
    %v30 = vunpack.c.l.bf16 %v24
    %v31 = vunpack.c.h.bf16 %v24
    %v32 = vunpack.c.l.bf16 %v25
    %v33 = vunpack.c.h.bf16 %v25
    %v34 = vadd.f32 %v26, %v28
    %v35 = vrot.slane %v34, 4
    %v36 = vadd.f32 %v34, %v35
    %v37 = vrot.slane %v36, 2
    %v38 = vadd.f32 %v36, %v37
    %v39 = vrot.slane %v38, 1
    %v40 = vadd.f32 %v38, %v39
    %vm41 = vcmask 130048
    %v42 = vsel %vm41, %v27, 0.0
    %v43 = vsel %vm41, %v29, 0.0
    %v44 = vadd.f32 %v42, %v43
    %v45 = vrot.slane %v44, 4
    %v46 = vadd.f32 %v44, %v45
    %v47 = vrot.slane %v46, 2
    %v48 = vadd.f32 %v46, %v47
    %v49 = vrot.slane %v48, 1
    %v50 = vadd.f32 %v48, %v49
    %v51 = vadd.f32 %v30, %v32
    %v52 = vrot.slane %v51, 4
    %v53 = vadd.f32 %v51, %v52
    %v54 = vrot.slane %v53, 2
    %v55 = vadd.f32 %v53, %v54
    %v56 = vrot.slane %v55, 1
    %v57 = vadd.f32 %v55, %v56
    %v58 = vsel %vm41, %v31, 0.0
    %v59 = vsel %vm41, %v33, 0.0
    %v60 = vadd.f32 %v58, %v59
    %v61 = vrot.slane %v60, 4
    %v62 = vadd.f32 %v60, %v61
    %v63 = vrot.slane %v62, 2
    %v64 = vadd.f32 %v62, %v63
    %v65 = vrot.slane %v64, 1
    %v66 = vadd.f32 %v64, %v65
    %v67 = vrcp.pop 16.0
    %v68 = vmul.f32 %v40, %v67
    %v69 = vmul.f32 %v50, %v67
    %v70 = vmul.f32 %v57, %v67
    %v71 = vmul.f32 %v66, %v67
    %v72 = vpack.c.bf16 %v68, %v68
    %v73 = vpack.c.bf16 %v69, %v69
    %v74 = vpack.c.bf16 %v70, %v70
    %v75 = vpack.c.bf16 %v71, %v71
    %v76 = vld [vmem:[%s1] sm:$0xf]
    %v77 = vld [vmem:[%s1 + $0x4] sm:$0xf]
    %v78 = vld [vmem:[%s1 + $0x8] sm:$0xf]
    %v79 = vld [vmem:[%s1 + $0xc] sm:$0xf]
    %v80 = vld [vmem:[%s1 + $0x10] sm:$0xf]
    %v81 = vld [vmem:[%s1 + $0x14] sm:$0xf]
    %v82 = vld [vmem:[%s1 + $0x18] sm:$0xf]
    %v83 = vld [vmem:[%s1 + $0x1c] sm:$0xf]
    %v84 = vld [vmem:[%s1 + $0x20] sm:$0xf]
    %v85 = vld [vmem:[%s1 + $0x24] sm:$0xf]
    %v86 = vld [vmem:[%s1 + $0x28] sm:$0xf]
    %v87 = vld [vmem:[%s1 + $0x2c] sm:$0xf]
    %v88 = vld [vmem:[%s1 + $0x30] sm:$0xf]
    %v89 = vld [vmem:[%s1 + $0x34] sm:$0xf]
    %v90 = vld [vmem:[%s1 + $0x38] sm:$0xf]
    %v91 = vld [vmem:[%s1 + $0x3c] sm:$0xf]
    %v92 = vld [vmem:[%s1 + $0x40] sm:$0xf]
    %v93 = vld [vmem:[%s1 + $0x44] sm:$0xf]
    %v94 = vld [vmem:[%s2] sm:$0x1]
    %v96 = vlaneseq
    %v97 = vshrl.u32 %v96, 7
    %v98 = vsub.s32 0, %v97
    %v99 = vrot.slane %v94, %v98
    %v105 = vunpack.c.l.b16 %v72
    %v106 = vunpack.c.l.b16 %v73
    %v107 = vunpack.c.l.b16 %v74
    %v108 = vunpack.c.l.b16 %v75
    %vm109 = vcmask 1041409
    %v110 = vsel %vm109, %v107, %v105
    %v111 = vsel %vm109, %v108, %v106
    %v112 = vpack.c.b16 %v110, %v110
    %v113 = vpack.c.b16 %v111, %v111
    %v133 = vunpack.c.l.b16 %v76
    %v134 = vunpack.c.l.b16 %v77
    %v135 = vunpack.c.l.b16 %v78
    %v136 = vunpack.c.l.b16 %v79
    %v137 = vunpack.c.l.b16 %v80
    %v138 = vunpack.c.l.b16 %v81
    %v139 = vunpack.c.l.b16 %v82
    %v140 = vunpack.c.l.b16 %v83
    %v141 = vunpack.c.l.b16 %v84
    %v142 = vunpack.c.l.b16 %v85
    %v143 = vunpack.c.l.b16 %v86
    %v144 = vunpack.c.l.b16 %v87
    %v145 = vunpack.c.l.b16 %v88
    %v146 = vunpack.c.l.b16 %v89
    %v147 = vunpack.c.l.b16 %v90
    %v148 = vunpack.c.l.b16 %v91
    %v149 = vunpack.c.l.b16 %v92
    %v150 = vunpack.c.l.b16 %v93
    %v151 = vpack.c.b16 %v134, %v133
    %v152 = vpack.c.b16 %v136, %v135
    %v153 = vpack.c.b16 %v138, %v137
    %v154 = vpack.c.b16 %v140, %v139
    %v155 = vpack.c.b16 %v142, %v141
    %v156 = vpack.c.b16 %v144, %v143
    %v157 = vpack.c.b16 %v146, %v145
    %v158 = vpack.c.b16 %v148, %v147
    %v159 = vpack.c.b16 %v150, %v149
    %v170 = vsel %vm41, %v113, 0
    %172 = vmatprep.subr.bf16.mxu0 0
    %173 = vmatpush1.bf16.msra.mxu0 %v158
    %174 = vmatprep.subr.bf16.mxu0 0
    %175 = vmatpush1.bf16.msra.mxu0 %v157
    %176 = vmatprep.subr.bf16.mxu0 0
    %177 = vmatpush1.bf16.msra.mxu0 %v156
    %178 = vmatprep.subr.bf16.mxu0 0
    %179 = vmatpush1.bf16.msra.mxu0 %v155
    %180 = vmatprep.subr.bf16.mxu0 0
    %181 = vmatpush1.bf16.msra.mxu0 %v154
    %182 = vmatprep.subr.bf16.mxu0 0
    %183 = vmatpush1.bf16.msra.mxu0 %v153
    %184 = vmatprep.subr.bf16.mxu0 0
    %185 = vmatpush1.bf16.msra.mxu0 %v152
    %186 = vmatprep.subr.bf16.mxu0 0
    %187 = vmatpush1.bf16.msra.mxu0 %v151
    %188 = vmatprep.subr.bf16.mxu0 0
    %189 = vmatpush2.bf16.msra.mxu0 0
    %190 = vmatprep.subr.bf16.mxu0 0
    %191 = vmatpush2.bf16.msra.mxu0 0
    %192 = vmatprep.subr.bf16.mxu0 0
    %193 = vmatpush2.bf16.msra.mxu0 0
    %194 = vmatprep.subr.bf16.mxu0 0
    %195 = vmatpush2.bf16.msra.mxu0 0
    %196 = vmatprep.subr.bf16.mxu0 0
    %197 = vmatpush2.bf16.msra.mxu0 0
    %198 = vmatprep.subr.bf16.mxu0 0
    %199 = vmatpush2.bf16.msra.mxu0 0
    %200 = vmatprep.subr.bf16.mxu0 0
    %201 = vmatpush2.bf16.msra.mxu0 0
    %202 = vmatprep.subr.bf16.mxu0 0
    %203 = vmatpush2.bf16.msra.mxu0 %v159
    %204 = vmatprep.mubr.bf16.mxu0 %v170
    %205 = vmatmul.mubr.bf16.gmra.mxu0 %v112
    %v206 = vpop.f32.mrf.mxu0
    %v207 = vadd.f32 %v99, %v206
    %v208 = vpop.f32.mrf.mxu0
    %v209 = vpop.f32.mrf.mxu0
    %v210 = vpop.f32.mrf.mxu0
    %211 = vdwg.mxu0
    %v212 = vadd.f32 %v207, 3.0
    %v213 = vmax.f32 %v212, 0.0
    %v214 = vmin.f32 %v213, 6.0
    %v215 = vmul.f32 %v207, %v214
    %v216 = vmul.f32 %v215, 0.16666667
    %v217 = vpack.c.bf16 %v216, %v216
    %v218 = vld [vmem:[%s3] sm:$0xf]
    %v219 = vld [vmem:[%s3 + $0x4] sm:$0xf]
    %v220 = vld [vmem:[%s3 + $0x8] sm:$0xf]
    %v221 = vld [vmem:[%s3 + $0xc] sm:$0xf]
    %v222 = vld [vmem:[%s3 + $0x10] sm:$0xf]
    %v223 = vld [vmem:[%s3 + $0x14] sm:$0xf]
    %v224 = vld [vmem:[%s3 + $0x18] sm:$0xf]
    %v225 = vld [vmem:[%s3 + $0x1c] sm:$0xf]
    %v226 = vld [vmem:[%s3 + $0x20] sm:$0xf]
    %v227 = vld [vmem:[%s3 + $0x24] sm:$0xf]
    %v228 = vld [vmem:[%s3 + $0x28] sm:$0xf]
    %v229 = vld [vmem:[%s3 + $0x2c] sm:$0xf]
    %v230 = vld [vmem:[%s3 + $0x30] sm:$0xf]
    %v231 = vld [vmem:[%s3 + $0x34] sm:$0xf]
    %v232 = vld [vmem:[%s3 + $0x38] sm:$0xf]
    %v233 = vld [vmem:[%s3 + $0x3c] sm:$0xf]
    %v234 = vld [vmem:[%s4] sm:$0x1]
    %v236 = vlaneseq
    %v237 = vshrl.u32 %v236, 7
    %v238 = vsub.s32 0, %v237
    %v239 = vrot.slane %v234, %v238
    %v257 = vunpack.c.l.b16 %v218
    %v258 = vunpack.c.l.b16 %v219
    %v259 = vunpack.c.l.b16 %v220
    %v260 = vunpack.c.l.b16 %v221
    %v261 = vunpack.c.l.b16 %v222
    %v262 = vunpack.c.l.b16 %v223
    %v263 = vunpack.c.l.b16 %v224
    %v264 = vunpack.c.l.b16 %v225
    %v265 = vunpack.c.l.b16 %v226
    %v266 = vunpack.c.l.b16 %v227
    %v267 = vunpack.c.l.b16 %v228
    %v268 = vunpack.c.l.b16 %v229
    %v269 = vunpack.c.l.b16 %v230
    %v270 = vunpack.c.l.b16 %v231
    %v271 = vunpack.c.l.b16 %v232
    %v272 = vunpack.c.l.b16 %v233
    %v273 = vpack.c.b16 %v258, %v257
    %v274 = vpack.c.b16 %v260, %v259
    %v275 = vpack.c.b16 %v262, %v261
    %v276 = vpack.c.b16 %v264, %v263
    %v277 = vpack.c.b16 %v266, %v265
    %v278 = vpack.c.b16 %v268, %v267
    %v279 = vpack.c.b16 %v270, %v269
    %v280 = vpack.c.b16 %v272, %v271
    %289 = vmatprep.subr.bf16.mxu0 0
    %290 = vmatpush1.bf16.msra.mxu0 %v280
    %291 = vmatprep.subr.bf16.mxu0 0
    %292 = vmatpush1.bf16.msra.mxu0 %v279
    %293 = vmatprep.subr.bf16.mxu0 0
    %294 = vmatpush1.bf16.msra.mxu0 %v278
    %295 = vmatprep.subr.bf16.mxu0 0
    %296 = vmatpush1.bf16.msra.mxu0 %v277
    %297 = vmatprep.subr.bf16.mxu0 0
    %298 = vmatpush1.bf16.msra.mxu0 %v276
    %299 = vmatprep.subr.bf16.mxu0 0
    %300 = vmatpush1.bf16.msra.mxu0 %v275
    %301 = vmatprep.subr.bf16.mxu0 0
    %302 = vmatpush1.bf16.msra.mxu0 %v274
    %303 = vmatprep.subr.bf16.mxu0 0
    %304 = vmatpush1.bf16.msra.mxu0 %v273
    %305 = vmatprep.subr.bf16.mxu0 0
    %306 = vmatpush2.bf16.msra.mxu0 0
    %307 = vmatprep.subr.bf16.mxu0 0
    %308 = vmatpush2.bf16.msra.mxu0 0
    %309 = vmatprep.subr.bf16.mxu0 0
    %310 = vmatpush2.bf16.msra.mxu0 0
    %311 = vmatprep.subr.bf16.mxu0 0
    %312 = vmatpush2.bf16.msra.mxu0 0
    %313 = vmatprep.subr.bf16.mxu0 0
    %314 = vmatpush2.bf16.msra.mxu0 0
    %315 = vmatprep.subr.bf16.mxu0 0
    %316 = vmatpush2.bf16.msra.mxu0 0
    %317 = vmatprep.subr.bf16.mxu0 0
    %318 = vmatpush2.bf16.msra.mxu0 0
    %319 = vmatprep.subr.bf16.mxu0 0
    %320 = vmatpush2.bf16.msra.mxu0 0
    %321 = vmatprep.mubr.bf16.mxu0 0
    %322 = vmatmul.mubr.bf16.gmra.mxu0 %v217
    %v323 = vpop.f32.mrf.mxu0
    %v324 = vadd.f32 %v239, %v323
    %v325 = vpop.f32.mrf.mxu0
    %v326 = vpop.f32.mrf.mxu0
    %v327 = vpop.f32.mrf.mxu0
    %328 = vdwg.mxu0
    %vm329 = vcmask 74752
    %330 = vst.msk [vmem:[#allocation2] sm:$0x3] %vm329, %v324
    // Predicated region
    $region22: #{fwd.25} parent=1 // pred_check
      _
    $region23: #{fwd.25} parent=1 // pred_check_branch
      %332 = sbr.rel (0) target = $region25
    $region24: #{fwd.25} parent=1 // pred_region
      %s334 = ssub.s32 32, 32
      %335 = vsyncadd [#allocation3], %s334
      %s337 = sshll.u32 [#allocation2], 4
      %s338 = int_to_ptr.vmem [resolvable:$true] %s337
      %340 = dma.vmem_to_hbm [thread:$0]  %s338, 32, %s5, [#allocation3]
    $region25: #{fwd.25} parent=1 // pred_fallthru
      _
    // Predicated region
    $region26: #{fwd.25} parent=1 // pred_check
      _
    $region27: #{fwd.25} parent=1 // pred_check_branch
      %342 = sbr.rel (0) target = $region29
    $region28: #{fwd.25} parent=1 // pred_region
      %343 = dma.done [#allocation3], 32
    $region29: #{fwd.25} parent=1 // pred_fallthru
      _
    %344 = vsyncpa [#allocation3], 1

</llo_original>
